<compile_context>
chip_gen: v7x
topology: tpu7x:2x2x1
jax: 0.10.0
libtpu: 0.0.40
codegen_flags: <defaults>
</compile_context>

<pallas_src>
import functools

import numpy as np
import jax
import jax.numpy as jnp
from jax import lax
from jax.experimental import pallas as pl
from jax.experimental.pallas import tpu as pltpu


# ----------------------------------------------------------------------------
# Conv2d (valid padding, stride 1) + per-image sum / sum-of-squares
# ----------------------------------------------------------------------------
def _conv_kernel(x_ref, w_ref, b_ref, o_ref, sum_ref, ssq_ref,
                 *, KH, KW, Cin, Cout, Ho, Wo):
    # x_ref: (H, Cin, W); w_ref: (KH, Cout, KW*Cin); b_ref: (Cout, 1)
    # o_ref: (Ho, Cout, Wo); sum_ref/ssq_ref: (1, 1) per-image stats.
    def row(h, carry):
        psum, pssq = carry
        acc = jnp.zeros((Cout, Wo), jnp.float32)
        for kh in range(KH):
            xrow = x_ref[h + kh]                                  # (Cin, W)
            if Cin == 1:
                # degenerate contraction -> broadcast outer product on the VPU
                for kw in range(KW):
                    piece = xrow[:, kw:kw + Wo]                   # (1, Wo)
                    wcol = w_ref[kh][:, kw:kw + 1]                # (Cout, 1)
                    acc = acc + wcol * piece
            else:
                # fold the KW taps into the MXU contraction dim: K = KW*Cin
                patch = jnp.concatenate(
                    [xrow[:, kw:kw + Wo] for kw in range(KW)], axis=0)
                acc = acc + jnp.dot(w_ref[kh], patch,
                                    preferred_element_type=jnp.float32)
        acc = acc + b_ref[...]                                    # (Cout, Wo)
        o_ref[h] = acc
        return psum + acc, pssq + acc * acc

    zeros = jnp.zeros((Cout, Wo), jnp.float32)
    psum, pssq = lax.fori_loop(0, Ho, row, (zeros, zeros))
    # single cross-lane reduction per image (epilogue), not per row
    sum_ref[...] = jnp.sum(psum, keepdims=True)
    ssq_ref[...] = jnp.sum(pssq, keepdims=True)


def conv2d_with_stats(x, w, b):
    """x: (N, H, Cin, W); w: (KH, Cout, KW*Cin); b: (Cout, 1)."""
    N, H, Cin, W = x.shape
    KH, Cout, KWCin = w.shape
    KW = KWCin // Cin
    Ho, Wo = H - KH + 1, W - KW + 1

    kernel = functools.partial(_conv_kernel, KH=KH, KW=KW,
                               Cin=Cin, Cout=Cout, Ho=Ho, Wo=Wo)
    out, s, ssq = pl.pallas_call(
        kernel,
        grid=(N,),
        in_specs=[
            pl.BlockSpec((None, H, Cin, W), lambda n: (n, 0, 0, 0)),
            pl.BlockSpec((KH, Cout, KWCin), lambda n: (0, 0, 0)),
            pl.BlockSpec((Cout, 1), lambda n: (0, 0)),
        ],
        out_specs=[
            pl.BlockSpec((None, Ho, Cout, Wo), lambda n: (n, 0, 0, 0)),
            pl.BlockSpec((None, 1, 1), lambda n: (n, 0, 0)),
            pl.BlockSpec((None, 1, 1), lambda n: (n, 0, 0)),
        ],
        out_shape=[
            jax.ShapeDtypeStruct((N, Ho, Cout, Wo), jnp.float32),
            jax.ShapeDtypeStruct((N, 1, 1), jnp.float32),
            jax.ShapeDtypeStruct((N, 1, 1), jnp.float32),
        ],
        compiler_params=pltpu.CompilerParams(
            dimension_semantics=("parallel",),
            vmem_limit_bytes=32 * 1024 * 1024),
    )(x, w, b)

    cnt = N * Ho * Cout * Wo
    total = jnp.sum(s)
    sum_sq = jnp.sum(ssq)
    mean = total / cnt
    # torch.std is unbiased (N-1); gaussian() divides by std**2 == var.
    # Note: E[x^2]-E[x]^2 in f32 is adequate here (conv outputs are roughly
    # zero-mean), matching the f32 torch reference.
    var = (sum_sq - total * total / cnt) / (cnt - 1)
    return out, mean, 1.0 / var


# ----------------------------------------------------------------------------
# gaussian(x) = exp(-(x-mean)^2 / var) fused with AvgPool2d(k=3, s=2, pad=p)
# (count_include_pad=True, i.e. always divide by 9, like torch's default)
# ----------------------------------------------------------------------------
def _gauss_pool_kernel(stats_ref, x_ref, pt_ref, o_ref, gh_ref,
                       *, Hg, Hp, C, Wp, pad):
    mean = stats_ref[0]
    inv_var = stats_ref[1]

    # pass 1: gaussian (exp'd exactly once per element) + horizontal 3-tap /
    # stride-2 pool as a lane-dense (C, Wg) @ (Wg, Wp) matmul per input row.
    def hrow(hg, _):
        g = jnp.exp(-((x_ref[hg] - mean) ** 2) * inv_var)         # (C, Wg)
        gh_ref[hg] = jnp.dot(g, pt_ref[...],
                             preferred_element_type=jnp.float32)  # (C, Wp)
        return 0

    lax.fori_loop(0, Hg, hrow, 0)

    # pass 2: vertical 3-tap / stride-2 sum with zero padding.
    def vrow(hp, _):
        acc = jnp.zeros((C, Wp), jnp.float32)
        for i in range(3):
            r = 2 * hp - pad + i
            rc = jnp.clip(r, 0, Hg - 1)
            valid = jnp.logical_and(r >= 0, r < Hg).astype(jnp.float32)
            acc = acc + gh_ref[rc] * valid
        o_ref[hp] = acc * (1.0 / 9.0)
        return 0

    lax.fori_loop(0, Hp, vrow, 0)


def gaussian_avg_pool(x, mean, inv_var, pad):
    """x: (N, Hg, C, Wg); returns (N, Hp, C, Wp)."""
    N, Hg, C, Wg = x.shape
    Hp = (Hg + 2 * pad - 3) // 2 + 1
    Wp = (Wg + 2 * pad - 3) // 2 + 1

    # 0/1 horizontal pooling matrix, transposed so the output last dim is Wp.
    PT = np.zeros((Wg, Wp), np.float32)
    for wp in range(Wp):
        for j in range(3):
            col = 2 * wp - pad + j
            if 0 <= col < Wg:
                PT[col, wp] = 1.0
    PT = jnp.asarray(PT)
    stats = jnp.stack([mean, inv_var]).astype(jnp.float32)        # (2,)

    kernel = functools.partial(_gauss_pool_kernel, Hg=Hg, Hp=Hp, C=C,
                               Wp=Wp, pad=pad)
    return pl.pallas_call(
        kernel,
        grid=(N,),
        in_specs=[
            pl.BlockSpec(memory_space=pltpu.MemorySpace.SMEM),
            pl.BlockSpec((None, Hg, C, Wg), lambda n: (n, 0, 0, 0)),
            pl.BlockSpec((Wg, Wp), lambda n: (0, 0)),
        ],
        out_specs=pl.BlockSpec((None, Hp, C, Wp), lambda n: (n, 0, 0, 0)),
        out_shape=jax.ShapeDtypeStruct((N, Hp, C, Wp), jnp.float32),
        scratch_shapes=[pltpu.VMEM((Hg, C, Wp), jnp.float32)],
        compiler_params=pltpu.CompilerParams(
            dimension_semantics=("parallel",),
            vmem_limit_bytes=32 * 1024 * 1024),
    )(stats, x, PT)


# ----------------------------------------------------------------------------
# Fused MLP head: fc1 + relu, fc2 + relu, fc3
# ----------------------------------------------------------------------------
def _mlp_kernel(x_ref, w1_ref, b1_ref, w2_ref, b2_ref, w3_ref, b3_ref, out_ref):
    h = jnp.dot(x_ref[...], w1_ref[...],
                preferred_element_type=jnp.float32) + b1_ref[...]
    h = jnp.maximum(h, 0.0)
    h = jnp.dot(h, w2_ref[...],
                preferred_element_type=jnp.float32) + b2_ref[...]
    h = jnp.maximum(h, 0.0)
    out_ref[...] = jnp.dot(h, w3_ref[...],
                           preferred_element_type=jnp.float32) + b3_ref[...]


def mlp_head(x, w1, b1, w2, b2, w3, b3):
    N = x.shape[0]

    def full(shape):
        return pl.BlockSpec(shape, lambda i, _s=len(shape): (0,) * _s)

    return pl.pallas_call(
        _mlp_kernel,
        grid=(1,),
        in_specs=[full(x.shape), full(w1.shape), full(b1.shape),
                  full(w2.shape), full(b2.shape), full(w3.shape), full(b3.shape)],
        out_specs=full((N, 2)),
        out_shape=jax.ShapeDtypeStruct((N, 2), jnp.float32),
    )(x, w1, b1, w2, b2, w3, b3)


# ----------------------------------------------------------------------------
# GNCNN forward
# ----------------------------------------------------------------------------
def gncnn_forward(x_nchw, params):
    # internal layout: (N, H, C, W)  -- W on lanes, C on sublanes
    x = jnp.transpose(x_nchw, (0, 2, 1, 3))          # (N,C,H,W) -> (N,H,C,W)
    pads = (1, 1, 0, 0, 0)                           # avg_pool1..5 paddings
    for i in range(5):
        w = params[f"conv{i + 1}_w"]                 # torch layout (Cout,Cin,KH,KW)
        b = params[f"conv{i + 1}_b"]                 # (Cout,)
        Cout, Cin, KH, KW = w.shape
        # weight for the KW-folded contraction: [kh, co, kw*Cin + ci]
        w_p = jnp.transpose(w, (2, 0, 3, 1)).reshape(KH, Cout, KW * Cin)
        b_p = b.reshape(Cout, 1)
        conv_out, mean, inv_var = conv2d_with_stats(x, w_p, b_p)
        x = gaussian_avg_pool(conv_out, mean, inv_var, pads[i])
    N = x.shape[0]
    # torch flattens NCHW: (N,C,H,W) -> (N, C*H*W); our layout is (N,H,C,W)
    flat = jnp.transpose(x, (0, 2, 1, 3)).reshape(N, -1)
    return mlp_head(flat,
                    params["fc1_w"], params["fc1_b"],
                    params["fc2_w"], params["fc2_b"],
                    params["fc3_w"], params["fc3_b"])


def init_params(key):
    ks = jax.random.split(key, 16)
    p = {}

    def conv(kw_key, kb_key, kh, kw, cin, cout):
        scale = 1.0 / np.sqrt(cin * kh * kw)
        w = jax.random.normal(kw_key, (cout, cin, kh, kw), jnp.float32) * scale
        b = jax.random.normal(kb_key, (cout,), jnp.float32) * scale
        return w, b

    def lin(kw_key, kb_key, din, dout):
        scale = 1.0 / np.sqrt(din)
        w = jax.random.normal(kw_key, (din, dout), jnp.float32) * scale
        b = jax.random.normal(kb_key, (1, dout), jnp.float32) * scale
        return w, b

    p["conv1_w"], p["conv1_b"] = conv(ks[0], ks[1], 5, 5, 1, 16)
    p["conv2_w"], p["conv2_b"] = conv(ks[2], ks[3], 3, 3, 16, 16)
    p["conv3_w"], p["conv3_b"] = conv(ks[4], ks[5], 3, 3, 16, 16)
    p["conv4_w"], p["conv4_b"] = conv(ks[6], ks[7], 3, 3, 16, 16)
    p["conv5_w"], p["conv5_b"] = conv(ks[8], ks[9], 5, 5, 16, 16)
    p["fc1_w"], p["fc1_b"] = lin(ks[10], ks[11], 256, 128)
    p["fc2_w"], p["fc2_b"] = lin(ks[12], ks[13], 128, 128)
    p["fc3_w"], p["fc3_b"] = lin(ks[14], ks[15], 128, 2)
    return p


if __name__ == "__main__":
    key = jax.random.PRNGKey(0)
    pkey, xkey = jax.random.split(key)
    params = init_params(pkey)

    # 256x256 single-channel input is dictated by fc1 = Linear(256, 128)
    # (16 channels * 4 * 4 spatial after the five conv/pool stages).
    x = jax.random.normal(xkey, (2, 1, 256, 256), jnp.float32)  # NCHW like torch

    out = jax.jit(gncnn_forward)(x, params)
    out = jax.block_until_ready(out)
    assert out.shape == (2, 2) and out.dtype == jnp.float32
    print("KERNEL_OK")
</pallas_src>

<mosaic_0001>
module attributes {stable_mosaic.version = 11 : i64} {
  func.func @_conv_kernel(%arg0: i32, %arg1: memref<1x256x1x256xf32, #tpu.memory_space<vmem>>, %arg2: memref<5x16x5xf32, #tpu.memory_space<vmem>>, %arg3: memref<16x1xf32, #tpu.memory_space<vmem>>, %arg4: memref<1x252x16x252xf32, #tpu.memory_space<vmem>>, %arg5: memref<1x1x1xf32, #tpu.memory_space<vmem>>, %arg6: memref<1x1x1xf32, #tpu.memory_space<vmem>>) attributes {dimension_semantics = [#tpu.dimension_semantics<parallel>], iteration_bounds = array<i64: 2>, scalar_prefetch = 0 : i64, scratch_operands = 0 : i64, tpu.core_type = #tpu.core_type<tc>, window_params = [{transform_indices = @transform_0, window_bounds = array<i64: 1, 256, 1, 256>}, {pipeline_mode = #tpu.pipeline_mode<synchronous>, transform_indices = @transform_1, window_bounds = array<i64: 5, 16, 5>}, {pipeline_mode = #tpu.pipeline_mode<synchronous>, transform_indices = @transform_2, window_bounds = array<i64: 16, 1>}, {transform_indices = @transform_3, window_bounds = array<i64: 1, 252, 16, 252>}, {transform_indices = @transform_4, window_bounds = array<i64: 1, 1, 1>}, {transform_indices = @transform_5, window_bounds = array<i64: 1, 1, 1>}]} {
    %cst = arith.constant 0.000000e+00 : f32
    %0 = vector.broadcast %cst : f32 to vector<16x252xf32>
    %c0_i32 = arith.constant 0 : i32
    %c252_i32 = arith.constant 252 : i32
    %1 = arith.addi %c0_i32, %c252_i32 : i32
    %c1_i32 = arith.constant 1 : i32
    %2:2 = scf.for %arg7 = %c0_i32 to %1 step %c1_i32 iter_args(%arg8 = %0, %arg9 = %0) -> (vector<16x252xf32>, vector<16x252xf32>)  : i32 {
      %cst_8 = arith.constant 0.000000e+00 : f32
      %19 = vector.broadcast %cst_8 : f32 to vector<16x252xf32>
      %c0_i32_9 = arith.constant 0 : i32
      %20 = arith.addi %arg7, %c0_i32_9 : i32
      %c0_10 = arith.constant 0 : index
      %21 = arith.index_cast %20 : i32 to index
      %c0_11 = arith.constant 0 : index
      %c0_12 = arith.constant 0 : index
      %22 = vector.load %arg1[%c0_10, %21, %c0_11, %c0_12] : memref<1x256x1x256xf32, #tpu.memory_space<vmem>>, vector<1x1x1x256xf32>
      %23 = vector.shape_cast %22 : vector<1x1x1x256xf32> to vector<1x256xf32>
      %24 = vector.extract_strided_slice %23 {offsets = [0, 0], sizes = [1, 252], strides = [1, 1]} : vector<1x256xf32> to vector<1x252xf32>
      %c0_13 = arith.constant 0 : index
      %c0_14 = arith.constant 0 : index
      %c0_15 = arith.constant 0 : index
      %25 = vector.load %arg2[%c0_13, %c0_14, %c0_15] : memref<5x16x5xf32, #tpu.memory_space<vmem>>, vector<1x16x5xf32>
      %26 = vector.shape_cast %25 : vector<1x16x5xf32> to vector<16x5xf32>
      %27 = vector.extract_strided_slice %26 {offsets = [0, 0], sizes = [16, 1], strides = [1, 1]} : vector<16x5xf32> to vector<16x1xf32>
      %28 = vector.broadcast %27 : vector<16x1xf32> to vector<16x252xf32>
      %29 = vector.broadcast %24 : vector<1x252xf32> to vector<16x252xf32>
      %30 = arith.mulf %28, %29 : vector<16x252xf32>
      %31 = arith.addf %19, %30 : vector<16x252xf32>
      %32 = vector.extract_strided_slice %23 {offsets = [0, 1], sizes = [1, 252], strides = [1, 1]} : vector<1x256xf32> to vector<1x252xf32>
      %c0_16 = arith.constant 0 : index
      %c0_17 = arith.constant 0 : index
      %c0_18 = arith.constant 0 : index
      %33 = vector.load %arg2[%c0_16, %c0_17, %c0_18] : memref<5x16x5xf32, #tpu.memory_space<vmem>>, vector<1x16x5xf32>
      %34 = vector.shape_cast %33 : vector<1x16x5xf32> to vector<16x5xf32>
      %35 = vector.extract_strided_slice %34 {offsets = [0, 1], sizes = [16, 1], strides = [1, 1]} : vector<16x5xf32> to vector<16x1xf32>
      %36 = vector.broadcast %35 : vector<16x1xf32> to vector<16x252xf32>
      %37 = vector.broadcast %32 : vector<1x252xf32> to vector<16x252xf32>
      %38 = arith.mulf %36, %37 : vector<16x252xf32>
      %39 = arith.addf %31, %38 : vector<16x252xf32>
      %40 = vector.extract_strided_slice %23 {offsets = [0, 2], sizes = [1, 252], strides = [1, 1]} : vector<1x256xf32> to vector<1x252xf32>
      %c0_19 = arith.constant 0 : index
      %c0_20 = arith.constant 0 : index
      %c0_21 = arith.constant 0 : index
      %41 = vector.load %arg2[%c0_19, %c0_20, %c0_21] : memref<5x16x5xf32, #tpu.memory_space<vmem>>, vector<1x16x5xf32>
      %42 = vector.shape_cast %41 : vector<1x16x5xf32> to vector<16x5xf32>
      %43 = vector.extract_strided_slice %42 {offsets = [0, 2], sizes = [16, 1], strides = [1, 1]} : vector<16x5xf32> to vector<16x1xf32>
      %44 = vector.broadcast %43 : vector<16x1xf32> to vector<16x252xf32>
      %45 = vector.broadcast %40 : vector<1x252xf32> to vector<16x252xf32>
      %46 = arith.mulf %44, %45 : vector<16x252xf32>
      %47 = arith.addf %39, %46 : vector<16x252xf32>
      %48 = vector.extract_strided_slice %23 {offsets = [0, 3], sizes = [1, 252], strides = [1, 1]} : vector<1x256xf32> to vector<1x252xf32>
      %c0_22 = arith.constant 0 : index
      %c0_23 = arith.constant 0 : index
      %c0_24 = arith.constant 0 : index
      %49 = vector.load %arg2[%c0_22, %c0_23, %c0_24] : memref<5x16x5xf32, #tpu.memory_space<vmem>>, vector<1x16x5xf32>
      %50 = vector.shape_cast %49 : vector<1x16x5xf32> to vector<16x5xf32>
      %51 = vector.extract_strided_slice %50 {offsets = [0, 3], sizes = [16, 1], strides = [1, 1]} : vector<16x5xf32> to vector<16x1xf32>
      %52 = vector.broadcast %51 : vector<16x1xf32> to vector<16x252xf32>
      %53 = vector.broadcast %48 : vector<1x252xf32> to vector<16x252xf32>
      %54 = arith.mulf %52, %53 : vector<16x252xf32>
      %55 = arith.addf %47, %54 : vector<16x252xf32>
      %56 = vector.extract_strided_slice %23 {offsets = [0, 4], sizes = [1, 252], strides = [1, 1]} : vector<1x256xf32> to vector<1x252xf32>
      %c0_25 = arith.constant 0 : index
      %c0_26 = arith.constant 0 : index
      %c0_27 = arith.constant 0 : index
      %57 = vector.load %arg2[%c0_25, %c0_26, %c0_27] : memref<5x16x5xf32, #tpu.memory_space<vmem>>, vector<1x16x5xf32>
      %58 = vector.shape_cast %57 : vector<1x16x5xf32> to vector<16x5xf32>
      %59 = vector.extract_strided_slice %58 {offsets = [0, 4], sizes = [16, 1], strides = [1, 1]} : vector<16x5xf32> to vector<16x1xf32>
      %60 = vector.broadcast %59 : vector<16x1xf32> to vector<16x252xf32>
      %61 = vector.broadcast %56 : vector<1x252xf32> to vector<16x252xf32>
      %62 = arith.mulf %60, %61 : vector<16x252xf32>
      %63 = arith.addf %55, %62 : vector<16x252xf32>
      %c1_i32_28 = arith.constant 1 : i32
      %64 = arith.addi %arg7, %c1_i32_28 : i32
      %c0_29 = arith.constant 0 : index
      %65 = arith.index_cast %64 : i32 to index
      %c0_30 = arith.constant 0 : index
      %c0_31 = arith.constant 0 : index
      %66 = vector.load %arg1[%c0_29, %65, %c0_30, %c0_31] : memref<1x256x1x256xf32, #tpu.memory_space<vmem>>, vector<1x1x1x256xf32>
      %67 = vector.shape_cast %66 : vector<1x1x1x256xf32> to vector<1x256xf32>
      %68 = vector.extract_strided_slice %67 {offsets = [0, 0], sizes = [1, 252], strides = [1, 1]} : vector<1x256xf32> to vector<1x252xf32>
      %c1 = arith.constant 1 : index
      %c0_32 = arith.constant 0 : index
      %c0_33 = arith.constant 0 : index
      %69 = vector.load %arg2[%c1, %c0_32, %c0_33] : memref<5x16x5xf32, #tpu.memory_space<vmem>>, vector<1x16x5xf32>
      %70 = vector.shape_cast %69 : vector<1x16x5xf32> to vector<16x5xf32>
      %71 = vector.extract_strided_slice %70 {offsets = [0, 0], sizes = [16, 1], strides = [1, 1]} : vector<16x5xf32> to vector<16x1xf32>
      %72 = vector.broadcast %71 : vector<16x1xf32> to vector<16x252xf32>
      %73 = vector.broadcast %68 : vector<1x252xf32> to vector<16x252xf32>
      %74 = arith.mulf %72, %73 : vector<16x252xf32>
      %75 = arith.addf %63, %74 : vector<16x252xf32>
      %76 = vector.extract_strided_slice %67 {offsets = [0, 1], sizes = [1, 252], strides = [1, 1]} : vector<1x256xf32> to vector<1x252xf32>
      %c1_34 = arith.constant 1 : index
      %c0_35 = arith.constant 0 : index
      %c0_36 = arith.constant 0 : index
      %77 = vector.load %arg2[%c1_34, %c0_35, %c0_36] : memref<5x16x5xf32, #tpu.memory_space<vmem>>, vector<1x16x5xf32>
      %78 = vector.shape_cast %77 : vector<1x16x5xf32> to vector<16x5xf32>
      %79 = vector.extract_strided_slice %78 {offsets = [0, 1], sizes = [16, 1], strides = [1, 1]} : vector<16x5xf32> to vector<16x1xf32>
      %80 = vector.broadcast %79 : vector<16x1xf32> to vector<16x252xf32>
      %81 = vector.broadcast %76 : vector<1x252xf32> to vector<16x252xf32>
      %82 = arith.mulf %80, %81 : vector<16x252xf32>
      %83 = arith.addf %75, %82 : vector<16x252xf32>
      %84 = vector.extract_strided_slice %67 {offsets = [0, 2], sizes = [1, 252], strides = [1, 1]} : vector<1x256xf32> to vector<1x252xf32>
      %c1_37 = arith.constant 1 : index
      %c0_38 = arith.constant 0 : index
      %c0_39 = arith.constant 0 : index
      %85 = vector.load %arg2[%c1_37, %c0_38, %c0_39] : memref<5x16x5xf32, #tpu.memory_space<vmem>>, vector<1x16x5xf32>
      %86 = vector.shape_cast %85 : vector<1x16x5xf32> to vector<16x5xf32>
      %87 = vector.extract_strided_slice %86 {offsets = [0, 2], sizes = [16, 1], strides = [1, 1]} : vector<16x5xf32> to vector<16x1xf32>
      %88 = vector.broadcast %87 : vector<16x1xf32> to vector<16x252xf32>
      %89 = vector.broadcast %84 : vector<1x252xf32> to vector<16x252xf32>
      %90 = arith.mulf %88, %89 : vector<16x252xf32>
      %91 = arith.addf %83, %90 : vector<16x252xf32>
      %92 = vector.extract_strided_slice %67 {offsets = [0, 3], sizes = [1, 252], strides = [1, 1]} : vector<1x256xf32> to vector<1x252xf32>
      %c1_40 = arith.constant 1 : index
      %c0_41 = arith.constant 0 : index
      %c0_42 = arith.constant 0 : index
      %93 = vector.load %arg2[%c1_40, %c0_41, %c0_42] : memref<5x16x5xf32, #tpu.memory_space<vmem>>, vector<1x16x5xf32>
      %94 = vector.shape_cast %93 : vector<1x16x5xf32> to vector<16x5xf32>
      %95 = vector.extract_strided_slice %94 {offsets = [0, 3], sizes = [16, 1], strides = [1, 1]} : vector<16x5xf32> to vector<16x1xf32>
      %96 = vector.broadcast %95 : vector<16x1xf32> to vector<16x252xf32>
      %97 = vector.broadcast %92 : vector<1x252xf32> to vector<16x252xf32>
      %98 = arith.mulf %96, %97 : vector<16x252xf32>
      %99 = arith.addf %91, %98 : vector<16x252xf32>
      %100 = vector.extract_strided_slice %67 {offsets = [0, 4], sizes = [1, 252], strides = [1, 1]} : vector<1x256xf32> to vector<1x252xf32>
      %c1_43 = arith.constant 1 : index
      %c0_44 = arith.constant 0 : index
      %c0_45 = arith.constant 0 : index
      %101 = vector.load %arg2[%c1_43, %c0_44, %c0_45] : memref<5x16x5xf32, #tpu.memory_space<vmem>>, vector<1x16x5xf32>
      %102 = vector.shape_cast %101 : vector<1x16x5xf32> to vector<16x5xf32>
      %103 = vector.extract_strided_slice %102 {offsets = [0, 4], sizes = [16, 1], strides = [1, 1]} : vector<16x5xf32> to vector<16x1xf32>
      %104 = vector.broadcast %103 : vector<16x1xf32> to vector<16x252xf32>
      %105 = vector.broadcast %100 : vector<1x252xf32> to vector<16x252xf32>
      %106 = arith.mulf %104, %105 : vector<16x252xf32>
      %107 = arith.addf %99, %106 : vector<16x252xf32>
      %c2_i32 = arith.constant 2 : i32
      %108 = arith.addi %arg7, %c2_i32 : i32
      %c0_46 = arith.constant 0 : index
      %109 = arith.index_cast %108 : i32 to index
      %c0_47 = arith.constant 0 : index
      %c0_48 = arith.constant 0 : index
      %110 = vector.load %arg1[%c0_46, %109, %c0_47, %c0_48] : memref<1x256x1x256xf32, #tpu.memory_space<vmem>>, vector<1x1x1x256xf32>
      %111 = vector.shape_cast %110 : vector<1x1x1x256xf32> to vector<1x256xf32>
      %112 = vector.extract_strided_slice %111 {offsets = [0, 0], sizes = [1, 252], strides = [1, 1]} : vector<1x256xf32> to vector<1x252xf32>
      %c2 = arith.constant 2 : index
      %c0_49 = arith.constant 0 : index
      %c0_50 = arith.constant 0 : index
      %113 = vector.load %arg2[%c2, %c0_49, %c0_50] : memref<5x16x5xf32, #tpu.memory_space<vmem>>, vector<1x16x5xf32>
      %114 = vector.shape_cast %113 : vector<1x16x5xf32> to vector<16x5xf32>
      %115 = vector.extract_strided_slice %114 {offsets = [0, 0], sizes = [16, 1], strides = [1, 1]} : vector<16x5xf32> to vector<16x1xf32>
      %116 = vector.broadcast %115 : vector<16x1xf32> to vector<16x252xf32>
      %117 = vector.broadcast %112 : vector<1x252xf32> to vector<16x252xf32>
      %118 = arith.mulf %116, %117 : vector<16x252xf32>
      %119 = arith.addf %107, %118 : vector<16x252xf32>
      %120 = vector.extract_strided_slice %111 {offsets = [0, 1], sizes = [1, 252], strides = [1, 1]} : vector<1x256xf32> to vector<1x252xf32>
      %c2_51 = arith.constant 2 : index
      %c0_52 = arith.constant 0 : index
      %c0_53 = arith.constant 0 : index
      %121 = vector.load %arg2[%c2_51, %c0_52, %c0_53] : memref<5x16x5xf32, #tpu.memory_space<vmem>>, vector<1x16x5xf32>
      %122 = vector.shape_cast %121 : vector<1x16x5xf32> to vector<16x5xf32>
      %123 = vector.extract_strided_slice %122 {offsets = [0, 1], sizes = [16, 1], strides = [1, 1]} : vector<16x5xf32> to vector<16x1xf32>
      %124 = vector.broadcast %123 : vector<16x1xf32> to vector<16x252xf32>
      %125 = vector.broadcast %120 : vector<1x252xf32> to vector<16x252xf32>
      %126 = arith.mulf %124, %125 : vector<16x252xf32>
      %127 = arith.addf %119, %126 : vector<16x252xf32>
      %128 = vector.extract_strided_slice %111 {offsets = [0, 2], sizes = [1, 252], strides = [1, 1]} : vector<1x256xf32> to vector<1x252xf32>
      %c2_54 = arith.constant 2 : index
      %c0_55 = arith.constant 0 : index
      %c0_56 = arith.constant 0 : index
      %129 = vector.load %arg2[%c2_54, %c0_55, %c0_56] : memref<5x16x5xf32, #tpu.memory_space<vmem>>, vector<1x16x5xf32>
      %130 = vector.shape_cast %129 : vector<1x16x5xf32> to vector<16x5xf32>
      %131 = vector.extract_strided_slice %130 {offsets = [0, 2], sizes = [16, 1], strides = [1, 1]} : vector<16x5xf32> to vector<16x1xf32>
      %132 = vector.broadcast %131 : vector<16x1xf32> to vector<16x252xf32>
      %133 = vector.broadcast %128 : vector<1x252xf32> to vector<16x252xf32>
      %134 = arith.mulf %132, %133 : vector<16x252xf32>
      %135 = arith.addf %127, %134 : vector<16x252xf32>
      %136 = vector.extract_strided_slice %111 {offsets = [0, 3], sizes = [1, 252], strides = [1, 1]} : vector<1x256xf32> to vector<1x252xf32>
      %c2_57 = arith.constant 2 : index
      %c0_58 = arith.constant 0 : index
      %c0_59 = arith.constant 0 : index
      %137 = vector.load %arg2[%c2_57, %c0_58, %c0_59] : memref<5x16x5xf32, #tpu.memory_space<vmem>>, vector<1x16x5xf32>
      %138 = vector.shape_cast %137 : vector<1x16x5xf32> to vector<16x5xf32>
      %139 = vector.extract_strided_slice %138 {offsets = [0, 3], sizes = [16, 1], strides = [1, 1]} : vector<16x5xf32> to vector<16x1xf32>
      %140 = vector.broadcast %139 : vector<16x1xf32> to vector<16x252xf32>
      %141 = vector.broadcast %136 : vector<1x252xf32> to vector<16x252xf32>
      %142 = arith.mulf %140, %141 : vector<16x252xf32>
      %143 = arith.addf %135, %142 : vector<16x252xf32>
      %144 = vector.extract_strided_slice %111 {offsets = [0, 4], sizes = [1, 252], strides = [1, 1]} : vector<1x256xf32> to vector<1x252xf32>
      %c2_60 = arith.constant 2 : index
      %c0_61 = arith.constant 0 : index
      %c0_62 = arith.constant 0 : index
      %145 = vector.load %arg2[%c2_60, %c0_61, %c0_62] : memref<5x16x5xf32, #tpu.memory_space<vmem>>, vector<1x16x5xf32>
      %146 = vector.shape_cast %145 : vector<1x16x5xf32> to vector<16x5xf32>
      %147 = vector.extract_strided_slice %146 {offsets = [0, 4], sizes = [16, 1], strides = [1, 1]} : vector<16x5xf32> to vector<16x1xf32>
      %148 = vector.broadcast %147 : vector<16x1xf32> to vector<16x252xf32>
      %149 = vector.broadcast %144 : vector<1x252xf32> to vector<16x252xf32>
      %150 = arith.mulf %148, %149 : vector<16x252xf32>
      %151 = arith.addf %143, %150 : vector<16x252xf32>
      %c3_i32 = arith.constant 3 : i32
      %152 = arith.addi %arg7, %c3_i32 : i32
      %c0_63 = arith.constant 0 : index
      %153 = arith.index_cast %152 : i32 to index
      %c0_64 = arith.constant 0 : index
      %c0_65 = arith.constant 0 : index
      %154 = vector.load %arg1[%c0_63, %153, %c0_64, %c0_65] : memref<1x256x1x256xf32, #tpu.memory_space<vmem>>, vector<1x1x1x256xf32>
      %155 = vector.shape_cast %154 : vector<1x1x1x256xf32> to vector<1x256xf32>
      %156 = vector.extract_strided_slice %155 {offsets = [0, 0], sizes = [1, 252], strides = [1, 1]} : vector<1x256xf32> to vector<1x252xf32>
      %c3 = arith.constant 3 : index
      %c0_66 = arith.constant 0 : index
      %c0_67 = arith.constant 0 : index
      %157 = vector.load %arg2[%c3, %c0_66, %c0_67] : memref<5x16x5xf32, #tpu.memory_space<vmem>>, vector<1x16x5xf32>
      %158 = vector.shape_cast %157 : vector<1x16x5xf32> to vector<16x5xf32>
      %159 = vector.extract_strided_slice %158 {offsets = [0, 0], sizes = [16, 1], strides = [1, 1]} : vector<16x5xf32> to vector<16x1xf32>
      %160 = vector.broadcast %159 : vector<16x1xf32> to vector<16x252xf32>
      %161 = vector.broadcast %156 : vector<1x252xf32> to vector<16x252xf32>
      %162 = arith.mulf %160, %161 : vector<16x252xf32>
      %163 = arith.addf %151, %162 : vector<16x252xf32>
      %164 = vector.extract_strided_slice %155 {offsets = [0, 1], sizes = [1, 252], strides = [1, 1]} : vector<1x256xf32> to vector<1x252xf32>
      %c3_68 = arith.constant 3 : index
      %c0_69 = arith.constant 0 : index
      %c0_70 = arith.constant 0 : index
      %165 = vector.load %arg2[%c3_68, %c0_69, %c0_70] : memref<5x16x5xf32, #tpu.memory_space<vmem>>, vector<1x16x5xf32>
      %166 = vector.shape_cast %165 : vector<1x16x5xf32> to vector<16x5xf32>
      %167 = vector.extract_strided_slice %166 {offsets = [0, 1], sizes = [16, 1], strides = [1, 1]} : vector<16x5xf32> to vector<16x1xf32>
      %168 = vector.broadcast %167 : vector<16x1xf32> to vector<16x252xf32>
      %169 = vector.broadcast %164 : vector<1x252xf32> to vector<16x252xf32>
      %170 = arith.mulf %168, %169 : vector<16x252xf32>
      %171 = arith.addf %163, %170 : vector<16x252xf32>
      %172 = vector.extract_strided_slice %155 {offsets = [0, 2], sizes = [1, 252], strides = [1, 1]} : vector<1x256xf32> to vector<1x252xf32>
      %c3_71 = arith.constant 3 : index
      %c0_72 = arith.constant 0 : index
      %c0_73 = arith.constant 0 : index
      %173 = vector.load %arg2[%c3_71, %c0_72, %c0_73] : memref<5x16x5xf32, #tpu.memory_space<vmem>>, vector<1x16x5xf32>
      %174 = vector.shape_cast %173 : vector<1x16x5xf32> to vector<16x5xf32>
      %175 = vector.extract_strided_slice %174 {offsets = [0, 2], sizes = [16, 1], strides = [1, 1]} : vector<16x5xf32> to vector<16x1xf32>
      %176 = vector.broadcast %175 : vector<16x1xf32> to vector<16x252xf32>
      %177 = vector.broadcast %172 : vector<1x252xf32> to vector<16x252xf32>
      %178 = arith.mulf %176, %177 : vector<16x252xf32>
      %179 = arith.addf %171, %178 : vector<16x252xf32>
      %180 = vector.extract_strided_slice %155 {offsets = [0, 3], sizes = [1, 252], strides = [1, 1]} : vector<1x256xf32> to vector<1x252xf32>
      %c3_74 = arith.constant 3 : index
      %c0_75 = arith.constant 0 : index
      %c0_76 = arith.constant 0 : index
      %181 = vector.load %arg2[%c3_74, %c0_75, %c0_76] : memref<5x16x5xf32, #tpu.memory_space<vmem>>, vector<1x16x5xf32>
      %182 = vector.shape_cast %181 : vector<1x16x5xf32> to vector<16x5xf32>
      %183 = vector.extract_strided_slice %182 {offsets = [0, 3], sizes = [16, 1], strides = [1, 1]} : vector<16x5xf32> to vector<16x1xf32>
      %184 = vector.broadcast %183 : vector<16x1xf32> to vector<16x252xf32>
      %185 = vector.broadcast %180 : vector<1x252xf32> to vector<16x252xf32>
      %186 = arith.mulf %184, %185 : vector<16x252xf32>
      %187 = arith.addf %179, %186 : vector<16x252xf32>
      %188 = vector.extract_strided_slice %155 {offsets = [0, 4], sizes = [1, 252], strides = [1, 1]} : vector<1x256xf32> to vector<1x252xf32>
      %c3_77 = arith.constant 3 : index
      %c0_78 = arith.constant 0 : index
      %c0_79 = arith.constant 0 : index
      %189 = vector.load %arg2[%c3_77, %c0_78, %c0_79] : memref<5x16x5xf32, #tpu.memory_space<vmem>>, vector<1x16x5xf32>
      %190 = vector.shape_cast %189 : vector<1x16x5xf32> to vector<16x5xf32>
      %191 = vector.extract_strided_slice %190 {offsets = [0, 4], sizes = [16, 1], strides = [1, 1]} : vector<16x5xf32> to vector<16x1xf32>
      %192 = vector.broadcast %191 : vector<16x1xf32> to vector<16x252xf32>
      %193 = vector.broadcast %188 : vector<1x252xf32> to vector<16x252xf32>
      %194 = arith.mulf %192, %193 : vector<16x252xf32>
      %195 = arith.addf %187, %194 : vector<16x252xf32>
      %c4_i32 = arith.constant 4 : i32
      %196 = arith.addi %arg7, %c4_i32 : i32
      %c0_80 = arith.constant 0 : index
      %197 = arith.index_cast %196 : i32 to index
      %c0_81 = arith.constant 0 : index
      %c0_82 = arith.constant 0 : index
      %198 = vector.load %arg1[%c0_80, %197, %c0_81, %c0_82] : memref<1x256x1x256xf32, #tpu.memory_space<vmem>>, vector<1x1x1x256xf32>
      %199 = vector.shape_cast %198 : vector<1x1x1x256xf32> to vector<1x256xf32>
      %200 = vector.extract_strided_slice %199 {offsets = [0, 0], sizes = [1, 252], strides = [1, 1]} : vector<1x256xf32> to vector<1x252xf32>
      %c4 = arith.constant 4 : index
      %c0_83 = arith.constant 0 : index
      %c0_84 = arith.constant 0 : index
      %201 = vector.load %arg2[%c4, %c0_83, %c0_84] : memref<5x16x5xf32, #tpu.memory_space<vmem>>, vector<1x16x5xf32>
      %202 = vector.shape_cast %201 : vector<1x16x5xf32> to vector<16x5xf32>
      %203 = vector.extract_strided_slice %202 {offsets = [0, 0], sizes = [16, 1], strides = [1, 1]} : vector<16x5xf32> to vector<16x1xf32>
      %204 = vector.broadcast %203 : vector<16x1xf32> to vector<16x252xf32>
      %205 = vector.broadcast %200 : vector<1x252xf32> to vector<16x252xf32>
      %206 = arith.mulf %204, %205 : vector<16x252xf32>
      %207 = arith.addf %195, %206 : vector<16x252xf32>
      %208 = vector.extract_strided_slice %199 {offsets = [0, 1], sizes = [1, 252], strides = [1, 1]} : vector<1x256xf32> to vector<1x252xf32>
      %c4_85 = arith.constant 4 : index
      %c0_86 = arith.constant 0 : index
      %c0_87 = arith.constant 0 : index
      %209 = vector.load %arg2[%c4_85, %c0_86, %c0_87] : memref<5x16x5xf32, #tpu.memory_space<vmem>>, vector<1x16x5xf32>
      %210 = vector.shape_cast %209 : vector<1x16x5xf32> to vector<16x5xf32>
      %211 = vector.extract_strided_slice %210 {offsets = [0, 1], sizes = [16, 1], strides = [1, 1]} : vector<16x5xf32> to vector<16x1xf32>
      %212 = vector.broadcast %211 : vector<16x1xf32> to vector<16x252xf32>
      %213 = vector.broadcast %208 : vector<1x252xf32> to vector<16x252xf32>
      %214 = arith.mulf %212, %213 : vector<16x252xf32>
      %215 = arith.addf %207, %214 : vector<16x252xf32>
      %216 = vector.extract_strided_slice %199 {offsets = [0, 2], sizes = [1, 252], strides = [1, 1]} : vector<1x256xf32> to vector<1x252xf32>
      %c4_88 = arith.constant 4 : index
      %c0_89 = arith.constant 0 : index
      %c0_90 = arith.constant 0 : index
      %217 = vector.load %arg2[%c4_88, %c0_89, %c0_90] : memref<5x16x5xf32, #tpu.memory_space<vmem>>, vector<1x16x5xf32>
      %218 = vector.shape_cast %217 : vector<1x16x5xf32> to vector<16x5xf32>
      %219 = vector.extract_strided_slice %218 {offsets = [0, 2], sizes = [16, 1], strides = [1, 1]} : vector<16x5xf32> to vector<16x1xf32>
      %220 = vector.broadcast %219 : vector<16x1xf32> to vector<16x252xf32>
      %221 = vector.broadcast %216 : vector<1x252xf32> to vector<16x252xf32>
      %222 = arith.mulf %220, %221 : vector<16x252xf32>
      %223 = arith.addf %215, %222 : vector<16x252xf32>
      %224 = vector.extract_strided_slice %199 {offsets = [0, 3], sizes = [1, 252], strides = [1, 1]} : vector<1x256xf32> to vector<1x252xf32>
      %c4_91 = arith.constant 4 : index
      %c0_92 = arith.constant 0 : index
      %c0_93 = arith.constant 0 : index
      %225 = vector.load %arg2[%c4_91, %c0_92, %c0_93] : memref<5x16x5xf32, #tpu.memory_space<vmem>>, vector<1x16x5xf32>
      %226 = vector.shape_cast %225 : vector<1x16x5xf32> to vector<16x5xf32>
      %227 = vector.extract_strided_slice %226 {offsets = [0, 3], sizes = [16, 1], strides = [1, 1]} : vector<16x5xf32> to vector<16x1xf32>
      %228 = vector.broadcast %227 : vector<16x1xf32> to vector<16x252xf32>
      %229 = vector.broadcast %224 : vector<1x252xf32> to vector<16x252xf32>
      %230 = arith.mulf %228, %229 : vector<16x252xf32>
      %231 = arith.addf %223, %230 : vector<16x252xf32>
      %232 = vector.extract_strided_slice %199 {offsets = [0, 4], sizes = [1, 252], strides = [1, 1]} : vector<1x256xf32> to vector<1x252xf32>
      %c4_94 = arith.constant 4 : index
      %c0_95 = arith.constant 0 : index
      %c0_96 = arith.constant 0 : index
      %233 = vector.load %arg2[%c4_94, %c0_95, %c0_96] : memref<5x16x5xf32, #tpu.memory_space<vmem>>, vector<1x16x5xf32>
      %234 = vector.shape_cast %233 : vector<1x16x5xf32> to vector<16x5xf32>
      %235 = vector.extract_strided_slice %234 {offsets = [0, 4], sizes = [16, 1], strides = [1, 1]} : vector<16x5xf32> to vector<16x1xf32>
      %236 = vector.broadcast %235 : vector<16x1xf32> to vector<16x252xf32>
      %237 = vector.broadcast %232 : vector<1x252xf32> to vector<16x252xf32>
      %238 = arith.mulf %236, %237 : vector<16x252xf32>
      %239 = arith.addf %231, %238 : vector<16x252xf32>
      %c0_97 = arith.constant 0 : index
      %c0_98 = arith.constant 0 : index
      %240 = vector.load %arg3[%c0_97, %c0_98] : memref<16x1xf32, #tpu.memory_space<vmem>>, vector<16x1xf32>
      %241 = vector.broadcast %240 : vector<16x1xf32> to vector<16x252xf32>
      %242 = arith.addf %239, %241 : vector<16x252xf32>
      %c0_99 = arith.constant 0 : index
      %243 = arith.index_cast %arg7 : i32 to index
      %c0_100 = arith.constant 0 : index
      %c0_101 = arith.constant 0 : index
      %244 = vector.load %arg4[%c0_99, %243, %c0_100, %c0_101] : memref<1x252x16x252xf32, #tpu.memory_space<vmem>>, vector<1x1x16x252xf32>
      %245 = vector.shape_cast %244 : vector<1x1x16x252xf32> to vector<16x252xf32>
      %246 = vector.shape_cast %242 : vector<16x252xf32> to vector<1x1x16x252xf32>
      tpu.vector_store %arg4[%c0_99, %243, %c0_100, %c0_101], %246 {strides = array<i32>} : memref<1x252x16x252xf32, #tpu.memory_space<vmem>>, vector<1x1x16x252xf32>,
      %247 = arith.addf %arg8, %242 : vector<16x252xf32>
      %248 = arith.mulf %242, %242 : vector<16x252xf32>
      %249 = arith.addf %arg9, %248 : vector<16x252xf32>
      scf.yield %247, %249 : vector<16x252xf32>, vector<16x252xf32>
    }
    %c252_i32_0 = arith.constant 252 : i32
    %3 = vector.shape_cast %2#0 : vector<16x252xf32> to vector<1x16x252xf32>
    %cst_1 = arith.constant dense<0.000000e+00> : vector<1xf32>
    %4 = vector.multi_reduction <add>, %3, %cst_1 [1, 2] : vector<1x16x252xf32> to vector<1xf32>
    %5 = vector.shape_cast %4 : vector<1xf32> to vector<1x1x1xf32>
    %6 = vector.extract %5[0, 0, 0] : f32 from vector<1x1x1xf32>
    %7 = vector.broadcast %6 : f32 to vector<1x1xf32>
    %c0 = arith.constant 0 : index
    %c0_2 = arith.constant 0 : index
    %c0_3 = arith.constant 0 : index
    %8 = vector.load %arg5[%c0, %c0_2, %c0_3] : memref<1x1x1xf32, #tpu.memory_space<vmem>>, vector<1x1x1xf32>
    %9 = vector.shape_cast %8 : vector<1x1x1xf32> to vector<1x1xf32>
    %10 = vector.shape_cast %7 : vector<1x1xf32> to vector<1x1x1xf32>
    tpu.vector_store %arg5[%c0, %c0_2, %c0_3], %10 {strides = array<i32>} : memref<1x1x1xf32, #tpu.memory_space<vmem>>, vector<1x1x1xf32>,
    %11 = vector.shape_cast %2#1 : vector<16x252xf32> to vector<1x16x252xf32>
    %cst_4 = arith.constant dense<0.000000e+00> : vector<1xf32>
    %12 = vector.multi_reduction <add>, %11, %cst_4 [1, 2] : vector<1x16x252xf32> to vector<1xf32>
    %13 = vector.shape_cast %12 : vector<1xf32> to vector<1x1x1xf32>
    %14 = vector.extract %13[0, 0, 0] : f32 from vector<1x1x1xf32>
    %15 = vector.broadcast %14 : f32 to vector<1x1xf32>
    %c0_5 = arith.constant 0 : index
    %c0_6 = arith.constant 0 : index
    %c0_7 = arith.constant 0 : index
    %16 = vector.load %arg6[%c0_5, %c0_6, %c0_7] : memref<1x1x1xf32, #tpu.memory_space<vmem>>, vector<1x1x1xf32>
    %17 = vector.shape_cast %16 : vector<1x1x1xf32> to vector<1x1xf32>
    %18 = vector.shape_cast %15 : vector<1x1xf32> to vector<1x1x1xf32>
    tpu.vector_store %arg6[%c0_5, %c0_6, %c0_7], %18 {strides = array<i32>} : memref<1x1x1xf32, #tpu.memory_space<vmem>>, vector<1x1x1xf32>,
    return
  }
  func.func @transform_0(%arg0: i32) -> (i32, i32, i32, i32) {
    %c0_i32 = arith.constant 0 : i32
    %c0_i32_0 = arith.constant 0 : i32
    %c0_i32_1 = arith.constant 0 : i32
    %c0_i32_2 = arith.constant 0 : i32
    return %arg0, %c0_i32, %c0_i32_0, %c0_i32_1 : i32, i32, i32, i32
  }
  func.func @transform_1(%arg0: i32) -> (i32, i32, i32) {
    %c0_i32 = arith.constant 0 : i32
    %c0_i32_0 = arith.constant 0 : i32
    %c0_i32_1 = arith.constant 0 : i32
    %c0_i32_2 = arith.constant 0 : i32
    return %c0_i32, %c0_i32_0, %c0_i32_1 : i32, i32, i32
  }
  func.func @transform_2(%arg0: i32) -> (i32, i32) {
    %c0_i32 = arith.constant 0 : i32
    %c0_i32_0 = arith.constant 0 : i32
    %c0_i32_1 = arith.constant 0 : i32
    return %c0_i32, %c0_i32_0 : i32, i32
  }
  func.func @transform_3(%arg0: i32) -> (i32, i32, i32, i32) {
    %c0_i32 = arith.constant 0 : i32
    %c0_i32_0 = arith.constant 0 : i32
    %c0_i32_1 = arith.constant 0 : i32
    %c0_i32_2 = arith.constant 0 : i32
    return %arg0, %c0_i32, %c0_i32_0, %c0_i32_1 : i32, i32, i32, i32
  }
  func.func @transform_4(%arg0: i32) -> (i32, i32, i32) {
    %c0_i32 = arith.constant 0 : i32
    %c0_i32_0 = arith.constant 0 : i32
    %c0_i32_1 = arith.constant 0 : i32
    return %arg0, %c0_i32, %c0_i32_0 : i32, i32, i32
  }
  func.func @transform_5(%arg0: i32) -> (i32, i32, i32) {
    %c0_i32 = arith.constant 0 : i32
    %c0_i32_0 = arith.constant 0 : i32
    %c0_i32_1 = arith.constant 0 : i32
    return %arg0, %c0_i32, %c0_i32_0 : i32, i32, i32
  }
}

module attributes {stable_mosaic.version = 11 : i64} {
  func.func @_gauss_pool_kernel(%arg0: i32, %arg1: memref<2xf32, #tpu.memory_space<smem>>, %arg2: memref<1x252x16x252xf32, #tpu.memory_space<vmem>>, %arg3: memref<252x126xf32, #tpu.memory_space<vmem>>, %arg4: memref<1x126x16x126xf32, #tpu.memory_space<vmem>>, %arg5: memref<252x16x126xf32, #tpu.memory_space<vmem>>) attributes {dimension_semantics = [#tpu.dimension_semantics<parallel>], iteration_bounds = array<i64: 2>, scalar_prefetch = 0 : i64, scratch_operands = 1 : i64, tpu.core_type = #tpu.core_type<tc>, window_params = [{transform_indices = @transform_0, window_bounds = array<i64: 2>}, {transform_indices = @transform_1, window_bounds = array<i64: 1, 252, 16, 252>}, {pipeline_mode = #tpu.pipeline_mode<synchronous>, transform_indices = @transform_2, window_bounds = array<i64: 252, 126>}, {transform_indices = @transform_3, window_bounds = array<i64: 1, 126, 16, 126>}]} {
    %c0 = arith.constant 0 : index
    %0 = memref.load %arg1[%c0] : memref<2xf32, #tpu.memory_space<smem>>
    %c1 = arith.constant 1 : index
    %1 = memref.load %arg1[%c1] : memref<2xf32, #tpu.memory_space<smem>>
    %c0_i32 = arith.constant 0 : i32
    %c252_i32 = arith.constant 252 : i32
    %2 = arith.addi %c0_i32, %c252_i32 : i32
    %c1_i32 = arith.constant 1 : i32
    scf.for %arg6 = %c0_i32 to %2 step %c1_i32  : i32 {
      %c0_4 = arith.constant 0 : index
      %4 = arith.index_cast %arg6 : i32 to index
      %c0_5 = arith.constant 0 : index
      %c0_6 = arith.constant 0 : index
      %5 = vector.load %arg2[%c0_4, %4, %c0_5, %c0_6] : memref<1x252x16x252xf32, #tpu.memory_space<vmem>>, vector<1x1x16x252xf32>
      %6 = vector.shape_cast %5 : vector<1x1x16x252xf32> to vector<16x252xf32>
      %7 = vector.broadcast %0 : f32 to vector<16x252xf32>
      %8 = arith.subf %6, %7 : vector<16x252xf32>
      %9 = arith.mulf %8, %8 : vector<16x252xf32>
      %cst = arith.constant 0.000000e+00 : f32
      %10 = vector.broadcast %cst : f32 to vector<16x252xf32>
      %11 = arith.subf %10, %9 : vector<16x252xf32>
      %12 = vector.broadcast %1 : f32 to vector<16x252xf32>
      %13 = arith.mulf %11, %12 : vector<16x252xf32>
      %14 = math.exp %13 : vector<16x252xf32>
      %c0_7 = arith.constant 0 : index
      %c0_8 = arith.constant 0 : index
      %15 = vector.load %arg3[%c0_7, %c0_8] : memref<252x126xf32, #tpu.memory_space<vmem>>, vector<252x126xf32>
      %cst_9 = arith.constant dense<0.000000e+00> : vector<16x126xf32>
      %16 = tpu.matmul %14, %15, %cst_9 {dimension_numbers = #tpu.dot_dimension_numbers<[1], [0], [0], [1], [0, 0, 1, 1], [], []>} : vector<16x252xf32>, vector<252x126xf32>, vector<16x126xf32> -> vector<16x126xf32>
      %17 = arith.index_cast %arg6 : i32 to index
      %c0_10 = arith.constant 0 : index
      %c0_11 = arith.constant 0 : index
      %18 = vector.load %arg5[%17, %c0_10, %c0_11] : memref<252x16x126xf32, #tpu.memory_space<vmem>>, vector<1x16x126xf32>
      %19 = vector.shape_cast %18 : vector<1x16x126xf32> to vector<16x126xf32>
      %20 = vector.shape_cast %16 : vector<16x126xf32> to vector<1x16x126xf32>
      tpu.vector_store %arg5[%17, %c0_10, %c0_11], %20 {strides = array<i32>} : memref<252x16x126xf32, #tpu.memory_space<vmem>>, vector<1x16x126xf32>,
    }
    %c252_i32_0 = arith.constant 252 : i32
    %c0_i32_1 = arith.constant 0 : i32
    %c126_i32 = arith.constant 126 : i32
    %3 = arith.addi %c0_i32_1, %c126_i32 : i32
    %c1_i32_2 = arith.constant 1 : i32
    scf.for %arg6 = %c0_i32_1 to %3 step %c1_i32_2  : i32 {
      %cst = arith.constant 0.000000e+00 : f32
      %4 = vector.broadcast %cst : f32 to vector<16x126xf32>
      %c2_i32 = arith.constant 2 : i32
      %5 = arith.muli %c2_i32, %arg6 : i32
      %c1_i32_4 = arith.constant 1 : i32
      %6 = arith.subi %5, %c1_i32_4 : i32
      %c0_i32_5 = arith.constant 0 : i32
      %7 = arith.addi %6, %c0_i32_5 : i32
      %c0_i32_6 = arith.constant 0 : i32
      %c251_i32 = arith.constant 251 : i32
      %8 = arith.maxsi %c0_i32_6, %7 : i32
      %9 = arith.minsi %c251_i32, %8 : i32
      %c0_i32_7 = arith.constant 0 : i32
      %10 = arith.cmpi sge, %7, %c0_i32_7 : i32
      %c252_i32_8 = arith.constant 252 : i32
      %11 = arith.cmpi slt, %7, %c252_i32_8 : i32
      %12 = arith.andi %10, %11 : i1
      %13 = arith.extui %12 : i1 to i32
      %14 = arith.sitofp %13 : i32 to f32
      %15 = arith.index_cast %9 : i32 to index
      %c0_9 = arith.constant 0 : index
      %c0_10 = arith.constant 0 : index
      %16 = vector.load %arg5[%15, %c0_9, %c0_10] : memref<252x16x126xf32, #tpu.memory_space<vmem>>, vector<1x16x126xf32>
      %17 = vector.shape_cast %16 : vector<1x16x126xf32> to vector<16x126xf32>
      %18 = vector.broadcast %14 : f32 to vector<16x126xf32>
      %19 = arith.mulf %17, %18 : vector<16x126xf32>
      %20 = arith.addf %4, %19 : vector<16x126xf32>
      %c2_i32_11 = arith.constant 2 : i32
      %21 = arith.muli %c2_i32_11, %arg6 : i32
      %c1_i32_12 = arith.constant 1 : i32
      %22 = arith.subi %21, %c1_i32_12 : i32
      %c1_i32_13 = arith.constant 1 : i32
      %23 = arith.addi %22, %c1_i32_13 : i32
      %c0_i32_14 = arith.constant 0 : i32
      %c251_i32_15 = arith.constant 251 : i32
      %24 = arith.maxsi %c0_i32_14, %23 : i32
      %25 = arith.minsi %c251_i32_15, %24 : i32
      %c0_i32_16 = arith.constant 0 : i32
      %26 = arith.cmpi sge, %23, %c0_i32_16 : i32
      %c252_i32_17 = arith.constant 252 : i32
      %27 = arith.cmpi slt, %23, %c252_i32_17 : i32
      %28 = arith.andi %26, %27 : i1
      %29 = arith.extui %28 : i1 to i32
      %30 = arith.sitofp %29 : i32 to f32
      %31 = arith.index_cast %25 : i32 to index
      %c0_18 = arith.constant 0 : index
      %c0_19 = arith.constant 0 : index
      %32 = vector.load %arg5[%31, %c0_18, %c0_19] : memref<252x16x126xf32, #tpu.memory_space<vmem>>, vector<1x16x126xf32>
      %33 = vector.shape_cast %32 : vector<1x16x126xf32> to vector<16x126xf32>
      %34 = vector.broadcast %30 : f32 to vector<16x126xf32>
      %35 = arith.mulf %33, %34 : vector<16x126xf32>
      %36 = arith.addf %20, %35 : vector<16x126xf32>
      %c2_i32_20 = arith.constant 2 : i32
      %37 = arith.muli %c2_i32_20, %arg6 : i32
      %c1_i32_21 = arith.constant 1 : i32
      %38 = arith.subi %37, %c1_i32_21 : i32
      %c2_i32_22 = arith.constant 2 : i32
      %39 = arith.addi %38, %c2_i32_22 : i32
      %c0_i32_23 = arith.constant 0 : i32
      %c251_i32_24 = arith.constant 251 : i32
      %40 = arith.maxsi %c0_i32_23, %39 : i32
      %41 = arith.minsi %c251_i32_24, %40 : i32
      %c0_i32_25 = arith.constant 0 : i32
      %42 = arith.cmpi sge, %39, %c0_i32_25 : i32
      %c252_i32_26 = arith.constant 252 : i32
      %43 = arith.cmpi slt, %39, %c252_i32_26 : i32
      %44 = arith.andi %42, %43 : i1
      %45 = arith.extui %44 : i1 to i32
      %46 = arith.sitofp %45 : i32 to f32
      %47 = arith.index_cast %41 : i32 to index
      %c0_27 = arith.constant 0 : index
      %c0_28 = arith.constant 0 : index
      %48 = vector.load %arg5[%47, %c0_27, %c0_28] : memref<252x16x126xf32, #tpu.memory_space<vmem>>, vector<1x16x126xf32>
      %49 = vector.shape_cast %48 : vector<1x16x126xf32> to vector<16x126xf32>
      %50 = vector.broadcast %46 : f32 to vector<16x126xf32>
      %51 = arith.mulf %49, %50 : vector<16x126xf32>
      %52 = arith.addf %36, %51 : vector<16x126xf32>
      %cst_29 = arith.constant 0.111111112 : f32
      %53 = vector.broadcast %cst_29 : f32 to vector<16x126xf32>
      %54 = arith.mulf %52, %53 : vector<16x126xf32>
      %c0_30 = arith.constant 0 : index
      %55 = arith.index_cast %arg6 : i32 to index
      %c0_31 = arith.constant 0 : index
      %c0_32 = arith.constant 0 : index
      %56 = vector.load %arg4[%c0_30, %55, %c0_31, %c0_32] : memref<1x126x16x126xf32, #tpu.memory_space<vmem>>, vector<1x1x16x126xf32>
      %57 = vector.shape_cast %56 : vector<1x1x16x126xf32> to vector<16x126xf32>
      %58 = vector.shape_cast %54 : vector<16x126xf32> to vector<1x1x16x126xf32>
      tpu.vector_store %arg4[%c0_30, %55, %c0_31, %c0_32], %58 {strides = array<i32>} : memref<1x126x16x126xf32, #tpu.memory_space<vmem>>, vector<1x1x16x126xf32>,
    }
    %c126_i32_3 = arith.constant 126 : i32
    return
  }
  func.func @transform_0(%arg0: i32) -> i32 {
    %c0_i32 = arith.constant 0 : i32
    %c0_i32_0 = arith.constant 0 : i32
    return %c0_i32 : i32
  }
  func.func @transform_1(%arg0: i32) -> (i32, i32, i32, i32) {
    %c0_i32 = arith.constant 0 : i32
    %c0_i32_0 = arith.constant 0 : i32
    %c0_i32_1 = arith.constant 0 : i32
    %c0_i32_2 = arith.constant 0 : i32
    return %arg0, %c0_i32, %c0_i32_0, %c0_i32_1 : i32, i32, i32, i32
  }
  func.func @transform_2(%arg0: i32) -> (i32, i32) {
    %c0_i32 = arith.constant 0 : i32
    %c0_i32_0 = arith.constant 0 : i32
    %c0_i32_1 = arith.constant 0 : i32
    return %c0_i32, %c0_i32_0 : i32, i32
  }
  func.func @transform_3(%arg0: i32) -> (i32, i32, i32, i32) {
    %c0_i32 = arith.constant 0 : i32
    %c0_i32_0 = arith.constant 0 : i32
    %c0_i32_1 = arith.constant 0 : i32
    %c0_i32_2 = arith.constant 0 : i32
    return %arg0, %c0_i32, %c0_i32_0, %c0_i32_1 : i32, i32, i32, i32
  }
}

module attributes {stable_mosaic.version = 11 : i64} {
  func.func @_conv_kernel(%arg0: i32, %arg1: memref<1x126x16x126xf32, #tpu.memory_space<vmem>>, %arg2: memref<3x16x48xf32, #tpu.memory_space<vmem>>, %arg3: memref<16x1xf32, #tpu.memory_space<vmem>>, %arg4: memref<1x124x16x124xf32, #tpu.memory_space<vmem>>, %arg5: memref<1x1x1xf32, #tpu.memory_space<vmem>>, %arg6: memref<1x1x1xf32, #tpu.memory_space<vmem>>) attributes {dimension_semantics = [#tpu.dimension_semantics<parallel>], iteration_bounds = array<i64: 2>, scalar_prefetch = 0 : i64, scratch_operands = 0 : i64, tpu.core_type = #tpu.core_type<tc>, window_params = [{transform_indices = @transform_0, window_bounds = array<i64: 1, 126, 16, 126>}, {pipeline_mode = #tpu.pipeline_mode<synchronous>, transform_indices = @transform_1, window_bounds = array<i64: 3, 16, 48>}, {pipeline_mode = #tpu.pipeline_mode<synchronous>, transform_indices = @transform_2, window_bounds = array<i64: 16, 1>}, {transform_indices = @transform_3, window_bounds = array<i64: 1, 124, 16, 124>}, {transform_indices = @transform_4, window_bounds = array<i64: 1, 1, 1>}, {transform_indices = @transform_5, window_bounds = array<i64: 1, 1, 1>}]} {
    %cst = arith.constant 0.000000e+00 : f32
    %0 = vector.broadcast %cst : f32 to vector<16x124xf32>
    %c0_i32 = arith.constant 0 : i32
    %c124_i32 = arith.constant 124 : i32
    %1 = arith.addi %c0_i32, %c124_i32 : i32
    %c1_i32 = arith.constant 1 : i32
    %2:2 = scf.for %arg7 = %c0_i32 to %1 step %c1_i32 iter_args(%arg8 = %0, %arg9 = %0) -> (vector<16x124xf32>, vector<16x124xf32>)  : i32 {
      %cst_8 = arith.constant 0.000000e+00 : f32
      %19 = vector.broadcast %cst_8 : f32 to vector<16x124xf32>
      %c0_i32_9 = arith.constant 0 : i32
      %20 = arith.addi %arg7, %c0_i32_9 : i32
      %c0_10 = arith.constant 0 : index
      %21 = arith.index_cast %20 : i32 to index
      %c0_11 = arith.constant 0 : index
      %c0_12 = arith.constant 0 : index
      %22 = vector.load %arg1[%c0_10, %21, %c0_11, %c0_12] : memref<1x126x16x126xf32, #tpu.memory_space<vmem>>, vector<1x1x16x126xf32>
      %23 = vector.shape_cast %22 : vector<1x1x16x126xf32> to vector<16x126xf32>
      %24 = vector.extract_strided_slice %23 {offsets = [0, 0], sizes = [16, 124], strides = [1, 1]} : vector<16x126xf32> to vector<16x124xf32>
      %25 = vector.extract_strided_slice %23 {offsets = [0, 1], sizes = [16, 124], strides = [1, 1]} : vector<16x126xf32> to vector<16x124xf32>
      %26 = vector.extract_strided_slice %23 {offsets = [0, 2], sizes = [16, 124], strides = [1, 1]} : vector<16x126xf32> to vector<16x124xf32>
      %27 = tpu.concatenate %24, %25, %26 in 0 : vector<16x124xf32>, vector<16x124xf32>, vector<16x124xf32> -> vector<48x124xf32>
      %c0_13 = arith.constant 0 : index
      %c0_14 = arith.constant 0 : index
      %c0_15 = arith.constant 0 : index
      %28 = vector.load %arg2[%c0_13, %c0_14, %c0_15] : memref<3x16x48xf32, #tpu.memory_space<vmem>>, vector<1x16x48xf32>
      %29 = vector.shape_cast %28 : vector<1x16x48xf32> to vector<16x48xf32>
      %cst_16 = arith.constant dense<0.000000e+00> : vector<16x124xf32>
      %30 = tpu.matmul %29, %27, %cst_16 {dimension_numbers = #tpu.dot_dimension_numbers<[1], [0], [0], [1], [0, 0, 1, 1], [], []>} : vector<16x48xf32>, vector<48x124xf32>, vector<16x124xf32> -> vector<16x124xf32>
      %31 = arith.addf %19, %30 : vector<16x124xf32>
      %c1_i32_17 = arith.constant 1 : i32
      %32 = arith.addi %arg7, %c1_i32_17 : i32
      %c0_18 = arith.constant 0 : index
      %33 = arith.index_cast %32 : i32 to index
      %c0_19 = arith.constant 0 : index
      %c0_20 = arith.constant 0 : index
      %34 = vector.load %arg1[%c0_18, %33, %c0_19, %c0_20] : memref<1x126x16x126xf32, #tpu.memory_space<vmem>>, vector<1x1x16x126xf32>
      %35 = vector.shape_cast %34 : vector<1x1x16x126xf32> to vector<16x126xf32>
      %36 = vector.extract_strided_slice %35 {offsets = [0, 0], sizes = [16, 124], strides = [1, 1]} : vector<16x126xf32> to vector<16x124xf32>
      %37 = vector.extract_strided_slice %35 {offsets = [0, 1], sizes = [16, 124], strides = [1, 1]} : vector<16x126xf32> to vector<16x124xf32>
      %38 = vector.extract_strided_slice %35 {offsets = [0, 2], sizes = [16, 124], strides = [1, 1]} : vector<16x126xf32> to vector<16x124xf32>
      %39 = tpu.concatenate %36, %37, %38 in 0 : vector<16x124xf32>, vector<16x124xf32>, vector<16x124xf32> -> vector<48x124xf32>
      %c1 = arith.constant 1 : index
      %c0_21 = arith.constant 0 : index
      %c0_22 = arith.constant 0 : index
      %40 = vector.load %arg2[%c1, %c0_21, %c0_22] : memref<3x16x48xf32, #tpu.memory_space<vmem>>, vector<1x16x48xf32>
      %41 = vector.shape_cast %40 : vector<1x16x48xf32> to vector<16x48xf32>
      %cst_23 = arith.constant dense<0.000000e+00> : vector<16x124xf32>
      %42 = tpu.matmul %41, %39, %cst_23 {dimension_numbers = #tpu.dot_dimension_numbers<[1], [0], [0], [1], [0, 0, 1, 1], [], []>} : vector<16x48xf32>, vector<48x124xf32>, vector<16x124xf32> -> vector<16x124xf32>
      %43 = arith.addf %31, %42 : vector<16x124xf32>
      %c2_i32 = arith.constant 2 : i32
      %44 = arith.addi %arg7, %c2_i32 : i32
      %c0_24 = arith.constant 0 : index
      %45 = arith.index_cast %44 : i32 to index
      %c0_25 = arith.constant 0 : index
      %c0_26 = arith.constant 0 : index
      %46 = vector.load %arg1[%c0_24, %45, %c0_25, %c0_26] : memref<1x126x16x126xf32, #tpu.memory_space<vmem>>, vector<1x1x16x126xf32>
      %47 = vector.shape_cast %46 : vector<1x1x16x126xf32> to vector<16x126xf32>
      %48 = vector.extract_strided_slice %47 {offsets = [0, 0], sizes = [16, 124], strides = [1, 1]} : vector<16x126xf32> to vector<16x124xf32>
      %49 = vector.extract_strided_slice %47 {offsets = [0, 1], sizes = [16, 124], strides = [1, 1]} : vector<16x126xf32> to vector<16x124xf32>
      %50 = vector.extract_strided_slice %47 {offsets = [0, 2], sizes = [16, 124], strides = [1, 1]} : vector<16x126xf32> to vector<16x124xf32>
      %51 = tpu.concatenate %48, %49, %50 in 0 : vector<16x124xf32>, vector<16x124xf32>, vector<16x124xf32> -> vector<48x124xf32>
      %c2 = arith.constant 2 : index
      %c0_27 = arith.constant 0 : index
      %c0_28 = arith.constant 0 : index
      %52 = vector.load %arg2[%c2, %c0_27, %c0_28] : memref<3x16x48xf32, #tpu.memory_space<vmem>>, vector<1x16x48xf32>
      %53 = vector.shape_cast %52 : vector<1x16x48xf32> to vector<16x48xf32>
      %cst_29 = arith.constant dense<0.000000e+00> : vector<16x124xf32>
      %54 = tpu.matmul %53, %51, %cst_29 {dimension_numbers = #tpu.dot_dimension_numbers<[1], [0], [0], [1], [0, 0, 1, 1], [], []>} : vector<16x48xf32>, vector<48x124xf32>, vector<16x124xf32> -> vector<16x124xf32>
      %55 = arith.addf %43, %54 : vector<16x124xf32>
      %c0_30 = arith.constant 0 : index
      %c0_31 = arith.constant 0 : index
      %56 = vector.load %arg3[%c0_30, %c0_31] : memref<16x1xf32, #tpu.memory_space<vmem>>, vector<16x1xf32>
      %57 = vector.broadcast %56 : vector<16x1xf32> to vector<16x124xf32>
      %58 = arith.addf %55, %57 : vector<16x124xf32>
      %c0_32 = arith.constant 0 : index
      %59 = arith.index_cast %arg7 : i32 to index
      %c0_33 = arith.constant 0 : index
      %c0_34 = arith.constant 0 : index
      %60 = vector.load %arg4[%c0_32, %59, %c0_33, %c0_34] : memref<1x124x16x124xf32, #tpu.memory_space<vmem>>, vector<1x1x16x124xf32>
      %61 = vector.shape_cast %60 : vector<1x1x16x124xf32> to vector<16x124xf32>
      %62 = vector.shape_cast %58 : vector<16x124xf32> to vector<1x1x16x124xf32>
      tpu.vector_store %arg4[%c0_32, %59, %c0_33, %c0_34], %62 {strides = array<i32>} : memref<1x124x16x124xf32, #tpu.memory_space<vmem>>, vector<1x1x16x124xf32>,
      %63 = arith.addf %arg8, %58 : vector<16x124xf32>
      %64 = arith.mulf %58, %58 : vector<16x124xf32>
      %65 = arith.addf %arg9, %64 : vector<16x124xf32>
      scf.yield %63, %65 : vector<16x124xf32>, vector<16x124xf32>
    }
    %c124_i32_0 = arith.constant 124 : i32
    %3 = vector.shape_cast %2#0 : vector<16x124xf32> to vector<1x16x124xf32>
    %cst_1 = arith.constant dense<0.000000e+00> : vector<1xf32>
    %4 = vector.multi_reduction <add>, %3, %cst_1 [1, 2] : vector<1x16x124xf32> to vector<1xf32>
    %5 = vector.shape_cast %4 : vector<1xf32> to vector<1x1x1xf32>
    %6 = vector.extract %5[0, 0, 0] : f32 from vector<1x1x1xf32>
    %7 = vector.broadcast %6 : f32 to vector<1x1xf32>
    %c0 = arith.constant 0 : index
    %c0_2 = arith.constant 0 : index
    %c0_3 = arith.constant 0 : index
    %8 = vector.load %arg5[%c0, %c0_2, %c0_3] : memref<1x1x1xf32, #tpu.memory_space<vmem>>, vector<1x1x1xf32>
    %9 = vector.shape_cast %8 : vector<1x1x1xf32> to vector<1x1xf32>
    %10 = vector.shape_cast %7 : vector<1x1xf32> to vector<1x1x1xf32>
    tpu.vector_store %arg5[%c0, %c0_2, %c0_3], %10 {strides = array<i32>} : memref<1x1x1xf32, #tpu.memory_space<vmem>>, vector<1x1x1xf32>,
    %11 = vector.shape_cast %2#1 : vector<16x124xf32> to vector<1x16x124xf32>
    %cst_4 = arith.constant dense<0.000000e+00> : vector<1xf32>
    %12 = vector.multi_reduction <add>, %11, %cst_4 [1, 2] : vector<1x16x124xf32> to vector<1xf32>
    %13 = vector.shape_cast %12 : vector<1xf32> to vector<1x1x1xf32>
    %14 = vector.extract %13[0, 0, 0] : f32 from vector<1x1x1xf32>
    %15 = vector.broadcast %14 : f32 to vector<1x1xf32>
    %c0_5 = arith.constant 0 : index
    %c0_6 = arith.constant 0 : index
    %c0_7 = arith.constant 0 : index
    %16 = vector.load %arg6[%c0_5, %c0_6, %c0_7] : memref<1x1x1xf32, #tpu.memory_space<vmem>>, vector<1x1x1xf32>
    %17 = vector.shape_cast %16 : vector<1x1x1xf32> to vector<1x1xf32>
    %18 = vector.shape_cast %15 : vector<1x1xf32> to vector<1x1x1xf32>
    tpu.vector_store %arg6[%c0_5, %c0_6, %c0_7], %18 {strides = array<i32>} : memref<1x1x1xf32, #tpu.memory_space<vmem>>, vector<1x1x1xf32>,
    return
  }
  func.func @transform_0(%arg0: i32) -> (i32, i32, i32, i32) {
    %c0_i32 = arith.constant 0 : i32
    %c0_i32_0 = arith.constant 0 : i32
    %c0_i32_1 = arith.constant 0 : i32
    %c0_i32_2 = arith.constant 0 : i32
    return %arg0, %c0_i32, %c0_i32_0, %c0_i32_1 : i32, i32, i32, i32
  }
  func.func @transform_1(%arg0: i32) -> (i32, i32, i32) {
    %c0_i32 = arith.constant 0 : i32
    %c0_i32_0 = arith.constant 0 : i32
    %c0_i32_1 = arith.constant 0 : i32
    %c0_i32_2 = arith.constant 0 : i32
    return %c0_i32, %c0_i32_0, %c0_i32_1 : i32, i32, i32
  }
  func.func @transform_2(%arg0: i32) -> (i32, i32) {
    %c0_i32 = arith.constant 0 : i32
    %c0_i32_0 = arith.constant 0 : i32
    %c0_i32_1 = arith.constant 0 : i32
    return %c0_i32, %c0_i32_0 : i32, i32
  }
  func.func @transform_3(%arg0: i32) -> (i32, i32, i32, i32) {
    %c0_i32 = arith.constant 0 : i32
    %c0_i32_0 = arith.constant 0 : i32
    %c0_i32_1 = arith.constant 0 : i32
    %c0_i32_2 = arith.constant 0 : i32
    return %arg0, %c0_i32, %c0_i32_0, %c0_i32_1 : i32, i32, i32, i32
  }
  func.func @transform_4(%arg0: i32) -> (i32, i32, i32) {
    %c0_i32 = arith.constant 0 : i32
    %c0_i32_0 = arith.constant 0 : i32
    %c0_i32_1 = arith.constant 0 : i32
    return %arg0, %c0_i32, %c0_i32_0 : i32, i32, i32
  }
  func.func @transform_5(%arg0: i32) -> (i32, i32, i32) {
    %c0_i32 = arith.constant 0 : i32
    %c0_i32_0 = arith.constant 0 : i32
    %c0_i32_1 = arith.constant 0 : i32
    return %arg0, %c0_i32, %c0_i32_0 : i32, i32, i32
  }
}

module attributes {stable_mosaic.version = 11 : i64} {
  func.func @_gauss_pool_kernel(%arg0: i32, %arg1: memref<2xf32, #tpu.memory_space<smem>>, %arg2: memref<1x124x16x124xf32, #tpu.memory_space<vmem>>, %arg3: memref<124x62xf32, #tpu.memory_space<vmem>>, %arg4: memref<1x62x16x62xf32, #tpu.memory_space<vmem>>, %arg5: memref<124x16x62xf32, #tpu.memory_space<vmem>>) attributes {dimension_semantics = [#tpu.dimension_semantics<parallel>], iteration_bounds = array<i64: 2>, scalar_prefetch = 0 : i64, scratch_operands = 1 : i64, tpu.core_type = #tpu.core_type<tc>, window_params = [{transform_indices = @transform_0, window_bounds = array<i64: 2>}, {transform_indices = @transform_1, window_bounds = array<i64: 1, 124, 16, 124>}, {pipeline_mode = #tpu.pipeline_mode<synchronous>, transform_indices = @transform_2, window_bounds = array<i64: 124, 62>}, {transform_indices = @transform_3, window_bounds = array<i64: 1, 62, 16, 62>}]} {
    %c0 = arith.constant 0 : index
    %0 = memref.load %arg1[%c0] : memref<2xf32, #tpu.memory_space<smem>>
    %c1 = arith.constant 1 : index
    %1 = memref.load %arg1[%c1] : memref<2xf32, #tpu.memory_space<smem>>
    %c0_i32 = arith.constant 0 : i32
    %c124_i32 = arith.constant 124 : i32
    %2 = arith.addi %c0_i32, %c124_i32 : i32
    %c1_i32 = arith.constant 1 : i32
    scf.for %arg6 = %c0_i32 to %2 step %c1_i32  : i32 {
      %c0_4 = arith.constant 0 : index
      %4 = arith.index_cast %arg6 : i32 to index
      %c0_5 = arith.constant 0 : index
      %c0_6 = arith.constant 0 : index
      %5 = vector.load %arg2[%c0_4, %4, %c0_5, %c0_6] : memref<1x124x16x124xf32, #tpu.memory_space<vmem>>, vector<1x1x16x124xf32>
      %6 = vector.shape_cast %5 : vector<1x1x16x124xf32> to vector<16x124xf32>
      %7 = vector.broadcast %0 : f32 to vector<16x124xf32>
      %8 = arith.subf %6, %7 : vector<16x124xf32>
      %9 = arith.mulf %8, %8 : vector<16x124xf32>
      %cst = arith.constant 0.000000e+00 : f32
      %10 = vector.broadcast %cst : f32 to vector<16x124xf32>
      %11 = arith.subf %10, %9 : vector<16x124xf32>
      %12 = vector.broadcast %1 : f32 to vector<16x124xf32>
      %13 = arith.mulf %11, %12 : vector<16x124xf32>
      %14 = math.exp %13 : vector<16x124xf32>
      %c0_7 = arith.constant 0 : index
      %c0_8 = arith.constant 0 : index
      %15 = vector.load %arg3[%c0_7, %c0_8] : memref<124x62xf32, #tpu.memory_space<vmem>>, vector<124x62xf32>
      %cst_9 = arith.constant dense<0.000000e+00> : vector<16x62xf32>
      %16 = tpu.matmul %14, %15, %cst_9 {dimension_numbers = #tpu.dot_dimension_numbers<[1], [0], [0], [1], [0, 0, 1, 1], [], []>} : vector<16x124xf32>, vector<124x62xf32>, vector<16x62xf32> -> vector<16x62xf32>
      %17 = arith.index_cast %arg6 : i32 to index
      %c0_10 = arith.constant 0 : index
      %c0_11 = arith.constant 0 : index
      %18 = vector.load %arg5[%17, %c0_10, %c0_11] : memref<124x16x62xf32, #tpu.memory_space<vmem>>, vector<1x16x62xf32>
      %19 = vector.shape_cast %18 : vector<1x16x62xf32> to vector<16x62xf32>
      %20 = vector.shape_cast %16 : vector<16x62xf32> to vector<1x16x62xf32>
      tpu.vector_store %arg5[%17, %c0_10, %c0_11], %20 {strides = array<i32>} : memref<124x16x62xf32, #tpu.memory_space<vmem>>, vector<1x16x62xf32>,
    }
    %c124_i32_0 = arith.constant 124 : i32
    %c0_i32_1 = arith.constant 0 : i32
    %c62_i32 = arith.constant 62 : i32
    %3 = arith.addi %c0_i32_1, %c62_i32 : i32
    %c1_i32_2 = arith.constant 1 : i32
    scf.for %arg6 = %c0_i32_1 to %3 step %c1_i32_2  : i32 {
      %cst = arith.constant 0.000000e+00 : f32
      %4 = vector.broadcast %cst : f32 to vector<16x62xf32>
      %c2_i32 = arith.constant 2 : i32
      %5 = arith.muli %c2_i32, %arg6 : i32
      %c1_i32_4 = arith.constant 1 : i32
      %6 = arith.subi %5, %c1_i32_4 : i32
      %c0_i32_5 = arith.constant 0 : i32
      %7 = arith.addi %6, %c0_i32_5 : i32
      %c0_i32_6 = arith.constant 0 : i32
      %c123_i32 = arith.constant 123 : i32
      %8 = arith.maxsi %c0_i32_6, %7 : i32
      %9 = arith.minsi %c123_i32, %8 : i32
      %c0_i32_7 = arith.constant 0 : i32
      %10 = arith.cmpi sge, %7, %c0_i32_7 : i32
      %c124_i32_8 = arith.constant 124 : i32
      %11 = arith.cmpi slt, %7, %c124_i32_8 : i32
      %12 = arith.andi %10, %11 : i1
      %13 = arith.extui %12 : i1 to i32
      %14 = arith.sitofp %13 : i32 to f32
      %15 = arith.index_cast %9 : i32 to index
      %c0_9 = arith.constant 0 : index
      %c0_10 = arith.constant 0 : index
      %16 = vector.load %arg5[%15, %c0_9, %c0_10] : memref<124x16x62xf32, #tpu.memory_space<vmem>>, vector<1x16x62xf32>
      %17 = vector.shape_cast %16 : vector<1x16x62xf32> to vector<16x62xf32>
      %18 = vector.broadcast %14 : f32 to vector<16x62xf32>
      %19 = arith.mulf %17, %18 : vector<16x62xf32>
      %20 = arith.addf %4, %19 : vector<16x62xf32>
      %c2_i32_11 = arith.constant 2 : i32
      %21 = arith.muli %c2_i32_11, %arg6 : i32
      %c1_i32_12 = arith.constant 1 : i32
      %22 = arith.subi %21, %c1_i32_12 : i32
      %c1_i32_13 = arith.constant 1 : i32
      %23 = arith.addi %22, %c1_i32_13 : i32
      %c0_i32_14 = arith.constant 0 : i32
      %c123_i32_15 = arith.constant 123 : i32
      %24 = arith.maxsi %c0_i32_14, %23 : i32
      %25 = arith.minsi %c123_i32_15, %24 : i32
      %c0_i32_16 = arith.constant 0 : i32
      %26 = arith.cmpi sge, %23, %c0_i32_16 : i32
      %c124_i32_17 = arith.constant 124 : i32
      %27 = arith.cmpi slt, %23, %c124_i32_17 : i32
      %28 = arith.andi %26, %27 : i1
      %29 = arith.extui %28 : i1 to i32
      %30 = arith.sitofp %29 : i32 to f32
      %31 = arith.index_cast %25 : i32 to index
      %c0_18 = arith.constant 0 : index
      %c0_19 = arith.constant 0 : index
      %32 = vector.load %arg5[%31, %c0_18, %c0_19] : memref<124x16x62xf32, #tpu.memory_space<vmem>>, vector<1x16x62xf32>
      %33 = vector.shape_cast %32 : vector<1x16x62xf32> to vector<16x62xf32>
      %34 = vector.broadcast %30 : f32 to vector<16x62xf32>
      %35 = arith.mulf %33, %34 : vector<16x62xf32>
      %36 = arith.addf %20, %35 : vector<16x62xf32>
      %c2_i32_20 = arith.constant 2 : i32
      %37 = arith.muli %c2_i32_20, %arg6 : i32
      %c1_i32_21 = arith.constant 1 : i32
      %38 = arith.subi %37, %c1_i32_21 : i32
      %c2_i32_22 = arith.constant 2 : i32
      %39 = arith.addi %38, %c2_i32_22 : i32
      %c0_i32_23 = arith.constant 0 : i32
      %c123_i32_24 = arith.constant 123 : i32
      %40 = arith.maxsi %c0_i32_23, %39 : i32
      %41 = arith.minsi %c123_i32_24, %40 : i32
      %c0_i32_25 = arith.constant 0 : i32
      %42 = arith.cmpi sge, %39, %c0_i32_25 : i32
      %c124_i32_26 = arith.constant 124 : i32
      %43 = arith.cmpi slt, %39, %c124_i32_26 : i32
      %44 = arith.andi %42, %43 : i1
      %45 = arith.extui %44 : i1 to i32
      %46 = arith.sitofp %45 : i32 to f32
      %47 = arith.index_cast %41 : i32 to index
      %c0_27 = arith.constant 0 : index
      %c0_28 = arith.constant 0 : index
      %48 = vector.load %arg5[%47, %c0_27, %c0_28] : memref<124x16x62xf32, #tpu.memory_space<vmem>>, vector<1x16x62xf32>
      %49 = vector.shape_cast %48 : vector<1x16x62xf32> to vector<16x62xf32>
      %50 = vector.broadcast %46 : f32 to vector<16x62xf32>
      %51 = arith.mulf %49, %50 : vector<16x62xf32>
      %52 = arith.addf %36, %51 : vector<16x62xf32>
      %cst_29 = arith.constant 0.111111112 : f32
      %53 = vector.broadcast %cst_29 : f32 to vector<16x62xf32>
      %54 = arith.mulf %52, %53 : vector<16x62xf32>
      %c0_30 = arith.constant 0 : index
      %55 = arith.index_cast %arg6 : i32 to index
      %c0_31 = arith.constant 0 : index
      %c0_32 = arith.constant 0 : index
      %56 = vector.load %arg4[%c0_30, %55, %c0_31, %c0_32] : memref<1x62x16x62xf32, #tpu.memory_space<vmem>>, vector<1x1x16x62xf32>
      %57 = vector.shape_cast %56 : vector<1x1x16x62xf32> to vector<16x62xf32>
      %58 = vector.shape_cast %54 : vector<16x62xf32> to vector<1x1x16x62xf32>
      tpu.vector_store %arg4[%c0_30, %55, %c0_31, %c0_32], %58 {strides = array<i32>} : memref<1x62x16x62xf32, #tpu.memory_space<vmem>>, vector<1x1x16x62xf32>,
    }
    %c62_i32_3 = arith.constant 62 : i32
    return
  }
  func.func @transform_0(%arg0: i32) -> i32 {
    %c0_i32 = arith.constant 0 : i32
    %c0_i32_0 = arith.constant 0 : i32
    return %c0_i32 : i32
  }
  func.func @transform_1(%arg0: i32) -> (i32, i32, i32, i32) {
    %c0_i32 = arith.constant 0 : i32
    %c0_i32_0 = arith.constant 0 : i32
    %c0_i32_1 = arith.constant 0 : i32
    %c0_i32_2 = arith.constant 0 : i32
    return %arg0, %c0_i32, %c0_i32_0, %c0_i32_1 : i32, i32, i32, i32
  }
  func.func @transform_2(%arg0: i32) -> (i32, i32) {
    %c0_i32 = arith.constant 0 : i32
    %c0_i32_0 = arith.constant 0 : i32
    %c0_i32_1 = arith.constant 0 : i32
    return %c0_i32, %c0_i32_0 : i32, i32
  }
  func.func @transform_3(%arg0: i32) -> (i32, i32, i32, i32) {
    %c0_i32 = arith.constant 0 : i32
    %c0_i32_0 = arith.constant 0 : i32
    %c0_i32_1 = arith.constant 0 : i32
    %c0_i32_2 = arith.constant 0 : i32
    return %arg0, %c0_i32, %c0_i32_0, %c0_i32_1 : i32, i32, i32, i32
  }
}

module attributes {stable_mosaic.version = 11 : i64} {
  func.func @_conv_kernel(%arg0: i32, %arg1: memref<1x62x16x62xf32, #tpu.memory_space<vmem>>, %arg2: memref<3x16x48xf32, #tpu.memory_space<vmem>>, %arg3: memref<16x1xf32, #tpu.memory_space<vmem>>, %arg4: memref<1x60x16x60xf32, #tpu.memory_space<vmem>>, %arg5: memref<1x1x1xf32, #tpu.memory_space<vmem>>, %arg6: memref<1x1x1xf32, #tpu.memory_space<vmem>>) attributes {dimension_semantics = [#tpu.dimension_semantics<parallel>], iteration_bounds = array<i64: 2>, scalar_prefetch = 0 : i64, scratch_operands = 0 : i64, tpu.core_type = #tpu.core_type<tc>, window_params = [{transform_indices = @transform_0, window_bounds = array<i64: 1, 62, 16, 62>}, {pipeline_mode = #tpu.pipeline_mode<synchronous>, transform_indices = @transform_1, window_bounds = array<i64: 3, 16, 48>}, {pipeline_mode = #tpu.pipeline_mode<synchronous>, transform_indices = @transform_2, window_bounds = array<i64: 16, 1>}, {transform_indices = @transform_3, window_bounds = array<i64: 1, 60, 16, 60>}, {transform_indices = @transform_4, window_bounds = array<i64: 1, 1, 1>}, {transform_indices = @transform_5, window_bounds = array<i64: 1, 1, 1>}]} {
    %cst = arith.constant 0.000000e+00 : f32
    %0 = vector.broadcast %cst : f32 to vector<16x60xf32>
    %c0_i32 = arith.constant 0 : i32
    %c60_i32 = arith.constant 60 : i32
    %1 = arith.addi %c0_i32, %c60_i32 : i32
    %c1_i32 = arith.constant 1 : i32
    %2:2 = scf.for %arg7 = %c0_i32 to %1 step %c1_i32 iter_args(%arg8 = %0, %arg9 = %0) -> (vector<16x60xf32>, vector<16x60xf32>)  : i32 {
      %cst_8 = arith.constant 0.000000e+00 : f32
      %19 = vector.broadcast %cst_8 : f32 to vector<16x60xf32>
      %c0_i32_9 = arith.constant 0 : i32
      %20 = arith.addi %arg7, %c0_i32_9 : i32
      %c0_10 = arith.constant 0 : index
      %21 = arith.index_cast %20 : i32 to index
      %c0_11 = arith.constant 0 : index
      %c0_12 = arith.constant 0 : index
      %22 = vector.load %arg1[%c0_10, %21, %c0_11, %c0_12] : memref<1x62x16x62xf32, #tpu.memory_space<vmem>>, vector<1x1x16x62xf32>
      %23 = vector.shape_cast %22 : vector<1x1x16x62xf32> to vector<16x62xf32>
      %24 = vector.extract_strided_slice %23 {offsets = [0, 0], sizes = [16, 60], strides = [1, 1]} : vector<16x62xf32> to vector<16x60xf32>
      %25 = vector.extract_strided_slice %23 {offsets = [0, 1], sizes = [16, 60], strides = [1, 1]} : vector<16x62xf32> to vector<16x60xf32>
      %26 = vector.extract_strided_slice %23 {offsets = [0, 2], sizes = [16, 60], strides = [1, 1]} : vector<16x62xf32> to vector<16x60xf32>
      %27 = tpu.concatenate %24, %25, %26 in 0 : vector<16x60xf32>, vector<16x60xf32>, vector<16x60xf32> -> vector<48x60xf32>
      %c0_13 = arith.constant 0 : index
      %c0_14 = arith.constant 0 : index
      %c0_15 = arith.constant 0 : index
      %28 = vector.load %arg2[%c0_13, %c0_14, %c0_15] : memref<3x16x48xf32, #tpu.memory_space<vmem>>, vector<1x16x48xf32>
      %29 = vector.shape_cast %28 : vector<1x16x48xf32> to vector<16x48xf32>
      %cst_16 = arith.constant dense<0.000000e+00> : vector<16x60xf32>
      %30 = tpu.matmul %29, %27, %cst_16 {dimension_numbers = #tpu.dot_dimension_numbers<[1], [0], [0], [1], [0, 0, 1, 1], [], []>} : vector<16x48xf32>, vector<48x60xf32>, vector<16x60xf32> -> vector<16x60xf32>
      %31 = arith.addf %19, %30 : vector<16x60xf32>
      %c1_i32_17 = arith.constant 1 : i32
      %32 = arith.addi %arg7, %c1_i32_17 : i32
      %c0_18 = arith.constant 0 : index
      %33 = arith.index_cast %32 : i32 to index
      %c0_19 = arith.constant 0 : index
      %c0_20 = arith.constant 0 : index
      %34 = vector.load %arg1[%c0_18, %33, %c0_19, %c0_20] : memref<1x62x16x62xf32, #tpu.memory_space<vmem>>, vector<1x1x16x62xf32>
      %35 = vector.shape_cast %34 : vector<1x1x16x62xf32> to vector<16x62xf32>
      %36 = vector.extract_strided_slice %35 {offsets = [0, 0], sizes = [16, 60], strides = [1, 1]} : vector<16x62xf32> to vector<16x60xf32>
      %37 = vector.extract_strided_slice %35 {offsets = [0, 1], sizes = [16, 60], strides = [1, 1]} : vector<16x62xf32> to vector<16x60xf32>
      %38 = vector.extract_strided_slice %35 {offsets = [0, 2], sizes = [16, 60], strides = [1, 1]} : vector<16x62xf32> to vector<16x60xf32>
      %39 = tpu.concatenate %36, %37, %38 in 0 : vector<16x60xf32>, vector<16x60xf32>, vector<16x60xf32> -> vector<48x60xf32>
      %c1 = arith.constant 1 : index
      %c0_21 = arith.constant 0 : index
      %c0_22 = arith.constant 0 : index
      %40 = vector.load %arg2[%c1, %c0_21, %c0_22] : memref<3x16x48xf32, #tpu.memory_space<vmem>>, vector<1x16x48xf32>
      %41 = vector.shape_cast %40 : vector<1x16x48xf32> to vector<16x48xf32>
      %cst_23 = arith.constant dense<0.000000e+00> : vector<16x60xf32>
      %42 = tpu.matmul %41, %39, %cst_23 {dimension_numbers = #tpu.dot_dimension_numbers<[1], [0], [0], [1], [0, 0, 1, 1], [], []>} : vector<16x48xf32>, vector<48x60xf32>, vector<16x60xf32> -> vector<16x60xf32>
      %43 = arith.addf %31, %42 : vector<16x60xf32>
      %c2_i32 = arith.constant 2 : i32
      %44 = arith.addi %arg7, %c2_i32 : i32
      %c0_24 = arith.constant 0 : index
      %45 = arith.index_cast %44 : i32 to index
      %c0_25 = arith.constant 0 : index
      %c0_26 = arith.constant 0 : index
      %46 = vector.load %arg1[%c0_24, %45, %c0_25, %c0_26] : memref<1x62x16x62xf32, #tpu.memory_space<vmem>>, vector<1x1x16x62xf32>
      %47 = vector.shape_cast %46 : vector<1x1x16x62xf32> to vector<16x62xf32>
      %48 = vector.extract_strided_slice %47 {offsets = [0, 0], sizes = [16, 60], strides = [1, 1]} : vector<16x62xf32> to vector<16x60xf32>
      %49 = vector.extract_strided_slice %47 {offsets = [0, 1], sizes = [16, 60], strides = [1, 1]} : vector<16x62xf32> to vector<16x60xf32>
      %50 = vector.extract_strided_slice %47 {offsets = [0, 2], sizes = [16, 60], strides = [1, 1]} : vector<16x62xf32> to vector<16x60xf32>
      %51 = tpu.concatenate %48, %49, %50 in 0 : vector<16x60xf32>, vector<16x60xf32>, vector<16x60xf32> -> vector<48x60xf32>
      %c2 = arith.constant 2 : index
      %c0_27 = arith.constant 0 : index
      %c0_28 = arith.constant 0 : index
      %52 = vector.load %arg2[%c2, %c0_27, %c0_28] : memref<3x16x48xf32, #tpu.memory_space<vmem>>, vector<1x16x48xf32>
      %53 = vector.shape_cast %52 : vector<1x16x48xf32> to vector<16x48xf32>
      %cst_29 = arith.constant dense<0.000000e+00> : vector<16x60xf32>
      %54 = tpu.matmul %53, %51, %cst_29 {dimension_numbers = #tpu.dot_dimension_numbers<[1], [0], [0], [1], [0, 0, 1, 1], [], []>} : vector<16x48xf32>, vector<48x60xf32>, vector<16x60xf32> -> vector<16x60xf32>
      %55 = arith.addf %43, %54 : vector<16x60xf32>
      %c0_30 = arith.constant 0 : index
      %c0_31 = arith.constant 0 : index
      %56 = vector.load %arg3[%c0_30, %c0_31] : memref<16x1xf32, #tpu.memory_space<vmem>>, vector<16x1xf32>
      %57 = vector.broadcast %56 : vector<16x1xf32> to vector<16x60xf32>
      %58 = arith.addf %55, %57 : vector<16x60xf32>
      %c0_32 = arith.constant 0 : index
      %59 = arith.index_cast %arg7 : i32 to index
      %c0_33 = arith.constant 0 : index
      %c0_34 = arith.constant 0 : index
      %60 = vector.load %arg4[%c0_32, %59, %c0_33, %c0_34] : memref<1x60x16x60xf32, #tpu.memory_space<vmem>>, vector<1x1x16x60xf32>
      %61 = vector.shape_cast %60 : vector<1x1x16x60xf32> to vector<16x60xf32>
      %62 = vector.shape_cast %58 : vector<16x60xf32> to vector<1x1x16x60xf32>
      tpu.vector_store %arg4[%c0_32, %59, %c0_33, %c0_34], %62 {strides = array<i32>} : memref<1x60x16x60xf32, #tpu.memory_space<vmem>>, vector<1x1x16x60xf32>,
      %63 = arith.addf %arg8, %58 : vector<16x60xf32>
      %64 = arith.mulf %58, %58 : vector<16x60xf32>
      %65 = arith.addf %arg9, %64 : vector<16x60xf32>
      scf.yield %63, %65 : vector<16x60xf32>, vector<16x60xf32>
    }
    %c60_i32_0 = arith.constant 60 : i32
    %3 = vector.shape_cast %2#0 : vector<16x60xf32> to vector<1x16x60xf32>
    %cst_1 = arith.constant dense<0.000000e+00> : vector<1xf32>
    %4 = vector.multi_reduction <add>, %3, %cst_1 [1, 2] : vector<1x16x60xf32> to vector<1xf32>
    %5 = vector.shape_cast %4 : vector<1xf32> to vector<1x1x1xf32>
    %6 = vector.extract %5[0, 0, 0] : f32 from vector<1x1x1xf32>
    %7 = vector.broadcast %6 : f32 to vector<1x1xf32>
    %c0 = arith.constant 0 : index
    %c0_2 = arith.constant 0 : index
    %c0_3 = arith.constant 0 : index
    %8 = vector.load %arg5[%c0, %c0_2, %c0_3] : memref<1x1x1xf32, #tpu.memory_space<vmem>>, vector<1x1x1xf32>
    %9 = vector.shape_cast %8 : vector<1x1x1xf32> to vector<1x1xf32>
    %10 = vector.shape_cast %7 : vector<1x1xf32> to vector<1x1x1xf32>
    tpu.vector_store %arg5[%c0, %c0_2, %c0_3], %10 {strides = array<i32>} : memref<1x1x1xf32, #tpu.memory_space<vmem>>, vector<1x1x1xf32>,
    %11 = vector.shape_cast %2#1 : vector<16x60xf32> to vector<1x16x60xf32>
    %cst_4 = arith.constant dense<0.000000e+00> : vector<1xf32>
    %12 = vector.multi_reduction <add>, %11, %cst_4 [1, 2] : vector<1x16x60xf32> to vector<1xf32>
    %13 = vector.shape_cast %12 : vector<1xf32> to vector<1x1x1xf32>
    %14 = vector.extract %13[0, 0, 0] : f32 from vector<1x1x1xf32>
    %15 = vector.broadcast %14 : f32 to vector<1x1xf32>
    %c0_5 = arith.constant 0 : index
    %c0_6 = arith.constant 0 : index
    %c0_7 = arith.constant 0 : index
    %16 = vector.load %arg6[%c0_5, %c0_6, %c0_7] : memref<1x1x1xf32, #tpu.memory_space<vmem>>, vector<1x1x1xf32>
    %17 = vector.shape_cast %16 : vector<1x1x1xf32> to vector<1x1xf32>
    %18 = vector.shape_cast %15 : vector<1x1xf32> to vector<1x1x1xf32>
    tpu.vector_store %arg6[%c0_5, %c0_6, %c0_7], %18 {strides = array<i32>} : memref<1x1x1xf32, #tpu.memory_space<vmem>>, vector<1x1x1xf32>,
    return
  }
  func.func @transform_0(%arg0: i32) -> (i32, i32, i32, i32) {
    %c0_i32 = arith.constant 0 : i32
    %c0_i32_0 = arith.constant 0 : i32
    %c0_i32_1 = arith.constant 0 : i32
    %c0_i32_2 = arith.constant 0 : i32
    return %arg0, %c0_i32, %c0_i32_0, %c0_i32_1 : i32, i32, i32, i32
  }
  func.func @transform_1(%arg0: i32) -> (i32, i32, i32) {
    %c0_i32 = arith.constant 0 : i32
    %c0_i32_0 = arith.constant 0 : i32
    %c0_i32_1 = arith.constant 0 : i32
    %c0_i32_2 = arith.constant 0 : i32
    return %c0_i32, %c0_i32_0, %c0_i32_1 : i32, i32, i32
  }
  func.func @transform_2(%arg0: i32) -> (i32, i32) {
    %c0_i32 = arith.constant 0 : i32
    %c0_i32_0 = arith.constant 0 : i32
    %c0_i32_1 = arith.constant 0 : i32
    return %c0_i32, %c0_i32_0 : i32, i32
  }
  func.func @transform_3(%arg0: i32) -> (i32, i32, i32, i32) {
    %c0_i32 = arith.constant 0 : i32
    %c0_i32_0 = arith.constant 0 : i32
    %c0_i32_1 = arith.constant 0 : i32
    %c0_i32_2 = arith.constant 0 : i32
    return %arg0, %c0_i32, %c0_i32_0, %c0_i32_1 : i32, i32, i32, i32
  }
  func.func @transform_4(%arg0: i32) -> (i32, i32, i32) {
    %c0_i32 = arith.constant 0 : i32
    %c0_i32_0 = arith.constant 0 : i32
    %c0_i32_1 = arith.constant 0 : i32
    return %arg0, %c0_i32, %c0_i32_0 : i32, i32, i32
  }
  func.func @transform_5(%arg0: i32) -> (i32, i32, i32) {
    %c0_i32 = arith.constant 0 : i32
    %c0_i32_0 = arith.constant 0 : i32
    %c0_i32_1 = arith.constant 0 : i32
    return %arg0, %c0_i32, %c0_i32_0 : i32, i32, i32
  }
}

module attributes {stable_mosaic.version = 11 : i64} {
  func.func @_gauss_pool_kernel(%arg0: i32, %arg1: memref<2xf32, #tpu.memory_space<smem>>, %arg2: memref<1x60x16x60xf32, #tpu.memory_space<vmem>>, %arg3: memref<60x29xf32, #tpu.memory_space<vmem>>, %arg4: memref<1x29x16x29xf32, #tpu.memory_space<vmem>>, %arg5: memref<60x16x29xf32, #tpu.memory_space<vmem>>) attributes {dimension_semantics = [#tpu.dimension_semantics<parallel>], iteration_bounds = array<i64: 2>, scalar_prefetch = 0 : i64, scratch_operands = 1 : i64, tpu.core_type = #tpu.core_type<tc>, window_params = [{transform_indices = @transform_0, window_bounds = array<i64: 2>}, {transform_indices = @transform_1, window_bounds = array<i64: 1, 60, 16, 60>}, {pipeline_mode = #tpu.pipeline_mode<synchronous>, transform_indices = @transform_2, window_bounds = array<i64: 60, 29>}, {transform_indices = @transform_3, window_bounds = array<i64: 1, 29, 16, 29>}]} {
    %c0 = arith.constant 0 : index
    %0 = memref.load %arg1[%c0] : memref<2xf32, #tpu.memory_space<smem>>
    %c1 = arith.constant 1 : index
    %1 = memref.load %arg1[%c1] : memref<2xf32, #tpu.memory_space<smem>>
    %c0_i32 = arith.constant 0 : i32
    %c60_i32 = arith.constant 60 : i32
    %2 = arith.addi %c0_i32, %c60_i32 : i32
    %c1_i32 = arith.constant 1 : i32
    scf.for %arg6 = %c0_i32 to %2 step %c1_i32  : i32 {
      %c0_4 = arith.constant 0 : index
      %4 = arith.index_cast %arg6 : i32 to index
      %c0_5 = arith.constant 0 : index
      %c0_6 = arith.constant 0 : index
      %5 = vector.load %arg2[%c0_4, %4, %c0_5, %c0_6] : memref<1x60x16x60xf32, #tpu.memory_space<vmem>>, vector<1x1x16x60xf32>
      %6 = vector.shape_cast %5 : vector<1x1x16x60xf32> to vector<16x60xf32>
      %7 = vector.broadcast %0 : f32 to vector<16x60xf32>
      %8 = arith.subf %6, %7 : vector<16x60xf32>
      %9 = arith.mulf %8, %8 : vector<16x60xf32>
      %cst = arith.constant 0.000000e+00 : f32
      %10 = vector.broadcast %cst : f32 to vector<16x60xf32>
      %11 = arith.subf %10, %9 : vector<16x60xf32>
      %12 = vector.broadcast %1 : f32 to vector<16x60xf32>
      %13 = arith.mulf %11, %12 : vector<16x60xf32>
      %14 = math.exp %13 : vector<16x60xf32>
      %c0_7 = arith.constant 0 : index
      %c0_8 = arith.constant 0 : index
      %15 = vector.load %arg3[%c0_7, %c0_8] : memref<60x29xf32, #tpu.memory_space<vmem>>, vector<60x29xf32>
      %cst_9 = arith.constant dense<0.000000e+00> : vector<16x29xf32>
      %16 = tpu.matmul %14, %15, %cst_9 {dimension_numbers = #tpu.dot_dimension_numbers<[1], [0], [0], [1], [0, 0, 1, 1], [], []>} : vector<16x60xf32>, vector<60x29xf32>, vector<16x29xf32> -> vector<16x29xf32>
      %17 = arith.index_cast %arg6 : i32 to index
      %c0_10 = arith.constant 0 : index
      %c0_11 = arith.constant 0 : index
      %18 = vector.load %arg5[%17, %c0_10, %c0_11] : memref<60x16x29xf32, #tpu.memory_space<vmem>>, vector<1x16x29xf32>
      %19 = vector.shape_cast %18 : vector<1x16x29xf32> to vector<16x29xf32>
      %20 = vector.shape_cast %16 : vector<16x29xf32> to vector<1x16x29xf32>
      tpu.vector_store %arg5[%17, %c0_10, %c0_11], %20 {strides = array<i32>} : memref<60x16x29xf32, #tpu.memory_space<vmem>>, vector<1x16x29xf32>,
    }
    %c60_i32_0 = arith.constant 60 : i32
    %c0_i32_1 = arith.constant 0 : i32
    %c29_i32 = arith.constant 29 : i32
    %3 = arith.addi %c0_i32_1, %c29_i32 : i32
    %c1_i32_2 = arith.constant 1 : i32
    scf.for %arg6 = %c0_i32_1 to %3 step %c1_i32_2  : i32 {
      %cst = arith.constant 0.000000e+00 : f32
      %4 = vector.broadcast %cst : f32 to vector<16x29xf32>
      %c2_i32 = arith.constant 2 : i32
      %5 = arith.muli %c2_i32, %arg6 : i32
      %c0_i32_4 = arith.constant 0 : i32
      %6 = arith.subi %5, %c0_i32_4 : i32
      %c0_i32_5 = arith.constant 0 : i32
      %7 = arith.addi %6, %c0_i32_5 : i32
      %c0_i32_6 = arith.constant 0 : i32
      %c59_i32 = arith.constant 59 : i32
      %8 = arith.maxsi %c0_i32_6, %7 : i32
      %9 = arith.minsi %c59_i32, %8 : i32
      %c0_i32_7 = arith.constant 0 : i32
      %10 = arith.cmpi sge, %7, %c0_i32_7 : i32
      %c60_i32_8 = arith.constant 60 : i32
      %11 = arith.cmpi slt, %7, %c60_i32_8 : i32
      %12 = arith.andi %10, %11 : i1
      %13 = arith.extui %12 : i1 to i32
      %14 = arith.sitofp %13 : i32 to f32
      %15 = arith.index_cast %9 : i32 to index
      %c0_9 = arith.constant 0 : index
      %c0_10 = arith.constant 0 : index
      %16 = vector.load %arg5[%15, %c0_9, %c0_10] : memref<60x16x29xf32, #tpu.memory_space<vmem>>, vector<1x16x29xf32>
      %17 = vector.shape_cast %16 : vector<1x16x29xf32> to vector<16x29xf32>
      %18 = vector.broadcast %14 : f32 to vector<16x29xf32>
      %19 = arith.mulf %17, %18 : vector<16x29xf32>
      %20 = arith.addf %4, %19 : vector<16x29xf32>
      %c2_i32_11 = arith.constant 2 : i32
      %21 = arith.muli %c2_i32_11, %arg6 : i32
      %c0_i32_12 = arith.constant 0 : i32
      %22 = arith.subi %21, %c0_i32_12 : i32
      %c1_i32_13 = arith.constant 1 : i32
      %23 = arith.addi %22, %c1_i32_13 : i32
      %c0_i32_14 = arith.constant 0 : i32
      %c59_i32_15 = arith.constant 59 : i32
      %24 = arith.maxsi %c0_i32_14, %23 : i32
      %25 = arith.minsi %c59_i32_15, %24 : i32
      %c0_i32_16 = arith.constant 0 : i32
      %26 = arith.cmpi sge, %23, %c0_i32_16 : i32
      %c60_i32_17 = arith.constant 60 : i32
      %27 = arith.cmpi slt, %23, %c60_i32_17 : i32
      %28 = arith.andi %26, %27 : i1
      %29 = arith.extui %28 : i1 to i32
      %30 = arith.sitofp %29 : i32 to f32
      %31 = arith.index_cast %25 : i32 to index
      %c0_18 = arith.constant 0 : index
      %c0_19 = arith.constant 0 : index
      %32 = vector.load %arg5[%31, %c0_18, %c0_19] : memref<60x16x29xf32, #tpu.memory_space<vmem>>, vector<1x16x29xf32>
      %33 = vector.shape_cast %32 : vector<1x16x29xf32> to vector<16x29xf32>
      %34 = vector.broadcast %30 : f32 to vector<16x29xf32>
      %35 = arith.mulf %33, %34 : vector<16x29xf32>
      %36 = arith.addf %20, %35 : vector<16x29xf32>
      %c2_i32_20 = arith.constant 2 : i32
      %37 = arith.muli %c2_i32_20, %arg6 : i32
      %c0_i32_21 = arith.constant 0 : i32
      %38 = arith.subi %37, %c0_i32_21 : i32
      %c2_i32_22 = arith.constant 2 : i32
      %39 = arith.addi %38, %c2_i32_22 : i32
      %c0_i32_23 = arith.constant 0 : i32
      %c59_i32_24 = arith.constant 59 : i32
      %40 = arith.maxsi %c0_i32_23, %39 : i32
      %41 = arith.minsi %c59_i32_24, %40 : i32
      %c0_i32_25 = arith.constant 0 : i32
      %42 = arith.cmpi sge, %39, %c0_i32_25 : i32
      %c60_i32_26 = arith.constant 60 : i32
      %43 = arith.cmpi slt, %39, %c60_i32_26 : i32
      %44 = arith.andi %42, %43 : i1
      %45 = arith.extui %44 : i1 to i32
      %46 = arith.sitofp %45 : i32 to f32
      %47 = arith.index_cast %41 : i32 to index
      %c0_27 = arith.constant 0 : index
      %c0_28 = arith.constant 0 : index
      %48 = vector.load %arg5[%47, %c0_27, %c0_28] : memref<60x16x29xf32, #tpu.memory_space<vmem>>, vector<1x16x29xf32>
      %49 = vector.shape_cast %48 : vector<1x16x29xf32> to vector<16x29xf32>
      %50 = vector.broadcast %46 : f32 to vector<16x29xf32>
      %51 = arith.mulf %49, %50 : vector<16x29xf32>
      %52 = arith.addf %36, %51 : vector<16x29xf32>
      %cst_29 = arith.constant 0.111111112 : f32
      %53 = vector.broadcast %cst_29 : f32 to vector<16x29xf32>
      %54 = arith.mulf %52, %53 : vector<16x29xf32>
      %c0_30 = arith.constant 0 : index
      %55 = arith.index_cast %arg6 : i32 to index
      %c0_31 = arith.constant 0 : index
      %c0_32 = arith.constant 0 : index
      %56 = vector.load %arg4[%c0_30, %55, %c0_31, %c0_32] : memref<1x29x16x29xf32, #tpu.memory_space<vmem>>, vector<1x1x16x29xf32>
      %57 = vector.shape_cast %56 : vector<1x1x16x29xf32> to vector<16x29xf32>
      %58 = vector.shape_cast %54 : vector<16x29xf32> to vector<1x1x16x29xf32>
      tpu.vector_store %arg4[%c0_30, %55, %c0_31, %c0_32], %58 {strides = array<i32>} : memref<1x29x16x29xf32, #tpu.memory_space<vmem>>, vector<1x1x16x29xf32>,
    }
    %c29_i32_3 = arith.constant 29 : i32
    return
  }
  func.func @transform_0(%arg0: i32) -> i32 {
    %c0_i32 = arith.constant 0 : i32
    %c0_i32_0 = arith.constant 0 : i32
    return %c0_i32 : i32
  }
  func.func @transform_1(%arg0: i32) -> (i32, i32, i32, i32) {
    %c0_i32 = arith.constant 0 : i32
    %c0_i32_0 = arith.constant 0 : i32
    %c0_i32_1 = arith.constant 0 : i32
    %c0_i32_2 = arith.constant 0 : i32
    return %arg0, %c0_i32, %c0_i32_0, %c0_i32_1 : i32, i32, i32, i32
  }
  func.func @transform_2(%arg0: i32) -> (i32, i32) {
    %c0_i32 = arith.constant 0 : i32
    %c0_i32_0 = arith.constant 0 : i32
    %c0_i32_1 = arith.constant 0 : i32
    return %c0_i32, %c0_i32_0 : i32, i32
  }
  func.func @transform_3(%arg0: i32) -> (i32, i32, i32, i32) {
    %c0_i32 = arith.constant 0 : i32
    %c0_i32_0 = arith.constant 0 : i32
    %c0_i32_1 = arith.constant 0 : i32
    %c0_i32_2 = arith.constant 0 : i32
    return %arg0, %c0_i32, %c0_i32_0, %c0_i32_1 : i32, i32, i32, i32
  }
}

module attributes {stable_mosaic.version = 11 : i64} {
  func.func @_conv_kernel(%arg0: i32, %arg1: memref<1x29x16x29xf32, #tpu.memory_space<vmem>>, %arg2: memref<3x16x48xf32, #tpu.memory_space<vmem>>, %arg3: memref<16x1xf32, #tpu.memory_space<vmem>>, %arg4: memref<1x27x16x27xf32, #tpu.memory_space<vmem>>, %arg5: memref<1x1x1xf32, #tpu.memory_space<vmem>>, %arg6: memref<1x1x1xf32, #tpu.memory_space<vmem>>) attributes {dimension_semantics = [#tpu.dimension_semantics<parallel>], iteration_bounds = array<i64: 2>, scalar_prefetch = 0 : i64, scratch_operands = 0 : i64, tpu.core_type = #tpu.core_type<tc>, window_params = [{transform_indices = @transform_0, window_bounds = array<i64: 1, 29, 16, 29>}, {pipeline_mode = #tpu.pipeline_mode<synchronous>, transform_indices = @transform_1, window_bounds = array<i64: 3, 16, 48>}, {pipeline_mode = #tpu.pipeline_mode<synchronous>, transform_indices = @transform_2, window_bounds = array<i64: 16, 1>}, {transform_indices = @transform_3, window_bounds = array<i64: 1, 27, 16, 27>}, {transform_indices = @transform_4, window_bounds = array<i64: 1, 1, 1>}, {transform_indices = @transform_5, window_bounds = array<i64: 1, 1, 1>}]} {
    %cst = arith.constant 0.000000e+00 : f32
    %0 = vector.broadcast %cst : f32 to vector<16x27xf32>
    %c0_i32 = arith.constant 0 : i32
    %c27_i32 = arith.constant 27 : i32
    %1 = arith.addi %c0_i32, %c27_i32 : i32
    %c1_i32 = arith.constant 1 : i32
    %2:2 = scf.for %arg7 = %c0_i32 to %1 step %c1_i32 iter_args(%arg8 = %0, %arg9 = %0) -> (vector<16x27xf32>, vector<16x27xf32>)  : i32 {
      %cst_8 = arith.constant 0.000000e+00 : f32
      %19 = vector.broadcast %cst_8 : f32 to vector<16x27xf32>
      %c0_i32_9 = arith.constant 0 : i32
      %20 = arith.addi %arg7, %c0_i32_9 : i32
      %c0_10 = arith.constant 0 : index
      %21 = arith.index_cast %20 : i32 to index
      %c0_11 = arith.constant 0 : index
      %c0_12 = arith.constant 0 : index
      %22 = vector.load %arg1[%c0_10, %21, %c0_11, %c0_12] : memref<1x29x16x29xf32, #tpu.memory_space<vmem>>, vector<1x1x16x29xf32>
      %23 = vector.shape_cast %22 : vector<1x1x16x29xf32> to vector<16x29xf32>
      %24 = vector.extract_strided_slice %23 {offsets = [0, 0], sizes = [16, 27], strides = [1, 1]} : vector<16x29xf32> to vector<16x27xf32>
      %25 = vector.extract_strided_slice %23 {offsets = [0, 1], sizes = [16, 27], strides = [1, 1]} : vector<16x29xf32> to vector<16x27xf32>
      %26 = vector.extract_strided_slice %23 {offsets = [0, 2], sizes = [16, 27], strides = [1, 1]} : vector<16x29xf32> to vector<16x27xf32>
      %27 = tpu.concatenate %24, %25, %26 in 0 : vector<16x27xf32>, vector<16x27xf32>, vector<16x27xf32> -> vector<48x27xf32>
      %c0_13 = arith.constant 0 : index
      %c0_14 = arith.constant 0 : index
      %c0_15 = arith.constant 0 : index
      %28 = vector.load %arg2[%c0_13, %c0_14, %c0_15] : memref<3x16x48xf32, #tpu.memory_space<vmem>>, vector<1x16x48xf32>
      %29 = vector.shape_cast %28 : vector<1x16x48xf32> to vector<16x48xf32>
      %cst_16 = arith.constant dense<0.000000e+00> : vector<16x27xf32>
      %30 = tpu.matmul %29, %27, %cst_16 {dimension_numbers = #tpu.dot_dimension_numbers<[1], [0], [0], [1], [0, 0, 1, 1], [], []>} : vector<16x48xf32>, vector<48x27xf32>, vector<16x27xf32> -> vector<16x27xf32>
      %31 = arith.addf %19, %30 : vector<16x27xf32>
      %c1_i32_17 = arith.constant 1 : i32
      %32 = arith.addi %arg7, %c1_i32_17 : i32
      %c0_18 = arith.constant 0 : index
      %33 = arith.index_cast %32 : i32 to index
      %c0_19 = arith.constant 0 : index
      %c0_20 = arith.constant 0 : index
      %34 = vector.load %arg1[%c0_18, %33, %c0_19, %c0_20] : memref<1x29x16x29xf32, #tpu.memory_space<vmem>>, vector<1x1x16x29xf32>
      %35 = vector.shape_cast %34 : vector<1x1x16x29xf32> to vector<16x29xf32>
      %36 = vector.extract_strided_slice %35 {offsets = [0, 0], sizes = [16, 27], strides = [1, 1]} : vector<16x29xf32> to vector<16x27xf32>
      %37 = vector.extract_strided_slice %35 {offsets = [0, 1], sizes = [16, 27], strides = [1, 1]} : vector<16x29xf32> to vector<16x27xf32>
      %38 = vector.extract_strided_slice %35 {offsets = [0, 2], sizes = [16, 27], strides = [1, 1]} : vector<16x29xf32> to vector<16x27xf32>
      %39 = tpu.concatenate %36, %37, %38 in 0 : vector<16x27xf32>, vector<16x27xf32>, vector<16x27xf32> -> vector<48x27xf32>
      %c1 = arith.constant 1 : index
      %c0_21 = arith.constant 0 : index
      %c0_22 = arith.constant 0 : index
      %40 = vector.load %arg2[%c1, %c0_21, %c0_22] : memref<3x16x48xf32, #tpu.memory_space<vmem>>, vector<1x16x48xf32>
      %41 = vector.shape_cast %40 : vector<1x16x48xf32> to vector<16x48xf32>
      %cst_23 = arith.constant dense<0.000000e+00> : vector<16x27xf32>
      %42 = tpu.matmul %41, %39, %cst_23 {dimension_numbers = #tpu.dot_dimension_numbers<[1], [0], [0], [1], [0, 0, 1, 1], [], []>} : vector<16x48xf32>, vector<48x27xf32>, vector<16x27xf32> -> vector<16x27xf32>
      %43 = arith.addf %31, %42 : vector<16x27xf32>
      %c2_i32 = arith.constant 2 : i32
      %44 = arith.addi %arg7, %c2_i32 : i32
      %c0_24 = arith.constant 0 : index
      %45 = arith.index_cast %44 : i32 to index
      %c0_25 = arith.constant 0 : index
      %c0_26 = arith.constant 0 : index
      %46 = vector.load %arg1[%c0_24, %45, %c0_25, %c0_26] : memref<1x29x16x29xf32, #tpu.memory_space<vmem>>, vector<1x1x16x29xf32>
      %47 = vector.shape_cast %46 : vector<1x1x16x29xf32> to vector<16x29xf32>
      %48 = vector.extract_strided_slice %47 {offsets = [0, 0], sizes = [16, 27], strides = [1, 1]} : vector<16x29xf32> to vector<16x27xf32>
      %49 = vector.extract_strided_slice %47 {offsets = [0, 1], sizes = [16, 27], strides = [1, 1]} : vector<16x29xf32> to vector<16x27xf32>
      %50 = vector.extract_strided_slice %47 {offsets = [0, 2], sizes = [16, 27], strides = [1, 1]} : vector<16x29xf32> to vector<16x27xf32>
      %51 = tpu.concatenate %48, %49, %50 in 0 : vector<16x27xf32>, vector<16x27xf32>, vector<16x27xf32> -> vector<48x27xf32>
      %c2 = arith.constant 2 : index
      %c0_27 = arith.constant 0 : index
      %c0_28 = arith.constant 0 : index
      %52 = vector.load %arg2[%c2, %c0_27, %c0_28] : memref<3x16x48xf32, #tpu.memory_space<vmem>>, vector<1x16x48xf32>
      %53 = vector.shape_cast %52 : vector<1x16x48xf32> to vector<16x48xf32>
      %cst_29 = arith.constant dense<0.000000e+00> : vector<16x27xf32>
      %54 = tpu.matmul %53, %51, %cst_29 {dimension_numbers = #tpu.dot_dimension_numbers<[1], [0], [0], [1], [0, 0, 1, 1], [], []>} : vector<16x48xf32>, vector<48x27xf32>, vector<16x27xf32> -> vector<16x27xf32>
      %55 = arith.addf %43, %54 : vector<16x27xf32>
      %c0_30 = arith.constant 0 : index
      %c0_31 = arith.constant 0 : index
      %56 = vector.load %arg3[%c0_30, %c0_31] : memref<16x1xf32, #tpu.memory_space<vmem>>, vector<16x1xf32>
      %57 = vector.broadcast %56 : vector<16x1xf32> to vector<16x27xf32>
      %58 = arith.addf %55, %57 : vector<16x27xf32>
      %c0_32 = arith.constant 0 : index
      %59 = arith.index_cast %arg7 : i32 to index
      %c0_33 = arith.constant 0 : index
      %c0_34 = arith.constant 0 : index
      %60 = vector.load %arg4[%c0_32, %59, %c0_33, %c0_34] : memref<1x27x16x27xf32, #tpu.memory_space<vmem>>, vector<1x1x16x27xf32>
      %61 = vector.shape_cast %60 : vector<1x1x16x27xf32> to vector<16x27xf32>
      %62 = vector.shape_cast %58 : vector<16x27xf32> to vector<1x1x16x27xf32>
      tpu.vector_store %arg4[%c0_32, %59, %c0_33, %c0_34], %62 {strides = array<i32>} : memref<1x27x16x27xf32, #tpu.memory_space<vmem>>, vector<1x1x16x27xf32>,
      %63 = arith.addf %arg8, %58 : vector<16x27xf32>
      %64 = arith.mulf %58, %58 : vector<16x27xf32>
      %65 = arith.addf %arg9, %64 : vector<16x27xf32>
      scf.yield %63, %65 : vector<16x27xf32>, vector<16x27xf32>
    }
    %c27_i32_0 = arith.constant 27 : i32
    %3 = vector.shape_cast %2#0 : vector<16x27xf32> to vector<1x16x27xf32>
    %cst_1 = arith.constant dense<0.000000e+00> : vector<1xf32>
    %4 = vector.multi_reduction <add>, %3, %cst_1 [1, 2] : vector<1x16x27xf32> to vector<1xf32>
    %5 = vector.shape_cast %4 : vector<1xf32> to vector<1x1x1xf32>
    %6 = vector.extract %5[0, 0, 0] : f32 from vector<1x1x1xf32>
    %7 = vector.broadcast %6 : f32 to vector<1x1xf32>
    %c0 = arith.constant 0 : index
    %c0_2 = arith.constant 0 : index
    %c0_3 = arith.constant 0 : index
    %8 = vector.load %arg5[%c0, %c0_2, %c0_3] : memref<1x1x1xf32, #tpu.memory_space<vmem>>, vector<1x1x1xf32>
    %9 = vector.shape_cast %8 : vector<1x1x1xf32> to vector<1x1xf32>
    %10 = vector.shape_cast %7 : vector<1x1xf32> to vector<1x1x1xf32>
    tpu.vector_store %arg5[%c0, %c0_2, %c0_3], %10 {strides = array<i32>} : memref<1x1x1xf32, #tpu.memory_space<vmem>>, vector<1x1x1xf32>,
    %11 = vector.shape_cast %2#1 : vector<16x27xf32> to vector<1x16x27xf32>
    %cst_4 = arith.constant dense<0.000000e+00> : vector<1xf32>
    %12 = vector.multi_reduction <add>, %11, %cst_4 [1, 2] : vector<1x16x27xf32> to vector<1xf32>
    %13 = vector.shape_cast %12 : vector<1xf32> to vector<1x1x1xf32>
    %14 = vector.extract %13[0, 0, 0] : f32 from vector<1x1x1xf32>
    %15 = vector.broadcast %14 : f32 to vector<1x1xf32>
    %c0_5 = arith.constant 0 : index
    %c0_6 = arith.constant 0 : index
    %c0_7 = arith.constant 0 : index
    %16 = vector.load %arg6[%c0_5, %c0_6, %c0_7] : memref<1x1x1xf32, #tpu.memory_space<vmem>>, vector<1x1x1xf32>
    %17 = vector.shape_cast %16 : vector<1x1x1xf32> to vector<1x1xf32>
    %18 = vector.shape_cast %15 : vector<1x1xf32> to vector<1x1x1xf32>
    tpu.vector_store %arg6[%c0_5, %c0_6, %c0_7], %18 {strides = array<i32>} : memref<1x1x1xf32, #tpu.memory_space<vmem>>, vector<1x1x1xf32>,
    return
  }
  func.func @transform_0(%arg0: i32) -> (i32, i32, i32, i32) {
    %c0_i32 = arith.constant 0 : i32
    %c0_i32_0 = arith.constant 0 : i32
    %c0_i32_1 = arith.constant 0 : i32
    %c0_i32_2 = arith.constant 0 : i32
    return %arg0, %c0_i32, %c0_i32_0, %c0_i32_1 : i32, i32, i32, i32
  }
  func.func @transform_1(%arg0: i32) -> (i32, i32, i32) {
    %c0_i32 = arith.constant 0 : i32
    %c0_i32_0 = arith.constant 0 : i32
    %c0_i32_1 = arith.constant 0 : i32
    %c0_i32_2 = arith.constant 0 : i32
    return %c0_i32, %c0_i32_0, %c0_i32_1 : i32, i32, i32
  }
  func.func @transform_2(%arg0: i32) -> (i32, i32) {
    %c0_i32 = arith.constant 0 : i32
    %c0_i32_0 = arith.constant 0 : i32
    %c0_i32_1 = arith.constant 0 : i32
    return %c0_i32, %c0_i32_0 : i32, i32
  }
  func.func @transform_3(%arg0: i32) -> (i32, i32, i32, i32) {
    %c0_i32 = arith.constant 0 : i32
    %c0_i32_0 = arith.constant 0 : i32
    %c0_i32_1 = arith.constant 0 : i32
    %c0_i32_2 = arith.constant 0 : i32
    return %arg0, %c0_i32, %c0_i32_0, %c0_i32_1 : i32, i32, i32, i32
  }
  func.func @transform_4(%arg0: i32) -> (i32, i32, i32) {
    %c0_i32 = arith.constant 0 : i32
    %c0_i32_0 = arith.constant 0 : i32
    %c0_i32_1 = arith.constant 0 : i32
    return %arg0, %c0_i32, %c0_i32_0 : i32, i32, i32
  }
  func.func @transform_5(%arg0: i32) -> (i32, i32, i32) {
    %c0_i32 = arith.constant 0 : i32
    %c0_i32_0 = arith.constant 0 : i32
    %c0_i32_1 = arith.constant 0 : i32
    return %arg0, %c0_i32, %c0_i32_0 : i32, i32, i32
  }
}

module attributes {stable_mosaic.version = 11 : i64} {
  func.func @_gauss_pool_kernel(%arg0: i32, %arg1: memref<2xf32, #tpu.memory_space<smem>>, %arg2: memref<1x27x16x27xf32, #tpu.memory_space<vmem>>, %arg3: memref<27x13xf32, #tpu.memory_space<vmem>>, %arg4: memref<1x13x16x13xf32, #tpu.memory_space<vmem>>, %arg5: memref<27x16x13xf32, #tpu.memory_space<vmem>>) attributes {dimension_semantics = [#tpu.dimension_semantics<parallel>], iteration_bounds = array<i64: 2>, scalar_prefetch = 0 : i64, scratch_operands = 1 : i64, tpu.core_type = #tpu.core_type<tc>, window_params = [{transform_indices = @transform_0, window_bounds = array<i64: 2>}, {transform_indices = @transform_1, window_bounds = array<i64: 1, 27, 16, 27>}, {pipeline_mode = #tpu.pipeline_mode<synchronous>, transform_indices = @transform_2, window_bounds = array<i64: 27, 13>}, {transform_indices = @transform_3, window_bounds = array<i64: 1, 13, 16, 13>}]} {
    %c0 = arith.constant 0 : index
    %0 = memref.load %arg1[%c0] : memref<2xf32, #tpu.memory_space<smem>>
    %c1 = arith.constant 1 : index
    %1 = memref.load %arg1[%c1] : memref<2xf32, #tpu.memory_space<smem>>
    %c0_i32 = arith.constant 0 : i32
    %c27_i32 = arith.constant 27 : i32
    %2 = arith.addi %c0_i32, %c27_i32 : i32
    %c1_i32 = arith.constant 1 : i32
    scf.for %arg6 = %c0_i32 to %2 step %c1_i32  : i32 {
      %c0_4 = arith.constant 0 : index
      %4 = arith.index_cast %arg6 : i32 to index
      %c0_5 = arith.constant 0 : index
      %c0_6 = arith.constant 0 : index
      %5 = vector.load %arg2[%c0_4, %4, %c0_5, %c0_6] : memref<1x27x16x27xf32, #tpu.memory_space<vmem>>, vector<1x1x16x27xf32>
      %6 = vector.shape_cast %5 : vector<1x1x16x27xf32> to vector<16x27xf32>
      %7 = vector.broadcast %0 : f32 to vector<16x27xf32>
      %8 = arith.subf %6, %7 : vector<16x27xf32>
      %9 = arith.mulf %8, %8 : vector<16x27xf32>
      %cst = arith.constant 0.000000e+00 : f32
      %10 = vector.broadcast %cst : f32 to vector<16x27xf32>
      %11 = arith.subf %10, %9 : vector<16x27xf32>
      %12 = vector.broadcast %1 : f32 to vector<16x27xf32>
      %13 = arith.mulf %11, %12 : vector<16x27xf32>
      %14 = math.exp %13 : vector<16x27xf32>
      %c0_7 = arith.constant 0 : index
      %c0_8 = arith.constant 0 : index
      %15 = vector.load %arg3[%c0_7, %c0_8] : memref<27x13xf32, #tpu.memory_space<vmem>>, vector<27x13xf32>
      %cst_9 = arith.constant dense<0.000000e+00> : vector<16x13xf32>
      %16 = tpu.matmul %14, %15, %cst_9 {dimension_numbers = #tpu.dot_dimension_numbers<[1], [0], [0], [1], [0, 0, 1, 1], [], []>} : vector<16x27xf32>, vector<27x13xf32>, vector<16x13xf32> -> vector<16x13xf32>
      %17 = arith.index_cast %arg6 : i32 to index
      %c0_10 = arith.constant 0 : index
      %c0_11 = arith.constant 0 : index
      %18 = vector.load %arg5[%17, %c0_10, %c0_11] : memref<27x16x13xf32, #tpu.memory_space<vmem>>, vector<1x16x13xf32>
      %19 = vector.shape_cast %18 : vector<1x16x13xf32> to vector<16x13xf32>
      %20 = vector.shape_cast %16 : vector<16x13xf32> to vector<1x16x13xf32>
      tpu.vector_store %arg5[%17, %c0_10, %c0_11], %20 {strides = array<i32>} : memref<27x16x13xf32, #tpu.memory_space<vmem>>, vector<1x16x13xf32>,
    }
    %c27_i32_0 = arith.constant 27 : i32
    %c0_i32_1 = arith.constant 0 : i32
    %c13_i32 = arith.constant 13 : i32
    %3 = arith.addi %c0_i32_1, %c13_i32 : i32
    %c1_i32_2 = arith.constant 1 : i32
    scf.for %arg6 = %c0_i32_1 to %3 step %c1_i32_2  : i32 {
      %cst = arith.constant 0.000000e+00 : f32
      %4 = vector.broadcast %cst : f32 to vector<16x13xf32>
      %c2_i32 = arith.constant 2 : i32
      %5 = arith.muli %c2_i32, %arg6 : i32
      %c0_i32_4 = arith.constant 0 : i32
      %6 = arith.subi %5, %c0_i32_4 : i32
      %c0_i32_5 = arith.constant 0 : i32
      %7 = arith.addi %6, %c0_i32_5 : i32
      %c0_i32_6 = arith.constant 0 : i32
      %c26_i32 = arith.constant 26 : i32
      %8 = arith.maxsi %c0_i32_6, %7 : i32
      %9 = arith.minsi %c26_i32, %8 : i32
      %c0_i32_7 = arith.constant 0 : i32
      %10 = arith.cmpi sge, %7, %c0_i32_7 : i32
      %c27_i32_8 = arith.constant 27 : i32
      %11 = arith.cmpi slt, %7, %c27_i32_8 : i32
      %12 = arith.andi %10, %11 : i1
      %13 = arith.extui %12 : i1 to i32
      %14 = arith.sitofp %13 : i32 to f32
      %15 = arith.index_cast %9 : i32 to index
      %c0_9 = arith.constant 0 : index
      %c0_10 = arith.constant 0 : index
      %16 = vector.load %arg5[%15, %c0_9, %c0_10] : memref<27x16x13xf32, #tpu.memory_space<vmem>>, vector<1x16x13xf32>
      %17 = vector.shape_cast %16 : vector<1x16x13xf32> to vector<16x13xf32>
      %18 = vector.broadcast %14 : f32 to vector<16x13xf32>
      %19 = arith.mulf %17, %18 : vector<16x13xf32>
      %20 = arith.addf %4, %19 : vector<16x13xf32>
      %c2_i32_11 = arith.constant 2 : i32
      %21 = arith.muli %c2_i32_11, %arg6 : i32
      %c0_i32_12 = arith.constant 0 : i32
      %22 = arith.subi %21, %c0_i32_12 : i32
      %c1_i32_13 = arith.constant 1 : i32
      %23 = arith.addi %22, %c1_i32_13 : i32
      %c0_i32_14 = arith.constant 0 : i32
      %c26_i32_15 = arith.constant 26 : i32
      %24 = arith.maxsi %c0_i32_14, %23 : i32
      %25 = arith.minsi %c26_i32_15, %24 : i32
      %c0_i32_16 = arith.constant 0 : i32
      %26 = arith.cmpi sge, %23, %c0_i32_16 : i32
      %c27_i32_17 = arith.constant 27 : i32
      %27 = arith.cmpi slt, %23, %c27_i32_17 : i32
      %28 = arith.andi %26, %27 : i1
      %29 = arith.extui %28 : i1 to i32
      %30 = arith.sitofp %29 : i32 to f32
      %31 = arith.index_cast %25 : i32 to index
      %c0_18 = arith.constant 0 : index
      %c0_19 = arith.constant 0 : index
      %32 = vector.load %arg5[%31, %c0_18, %c0_19] : memref<27x16x13xf32, #tpu.memory_space<vmem>>, vector<1x16x13xf32>
      %33 = vector.shape_cast %32 : vector<1x16x13xf32> to vector<16x13xf32>
      %34 = vector.broadcast %30 : f32 to vector<16x13xf32>
      %35 = arith.mulf %33, %34 : vector<16x13xf32>
      %36 = arith.addf %20, %35 : vector<16x13xf32>
      %c2_i32_20 = arith.constant 2 : i32
      %37 = arith.muli %c2_i32_20, %arg6 : i32
      %c0_i32_21 = arith.constant 0 : i32
      %38 = arith.subi %37, %c0_i32_21 : i32
      %c2_i32_22 = arith.constant 2 : i32
      %39 = arith.addi %38, %c2_i32_22 : i32
      %c0_i32_23 = arith.constant 0 : i32
      %c26_i32_24 = arith.constant 26 : i32
      %40 = arith.maxsi %c0_i32_23, %39 : i32
      %41 = arith.minsi %c26_i32_24, %40 : i32
      %c0_i32_25 = arith.constant 0 : i32
      %42 = arith.cmpi sge, %39, %c0_i32_25 : i32
      %c27_i32_26 = arith.constant 27 : i32
      %43 = arith.cmpi slt, %39, %c27_i32_26 : i32
      %44 = arith.andi %42, %43 : i1
      %45 = arith.extui %44 : i1 to i32
      %46 = arith.sitofp %45 : i32 to f32
      %47 = arith.index_cast %41 : i32 to index
      %c0_27 = arith.constant 0 : index
      %c0_28 = arith.constant 0 : index
      %48 = vector.load %arg5[%47, %c0_27, %c0_28] : memref<27x16x13xf32, #tpu.memory_space<vmem>>, vector<1x16x13xf32>
      %49 = vector.shape_cast %48 : vector<1x16x13xf32> to vector<16x13xf32>
      %50 = vector.broadcast %46 : f32 to vector<16x13xf32>
      %51 = arith.mulf %49, %50 : vector<16x13xf32>
      %52 = arith.addf %36, %51 : vector<16x13xf32>
      %cst_29 = arith.constant 0.111111112 : f32
      %53 = vector.broadcast %cst_29 : f32 to vector<16x13xf32>
      %54 = arith.mulf %52, %53 : vector<16x13xf32>
      %c0_30 = arith.constant 0 : index
      %55 = arith.index_cast %arg6 : i32 to index
      %c0_31 = arith.constant 0 : index
      %c0_32 = arith.constant 0 : index
      %56 = vector.load %arg4[%c0_30, %55, %c0_31, %c0_32] : memref<1x13x16x13xf32, #tpu.memory_space<vmem>>, vector<1x1x16x13xf32>
      %57 = vector.shape_cast %56 : vector<1x1x16x13xf32> to vector<16x13xf32>
      %58 = vector.shape_cast %54 : vector<16x13xf32> to vector<1x1x16x13xf32>
      tpu.vector_store %arg4[%c0_30, %55, %c0_31, %c0_32], %58 {strides = array<i32>} : memref<1x13x16x13xf32, #tpu.memory_space<vmem>>, vector<1x1x16x13xf32>,
    }
    %c13_i32_3 = arith.constant 13 : i32
    return
  }
  func.func @transform_0(%arg0: i32) -> i32 {
    %c0_i32 = arith.constant 0 : i32
    %c0_i32_0 = arith.constant 0 : i32
    return %c0_i32 : i32
  }
  func.func @transform_1(%arg0: i32) -> (i32, i32, i32, i32) {
    %c0_i32 = arith.constant 0 : i32
    %c0_i32_0 = arith.constant 0 : i32
    %c0_i32_1 = arith.constant 0 : i32
    %c0_i32_2 = arith.constant 0 : i32
    return %arg0, %c0_i32, %c0_i32_0, %c0_i32_1 : i32, i32, i32, i32
  }
  func.func @transform_2(%arg0: i32) -> (i32, i32) {
    %c0_i32 = arith.constant 0 : i32
    %c0_i32_0 = arith.constant 0 : i32
    %c0_i32_1 = arith.constant 0 : i32
    return %c0_i32, %c0_i32_0 : i32, i32
  }
  func.func @transform_3(%arg0: i32) -> (i32, i32, i32, i32) {
    %c0_i32 = arith.constant 0 : i32
    %c0_i32_0 = arith.constant 0 : i32
    %c0_i32_1 = arith.constant 0 : i32
    %c0_i32_2 = arith.constant 0 : i32
    return %arg0, %c0_i32, %c0_i32_0, %c0_i32_1 : i32, i32, i32, i32
  }
}

module attributes {stable_mosaic.version = 11 : i64} {
  func.func @_conv_kernel(%arg0: i32, %arg1: memref<1x13x16x13xf32, #tpu.memory_space<vmem>>, %arg2: memref<5x16x80xf32, #tpu.memory_space<vmem>>, %arg3: memref<16x1xf32, #tpu.memory_space<vmem>>, %arg4: memref<1x9x16x9xf32, #tpu.memory_space<vmem>>, %arg5: memref<1x1x1xf32, #tpu.memory_space<vmem>>, %arg6: memref<1x1x1xf32, #tpu.memory_space<vmem>>) attributes {dimension_semantics = [#tpu.dimension_semantics<parallel>], iteration_bounds = array<i64: 2>, scalar_prefetch = 0 : i64, scratch_operands = 0 : i64, tpu.core_type = #tpu.core_type<tc>, window_params = [{transform_indices = @transform_0, window_bounds = array<i64: 1, 13, 16, 13>}, {pipeline_mode = #tpu.pipeline_mode<synchronous>, transform_indices = @transform_1, window_bounds = array<i64: 5, 16, 80>}, {pipeline_mode = #tpu.pipeline_mode<synchronous>, transform_indices = @transform_2, window_bounds = array<i64: 16, 1>}, {transform_indices = @transform_3, window_bounds = array<i64: 1, 9, 16, 9>}, {transform_indices = @transform_4, window_bounds = array<i64: 1, 1, 1>}, {transform_indices = @transform_5, window_bounds = array<i64: 1, 1, 1>}]} {
    %cst = arith.constant 0.000000e+00 : f32
    %0 = vector.broadcast %cst : f32 to vector<16x9xf32>
    %c0_i32 = arith.constant 0 : i32
    %c9_i32 = arith.constant 9 : i32
    %1 = arith.addi %c0_i32, %c9_i32 : i32
    %c1_i32 = arith.constant 1 : i32
    %2:2 = scf.for %arg7 = %c0_i32 to %1 step %c1_i32 iter_args(%arg8 = %0, %arg9 = %0) -> (vector<16x9xf32>, vector<16x9xf32>)  : i32 {
      %cst_8 = arith.constant 0.000000e+00 : f32
      %19 = vector.broadcast %cst_8 : f32 to vector<16x9xf32>
      %c0_i32_9 = arith.constant 0 : i32
      %20 = arith.addi %arg7, %c0_i32_9 : i32
      %c0_10 = arith.constant 0 : index
      %21 = arith.index_cast %20 : i32 to index
      %c0_11 = arith.constant 0 : index
      %c0_12 = arith.constant 0 : index
      %22 = vector.load %arg1[%c0_10, %21, %c0_11, %c0_12] : memref<1x13x16x13xf32, #tpu.memory_space<vmem>>, vector<1x1x16x13xf32>
      %23 = vector.shape_cast %22 : vector<1x1x16x13xf32> to vector<16x13xf32>
      %24 = vector.extract_strided_slice %23 {offsets = [0, 0], sizes = [16, 9], strides = [1, 1]} : vector<16x13xf32> to vector<16x9xf32>
      %25 = vector.extract_strided_slice %23 {offsets = [0, 1], sizes = [16, 9], strides = [1, 1]} : vector<16x13xf32> to vector<16x9xf32>
      %26 = vector.extract_strided_slice %23 {offsets = [0, 2], sizes = [16, 9], strides = [1, 1]} : vector<16x13xf32> to vector<16x9xf32>
      %27 = vector.extract_strided_slice %23 {offsets = [0, 3], sizes = [16, 9], strides = [1, 1]} : vector<16x13xf32> to vector<16x9xf32>
      %28 = vector.extract_strided_slice %23 {offsets = [0, 4], sizes = [16, 9], strides = [1, 1]} : vector<16x13xf32> to vector<16x9xf32>
      %29 = tpu.concatenate %24, %25, %26, %27, %28 in 0 : vector<16x9xf32>, vector<16x9xf32>, vector<16x9xf32>, vector<16x9xf32>, vector<16x9xf32> -> vector<80x9xf32>
      %c0_13 = arith.constant 0 : index
      %c0_14 = arith.constant 0 : index
      %c0_15 = arith.constant 0 : index
      %30 = vector.load %arg2[%c0_13, %c0_14, %c0_15] : memref<5x16x80xf32, #tpu.memory_space<vmem>>, vector<1x16x80xf32>
      %31 = vector.shape_cast %30 : vector<1x16x80xf32> to vector<16x80xf32>
      %cst_16 = arith.constant dense<0.000000e+00> : vector<16x9xf32>
      %32 = tpu.matmul %31, %29, %cst_16 {dimension_numbers = #tpu.dot_dimension_numbers<[1], [0], [0], [1], [0, 0, 1, 1], [], []>} : vector<16x80xf32>, vector<80x9xf32>, vector<16x9xf32> -> vector<16x9xf32>
      %33 = arith.addf %19, %32 : vector<16x9xf32>
      %c1_i32_17 = arith.constant 1 : i32
      %34 = arith.addi %arg7, %c1_i32_17 : i32
      %c0_18 = arith.constant 0 : index
      %35 = arith.index_cast %34 : i32 to index
      %c0_19 = arith.constant 0 : index
      %c0_20 = arith.constant 0 : index
      %36 = vector.load %arg1[%c0_18, %35, %c0_19, %c0_20] : memref<1x13x16x13xf32, #tpu.memory_space<vmem>>, vector<1x1x16x13xf32>
      %37 = vector.shape_cast %36 : vector<1x1x16x13xf32> to vector<16x13xf32>
      %38 = vector.extract_strided_slice %37 {offsets = [0, 0], sizes = [16, 9], strides = [1, 1]} : vector<16x13xf32> to vector<16x9xf32>
      %39 = vector.extract_strided_slice %37 {offsets = [0, 1], sizes = [16, 9], strides = [1, 1]} : vector<16x13xf32> to vector<16x9xf32>
      %40 = vector.extract_strided_slice %37 {offsets = [0, 2], sizes = [16, 9], strides = [1, 1]} : vector<16x13xf32> to vector<16x9xf32>
      %41 = vector.extract_strided_slice %37 {offsets = [0, 3], sizes = [16, 9], strides = [1, 1]} : vector<16x13xf32> to vector<16x9xf32>
      %42 = vector.extract_strided_slice %37 {offsets = [0, 4], sizes = [16, 9], strides = [1, 1]} : vector<16x13xf32> to vector<16x9xf32>
      %43 = tpu.concatenate %38, %39, %40, %41, %42 in 0 : vector<16x9xf32>, vector<16x9xf32>, vector<16x9xf32>, vector<16x9xf32>, vector<16x9xf32> -> vector<80x9xf32>
      %c1 = arith.constant 1 : index
      %c0_21 = arith.constant 0 : index
      %c0_22 = arith.constant 0 : index
      %44 = vector.load %arg2[%c1, %c0_21, %c0_22] : memref<5x16x80xf32, #tpu.memory_space<vmem>>, vector<1x16x80xf32>
      %45 = vector.shape_cast %44 : vector<1x16x80xf32> to vector<16x80xf32>
      %cst_23 = arith.constant dense<0.000000e+00> : vector<16x9xf32>
      %46 = tpu.matmul %45, %43, %cst_23 {dimension_numbers = #tpu.dot_dimension_numbers<[1], [0], [0], [1], [0, 0, 1, 1], [], []>} : vector<16x80xf32>, vector<80x9xf32>, vector<16x9xf32> -> vector<16x9xf32>
      %47 = arith.addf %33, %46 : vector<16x9xf32>
      %c2_i32 = arith.constant 2 : i32
      %48 = arith.addi %arg7, %c2_i32 : i32
      %c0_24 = arith.constant 0 : index
      %49 = arith.index_cast %48 : i32 to index
      %c0_25 = arith.constant 0 : index
      %c0_26 = arith.constant 0 : index
      %50 = vector.load %arg1[%c0_24, %49, %c0_25, %c0_26] : memref<1x13x16x13xf32, #tpu.memory_space<vmem>>, vector<1x1x16x13xf32>
      %51 = vector.shape_cast %50 : vector<1x1x16x13xf32> to vector<16x13xf32>
      %52 = vector.extract_strided_slice %51 {offsets = [0, 0], sizes = [16, 9], strides = [1, 1]} : vector<16x13xf32> to vector<16x9xf32>
      %53 = vector.extract_strided_slice %51 {offsets = [0, 1], sizes = [16, 9], strides = [1, 1]} : vector<16x13xf32> to vector<16x9xf32>
      %54 = vector.extract_strided_slice %51 {offsets = [0, 2], sizes = [16, 9], strides = [1, 1]} : vector<16x13xf32> to vector<16x9xf32>
      %55 = vector.extract_strided_slice %51 {offsets = [0, 3], sizes = [16, 9], strides = [1, 1]} : vector<16x13xf32> to vector<16x9xf32>
      %56 = vector.extract_strided_slice %51 {offsets = [0, 4], sizes = [16, 9], strides = [1, 1]} : vector<16x13xf32> to vector<16x9xf32>
      %57 = tpu.concatenate %52, %53, %54, %55, %56 in 0 : vector<16x9xf32>, vector<16x9xf32>, vector<16x9xf32>, vector<16x9xf32>, vector<16x9xf32> -> vector<80x9xf32>
      %c2 = arith.constant 2 : index
      %c0_27 = arith.constant 0 : index
      %c0_28 = arith.constant 0 : index
      %58 = vector.load %arg2[%c2, %c0_27, %c0_28] : memref<5x16x80xf32, #tpu.memory_space<vmem>>, vector<1x16x80xf32>
      %59 = vector.shape_cast %58 : vector<1x16x80xf32> to vector<16x80xf32>
      %cst_29 = arith.constant dense<0.000000e+00> : vector<16x9xf32>
      %60 = tpu.matmul %59, %57, %cst_29 {dimension_numbers = #tpu.dot_dimension_numbers<[1], [0], [0], [1], [0, 0, 1, 1], [], []>} : vector<16x80xf32>, vector<80x9xf32>, vector<16x9xf32> -> vector<16x9xf32>
      %61 = arith.addf %47, %60 : vector<16x9xf32>
      %c3_i32 = arith.constant 3 : i32
      %62 = arith.addi %arg7, %c3_i32 : i32
      %c0_30 = arith.constant 0 : index
      %63 = arith.index_cast %62 : i32 to index
      %c0_31 = arith.constant 0 : index
      %c0_32 = arith.constant 0 : index
      %64 = vector.load %arg1[%c0_30, %63, %c0_31, %c0_32] : memref<1x13x16x13xf32, #tpu.memory_space<vmem>>, vector<1x1x16x13xf32>
      %65 = vector.shape_cast %64 : vector<1x1x16x13xf32> to vector<16x13xf32>
      %66 = vector.extract_strided_slice %65 {offsets = [0, 0], sizes = [16, 9], strides = [1, 1]} : vector<16x13xf32> to vector<16x9xf32>
      %67 = vector.extract_strided_slice %65 {offsets = [0, 1], sizes = [16, 9], strides = [1, 1]} : vector<16x13xf32> to vector<16x9xf32>
      %68 = vector.extract_strided_slice %65 {offsets = [0, 2], sizes = [16, 9], strides = [1, 1]} : vector<16x13xf32> to vector<16x9xf32>
      %69 = vector.extract_strided_slice %65 {offsets = [0, 3], sizes = [16, 9], strides = [1, 1]} : vector<16x13xf32> to vector<16x9xf32>
      %70 = vector.extract_strided_slice %65 {offsets = [0, 4], sizes = [16, 9], strides = [1, 1]} : vector<16x13xf32> to vector<16x9xf32>
      %71 = tpu.concatenate %66, %67, %68, %69, %70 in 0 : vector<16x9xf32>, vector<16x9xf32>, vector<16x9xf32>, vector<16x9xf32>, vector<16x9xf32> -> vector<80x9xf32>
      %c3 = arith.constant 3 : index
      %c0_33 = arith.constant 0 : index
      %c0_34 = arith.constant 0 : index
      %72 = vector.load %arg2[%c3, %c0_33, %c0_34] : memref<5x16x80xf32, #tpu.memory_space<vmem>>, vector<1x16x80xf32>
      %73 = vector.shape_cast %72 : vector<1x16x80xf32> to vector<16x80xf32>
      %cst_35 = arith.constant dense<0.000000e+00> : vector<16x9xf32>
      %74 = tpu.matmul %73, %71, %cst_35 {dimension_numbers = #tpu.dot_dimension_numbers<[1], [0], [0], [1], [0, 0, 1, 1], [], []>} : vector<16x80xf32>, vector<80x9xf32>, vector<16x9xf32> -> vector<16x9xf32>
      %75 = arith.addf %61, %74 : vector<16x9xf32>
      %c4_i32 = arith.constant 4 : i32
      %76 = arith.addi %arg7, %c4_i32 : i32
      %c0_36 = arith.constant 0 : index
      %77 = arith.index_cast %76 : i32 to index
      %c0_37 = arith.constant 0 : index
      %c0_38 = arith.constant 0 : index
      %78 = vector.load %arg1[%c0_36, %77, %c0_37, %c0_38] : memref<1x13x16x13xf32, #tpu.memory_space<vmem>>, vector<1x1x16x13xf32>
      %79 = vector.shape_cast %78 : vector<1x1x16x13xf32> to vector<16x13xf32>
      %80 = vector.extract_strided_slice %79 {offsets = [0, 0], sizes = [16, 9], strides = [1, 1]} : vector<16x13xf32> to vector<16x9xf32>
      %81 = vector.extract_strided_slice %79 {offsets = [0, 1], sizes = [16, 9], strides = [1, 1]} : vector<16x13xf32> to vector<16x9xf32>
      %82 = vector.extract_strided_slice %79 {offsets = [0, 2], sizes = [16, 9], strides = [1, 1]} : vector<16x13xf32> to vector<16x9xf32>
      %83 = vector.extract_strided_slice %79 {offsets = [0, 3], sizes = [16, 9], strides = [1, 1]} : vector<16x13xf32> to vector<16x9xf32>
      %84 = vector.extract_strided_slice %79 {offsets = [0, 4], sizes = [16, 9], strides = [1, 1]} : vector<16x13xf32> to vector<16x9xf32>
      %85 = tpu.concatenate %80, %81, %82, %83, %84 in 0 : vector<16x9xf32>, vector<16x9xf32>, vector<16x9xf32>, vector<16x9xf32>, vector<16x9xf32> -> vector<80x9xf32>
      %c4 = arith.constant 4 : index
      %c0_39 = arith.constant 0 : index
      %c0_40 = arith.constant 0 : index
      %86 = vector.load %arg2[%c4, %c0_39, %c0_40] : memref<5x16x80xf32, #tpu.memory_space<vmem>>, vector<1x16x80xf32>
      %87 = vector.shape_cast %86 : vector<1x16x80xf32> to vector<16x80xf32>
      %cst_41 = arith.constant dense<0.000000e+00> : vector<16x9xf32>
      %88 = tpu.matmul %87, %85, %cst_41 {dimension_numbers = #tpu.dot_dimension_numbers<[1], [0], [0], [1], [0, 0, 1, 1], [], []>} : vector<16x80xf32>, vector<80x9xf32>, vector<16x9xf32> -> vector<16x9xf32>
      %89 = arith.addf %75, %88 : vector<16x9xf32>
      %c0_42 = arith.constant 0 : index
      %c0_43 = arith.constant 0 : index
      %90 = vector.load %arg3[%c0_42, %c0_43] : memref<16x1xf32, #tpu.memory_space<vmem>>, vector<16x1xf32>
      %91 = vector.broadcast %90 : vector<16x1xf32> to vector<16x9xf32>
      %92 = arith.addf %89, %91 : vector<16x9xf32>
      %c0_44 = arith.constant 0 : index
      %93 = arith.index_cast %arg7 : i32 to index
      %c0_45 = arith.constant 0 : index
      %c0_46 = arith.constant 0 : index
      %94 = vector.load %arg4[%c0_44, %93, %c0_45, %c0_46] : memref<1x9x16x9xf32, #tpu.memory_space<vmem>>, vector<1x1x16x9xf32>
      %95 = vector.shape_cast %94 : vector<1x1x16x9xf32> to vector<16x9xf32>
      %96 = vector.shape_cast %92 : vector<16x9xf32> to vector<1x1x16x9xf32>
      tpu.vector_store %arg4[%c0_44, %93, %c0_45, %c0_46], %96 {strides = array<i32>} : memref<1x9x16x9xf32, #tpu.memory_space<vmem>>, vector<1x1x16x9xf32>,
      %97 = arith.addf %arg8, %92 : vector<16x9xf32>
      %98 = arith.mulf %92, %92 : vector<16x9xf32>
      %99 = arith.addf %arg9, %98 : vector<16x9xf32>
      scf.yield %97, %99 : vector<16x9xf32>, vector<16x9xf32>
    }
    %c9_i32_0 = arith.constant 9 : i32
    %3 = vector.shape_cast %2#0 : vector<16x9xf32> to vector<1x16x9xf32>
    %cst_1 = arith.constant dense<0.000000e+00> : vector<1xf32>
    %4 = vector.multi_reduction <add>, %3, %cst_1 [1, 2] : vector<1x16x9xf32> to vector<1xf32>
    %5 = vector.shape_cast %4 : vector<1xf32> to vector<1x1x1xf32>
    %6 = vector.extract %5[0, 0, 0] : f32 from vector<1x1x1xf32>
    %7 = vector.broadcast %6 : f32 to vector<1x1xf32>
    %c0 = arith.constant 0 : index
    %c0_2 = arith.constant 0 : index
    %c0_3 = arith.constant 0 : index
    %8 = vector.load %arg5[%c0, %c0_2, %c0_3] : memref<1x1x1xf32, #tpu.memory_space<vmem>>, vector<1x1x1xf32>
    %9 = vector.shape_cast %8 : vector<1x1x1xf32> to vector<1x1xf32>
    %10 = vector.shape_cast %7 : vector<1x1xf32> to vector<1x1x1xf32>
    tpu.vector_store %arg5[%c0, %c0_2, %c0_3], %10 {strides = array<i32>} : memref<1x1x1xf32, #tpu.memory_space<vmem>>, vector<1x1x1xf32>,
    %11 = vector.shape_cast %2#1 : vector<16x9xf32> to vector<1x16x9xf32>
    %cst_4 = arith.constant dense<0.000000e+00> : vector<1xf32>
    %12 = vector.multi_reduction <add>, %11, %cst_4 [1, 2] : vector<1x16x9xf32> to vector<1xf32>
    %13 = vector.shape_cast %12 : vector<1xf32> to vector<1x1x1xf32>
    %14 = vector.extract %13[0, 0, 0] : f32 from vector<1x1x1xf32>
    %15 = vector.broadcast %14 : f32 to vector<1x1xf32>
    %c0_5 = arith.constant 0 : index
    %c0_6 = arith.constant 0 : index
    %c0_7 = arith.constant 0 : index
    %16 = vector.load %arg6[%c0_5, %c0_6, %c0_7] : memref<1x1x1xf32, #tpu.memory_space<vmem>>, vector<1x1x1xf32>
    %17 = vector.shape_cast %16 : vector<1x1x1xf32> to vector<1x1xf32>
    %18 = vector.shape_cast %15 : vector<1x1xf32> to vector<1x1x1xf32>
    tpu.vector_store %arg6[%c0_5, %c0_6, %c0_7], %18 {strides = array<i32>} : memref<1x1x1xf32, #tpu.memory_space<vmem>>, vector<1x1x1xf32>,
    return
  }
  func.func @transform_0(%arg0: i32) -> (i32, i32, i32, i32) {
    %c0_i32 = arith.constant 0 : i32
    %c0_i32_0 = arith.constant 0 : i32
    %c0_i32_1 = arith.constant 0 : i32
    %c0_i32_2 = arith.constant 0 : i32
    return %arg0, %c0_i32, %c0_i32_0, %c0_i32_1 : i32, i32, i32, i32
  }
  func.func @transform_1(%arg0: i32) -> (i32, i32, i32) {
    %c0_i32 = arith.constant 0 : i32
    %c0_i32_0 = arith.constant 0 : i32
    %c0_i32_1 = arith.constant 0 : i32
    %c0_i32_2 = arith.constant 0 : i32
    return %c0_i32, %c0_i32_0, %c0_i32_1 : i32, i32, i32
  }
  func.func @transform_2(%arg0: i32) -> (i32, i32) {
    %c0_i32 = arith.constant 0 : i32
    %c0_i32_0 = arith.constant 0 : i32
    %c0_i32_1 = arith.constant 0 : i32
    return %c0_i32, %c0_i32_0 : i32, i32
  }
  func.func @transform_3(%arg0: i32) -> (i32, i32, i32, i32) {
    %c0_i32 = arith.constant 0 : i32
    %c0_i32_0 = arith.constant 0 : i32
    %c0_i32_1 = arith.constant 0 : i32
    %c0_i32_2 = arith.constant 0 : i32
    return %arg0, %c0_i32, %c0_i32_0, %c0_i32_1 : i32, i32, i32, i32
  }
  func.func @transform_4(%arg0: i32) -> (i32, i32, i32) {
    %c0_i32 = arith.constant 0 : i32
    %c0_i32_0 = arith.constant 0 : i32
    %c0_i32_1 = arith.constant 0 : i32
    return %arg0, %c0_i32, %c0_i32_0 : i32, i32, i32
  }
  func.func @transform_5(%arg0: i32) -> (i32, i32, i32) {
    %c0_i32 = arith.constant 0 : i32
    %c0_i32_0 = arith.constant 0 : i32
    %c0_i32_1 = arith.constant 0 : i32
    return %arg0, %c0_i32, %c0_i32_0 : i32, i32, i32
  }
}

module attributes {stable_mosaic.version = 11 : i64} {
  func.func @_gauss_pool_kernel(%arg0: i32, %arg1: memref<2xf32, #tpu.memory_space<smem>>, %arg2: memref<1x9x16x9xf32, #tpu.memory_space<vmem>>, %arg3: memref<9x4xf32, #tpu.memory_space<vmem>>, %arg4: memref<1x4x16x4xf32, #tpu.memory_space<vmem>>, %arg5: memref<9x16x4xf32, #tpu.memory_space<vmem>>) attributes {dimension_semantics = [#tpu.dimension_semantics<parallel>], iteration_bounds = array<i64: 2>, scalar_prefetch = 0 : i64, scratch_operands = 1 : i64, tpu.core_type = #tpu.core_type<tc>, window_params = [{transform_indices = @transform_0, window_bounds = array<i64: 2>}, {transform_indices = @transform_1, window_bounds = array<i64: 1, 9, 16, 9>}, {pipeline_mode = #tpu.pipeline_mode<synchronous>, transform_indices = @transform_2, window_bounds = array<i64: 9, 4>}, {transform_indices = @transform_3, window_bounds = array<i64: 1, 4, 16, 4>}]} {
    %c0 = arith.constant 0 : index
    %0 = memref.load %arg1[%c0] : memref<2xf32, #tpu.memory_space<smem>>
    %c1 = arith.constant 1 : index
    %1 = memref.load %arg1[%c1] : memref<2xf32, #tpu.memory_space<smem>>
    %c0_i32 = arith.constant 0 : i32
    %c9_i32 = arith.constant 9 : i32
    %2 = arith.addi %c0_i32, %c9_i32 : i32
    %c1_i32 = arith.constant 1 : i32
    scf.for %arg6 = %c0_i32 to %2 step %c1_i32  : i32 {
      %c0_4 = arith.constant 0 : index
      %4 = arith.index_cast %arg6 : i32 to index
      %c0_5 = arith.constant 0 : index
      %c0_6 = arith.constant 0 : index
      %5 = vector.load %arg2[%c0_4, %4, %c0_5, %c0_6] : memref<1x9x16x9xf32, #tpu.memory_space<vmem>>, vector<1x1x16x9xf32>
      %6 = vector.shape_cast %5 : vector<1x1x16x9xf32> to vector<16x9xf32>
      %7 = vector.broadcast %0 : f32 to vector<16x9xf32>
      %8 = arith.subf %6, %7 : vector<16x9xf32>
      %9 = arith.mulf %8, %8 : vector<16x9xf32>
      %cst = arith.constant 0.000000e+00 : f32
      %10 = vector.broadcast %cst : f32 to vector<16x9xf32>
      %11 = arith.subf %10, %9 : vector<16x9xf32>
      %12 = vector.broadcast %1 : f32 to vector<16x9xf32>
      %13 = arith.mulf %11, %12 : vector<16x9xf32>
      %14 = math.exp %13 : vector<16x9xf32>
      %c0_7 = arith.constant 0 : index
      %c0_8 = arith.constant 0 : index
      %15 = vector.load %arg3[%c0_7, %c0_8] : memref<9x4xf32, #tpu.memory_space<vmem>>, vector<9x4xf32>
      %cst_9 = arith.constant dense<0.000000e+00> : vector<16x4xf32>
      %16 = tpu.matmul %14, %15, %cst_9 {dimension_numbers = #tpu.dot_dimension_numbers<[1], [0], [0], [1], [0, 0, 1, 1], [], []>} : vector<16x9xf32>, vector<9x4xf32>, vector<16x4xf32> -> vector<16x4xf32>
      %17 = arith.index_cast %arg6 : i32 to index
      %c0_10 = arith.constant 0 : index
      %c0_11 = arith.constant 0 : index
      %18 = vector.load %arg5[%17, %c0_10, %c0_11] : memref<9x16x4xf32, #tpu.memory_space<vmem>>, vector<1x16x4xf32>
      %19 = vector.shape_cast %18 : vector<1x16x4xf32> to vector<16x4xf32>
      %20 = vector.shape_cast %16 : vector<16x4xf32> to vector<1x16x4xf32>
      tpu.vector_store %arg5[%17, %c0_10, %c0_11], %20 {strides = array<i32>} : memref<9x16x4xf32, #tpu.memory_space<vmem>>, vector<1x16x4xf32>,
    }
    %c9_i32_0 = arith.constant 9 : i32
    %c0_i32_1 = arith.constant 0 : i32
    %c4_i32 = arith.constant 4 : i32
    %3 = arith.addi %c0_i32_1, %c4_i32 : i32
    %c1_i32_2 = arith.constant 1 : i32
    scf.for %arg6 = %c0_i32_1 to %3 step %c1_i32_2  : i32 {
      %cst = arith.constant 0.000000e+00 : f32
      %4 = vector.broadcast %cst : f32 to vector<16x4xf32>
      %c2_i32 = arith.constant 2 : i32
      %5 = arith.muli %c2_i32, %arg6 : i32
      %c0_i32_4 = arith.constant 0 : i32
      %6 = arith.subi %5, %c0_i32_4 : i32
      %c0_i32_5 = arith.constant 0 : i32
      %7 = arith.addi %6, %c0_i32_5 : i32
      %c0_i32_6 = arith.constant 0 : i32
      %c8_i32 = arith.constant 8 : i32
      %8 = arith.maxsi %c0_i32_6, %7 : i32
      %9 = arith.minsi %c8_i32, %8 : i32
      %c0_i32_7 = arith.constant 0 : i32
      %10 = arith.cmpi sge, %7, %c0_i32_7 : i32
      %c9_i32_8 = arith.constant 9 : i32
      %11 = arith.cmpi slt, %7, %c9_i32_8 : i32
      %12 = arith.andi %10, %11 : i1
      %13 = arith.extui %12 : i1 to i32
      %14 = arith.sitofp %13 : i32 to f32
      %15 = arith.index_cast %9 : i32 to index
      %c0_9 = arith.constant 0 : index
      %c0_10 = arith.constant 0 : index
      %16 = vector.load %arg5[%15, %c0_9, %c0_10] : memref<9x16x4xf32, #tpu.memory_space<vmem>>, vector<1x16x4xf32>
      %17 = vector.shape_cast %16 : vector<1x16x4xf32> to vector<16x4xf32>
      %18 = vector.broadcast %14 : f32 to vector<16x4xf32>
      %19 = arith.mulf %17, %18 : vector<16x4xf32>
      %20 = arith.addf %4, %19 : vector<16x4xf32>
      %c2_i32_11 = arith.constant 2 : i32
      %21 = arith.muli %c2_i32_11, %arg6 : i32
      %c0_i32_12 = arith.constant 0 : i32
      %22 = arith.subi %21, %c0_i32_12 : i32
      %c1_i32_13 = arith.constant 1 : i32
      %23 = arith.addi %22, %c1_i32_13 : i32
      %c0_i32_14 = arith.constant 0 : i32
      %c8_i32_15 = arith.constant 8 : i32
      %24 = arith.maxsi %c0_i32_14, %23 : i32
      %25 = arith.minsi %c8_i32_15, %24 : i32
      %c0_i32_16 = arith.constant 0 : i32
      %26 = arith.cmpi sge, %23, %c0_i32_16 : i32
      %c9_i32_17 = arith.constant 9 : i32
      %27 = arith.cmpi slt, %23, %c9_i32_17 : i32
      %28 = arith.andi %26, %27 : i1
      %29 = arith.extui %28 : i1 to i32
      %30 = arith.sitofp %29 : i32 to f32
      %31 = arith.index_cast %25 : i32 to index
      %c0_18 = arith.constant 0 : index
      %c0_19 = arith.constant 0 : index
      %32 = vector.load %arg5[%31, %c0_18, %c0_19] : memref<9x16x4xf32, #tpu.memory_space<vmem>>, vector<1x16x4xf32>
      %33 = vector.shape_cast %32 : vector<1x16x4xf32> to vector<16x4xf32>
      %34 = vector.broadcast %30 : f32 to vector<16x4xf32>
      %35 = arith.mulf %33, %34 : vector<16x4xf32>
      %36 = arith.addf %20, %35 : vector<16x4xf32>
      %c2_i32_20 = arith.constant 2 : i32
      %37 = arith.muli %c2_i32_20, %arg6 : i32
      %c0_i32_21 = arith.constant 0 : i32
      %38 = arith.subi %37, %c0_i32_21 : i32
      %c2_i32_22 = arith.constant 2 : i32
      %39 = arith.addi %38, %c2_i32_22 : i32
      %c0_i32_23 = arith.constant 0 : i32
      %c8_i32_24 = arith.constant 8 : i32
      %40 = arith.maxsi %c0_i32_23, %39 : i32
      %41 = arith.minsi %c8_i32_24, %40 : i32
      %c0_i32_25 = arith.constant 0 : i32
      %42 = arith.cmpi sge, %39, %c0_i32_25 : i32
      %c9_i32_26 = arith.constant 9 : i32
      %43 = arith.cmpi slt, %39, %c9_i32_26 : i32
      %44 = arith.andi %42, %43 : i1
      %45 = arith.extui %44 : i1 to i32
      %46 = arith.sitofp %45 : i32 to f32
      %47 = arith.index_cast %41 : i32 to index
      %c0_27 = arith.constant 0 : index
      %c0_28 = arith.constant 0 : index
      %48 = vector.load %arg5[%47, %c0_27, %c0_28] : memref<9x16x4xf32, #tpu.memory_space<vmem>>, vector<1x16x4xf32>
      %49 = vector.shape_cast %48 : vector<1x16x4xf32> to vector<16x4xf32>
      %50 = vector.broadcast %46 : f32 to vector<16x4xf32>
      %51 = arith.mulf %49, %50 : vector<16x4xf32>
      %52 = arith.addf %36, %51 : vector<16x4xf32>
      %cst_29 = arith.constant 0.111111112 : f32
      %53 = vector.broadcast %cst_29 : f32 to vector<16x4xf32>
      %54 = arith.mulf %52, %53 : vector<16x4xf32>
      %c0_30 = arith.constant 0 : index
      %55 = arith.index_cast %arg6 : i32 to index
      %c0_31 = arith.constant 0 : index
      %c0_32 = arith.constant 0 : index
      %56 = vector.load %arg4[%c0_30, %55, %c0_31, %c0_32] : memref<1x4x16x4xf32, #tpu.memory_space<vmem>>, vector<1x1x16x4xf32>
      %57 = vector.shape_cast %56 : vector<1x1x16x4xf32> to vector<16x4xf32>
      %58 = vector.shape_cast %54 : vector<16x4xf32> to vector<1x1x16x4xf32>
      tpu.vector_store %arg4[%c0_30, %55, %c0_31, %c0_32], %58 {strides = array<i32>} : memref<1x4x16x4xf32, #tpu.memory_space<vmem>>, vector<1x1x16x4xf32>,
    }
    %c4_i32_3 = arith.constant 4 : i32
    return
  }
  func.func @transform_0(%arg0: i32) -> i32 {
    %c0_i32 = arith.constant 0 : i32
    %c0_i32_0 = arith.constant 0 : i32
    return %c0_i32 : i32
  }
  func.func @transform_1(%arg0: i32) -> (i32, i32, i32, i32) {
    %c0_i32 = arith.constant 0 : i32
    %c0_i32_0 = arith.constant 0 : i32
    %c0_i32_1 = arith.constant 0 : i32
    %c0_i32_2 = arith.constant 0 : i32
    return %arg0, %c0_i32, %c0_i32_0, %c0_i32_1 : i32, i32, i32, i32
  }
  func.func @transform_2(%arg0: i32) -> (i32, i32) {
    %c0_i32 = arith.constant 0 : i32
    %c0_i32_0 = arith.constant 0 : i32
    %c0_i32_1 = arith.constant 0 : i32
    return %c0_i32, %c0_i32_0 : i32, i32
  }
  func.func @transform_3(%arg0: i32) -> (i32, i32, i32, i32) {
    %c0_i32 = arith.constant 0 : i32
    %c0_i32_0 = arith.constant 0 : i32
    %c0_i32_1 = arith.constant 0 : i32
    %c0_i32_2 = arith.constant 0 : i32
    return %arg0, %c0_i32, %c0_i32_0, %c0_i32_1 : i32, i32, i32, i32
  }
}

module attributes {stable_mosaic.version = 11 : i64} {
  func.func @_mlp_kernel(%arg0: i32, %arg1: memref<2x256xf32, #tpu.memory_space<vmem>>, %arg2: memref<256x128xf32, #tpu.memory_space<vmem>>, %arg3: memref<1x128xf32, #tpu.memory_space<vmem>>, %arg4: memref<128x128xf32, #tpu.memory_space<vmem>>, %arg5: memref<1x128xf32, #tpu.memory_space<vmem>>, %arg6: memref<128x2xf32, #tpu.memory_space<vmem>>, %arg7: memref<1x2xf32, #tpu.memory_space<vmem>>, %arg8: memref<2x2xf32, #tpu.memory_space<vmem>>) attributes {dimension_semantics = [#tpu.dimension_semantics<arbitrary>], iteration_bounds = array<i64: 1>, scalar_prefetch = 0 : i64, scratch_operands = 0 : i64, tpu.core_type = #tpu.core_type<tc>, window_params = [{pipeline_mode = #tpu.pipeline_mode<synchronous>, transform_indices = @transform_0, window_bounds = array<i64: 2, 256>}, {pipeline_mode = #tpu.pipeline_mode<synchronous>, transform_indices = @transform_1, window_bounds = array<i64: 256, 128>}, {pipeline_mode = #tpu.pipeline_mode<synchronous>, transform_indices = @transform_2, window_bounds = array<i64: 1, 128>}, {pipeline_mode = #tpu.pipeline_mode<synchronous>, transform_indices = @transform_3, window_bounds = array<i64: 128, 128>}, {pipeline_mode = #tpu.pipeline_mode<synchronous>, transform_indices = @transform_4, window_bounds = array<i64: 1, 128>}, {pipeline_mode = #tpu.pipeline_mode<synchronous>, transform_indices = @transform_5, window_bounds = array<i64: 128, 2>}, {pipeline_mode = #tpu.pipeline_mode<synchronous>, transform_indices = @transform_6, window_bounds = array<i64: 1, 2>}, {pipeline_mode = #tpu.pipeline_mode<synchronous>, transform_indices = @transform_7, window_bounds = array<i64: 2, 2>}]} {
    %c0 = arith.constant 0 : index
    %c0_0 = arith.constant 0 : index
    %0 = vector.load %arg1[%c0, %c0_0] : memref<2x256xf32, #tpu.memory_space<vmem>>, vector<2x256xf32>
    %c0_1 = arith.constant 0 : index
    %c0_2 = arith.constant 0 : index
    %1 = vector.load %arg2[%c0_1, %c0_2] : memref<256x128xf32, #tpu.memory_space<vmem>>, vector<256x128xf32>
    %cst = arith.constant dense<0.000000e+00> : vector<2x128xf32>
    %2 = tpu.matmul %0, %1, %cst {dimension_numbers = #tpu.dot_dimension_numbers<[1], [0], [0], [1], [0, 0, 1, 1], [], []>} : vector<2x256xf32>, vector<256x128xf32>, vector<2x128xf32> -> vector<2x128xf32>
    %c0_3 = arith.constant 0 : index
    %c0_4 = arith.constant 0 : index
    %3 = vector.load %arg3[%c0_3, %c0_4] : memref<1x128xf32, #tpu.memory_space<vmem>>, vector<1x128xf32>
    %4 = vector.broadcast %3 : vector<1x128xf32> to vector<2x128xf32>
    %5 = arith.addf %2, %4 : vector<2x128xf32>
    %cst_5 = arith.constant 0.000000e+00 : f32
    %6 = vector.broadcast %cst_5 : f32 to vector<2x128xf32>
    %7 = arith.maximumf %5, %6 : vector<2x128xf32>
    %c0_6 = arith.constant 0 : index
    %c0_7 = arith.constant 0 : index
    %8 = vector.load %arg4[%c0_6, %c0_7] : memref<128x128xf32, #tpu.memory_space<vmem>>, vector<128x128xf32>
    %cst_8 = arith.constant dense<0.000000e+00> : vector<2x128xf32>
    %9 = tpu.matmul %7, %8, %cst_8 {dimension_numbers = #tpu.dot_dimension_numbers<[1], [0], [0], [1], [0, 0, 1, 1], [], []>} : vector<2x128xf32>, vector<128x128xf32>, vector<2x128xf32> -> vector<2x128xf32>
    %c0_9 = arith.constant 0 : index
    %c0_10 = arith.constant 0 : index
    %10 = vector.load %arg5[%c0_9, %c0_10] : memref<1x128xf32, #tpu.memory_space<vmem>>, vector<1x128xf32>
    %11 = vector.broadcast %10 : vector<1x128xf32> to vector<2x128xf32>
    %12 = arith.addf %9, %11 : vector<2x128xf32>
    %cst_11 = arith.constant 0.000000e+00 : f32
    %13 = vector.broadcast %cst_11 : f32 to vector<2x128xf32>
    %14 = arith.maximumf %12, %13 : vector<2x128xf32>
    %c0_12 = arith.constant 0 : index
    %c0_13 = arith.constant 0 : index
    %15 = vector.load %arg6[%c0_12, %c0_13] : memref<128x2xf32, #tpu.memory_space<vmem>>, vector<128x2xf32>
    %cst_14 = arith.constant dense<0.000000e+00> : vector<2x2xf32>
    %16 = tpu.matmul %14, %15, %cst_14 {dimension_numbers = #tpu.dot_dimension_numbers<[1], [0], [0], [1], [0, 0, 1, 1], [], []>} : vector<2x128xf32>, vector<128x2xf32>, vector<2x2xf32> -> vector<2x2xf32>
    %c0_15 = arith.constant 0 : index
    %c0_16 = arith.constant 0 : index
    %17 = vector.load %arg7[%c0_15, %c0_16] : memref<1x2xf32, #tpu.memory_space<vmem>>, vector<1x2xf32>
    %18 = vector.broadcast %17 : vector<1x2xf32> to vector<2x2xf32>
    %19 = arith.addf %16, %18 : vector<2x2xf32>
    %c0_17 = arith.constant 0 : index
    %c0_18 = arith.constant 0 : index
    %20 = vector.load %arg8[%c0_17, %c0_18] : memref<2x2xf32, #tpu.memory_space<vmem>>, vector<2x2xf32>
    tpu.vector_store %arg8[%c0_17, %c0_18], %19 {strides = array<i32>} : memref<2x2xf32, #tpu.memory_space<vmem>>, vector<2x2xf32>,
    return
  }
  func.func @transform_0(%arg0: i32) -> (i32, i32) {
    %c0_i32 = arith.constant 0 : i32
    %c0_i32_0 = arith.constant 0 : i32
    %c0_i32_1 = arith.constant 0 : i32
    return %c0_i32, %c0_i32_0 : i32, i32
  }
  func.func @transform_1(%arg0: i32) -> (i32, i32) {
    %c0_i32 = arith.constant 0 : i32
    %c0_i32_0 = arith.constant 0 : i32
    %c0_i32_1 = arith.constant 0 : i32
    return %c0_i32, %c0_i32_0 : i32, i32
  }
  func.func @transform_2(%arg0: i32) -> (i32, i32) {
    %c0_i32 = arith.constant 0 : i32
    %c0_i32_0 = arith.constant 0 : i32
    %c0_i32_1 = arith.constant 0 : i32
    return %c0_i32, %c0_i32_0 : i32, i32
  }
  func.func @transform_3(%arg0: i32) -> (i32, i32) {
    %c0_i32 = arith.constant 0 : i32
    %c0_i32_0 = arith.constant 0 : i32
    %c0_i32_1 = arith.constant 0 : i32
    return %c0_i32, %c0_i32_0 : i32, i32
  }
  func.func @transform_4(%arg0: i32) -> (i32, i32) {
    %c0_i32 = arith.constant 0 : i32
    %c0_i32_0 = arith.constant 0 : i32
    %c0_i32_1 = arith.constant 0 : i32
    return %c0_i32, %c0_i32_0 : i32, i32
  }
  func.func @transform_5(%arg0: i32) -> (i32, i32) {
    %c0_i32 = arith.constant 0 : i32
    %c0_i32_0 = arith.constant 0 : i32
    %c0_i32_1 = arith.constant 0 : i32
    return %c0_i32, %c0_i32_0 : i32, i32
  }
  func.func @transform_6(%arg0: i32) -> (i32, i32) {
    %c0_i32 = arith.constant 0 : i32
    %c0_i32_0 = arith.constant 0 : i32
    %c0_i32_1 = arith.constant 0 : i32
    return %c0_i32, %c0_i32_0 : i32, i32
  }
  func.func @transform_7(%arg0: i32) -> (i32, i32) {
    %c0_i32 = arith.constant 0 : i32
    %c0_i32_0 = arith.constant 0 : i32
    %c0_i32_1 = arith.constant 0 : i32
    return %c0_i32, %c0_i32_0 : i32, i32
  }
}

</mosaic_0001>

<llo_original>
// kernel: gncnn_forward.12
$region0: #{gncnn_forward.12}
  #allocation0 [shape = 'u32[]', space=smem, size = 0x4, offset = 0x4, fixed_abs, tag = 'smem constant byte address 0x4 - core index']
  #allocation1 [shape = 'u32[144,128]{1,0:T(1,128)}', space=vmem, size = 0x12000, scoped, tag = 'internal scratch']
  #allocation2 [shape = 'f32[252,16,126]{2,1,0:T(8,128)}', space=vmem, size = 0x1f8000, scoped, tag = 'scratch operand']
  %s0 = inlined_call_operand.vmem [shape: f32[2], index: 0, kind: input, shape index: {}]
  %s1 = inlined_call_operand.vmem [shape: f32[2,252,16,252], index: 1, kind: input, shape index: {}]
  %s2 = inlined_call_operand.hbm [shape: f32[252,126], index: 2, kind: input, shape index: {}]
  %s3 = inlined_call_operand.vmem [shape: f32[2,126,16,126], index: 3, kind: output, shape index: {}]
  %s4 = sld [smem:[#allocation0]]
  $region67: #{gncnn_forward.12} parent=0
    _
  %s6 = ssub.s32 1, %s4
  %s7 = scalar_select 0, %s6, %s4
  $region1: #{gncnn_forward.12} parent=0
    #allocation3 [shape = 'u8[512]{0}', space=smem, size = 0x200, scoped, tag = 'input window, operand 0, single buffered']
    #allocation4 [shape = 's32[2]{0}', space=sflag, size = 0x8, scoped, tag = 'scoped memory for gncnn_forward.12']
    #allocation5 [shape = 's32[2]{0}', space=sflag, size = 0x8, scoped, tag = 'scoped memory for gncnn_forward.12']
    #allocation6 [shape = 'u8[131072]{0}', space=vmem, size = 0x20000, scoped, tag = 'input window, operand 2, single buffered']
    %8 = vsyncpa [#allocation5], 0
    %9 = vsyncpa [#allocation4], 0
    loop: start=0, step=1, limit=4
    $region2: #{gncnn_forward.12} parent=1 // loop_pre_header
      _
    $region3: #{gncnn_forward.12} parent=1 // loop_header
      %s11 = sphi 0, %s15
      %p12 = scmp.ge.s32.totalorder %s11, 4
      %s19 = sphi 0, %s19
      %s21 = sphi 0, %s19
      %s22 = sphi 0, %s21
      %s36 = sphi 0, %s22
      %s42 = sphi 0, %s44
      %s45 = sphi 0, %s42
      %s46 = sphi 0, %s45
      %s62 = sphi 0, %s46
      %s66 = sphi 0, %s66
      %s68 = sphi 0, %s66
      %s69 = sphi 0, %s68
      %s83 = sphi 0, %s69
      %s89 = sphi 0, %s91
      %s92 = sphi 0, %s89
      %s93 = sphi 0, %s92
      %s109 = sphi 0, %s93
    $region4: #{gncnn_forward.12} parent=1 // loop_header_branch
      %14 = sbr.rel (%p12) target = $region8
    $region5: #{gncnn_forward.12} parent=1 // loop_body
      %s16 = ssub.s32 %s11, 1
      %s17 = ssub.s32 %s11, 2
      %s18 = sadd.s32 %s11, 1
      %s20 = sadd.s32 %s19, 1
      %p23 = scmp.eq.s32.totalorder %s11, 1
      %p24 = scmp.ne.s32.totalorder %s19, %s21
      %p25 = scmp.eq.s32.totalorder %s11, 0
      %p26 = por %p24, %p25
      %p27 = scmp.ne.s32.totalorder %s19, %s21
      %p28 = scmp.eq.s32.totalorder %s16, 1
      %p29 = por %p27, %p28
      %p30 = scmp.ne.s32.totalorder %s21, %s22
      %p31 = scmp.eq.s32.totalorder %s16, 0
      %p32 = por %p30, %p31
      %p33 = scmp.ne.s32.totalorder %s21, %s22
      %p34 = scmp.eq.s32.totalorder %s17, 1
      %p35 = por %p33, %p34
      %p37 = scmp.ne.s32.totalorder %s22, %s36
      %p38 = scmp.eq.s32.totalorder %s17, 0
      %p39 = por %p37, %p38
      %s40 = ssub.s32 %s11, %s18
      %p41 = scmp.eq.s32.totalorder %s40, 0
      %s43 = sadd.s32 %s42, 1
      %s44 = scalar_select %p41, %s42, %s43
      %p47 = pneg %p41
      %p48 = scmp.eq.s32.totalorder %s11, 1
      %p49 = por %p47, %p48
      %p50 = scmp.ne.s32.totalorder %s42, %s45
      %p51 = scmp.eq.s32.totalorder %s11, 0
      %p52 = por %p50, %p51
      %p53 = scmp.ne.s32.totalorder %s42, %s45
      %p54 = scmp.eq.s32.totalorder %s16, 1
      %p55 = por %p53, %p54
      %p56 = scmp.ne.s32.totalorder %s45, %s46
      %p57 = scmp.eq.s32.totalorder %s16, 0
      %p58 = por %p56, %p57
      %p59 = scmp.ne.s32.totalorder %s45, %s46
      %p60 = scmp.eq.s32.totalorder %s17, 1
      %p61 = por %p59, %p60
      %p63 = scmp.ne.s32.totalorder %s46, %s62
      %p64 = scmp.eq.s32.totalorder %s17, 0
      %p65 = por %p63, %p64
      %s67 = sadd.s32 %s66, 1
      %p70 = scmp.eq.s32.totalorder %s11, 1
      %p71 = scmp.ne.s32.totalorder %s66, %s68
      %p72 = scmp.eq.s32.totalorder %s11, 0
      %p73 = por %p71, %p72
      %p74 = scmp.ne.s32.totalorder %s66, %s68
      %p75 = scmp.eq.s32.totalorder %s16, 1
      %p76 = por %p74, %p75
      %p77 = scmp.ne.s32.totalorder %s68, %s69
      %p78 = scmp.eq.s32.totalorder %s16, 0
      %p79 = por %p77, %p78
      %p80 = scmp.ne.s32.totalorder %s68, %s69
      %p81 = scmp.eq.s32.totalorder %s17, 1
      %p82 = por %p80, %p81
      %p84 = scmp.ne.s32.totalorder %s69, %s83
      %p85 = scmp.eq.s32.totalorder %s17, 0
      %p86 = por %p84, %p85
      %s87 = ssub.s32 %s11, %s18
      %p88 = scmp.eq.s32.totalorder %s87, 0
      %s90 = sadd.s32 %s89, 1
      %s91 = scalar_select %p88, %s89, %s90
      %p94 = pneg %p88
      %p95 = scmp.eq.s32.totalorder %s11, 1
      %p96 = por %p94, %p95
      %p97 = scmp.ne.s32.totalorder %s89, %s92
      %p98 = scmp.eq.s32.totalorder %s11, 0
      %p99 = por %p97, %p98
      %p100 = scmp.ne.s32.totalorder %s89, %s92
      %p101 = scmp.eq.s32.totalorder %s16, 1
      %p102 = por %p100, %p101
      %p103 = scmp.ne.s32.totalorder %s92, %s93
      %p104 = scmp.eq.s32.totalorder %s16, 0
      %p105 = por %p103, %p104
      %p106 = scmp.ne.s32.totalorder %s92, %s93
      %p107 = scmp.eq.s32.totalorder %s17, 1
      %p108 = por %p106, %p107
      %p110 = scmp.ne.s32.totalorder %s93, %s109
      %p111 = scmp.eq.s32.totalorder %s17, 0
      %p112 = por %p110, %p111
      %p113 = scmp.le.s32.totalorder 1, %s11
      %p114 = scmp.lt.s32.totalorder %s11, 3
      %p115 = pnand %p113, %p114
      %p116 = pneg %p115
      // Predicated region
      $region9: #{gncnn_forward.12} parent=5 // pred_check
        _
      $region10: #{gncnn_forward.12} parent=5 // pred_check_branch
        %118 = sbr.rel (%p115) target = $region12
      $region11: #{gncnn_forward.12} parent=5 // pred_region
        %s119 = ssub.s32 %s11, 1
        // Predicated region
        $region13: #{gncnn_forward.12} parent=11 // pred_check
          %p120 = pneg %p32
        $region14: #{gncnn_forward.12} parent=11 // pred_check_branch
          %122 = sbr.rel (%p120) target = $region16
        $region15: #{gncnn_forward.12} parent=11 // pred_region
          %s124 = ssub.s32 16, 16
          %125 = vsyncadd [#allocation5], %s124
          %s127 = sshll.u32 %s0, 4
          %s128 = int_to_ptr.vmem [resolvable:$true] %s127
          %130 = dma.vmem_to_smem %s128, 16, [#allocation3], [#allocation5]
        $region16: #{gncnn_forward.12} parent=11 // pred_fallthru
          _
        // Predicated region
        $region17: #{gncnn_forward.12} parent=11 // pred_check
          %p131 = pneg %p79
        $region18: #{gncnn_forward.12} parent=11 // pred_check_branch
          %133 = sbr.rel (%p131) target = $region20
        $region19: #{gncnn_forward.12} parent=11 // pred_region
          %s135 = ssub.s32 4096, 4096
          %136 = vsyncadd [#allocation4], %s135
          %s137 = sshll.u32 [#allocation6], 4
          %s138 = int_to_ptr.vmem [resolvable:$true] %s137
          %143 = dma.hbm_to_vmem [thread:$0]  %s2, 4096, %s138, [#allocation4], 128, 128, 8
        $region20: #{gncnn_forward.12} parent=11 // pred_fallthru
          _
      $region12: #{gncnn_forward.12} parent=5 // pred_fallthru
        _
      %p144 = scmp.lt.s32.totalorder %s11, 2
      // Predicated region
      $region21: #{gncnn_forward.12} parent=5 // pred_check
        %p145 = pneg %p144
      $region22: #{gncnn_forward.12} parent=5 // pred_check_branch
        %147 = sbr.rel (%p145) target = $region24
      $region23: #{gncnn_forward.12} parent=5 // pred_region
        // Predicated region
        $region25: #{gncnn_forward.12} parent=23 // pred_check
          %p148 = pneg %p52
        $region26: #{gncnn_forward.12} parent=23 // pred_check_branch
          %150 = sbr.rel (%p148) target = $region28
        $region27: #{gncnn_forward.12} parent=23 // pred_region
          %p151 = scmp.lt.s32.totalorder %s11, 1
          %s152 = scalar_select %p151, %s11, 1
          %s153 = smul.addr %s152, 1008
          %s154 = smul.addr %s153, 8
          %s155 = scalar_lea.vmem %s1, %s154
        $region28: #{gncnn_forward.12} parent=23 // pred_fallthru
          _
      $region24: #{gncnn_forward.12} parent=5 // pred_fallthru
        _
      %p156 = scmp.le.s32.totalorder 1, %s11
      %p157 = scmp.lt.s32.totalorder %s11, 3
      %p158 = pnand %p156, %p157
      %p159 = pneg %p158
      // Predicated region
      $region29: #{gncnn_forward.12} parent=5 // pred_check
        _
      $region30: #{gncnn_forward.12} parent=5 // pred_check_branch
        %161 = sbr.rel (%p158) target = $region32
      $region31: #{gncnn_forward.12} parent=5 // pred_region
        %s162 = ssub.s32 %s11, 1
        // Predicated region
        $region33: #{gncnn_forward.12} parent=31 // pred_check
          %p163 = pneg %p32
        $region34: #{gncnn_forward.12} parent=31 // pred_check_branch
          %165 = sbr.rel (%p163) target = $region36
        $region35: #{gncnn_forward.12} parent=31 // pred_region
          %166 = dma.done [#allocation5], 16
        $region36: #{gncnn_forward.12} parent=31 // pred_fallthru
          _
        // Predicated region
        $region37: #{gncnn_forward.12} parent=31 // pred_check
          %p167 = pneg %p79
        $region38: #{gncnn_forward.12} parent=31 // pred_check_branch
          %169 = sbr.rel (%p167) target = $region40
        $region39: #{gncnn_forward.12} parent=31 // pred_region
          %170 = dma.done [#allocation4], 4096
        $region40: #{gncnn_forward.12} parent=31 // pred_fallthru
          _
        %171 = sfence
        %p172 = pneg %p32
        %p173 = pneg %p29
        %p174 = scmp.lt.s32.totalorder %s16, 1
        %s175 = scalar_select %p174, %s16, 1
        %s176 = smul.addr %s175, 1008
        %s177 = smul.addr %s176, 8
        %s178 = scalar_lea.vmem %s1, %s177
        %p179 = pneg %p58
        %p180 = pneg %p55
        %p181 = pneg %p79
        %p182 = pneg %p76
        %p183 = pneg %p105
        %p184 = pneg %p102
        %p185 = scmp.lt.s32.totalorder %s16, 1
        %s186 = scalar_select %p185, %s16, 1
        %s187 = smul.addr %s186, 252
        %s188 = smul.addr %s187, 8
        %s189 = scalar_lea.vmem %s3, %s188
        %p190 = scmp.lt.s32.totalorder %s16, 1
        %s191 = scalar_select %p190, %s16, 1
        %s192 = smul.addr %s191, 1008
        %s193 = smul.addr %s192, 8
        %s194 = scalar_lea.vmem %s1, %s193
        %p195 = scmp.lt.s32.totalorder %s16, 1
        %s196 = scalar_select %p195, %s16, 1
        %s197 = smul.addr %s196, 252
        %s198 = smul.addr %s197, 8
        %s199 = scalar_lea.vmem %s3, %s198
        %s200 = sld [smem:[#allocation3]]
        %s201 = sld [smem:[#allocation3 + $0x1]]
        loop: start=0, step=1, limit=252
        $region41: #{gncnn_forward.12} parent=31 // loop_pre_header
          _
        $region42: #{gncnn_forward.12} parent=31 // loop_header
          %s203 = sphi 0, %s207
          %p204 = scmp.ge.s32.totalorder %s203, 252
        $region43: #{gncnn_forward.12} parent=31 // loop_header_branch
          %206 = sbr.rel (%p204) target = $region47
        $region44: #{gncnn_forward.12} parent=31 // loop_body
          %s208 = smul.u32 %s203, 4
          %s209 = smul.addr %s208, 8
          %s210 = scalar_lea.vmem %s194, %s209
          %v211 = vld [vmem:[%s210] sm:$0xff]
          %v212 = vld [vmem:[%s210 + $0x8] sm:$0xff]
          %v213 = vld [vmem:[%s210 + $0x10] sm:$0xff]
          %v214 = vld [vmem:[%s210 + $0x18] sm:$0xff]
          %v215 = vstv %s200
          %v216 = vsub.f32 %v211, %v215
          %v217 = vsub.f32 %v212, %v215
          %v218 = vsub.f32 %v213, %v215
          %v219 = vsub.f32 %v214, %v215
          %v220 = vmul.f32 %v216, %v216
          %v221 = vmul.f32 %v217, %v217
          %v222 = vmul.f32 %v218, %v218
          %v223 = vmul.f32 %v219, %v219
          %v224 = vsub.f32 0.0, %v220
          %v225 = vsub.f32 0.0, %v221
          %v226 = vsub.f32 0.0, %v222
          %v227 = vsub.f32 0.0, %v223
          %v228 = vstv %s201
          %v229 = vmul.f32 %v224, %v228
          %v230 = vmul.f32 %v225, %v228
          %v231 = vmul.f32 %v226, %v228
          %v232 = vmul.f32 %v227, %v228
          %v233 = vmul.f32 %v229, 1.442695
          %v234 = vpow.pop %v233
          %v235 = vmul.f32 %v230, 1.442695
          %v236 = vpow.pop %v235
          %v237 = vmul.f32 %v231, 1.442695
          %v238 = vpow.pop %v237
          %v239 = vmul.f32 %v232, 1.442695
          %v240 = vpow.pop %v239
          %v241 = vld [vmem:[#allocation6] sm:$0xff]
          %v242 = vld [vmem:[#allocation6 + $0x8] sm:$0xff]
          %v243 = vld [vmem:[#allocation6 + $0x10] sm:$0xff]
          %v244 = vld [vmem:[#allocation6 + $0x18] sm:$0xff]
          %v245 = vld [vmem:[#allocation6 + $0x20] sm:$0xff]
          %v246 = vld [vmem:[#allocation6 + $0x28] sm:$0xff]
          %v247 = vld [vmem:[#allocation6 + $0x30] sm:$0xff]
          %v248 = vld [vmem:[#allocation6 + $0x38] sm:$0xff]
          %v249 = vld [vmem:[#allocation6 + $0x40] sm:$0xff]
          %v250 = vld [vmem:[#allocation6 + $0x48] sm:$0xff]
          %v251 = vld [vmem:[#allocation6 + $0x50] sm:$0xff]
          %v252 = vld [vmem:[#allocation6 + $0x58] sm:$0xff]
          %v253 = vld [vmem:[#allocation6 + $0x60] sm:$0xff]
          %v254 = vld [vmem:[#allocation6 + $0x68] sm:$0xff]
          %v255 = vld [vmem:[#allocation6 + $0x70] sm:$0xff]
          %v256 = vld [vmem:[#allocation6 + $0x78] sm:$0xff]
          %v257 = vld [vmem:[#allocation6 + $0x80] sm:$0xff]
          %v258 = vld [vmem:[#allocation6 + $0x88] sm:$0xff]
          %v259 = vld [vmem:[#allocation6 + $0x90] sm:$0xff]
          %v260 = vld [vmem:[#allocation6 + $0x98] sm:$0xff]
          %v261 = vld [vmem:[#allocation6 + $0xa0] sm:$0xff]
          %v262 = vld [vmem:[#allocation6 + $0xa8] sm:$0xff]
          %v263 = vld [vmem:[#allocation6 + $0xb0] sm:$0xff]
          %v264 = vld [vmem:[#allocation6 + $0xb8] sm:$0xff]
          %v265 = vld [vmem:[#allocation6 + $0xc0] sm:$0xff]
          %v266 = vld [vmem:[#allocation6 + $0xc8] sm:$0xff]
          %v267 = vld [vmem:[#allocation6 + $0xd0] sm:$0xff]
          %v268 = vld [vmem:[#allocation6 + $0xd8] sm:$0xff]
          %v269 = vld [vmem:[#allocation6 + $0xe0] sm:$0xff]
          %v270 = vld [vmem:[#allocation6 + $0xe8] sm:$0xff]
          %v271 = vld [vmem:[#allocation6 + $0xf0] sm:$0xff]
          %v272 = vld [vmem:[#allocation6 + $0xf8] sm:$0xf]
          %vm273 = vcmask 1014784
          %v275 = vsel %vm273, %v236, 0
          %v278 = vsel %vm273, %v240, 0
          %vm280 = vcmask 1043456
          %v282 = vsel %vm280, %v272, 0
          %284 = vmatprep.subr.mxu0 0.0
          %285 = vmatpush1.msra.mxu0 %v241
          %286 = vmatprep.subr.mxu0 0.0
          %287 = vmatpush1.msra.mxu0 %v242
          %288 = vmatprep.subr.mxu0 0.0
          %289 = vmatpush1.msra.mxu0 %v243
          %290 = vmatprep.subr.mxu0 0.0
          %291 = vmatpush1.msra.mxu0 %v244
          %292 = vmatprep.subr.mxu0 0.0
          %293 = vmatpush1.msra.mxu0 %v245
          %294 = vmatprep.subr.mxu0 0.0
          %295 = vmatpush1.msra.mxu0 %v246
          %296 = vmatprep.subr.mxu0 0.0
          %297 = vmatpush1.msra.mxu0 %v247
          %298 = vmatprep.subr.mxu0 0.0
          %299 = vmatpush1.msra.mxu0 %v248
          %300 = vmatprep.subr.mxu0 0.0
          %301 = vmatpush1.msra.mxu0 %v249
          %302 = vmatprep.subr.mxu0 0.0
          %303 = vmatpush1.msra.mxu0 %v250
          %304 = vmatprep.subr.mxu0 0.0
          %305 = vmatpush1.msra.mxu0 %v251
          %306 = vmatprep.subr.mxu0 0.0
          %307 = vmatpush1.msra.mxu0 %v252
          %308 = vmatprep.subr.mxu0 0.0
          %309 = vmatpush1.msra.mxu0 %v253
          %310 = vmatprep.subr.mxu0 0.0
          %311 = vmatpush1.msra.mxu0 %v254
          %312 = vmatprep.subr.mxu0 0.0
          %313 = vmatpush1.msra.mxu0 %v255
          %314 = vmatprep.subr.mxu0 0.0
          %315 = vmatpush1.msra.mxu0 %v256
          %316 = vmatprep.subr.mxu0 0.0
          %317 = vmatpush1.msra.mxu0 %v257
          %318 = vmatprep.subr.mxu0 0.0
          %319 = vmatpush1.msra.mxu0 %v258
          %320 = vmatprep.subr.mxu0 0.0
          %321 = vmatpush1.msra.mxu0 %v259
          %322 = vmatprep.subr.mxu0 0.0
          %323 = vmatpush1.msra.mxu0 %v260
          %324 = vmatprep.subr.mxu0 0.0
          %325 = vmatpush1.msra.mxu0 %v261
          %326 = vmatprep.subr.mxu0 0.0
          %327 = vmatpush1.msra.mxu0 %v262
          %328 = vmatprep.subr.mxu0 0.0
          %329 = vmatpush1.msra.mxu0 %v263
          %330 = vmatprep.subr.mxu0 0.0
          %331 = vmatpush1.msra.mxu0 %v264
          %332 = vmatprep.subr.mxu0 0.0
          %333 = vmatpush1.msra.mxu0 %v265
          %334 = vmatprep.subr.mxu0 0.0
          %335 = vmatpush1.msra.mxu0 %v266
          %336 = vmatprep.subr.mxu0 0.0
          %337 = vmatpush1.msra.mxu0 %v267
          %338 = vmatprep.subr.mxu0 0.0
          %339 = vmatpush1.msra.mxu0 %v268
          %340 = vmatprep.subr.mxu0 0.0
          %341 = vmatpush1.msra.mxu0 %v269
          %342 = vmatprep.subr.mxu0 0.0
          %343 = vmatpush1.msra.mxu0 %v270
          %344 = vmatprep.subr.mxu0 0.0
          %345 = vmatpush1.msra.mxu0 %v271
          %346 = vmatprep.subr.mxu0 0.0
          %347 = vmatpush1.msra.mxu0 %v282
          %348 = vmatprep.mubr.f32.mxu0 %v275
          %349 = vmatmul.mubr.f32.gmra.mrb[0].mxu0 %v234
          %v350 = vpop.f32.mrb[0].mxu0
          %v351 = vadd.f32 0.0, %v350
          %v352 = vpop.f32.mrb[0].mxu0
          %353 = vmatprep.mubr.f32.mxu0 %v278
          %354 = vmatmul.mubr.f32.gmra.mrb[0].mxu0 %v238
          %v355 = vpop.f32.mrb[0].mxu0
          %v356 = vadd.f32 0.0, %v355
          %v357 = vpop.f32.mrb[0].mxu0
          %358 = vdwg.mxu0
          %s359 = smul.u32 %s203, 16
          %s360 = scalar_lea.vmem [#allocation2], %s359
          %vm361 = vcmask 1031168
          %362 = vst.msk [vmem:[%s360] sm:$0xff] %vm361, %v351
          %363 = vst.msk [vmem:[%s360 + $0x8] sm:$0xff] %vm361, %v356
        $region45: #{gncnn_forward.12} parent=31 // loop_footer
          %s207 = sadd.s32 1, %s203
        $region46: #{gncnn_forward.12} parent=31 // loop_footer_branch
          %202 = sbr.rel target = $region42
        $region47: #{gncnn_forward.12} parent=31 // loop_exit
          _
        loop: start=0, step=1, limit=126
        $region48: #{gncnn_forward.12} parent=31 // loop_pre_header
          _
        $region49: #{gncnn_forward.12} parent=31 // loop_header
          %s365 = sphi 0, %s369
          %p366 = scmp.ge.s32.totalorder %s365, 126
        $region50: #{gncnn_forward.12} parent=31 // loop_header_branch
          %368 = sbr.rel (%p366) target = $region54
        $region51: #{gncnn_forward.12} parent=31 // loop_body
          %s370 = smul.u32 %s365, 2
          %s371 = ssub.s32 %s370, 1
          %p372 = scmp.gt.s32.totalorder %s371, 0
          %s373 = scalar_select %p372, %s371, 0
          %p374 = scmp.lt.s32.totalorder %s373, 251
          %s375 = scalar_select %p374, %s373, 251
          %p376 = scmp.ge.s32.totalorder %s371, 0
          %p377 = scmp.lt.s32.totalorder %s371, 252
          %p378 = pnand %p376, %p377
          %p379 = pneg %p378
          %s380 = scalar_select %p379, 1, 0
          %s381 = scvt.s32.f32 %s380
          %s382 = smul.u32 %s375, 16
          %s383 = scalar_lea.vmem [#allocation2], %s382
          %v384 = vld [vmem:[%s383] sm:$0xff]
          %v385 = vld [vmem:[%s383 + $0x8] sm:$0xff]
          %v386 = vstv %s381
          %v387 = vmul.f32 %v384, %v386
          %v388 = vmul.f32 %v385, %v386
          %v389 = vadd.f32 %v387, 0.0
          %v390 = vadd.f32 %v388, 0.0
          %p391 = scmp.gt.s32.totalorder %s370, 0
          %s392 = scalar_select %p391, %s370, 0
          %p393 = scmp.lt.s32.totalorder %s392, 251
          %s394 = scalar_select %p393, %s392, 251
          %p395 = scmp.ge.s32.totalorder %s370, 0
          %p396 = scmp.lt.s32.totalorder %s370, 252
          %p397 = pnand %p395, %p396
          %p398 = pneg %p397
          %s399 = scalar_select %p398, 1, 0
          %s400 = scvt.s32.f32 %s399
          %s401 = smul.u32 %s394, 16
          %s402 = scalar_lea.vmem [#allocation2], %s401
          %v403 = vld [vmem:[%s402] sm:$0xff]
          %v404 = vld [vmem:[%s402 + $0x8] sm:$0xff]
          %v405 = vstv %s400
          %v406 = vmul.f32 %v403, %v405
          %v407 = vmul.f32 %v404, %v405
          %v408 = vadd.f32 %v389, %v406
          %v409 = vadd.f32 %v390, %v407
          %s410 = sadd.s32 %s370, 1
          %p411 = scmp.gt.s32.totalorder %s410, 0
          %s412 = scalar_select %p411, %s410, 0
          %p413 = scmp.lt.s32.totalorder %s412, 251
          %s414 = scalar_select %p413, %s412, 251
          %p415 = scmp.ge.s32.totalorder %s410, 0
          %p416 = scmp.lt.s32.totalorder %s410, 252
          %p417 = pnand %p415, %p416
          %p418 = pneg %p417
          %s419 = scalar_select %p418, 1, 0
          %s420 = scvt.s32.f32 %s419
          %s421 = smul.u32 %s414, 16
          %s422 = scalar_lea.vmem [#allocation2], %s421
          %v423 = vld [vmem:[%s422] sm:$0xff]
          %v424 = vld [vmem:[%s422 + $0x8] sm:$0xff]
          %v425 = vstv %s420
          %v426 = vmul.f32 %v423, %v425
          %v427 = vmul.f32 %v424, %v425
          %v428 = vadd.f32 %v408, %v426
          %v429 = vadd.f32 %v409, %v427
          %v430 = vmul.f32 %v428, 0.11111111
          %v431 = vmul.f32 %v429, 0.11111111
          %s432 = smul.u32 %s365, 16
          %s433 = scalar_lea.vmem %s199, %s432
          %vm434 = vcmask 1031168
          %435 = vst.msk [vmem:[%s433] sm:$0xff] %vm434, %v430
          %436 = vst.msk [vmem:[%s433 + $0x8] sm:$0xff] %vm434, %v431
        $region52: #{gncnn_forward.12} parent=31 // loop_footer
          %s369 = sadd.s32 1, %s365
        $region53: #{gncnn_forward.12} parent=31 // loop_footer_branch
          %364 = sbr.rel target = $region49
        $region54: #{gncnn_forward.12} parent=31 // loop_exit
          _
        %p437 = scmp.lt.s32.totalorder %s16, 1
        %s438 = scalar_select %p437, %s16, 1
        %s439 = smul.addr %s438, 252
        %s440 = smul.addr %s439, 8
        %s441 = scalar_lea.vmem %s3, %s440
        // Predicated region
        $region55: #{gncnn_forward.12} parent=31 // pred_check
          %p442 = pneg %p102
        $region56: #{gncnn_forward.12} parent=31 // pred_check_branch
          %444 = sbr.rel (%p442) target = $region58
        $region57: #{gncnn_forward.12} parent=31 // pred_region
          _
        $region58: #{gncnn_forward.12} parent=31 // pred_fallthru
          _
      $region32: #{gncnn_forward.12} parent=5 // pred_fallthru
        _
      %p445 = scmp.le.s32.totalorder 2, %s11
      // Predicated region
      $region59: #{gncnn_forward.12} parent=5 // pred_check
        %p446 = pneg %p445
      $region60: #{gncnn_forward.12} parent=5 // pred_check_branch
        %448 = sbr.rel (%p446) target = $region62
      $region61: #{gncnn_forward.12} parent=5 // pred_region
        %s449 = ssub.s32 %s11, 2
        // Predicated region
        $region63: #{gncnn_forward.12} parent=61 // pred_check
          %p450 = pneg %p108
        $region64: #{gncnn_forward.12} parent=61 // pred_check_branch
          %452 = sbr.rel (%p450) target = $region66
        $region65: #{gncnn_forward.12} parent=61 // pred_region
          %p453 = scmp.lt.s32.totalorder %s17, 1
          %s454 = scalar_select %p453, %s17, 1
          %s455 = smul.addr %s454, 252
          %s456 = smul.addr %s455, 8
          %s457 = scalar_lea.vmem %s3, %s456
        $region66: #{gncnn_forward.12} parent=61 // pred_fallthru
          _
      $region62: #{gncnn_forward.12} parent=5 // pred_fallthru
        _
    $region6: #{gncnn_forward.12} parent=1 // loop_footer
      %s15 = sadd.s32 1, %s11
    $region7: #{gncnn_forward.12} parent=1 // loop_footer_branch
      %10 = sbr.rel target = $region3
    $region8: #{gncnn_forward.12} parent=1 // loop_exit
      _
    %458 = vsyncpa [#allocation4], 1
    %s459 = scalar_lea.sflag [#allocation4], 1
    %460 = vsyncpa %s459, 1
    %461 = vsyncpa [#allocation5], 1
    %s462 = scalar_lea.sflag [#allocation5], 1
    %463 = vsyncpa %s462, 1

// kernel: gncnn_forward.11
$region0: #{gncnn_forward.11}
  #allocation0 [shape = 'u32[]', space=smem, size = 0x4, offset = 0x4, fixed_abs, tag = 'smem constant byte address 0x4 - core index']
  #allocation1 [shape = 'u32[144,128]{1,0:T(1,128)}', space=vmem, size = 0x12000, scoped, tag = 'internal scratch']
  %s0 = inlined_call_operand.vmem [shape: f32[2,256,1,256], index: 0, kind: input, shape index: {}]
  %s1 = inlined_call_operand.vmem [shape: f32[5,16,5], index: 1, kind: input, shape index: {}]
  %s2 = inlined_call_operand.vmem [shape: f32[16,1], index: 2, kind: input, shape index: {}]
  %s3 = inlined_call_operand.vmem [shape: f32[2,252,16,252], index: 3, kind: output, shape index: {0}]
  %s4 = inlined_call_operand.vmem [shape: f32[2,1,1], index: 4, kind: output, shape index: {1}]
  %s5 = inlined_call_operand.vmem [shape: f32[2,1,1], index: 5, kind: output, shape index: {2}]
  %6 = xla_tuple %s3, %s4, %s5
  %s7 = sld [smem:[#allocation0]]
  $region68: #{gncnn_forward.11} parent=0
    _
  %s9 = ssub.s32 1, %s7
  %s10 = scalar_select 0, %s9, %s7
  loop: start=0, step=1, limit=4
  $region2: #{gncnn_forward.11} parent=0 // loop_pre_header
    _
  $region3: #{gncnn_forward.11} parent=0 // loop_header
    %s12 = sphi 0, %s16
    %p13 = scmp.ge.s32.totalorder %s12, 4
    %s22 = sphi 0, %s24
    %s25 = sphi 0, %s22
    %s26 = sphi 0, %s25
    %s42 = sphi 0, %s26
    %s46 = sphi 0, %s46
    %s48 = sphi 0, %s46
    %s49 = sphi 0, %s48
    %s63 = sphi 0, %s49
    %s67 = sphi 0, %s67
    %s69 = sphi 0, %s67
    %s70 = sphi 0, %s69
    %s84 = sphi 0, %s70
    %s90 = sphi 0, %s92
    %s93 = sphi 0, %s90
    %s94 = sphi 0, %s93
    %s110 = sphi 0, %s94
    %s116 = sphi 0, %s118
    %s119 = sphi 0, %s116
    %s120 = sphi 0, %s119
    %s136 = sphi 0, %s120
    %s142 = sphi 0, %s144
    %s145 = sphi 0, %s142
    %s146 = sphi 0, %s145
    %s162 = sphi 0, %s146
  $region4: #{gncnn_forward.11} parent=0 // loop_header_branch
    %15 = sbr.rel (%p13) target = $region8
  $region5: #{gncnn_forward.11} parent=0 // loop_body
    %s17 = ssub.s32 %s12, 1
    %s18 = ssub.s32 %s12, 2
    %s19 = sadd.s32 %s12, 1
    %s20 = ssub.s32 %s12, %s19
    %p21 = scmp.eq.s32.totalorder %s20, 0
    %s23 = sadd.s32 %s22, 1
    %s24 = scalar_select %p21, %s22, %s23
    %p27 = pneg %p21
    %p28 = scmp.eq.s32.totalorder %s12, 1
    %p29 = por %p27, %p28
    %p30 = scmp.ne.s32.totalorder %s22, %s25
    %p31 = scmp.eq.s32.totalorder %s12, 0
    %p32 = por %p30, %p31
    %p33 = scmp.ne.s32.totalorder %s22, %s25
    %p34 = scmp.eq.s32.totalorder %s17, 1
    %p35 = por %p33, %p34
    %p36 = scmp.ne.s32.totalorder %s25, %s26
    %p37 = scmp.eq.s32.totalorder %s17, 0
    %p38 = por %p36, %p37
    %p39 = scmp.ne.s32.totalorder %s25, %s26
    %p40 = scmp.eq.s32.totalorder %s18, 1
    %p41 = por %p39, %p40
    %p43 = scmp.ne.s32.totalorder %s26, %s42
    %p44 = scmp.eq.s32.totalorder %s18, 0
    %p45 = por %p43, %p44
    %s47 = sadd.s32 %s46, 1
    %p50 = scmp.eq.s32.totalorder %s12, 1
    %p51 = scmp.ne.s32.totalorder %s46, %s48
    %p52 = scmp.eq.s32.totalorder %s12, 0
    %p53 = por %p51, %p52
    %p54 = scmp.ne.s32.totalorder %s46, %s48
    %p55 = scmp.eq.s32.totalorder %s17, 1
    %p56 = por %p54, %p55
    %p57 = scmp.ne.s32.totalorder %s48, %s49
    %p58 = scmp.eq.s32.totalorder %s17, 0
    %p59 = por %p57, %p58
    %p60 = scmp.ne.s32.totalorder %s48, %s49
    %p61 = scmp.eq.s32.totalorder %s18, 1
    %p62 = por %p60, %p61
    %p64 = scmp.ne.s32.totalorder %s49, %s63
    %p65 = scmp.eq.s32.totalorder %s18, 0
    %p66 = por %p64, %p65
    %s68 = sadd.s32 %s67, 1
    %p71 = scmp.eq.s32.totalorder %s12, 1
    %p72 = scmp.ne.s32.totalorder %s67, %s69
    %p73 = scmp.eq.s32.totalorder %s12, 0
    %p74 = por %p72, %p73
    %p75 = scmp.ne.s32.totalorder %s67, %s69
    %p76 = scmp.eq.s32.totalorder %s17, 1
    %p77 = por %p75, %p76
    %p78 = scmp.ne.s32.totalorder %s69, %s70
    %p79 = scmp.eq.s32.totalorder %s17, 0
    %p80 = por %p78, %p79
    %p81 = scmp.ne.s32.totalorder %s69, %s70
    %p82 = scmp.eq.s32.totalorder %s18, 1
    %p83 = por %p81, %p82
    %p85 = scmp.ne.s32.totalorder %s70, %s84
    %p86 = scmp.eq.s32.totalorder %s18, 0
    %p87 = por %p85, %p86
    %s88 = ssub.s32 %s12, %s19
    %p89 = scmp.eq.s32.totalorder %s88, 0
    %s91 = sadd.s32 %s90, 1
    %s92 = scalar_select %p89, %s90, %s91
    %p95 = pneg %p89
    %p96 = scmp.eq.s32.totalorder %s12, 1
    %p97 = por %p95, %p96
    %p98 = scmp.ne.s32.totalorder %s90, %s93
    %p99 = scmp.eq.s32.totalorder %s12, 0
    %p100 = por %p98, %p99
    %p101 = scmp.ne.s32.totalorder %s90, %s93
    %p102 = scmp.eq.s32.totalorder %s17, 1
    %p103 = por %p101, %p102
    %p104 = scmp.ne.s32.totalorder %s93, %s94
    %p105 = scmp.eq.s32.totalorder %s17, 0
    %p106 = por %p104, %p105
    %p107 = scmp.ne.s32.totalorder %s93, %s94
    %p108 = scmp.eq.s32.totalorder %s18, 1
    %p109 = por %p107, %p108
    %p111 = scmp.ne.s32.totalorder %s94, %s110
    %p112 = scmp.eq.s32.totalorder %s18, 0
    %p113 = por %p111, %p112
    %s114 = ssub.s32 %s12, %s19
    %p115 = scmp.eq.s32.totalorder %s114, 0
    %s117 = sadd.s32 %s116, 1
    %s118 = scalar_select %p115, %s116, %s117
    %p121 = pneg %p115
    %p122 = scmp.eq.s32.totalorder %s12, 1
    %p123 = por %p121, %p122
    %p124 = scmp.ne.s32.totalorder %s116, %s119
    %p125 = scmp.eq.s32.totalorder %s12, 0
    %p126 = por %p124, %p125
    %p127 = scmp.ne.s32.totalorder %s116, %s119
    %p128 = scmp.eq.s32.totalorder %s17, 1
    %p129 = por %p127, %p128
    %p130 = scmp.ne.s32.totalorder %s119, %s120
    %p131 = scmp.eq.s32.totalorder %s17, 0
    %p132 = por %p130, %p131
    %p133 = scmp.ne.s32.totalorder %s119, %s120
    %p134 = scmp.eq.s32.totalorder %s18, 1
    %p135 = por %p133, %p134
    %p137 = scmp.ne.s32.totalorder %s120, %s136
    %p138 = scmp.eq.s32.totalorder %s18, 0
    %p139 = por %p137, %p138
    %s140 = ssub.s32 %s12, %s19
    %p141 = scmp.eq.s32.totalorder %s140, 0
    %s143 = sadd.s32 %s142, 1
    %s144 = scalar_select %p141, %s142, %s143
    %p147 = pneg %p141
    %p148 = scmp.eq.s32.totalorder %s12, 1
    %p149 = por %p147, %p148
    %p150 = scmp.ne.s32.totalorder %s142, %s145
    %p151 = scmp.eq.s32.totalorder %s12, 0
    %p152 = por %p150, %p151
    %p153 = scmp.ne.s32.totalorder %s142, %s145
    %p154 = scmp.eq.s32.totalorder %s17, 1
    %p155 = por %p153, %p154
    %p156 = scmp.ne.s32.totalorder %s145, %s146
    %p157 = scmp.eq.s32.totalorder %s17, 0
    %p158 = por %p156, %p157
    %p159 = scmp.ne.s32.totalorder %s145, %s146
    %p160 = scmp.eq.s32.totalorder %s18, 1
    %p161 = por %p159, %p160
    %p163 = scmp.ne.s32.totalorder %s146, %s162
    %p164 = scmp.eq.s32.totalorder %s18, 0
    %p165 = por %p163, %p164
    %p166 = scmp.le.s32.totalorder 1, %s12
    %p167 = scmp.lt.s32.totalorder %s12, 3
    %p168 = pnand %p166, %p167
    %p169 = pneg %p168
    // Predicated region
    $region9: #{gncnn_forward.11} parent=5 // pred_check
      _
    $region10: #{gncnn_forward.11} parent=5 // pred_check_branch
      %171 = sbr.rel (%p168) target = $region12
    $region11: #{gncnn_forward.11} parent=5 // pred_region
      %s172 = ssub.s32 %s12, 1
      // Predicated region
      $region13: #{gncnn_forward.11} parent=11 // pred_check
        %p173 = pneg %p59
      $region14: #{gncnn_forward.11} parent=11 // pred_check_branch
        %175 = sbr.rel (%p173) target = $region16
      $region15: #{gncnn_forward.11} parent=11 // pred_region
        _
      $region16: #{gncnn_forward.11} parent=11 // pred_fallthru
        _
      // Predicated region
      $region17: #{gncnn_forward.11} parent=11 // pred_check
        %p176 = pneg %p80
      $region18: #{gncnn_forward.11} parent=11 // pred_check_branch
        %178 = sbr.rel (%p176) target = $region20
      $region19: #{gncnn_forward.11} parent=11 // pred_region
        _
      $region20: #{gncnn_forward.11} parent=11 // pred_fallthru
        _
    $region12: #{gncnn_forward.11} parent=5 // pred_fallthru
      _
    %p179 = scmp.lt.s32.totalorder %s12, 2
    // Predicated region
    $region21: #{gncnn_forward.11} parent=5 // pred_check
      %p180 = pneg %p179
    $region22: #{gncnn_forward.11} parent=5 // pred_check_branch
      %182 = sbr.rel (%p180) target = $region24
    $region23: #{gncnn_forward.11} parent=5 // pred_region
      // Predicated region
      $region25: #{gncnn_forward.11} parent=23 // pred_check
        %p183 = pneg %p32
      $region26: #{gncnn_forward.11} parent=23 // pred_check_branch
        %185 = sbr.rel (%p183) target = $region28
      $region27: #{gncnn_forward.11} parent=23 // pred_region
        %p186 = scmp.lt.s32.totalorder %s12, 1
        %s187 = scalar_select %p186, %s12, 1
        %s188 = smul.addr %s187, 512
        %s189 = scalar_lea.vmem %s0, %s188
      $region28: #{gncnn_forward.11} parent=23 // pred_fallthru
        _
    $region24: #{gncnn_forward.11} parent=5 // pred_fallthru
      _
    %p190 = scmp.le.s32.totalorder 1, %s12
    %p191 = scmp.lt.s32.totalorder %s12, 3
    %p192 = pnand %p190, %p191
    %p193 = pneg %p192
    // Predicated region
    $region29: #{gncnn_forward.11} parent=5 // pred_check
      _
    $region30: #{gncnn_forward.11} parent=5 // pred_check_branch
      %195 = sbr.rel (%p192) target = $region32
    $region31: #{gncnn_forward.11} parent=5 // pred_region
      %s196 = ssub.s32 %s12, 1
      %p197 = scmp.lt.s32.totalorder %s17, 1
      %s198 = scalar_select %p197, %s17, 1
      %s199 = smul.addr %s198, 512
      %s200 = scalar_lea.vmem %s0, %s199
      %p201 = pneg %p38
      %p202 = pneg %p35
      %p203 = pneg %p59
      %p204 = pneg %p56
      %p205 = pneg %p80
      %p206 = pneg %p77
      %p207 = pneg %p106
      %p208 = pneg %p103
      %p209 = scmp.lt.s32.totalorder %s17, 1
      %s210 = scalar_select %p209, %s17, 1
      %s211 = smul.addr %s210, 1008
      %s212 = smul.addr %s211, 8
      %s213 = scalar_lea.vmem %s3, %s212
      %p214 = pneg %p132
      %p215 = pneg %p129
      %p216 = scmp.lt.s32.totalorder %s17, 1
      %s217 = scalar_select %p216, %s17, 1
      %s218 = scalar_lea.vmem %s4, %s217
      %p219 = pneg %p158
      %p220 = pneg %p155
      %p221 = scmp.lt.s32.totalorder %s17, 1
      %s222 = scalar_select %p221, %s17, 1
      %s223 = scalar_lea.vmem %s5, %s222
      %p224 = scmp.lt.s32.totalorder %s17, 1
      %s225 = scalar_select %p224, %s17, 1
      %s226 = smul.addr %s225, 512
      %s227 = scalar_lea.vmem %s0, %s226
      %p228 = scmp.lt.s32.totalorder %s17, 1
      %s229 = scalar_select %p228, %s17, 1
      %s230 = smul.addr %s229, 1008
      %s231 = smul.addr %s230, 8
      %s232 = scalar_lea.vmem %s3, %s231
      %p233 = scmp.lt.s32.totalorder %s17, 1
      %s234 = scalar_select %p233, %s17, 1
      %s235 = scalar_lea.vmem %s4, %s234
      %p236 = scmp.lt.s32.totalorder %s17, 1
      %s237 = scalar_select %p236, %s17, 1
      %s238 = scalar_lea.vmem %s5, %s237
      loop: start=0, step=1, limit=252
      $region33: #{gncnn_forward.11} parent=31 // loop_pre_header
        _
      $region34: #{gncnn_forward.11} parent=31 // loop_header
        %s240 = sphi 0, %s244
        %p241 = scmp.ge.s32.totalorder %s240, 252
        %v245 = vphi 0.0, %v1138
        %v246 = vphi 0.0, %v1139
        %v247 = vphi 0.0, %v1140
        %v248 = vphi 0.0, %v1141
        %v249 = vphi 0.0, %v1146
        %v250 = vphi 0.0, %v1147
        %v251 = vphi 0.0, %v1148
        %v252 = vphi 0.0, %v1149
      $region35: #{gncnn_forward.11} parent=31 // loop_header_branch
        %243 = sbr.rel (%p241) target = $region39
      $region36: #{gncnn_forward.11} parent=31 // loop_body
        %s253 = smul.u32 %s240, 2
        %s254 = scalar_lea.vmem %s227, %s253
        %v255 = vld [vmem:[%s254] sm:$0x3]
        %v256 = vld [vmem:[%s1] sm:$0xff]
        %v257 = vld [vmem:[%s1 + $0x8] sm:$0xff]
        %259 = vset.pattern.permute.xlu0 0
        %260 = vperm.xlu0 %259, %v256
        %v261 = vpop.permute.xlu0 %260
        %264 = vset.pattern.permute.xlu0 0
        %265 = vperm.xlu0 %264, %v257
        %v266 = vpop.permute.xlu0 %265
        %v269 = vlaneseq
        %v270 = vshrl.u32 %v269, 7
        %v271 = vsub.s32 0, %v270
        %v272 = vrot.slane %v255, %v271
        %v273 = vlaneseq
        %v274 = vshrl.u32 %v273, 7
        %v275 = vsub.s32 1, %v274
        %v276 = vrot.slane %v255, %v275
        %v279 = vmul.f32 %v261, %v272
        %v280 = vmul.f32 %v261, %v276
        %v281 = vmul.f32 %v266, %v272
        %v282 = vmul.f32 %v266, %v276
        %v283 = vadd.f32 %v279, 0.0
        %v284 = vadd.f32 %v280, 0.0
        %v285 = vadd.f32 %v281, 0.0
        %v286 = vadd.f32 %v282, 0.0
        %287 = vset.pattern.permute.xlu0 1
        %288 = vperm.xlu0 %287, %v256
        %v289 = vpop.permute.xlu0 %288
        %291 = vset.pattern.permute.xlu0 1
        %292 = vperm.xlu0 %291, %v257
        %v293 = vpop.permute.xlu0 %292
        %v295 = vmul.f32 %v289, %v272
        %v296 = vmul.f32 %v289, %v276
        %v297 = vmul.f32 %v293, %v272
        %v298 = vmul.f32 %v293, %v276
        %303 = vrot.lane.b32.xlu0 %v295, 127
        %v304 = vpop.permute.xlu0 %303
        %305 = vrot.lane.b32.xlu0 %v296, 127
        %v306 = vpop.permute.xlu0 %305
        %307 = vrot.lane.b32.xlu0 %v297, 127
        %v308 = vpop.permute.xlu0 %307
        %309 = vrot.lane.b32.xlu0 %v298, 127
        %v310 = vpop.permute.xlu0 %309
        %vm311 = vcmask 1039360
        %v312 = vsel %vm311, %v304, %v306
        %v313 = vsel %vm311, %v308, %v310
        %v318 = vadd.f32 %v283, %v312
        %v319 = vadd.f32 %v284, %v306
        %v320 = vadd.f32 %v285, %v313
        %v321 = vadd.f32 %v286, %v310
        %322 = vset.pattern.permute.xlu0 2
        %323 = vperm.xlu0 %322, %v256
        %v324 = vpop.permute.xlu0 %323
        %326 = vset.pattern.permute.xlu0 2
        %327 = vperm.xlu0 %326, %v257
        %v328 = vpop.permute.xlu0 %327
        %v330 = vmul.f32 %v324, %v272
        %v331 = vmul.f32 %v324, %v276
        %v332 = vmul.f32 %v328, %v272
        %v333 = vmul.f32 %v328, %v276
        %338 = vrot.lane.b32.xlu0 %v330, 126
        %v339 = vpop.permute.xlu0 %338
        %340 = vrot.lane.b32.xlu0 %v331, 126
        %v341 = vpop.permute.xlu0 %340
        %342 = vrot.lane.b32.xlu0 %v332, 126
        %v343 = vpop.permute.xlu0 %342
        %344 = vrot.lane.b32.xlu0 %v333, 126
        %v345 = vpop.permute.xlu0 %344
        %vm346 = vcmask 1031168
        %v347 = vsel %vm346, %v339, %v341
        %v348 = vsel %vm346, %v343, %v345
        %v353 = vadd.f32 %v318, %v347
        %v354 = vadd.f32 %v319, %v341
        %v355 = vadd.f32 %v320, %v348
        %v356 = vadd.f32 %v321, %v345
        %357 = vset.pattern.permute.xlu0 3
        %358 = vperm.xlu0 %357, %v256
        %v359 = vpop.permute.xlu0 %358
        %361 = vset.pattern.permute.xlu0 3
        %362 = vperm.xlu0 %361, %v257
        %v363 = vpop.permute.xlu0 %362
        %v365 = vmul.f32 %v359, %v272
        %v366 = vmul.f32 %v359, %v276
        %v367 = vmul.f32 %v363, %v272
        %v368 = vmul.f32 %v363, %v276
        %373 = vrot.lane.b32.xlu0 %v365, 125
        %v374 = vpop.permute.xlu0 %373
        %375 = vrot.lane.b32.xlu0 %v366, 125
        %v376 = vpop.permute.xlu0 %375
        %377 = vrot.lane.b32.xlu0 %v367, 125
        %v378 = vpop.permute.xlu0 %377
        %379 = vrot.lane.b32.xlu0 %v368, 125
        %v380 = vpop.permute.xlu0 %379
        %vm381 = vcmask 1022976
        %v382 = vsel %vm381, %v374, %v376
        %v383 = vsel %vm381, %v378, %v380
        %v388 = vadd.f32 %v353, %v382
        %v389 = vadd.f32 %v354, %v376
        %v390 = vadd.f32 %v355, %v383
        %v391 = vadd.f32 %v356, %v380
        %392 = vset.pattern.permute.xlu0 4
        %393 = vperm.xlu0 %392, %v256
        %v394 = vpop.permute.xlu0 %393
        %396 = vset.pattern.permute.xlu0 4
        %397 = vperm.xlu0 %396, %v257
        %v398 = vpop.permute.xlu0 %397
        %v400 = vmul.f32 %v394, %v272
        %v401 = vmul.f32 %v394, %v276
        %v402 = vmul.f32 %v398, %v272
        %v403 = vmul.f32 %v398, %v276
        %408 = vrot.lane.b32.xlu0 %v400, 124
        %v409 = vpop.permute.xlu0 %408
        %410 = vrot.lane.b32.xlu0 %v401, 124
        %v411 = vpop.permute.xlu0 %410
        %412 = vrot.lane.b32.xlu0 %v402, 124
        %v413 = vpop.permute.xlu0 %412
        %414 = vrot.lane.b32.xlu0 %v403, 124
        %v415 = vpop.permute.xlu0 %414
        %vm416 = vcmask 1014784
        %v417 = vsel %vm416, %v409, %v411
        %v418 = vsel %vm416, %v413, %v415
        %v423 = vadd.f32 %v388, %v417
        %v424 = vadd.f32 %v389, %v411
        %v425 = vadd.f32 %v390, %v418
        %v426 = vadd.f32 %v391, %v415
        %s427 = sadd.s32 %s240, 1
        %s428 = smul.u32 %s427, 2
        %s429 = scalar_lea.vmem %s227, %s428
        %v430 = vld [vmem:[%s429] sm:$0x3]
        %s431 = scalar_lea.vmem %s1, 16
        %v432 = vld [vmem:[%s431] sm:$0xff]
        %v433 = vld [vmem:[%s431 + $0x8] sm:$0xff]
        %435 = vset.pattern.permute.xlu0 0
        %436 = vperm.xlu0 %435, %v432
        %v437 = vpop.permute.xlu0 %436
        %440 = vset.pattern.permute.xlu0 0
        %441 = vperm.xlu0 %440, %v433
        %v442 = vpop.permute.xlu0 %441
        %v445 = vlaneseq
        %v446 = vshrl.u32 %v445, 7
        %v447 = vsub.s32 0, %v446
        %v448 = vrot.slane %v430, %v447
        %v449 = vlaneseq
        %v450 = vshrl.u32 %v449, 7
        %v451 = vsub.s32 1, %v450
        %v452 = vrot.slane %v430, %v451
        %v455 = vmul.f32 %v437, %v448
        %v456 = vmul.f32 %v437, %v452
        %v457 = vmul.f32 %v442, %v448
        %v458 = vmul.f32 %v442, %v452
        %v459 = vadd.f32 %v423, %v455
        %v460 = vadd.f32 %v424, %v456
        %v461 = vadd.f32 %v425, %v457
        %v462 = vadd.f32 %v426, %v458
        %463 = vset.pattern.permute.xlu0 1
        %464 = vperm.xlu0 %463, %v432
        %v465 = vpop.permute.xlu0 %464
        %467 = vset.pattern.permute.xlu0 1
        %468 = vperm.xlu0 %467, %v433
        %v469 = vpop.permute.xlu0 %468
        %v471 = vmul.f32 %v465, %v448
        %v472 = vmul.f32 %v465, %v452
        %v473 = vmul.f32 %v469, %v448
        %v474 = vmul.f32 %v469, %v452
        %479 = vrot.lane.b32.xlu0 %v471, 127
        %v480 = vpop.permute.xlu0 %479
        %481 = vrot.lane.b32.xlu0 %v472, 127
        %v482 = vpop.permute.xlu0 %481
        %483 = vrot.lane.b32.xlu0 %v473, 127
        %v484 = vpop.permute.xlu0 %483
        %485 = vrot.lane.b32.xlu0 %v474, 127
        %v486 = vpop.permute.xlu0 %485
        %v487 = vsel %vm311, %v480, %v482
        %v488 = vsel %vm311, %v484, %v486
        %v493 = vadd.f32 %v459, %v487
        %v494 = vadd.f32 %v460, %v482
        %v495 = vadd.f32 %v461, %v488
        %v496 = vadd.f32 %v462, %v486
        %497 = vset.pattern.permute.xlu0 2
        %498 = vperm.xlu0 %497, %v432
        %v499 = vpop.permute.xlu0 %498
        %501 = vset.pattern.permute.xlu0 2
        %502 = vperm.xlu0 %501, %v433
        %v503 = vpop.permute.xlu0 %502
        %v505 = vmul.f32 %v499, %v448
        %v506 = vmul.f32 %v499, %v452
        %v507 = vmul.f32 %v503, %v448
        %v508 = vmul.f32 %v503, %v452
        %513 = vrot.lane.b32.xlu0 %v505, 126
        %v514 = vpop.permute.xlu0 %513
        %515 = vrot.lane.b32.xlu0 %v506, 126
        %v516 = vpop.permute.xlu0 %515
        %517 = vrot.lane.b32.xlu0 %v507, 126
        %v518 = vpop.permute.xlu0 %517
        %519 = vrot.lane.b32.xlu0 %v508, 126
        %v520 = vpop.permute.xlu0 %519
        %v521 = vsel %vm346, %v514, %v516
        %v522 = vsel %vm346, %v518, %v520
        %v527 = vadd.f32 %v493, %v521
        %v528 = vadd.f32 %v494, %v516
        %v529 = vadd.f32 %v495, %v522
        %v530 = vadd.f32 %v496, %v520
        %531 = vset.pattern.permute.xlu0 3
        %532 = vperm.xlu0 %531, %v432
        %v533 = vpop.permute.xlu0 %532
        %535 = vset.pattern.permute.xlu0 3
        %536 = vperm.xlu0 %535, %v433
        %v537 = vpop.permute.xlu0 %536
        %v539 = vmul.f32 %v533, %v448
        %v540 = vmul.f32 %v533, %v452
        %v541 = vmul.f32 %v537, %v448
        %v542 = vmul.f32 %v537, %v452
        %547 = vrot.lane.b32.xlu0 %v539, 125
        %v548 = vpop.permute.xlu0 %547
        %549 = vrot.lane.b32.xlu0 %v540, 125
        %v550 = vpop.permute.xlu0 %549
        %551 = vrot.lane.b32.xlu0 %v541, 125
        %v552 = vpop.permute.xlu0 %551
        %553 = vrot.lane.b32.xlu0 %v542, 125
        %v554 = vpop.permute.xlu0 %553
        %v555 = vsel %vm381, %v548, %v550
        %v556 = vsel %vm381, %v552, %v554
        %v561 = vadd.f32 %v527, %v555
        %v562 = vadd.f32 %v528, %v550
        %v563 = vadd.f32 %v529, %v556
        %v564 = vadd.f32 %v530, %v554
        %565 = vset.pattern.permute.xlu0 4
        %566 = vperm.xlu0 %565, %v432
        %v567 = vpop.permute.xlu0 %566
        %569 = vset.pattern.permute.xlu0 4
        %570 = vperm.xlu0 %569, %v433
        %v571 = vpop.permute.xlu0 %570
        %v573 = vmul.f32 %v567, %v448
        %v574 = vmul.f32 %v567, %v452
        %v575 = vmul.f32 %v571, %v448
        %v576 = vmul.f32 %v571, %v452
        %581 = vrot.lane.b32.xlu0 %v573, 124
        %v582 = vpop.permute.xlu0 %581
        %583 = vrot.lane.b32.xlu0 %v574, 124
        %v584 = vpop.permute.xlu0 %583
        %585 = vrot.lane.b32.xlu0 %v575, 124
        %v586 = vpop.permute.xlu0 %585
        %587 = vrot.lane.b32.xlu0 %v576, 124
        %v588 = vpop.permute.xlu0 %587
        %v589 = vsel %vm416, %v582, %v584
        %v590 = vsel %vm416, %v586, %v588
        %v595 = vadd.f32 %v561, %v589
        %v596 = vadd.f32 %v562, %v584
        %v597 = vadd.f32 %v563, %v590
        %v598 = vadd.f32 %v564, %v588
        %s599 = sadd.s32 %s240, 2
        %s600 = smul.u32 %s599, 2
        %s601 = scalar_lea.vmem %s227, %s600
        %v602 = vld [vmem:[%s601] sm:$0x3]
        %s603 = scalar_lea.vmem %s1, 32
        %v604 = vld [vmem:[%s603] sm:$0xff]
        %v605 = vld [vmem:[%s603 + $0x8] sm:$0xff]
        %607 = vset.pattern.permute.xlu0 0
        %608 = vperm.xlu0 %607, %v604
        %v609 = vpop.permute.xlu0 %608
        %612 = vset.pattern.permute.xlu0 0
        %613 = vperm.xlu0 %612, %v605
        %v614 = vpop.permute.xlu0 %613
        %v617 = vlaneseq
        %v618 = vshrl.u32 %v617, 7
        %v619 = vsub.s32 0, %v618
        %v620 = vrot.slane %v602, %v619
        %v621 = vlaneseq
        %v622 = vshrl.u32 %v621, 7
        %v623 = vsub.s32 1, %v622
        %v624 = vrot.slane %v602, %v623
        %v627 = vmul.f32 %v609, %v620
        %v628 = vmul.f32 %v609, %v624
        %v629 = vmul.f32 %v614, %v620
        %v630 = vmul.f32 %v614, %v624
        %v631 = vadd.f32 %v595, %v627
        %v632 = vadd.f32 %v596, %v628
        %v633 = vadd.f32 %v597, %v629
        %v634 = vadd.f32 %v598, %v630
        %635 = vset.pattern.permute.xlu0 1
        %636 = vperm.xlu0 %635, %v604
        %v637 = vpop.permute.xlu0 %636
        %639 = vset.pattern.permute.xlu0 1
        %640 = vperm.xlu0 %639, %v605
        %v641 = vpop.permute.xlu0 %640
        %v643 = vmul.f32 %v637, %v620
        %v644 = vmul.f32 %v637, %v624
        %v645 = vmul.f32 %v641, %v620
        %v646 = vmul.f32 %v641, %v624
        %651 = vrot.lane.b32.xlu0 %v643, 127
        %v652 = vpop.permute.xlu0 %651
        %653 = vrot.lane.b32.xlu0 %v644, 127
        %v654 = vpop.permute.xlu0 %653
        %655 = vrot.lane.b32.xlu0 %v645, 127
        %v656 = vpop.permute.xlu0 %655
        %657 = vrot.lane.b32.xlu0 %v646, 127
        %v658 = vpop.permute.xlu0 %657
        %v659 = vsel %vm311, %v652, %v654
        %v660 = vsel %vm311, %v656, %v658
        %v665 = vadd.f32 %v631, %v659
        %v666 = vadd.f32 %v632, %v654
        %v667 = vadd.f32 %v633, %v660
        %v668 = vadd.f32 %v634, %v658
        %669 = vset.pattern.permute.xlu0 2
        %670 = vperm.xlu0 %669, %v604
        %v671 = vpop.permute.xlu0 %670
        %673 = vset.pattern.permute.xlu0 2
        %674 = vperm.xlu0 %673, %v605
        %v675 = vpop.permute.xlu0 %674
        %v677 = vmul.f32 %v671, %v620
        %v678 = vmul.f32 %v671, %v624
        %v679 = vmul.f32 %v675, %v620
        %v680 = vmul.f32 %v675, %v624
        %685 = vrot.lane.b32.xlu0 %v677, 126
        %v686 = vpop.permute.xlu0 %685
        %687 = vrot.lane.b32.xlu0 %v678, 126
        %v688 = vpop.permute.xlu0 %687
        %689 = vrot.lane.b32.xlu0 %v679, 126
        %v690 = vpop.permute.xlu0 %689
        %691 = vrot.lane.b32.xlu0 %v680, 126
        %v692 = vpop.permute.xlu0 %691
        %v693 = vsel %vm346, %v686, %v688
        %v694 = vsel %vm346, %v690, %v692
        %v699 = vadd.f32 %v665, %v693
        %v700 = vadd.f32 %v666, %v688
        %v701 = vadd.f32 %v667, %v694
        %v702 = vadd.f32 %v668, %v692
        %703 = vset.pattern.permute.xlu0 3
        %704 = vperm.xlu0 %703, %v604
        %v705 = vpop.permute.xlu0 %704
        %707 = vset.pattern.permute.xlu0 3
        %708 = vperm.xlu0 %707, %v605
        %v709 = vpop.permute.xlu0 %708
        %v711 = vmul.f32 %v705, %v620
        %v712 = vmul.f32 %v705, %v624
        %v713 = vmul.f32 %v709, %v620
        %v714 = vmul.f32 %v709, %v624
        %719 = vrot.lane.b32.xlu0 %v711, 125
        %v720 = vpop.permute.xlu0 %719
        %721 = vrot.lane.b32.xlu0 %v712, 125
        %v722 = vpop.permute.xlu0 %721
        %723 = vrot.lane.b32.xlu0 %v713, 125
        %v724 = vpop.permute.xlu0 %723
        %725 = vrot.lane.b32.xlu0 %v714, 125
        %v726 = vpop.permute.xlu0 %725
        %v727 = vsel %vm381, %v720, %v722
        %v728 = vsel %vm381, %v724, %v726
        %v733 = vadd.f32 %v699, %v727
        %v734 = vadd.f32 %v700, %v722
        %v735 = vadd.f32 %v701, %v728
        %v736 = vadd.f32 %v702, %v726
        %737 = vset.pattern.permute.xlu0 4
        %738 = vperm.xlu0 %737, %v604
        %v739 = vpop.permute.xlu0 %738
        %741 = vset.pattern.permute.xlu0 4
        %742 = vperm.xlu0 %741, %v605
        %v743 = vpop.permute.xlu0 %742
        %v745 = vmul.f32 %v739, %v620
        %v746 = vmul.f32 %v739, %v624
        %v747 = vmul.f32 %v743, %v620
        %v748 = vmul.f32 %v743, %v624
        %753 = vrot.lane.b32.xlu0 %v745, 124
        %v754 = vpop.permute.xlu0 %753
        %755 = vrot.lane.b32.xlu0 %v746, 124
        %v756 = vpop.permute.xlu0 %755
        %757 = vrot.lane.b32.xlu0 %v747, 124
        %v758 = vpop.permute.xlu0 %757
        %759 = vrot.lane.b32.xlu0 %v748, 124
        %v760 = vpop.permute.xlu0 %759
        %v761 = vsel %vm416, %v754, %v756
        %v762 = vsel %vm416, %v758, %v760
        %v767 = vadd.f32 %v733, %v761
        %v768 = vadd.f32 %v734, %v756
        %v769 = vadd.f32 %v735, %v762
        %v770 = vadd.f32 %v736, %v760
        %s771 = sadd.s32 %s240, 3
        %s772 = smul.u32 %s771, 2
        %s773 = scalar_lea.vmem %s227, %s772
        %v774 = vld [vmem:[%s773] sm:$0x3]
        %s775 = scalar_lea.vmem %s1, 48
        %v776 = vld [vmem:[%s775] sm:$0xff]
        %v777 = vld [vmem:[%s775 + $0x8] sm:$0xff]
        %779 = vset.pattern.permute.xlu0 0
        %780 = vperm.xlu0 %779, %v776
        %v781 = vpop.permute.xlu0 %780
        %784 = vset.pattern.permute.xlu0 0
        %785 = vperm.xlu0 %784, %v777
        %v786 = vpop.permute.xlu0 %785
        %v789 = vlaneseq
        %v790 = vshrl.u32 %v789, 7
        %v791 = vsub.s32 0, %v790
        %v792 = vrot.slane %v774, %v791
        %v793 = vlaneseq
        %v794 = vshrl.u32 %v793, 7
        %v795 = vsub.s32 1, %v794
        %v796 = vrot.slane %v774, %v795
        %v799 = vmul.f32 %v781, %v792
        %v800 = vmul.f32 %v781, %v796
        %v801 = vmul.f32 %v786, %v792
        %v802 = vmul.f32 %v786, %v796
        %v803 = vadd.f32 %v767, %v799
        %v804 = vadd.f32 %v768, %v800
        %v805 = vadd.f32 %v769, %v801
        %v806 = vadd.f32 %v770, %v802
        %807 = vset.pattern.permute.xlu0 1
        %808 = vperm.xlu0 %807, %v776
        %v809 = vpop.permute.xlu0 %808
        %811 = vset.pattern.permute.xlu0 1
        %812 = vperm.xlu0 %811, %v777
        %v813 = vpop.permute.xlu0 %812
        %v815 = vmul.f32 %v809, %v792
        %v816 = vmul.f32 %v809, %v796
        %v817 = vmul.f32 %v813, %v792
        %v818 = vmul.f32 %v813, %v796
        %823 = vrot.lane.b32.xlu0 %v815, 127
        %v824 = vpop.permute.xlu0 %823
        %825 = vrot.lane.b32.xlu0 %v816, 127
        %v826 = vpop.permute.xlu0 %825
        %827 = vrot.lane.b32.xlu0 %v817, 127
        %v828 = vpop.permute.xlu0 %827
        %829 = vrot.lane.b32.xlu0 %v818, 127
        %v830 = vpop.permute.xlu0 %829
        %v831 = vsel %vm311, %v824, %v826
        %v832 = vsel %vm311, %v828, %v830
        %v837 = vadd.f32 %v803, %v831
        %v838 = vadd.f32 %v804, %v826
        %v839 = vadd.f32 %v805, %v832
        %v840 = vadd.f32 %v806, %v830
        %841 = vset.pattern.permute.xlu0 2
        %842 = vperm.xlu0 %841, %v776
        %v843 = vpop.permute.xlu0 %842
        %845 = vset.pattern.permute.xlu0 2
        %846 = vperm.xlu0 %845, %v777
        %v847 = vpop.permute.xlu0 %846
        %v849 = vmul.f32 %v843, %v792
        %v850 = vmul.f32 %v843, %v796
        %v851 = vmul.f32 %v847, %v792
        %v852 = vmul.f32 %v847, %v796
        %857 = vrot.lane.b32.xlu0 %v849, 126
        %v858 = vpop.permute.xlu0 %857
        %859 = vrot.lane.b32.xlu0 %v850, 126
        %v860 = vpop.permute.xlu0 %859
        %861 = vrot.lane.b32.xlu0 %v851, 126
        %v862 = vpop.permute.xlu0 %861
        %863 = vrot.lane.b32.xlu0 %v852, 126
        %v864 = vpop.permute.xlu0 %863
        %v865 = vsel %vm346, %v858, %v860
        %v866 = vsel %vm346, %v862, %v864
        %v871 = vadd.f32 %v837, %v865
        %v872 = vadd.f32 %v838, %v860
        %v873 = vadd.f32 %v839, %v866
        %v874 = vadd.f32 %v840, %v864
        %875 = vset.pattern.permute.xlu0 3
        %876 = vperm.xlu0 %875, %v776
        %v877 = vpop.permute.xlu0 %876
        %879 = vset.pattern.permute.xlu0 3
        %880 = vperm.xlu0 %879, %v777
        %v881 = vpop.permute.xlu0 %880
        %v883 = vmul.f32 %v877, %v792
        %v884 = vmul.f32 %v877, %v796
        %v885 = vmul.f32 %v881, %v792
        %v886 = vmul.f32 %v881, %v796
        %891 = vrot.lane.b32.xlu0 %v883, 125
        %v892 = vpop.permute.xlu0 %891
        %893 = vrot.lane.b32.xlu0 %v884, 125
        %v894 = vpop.permute.xlu0 %893
        %895 = vrot.lane.b32.xlu0 %v885, 125
        %v896 = vpop.permute.xlu0 %895
        %897 = vrot.lane.b32.xlu0 %v886, 125
        %v898 = vpop.permute.xlu0 %897
        %v899 = vsel %vm381, %v892, %v894
        %v900 = vsel %vm381, %v896, %v898
        %v905 = vadd.f32 %v871, %v899
        %v906 = vadd.f32 %v872, %v894
        %v907 = vadd.f32 %v873, %v900
        %v908 = vadd.f32 %v874, %v898
        %909 = vset.pattern.permute.xlu0 4
        %910 = vperm.xlu0 %909, %v776
        %v911 = vpop.permute.xlu0 %910
        %913 = vset.pattern.permute.xlu0 4
        %914 = vperm.xlu0 %913, %v777
        %v915 = vpop.permute.xlu0 %914
        %v917 = vmul.f32 %v911, %v792
        %v918 = vmul.f32 %v911, %v796
        %v919 = vmul.f32 %v915, %v792
        %v920 = vmul.f32 %v915, %v796
        %925 = vrot.lane.b32.xlu0 %v917, 124
        %v926 = vpop.permute.xlu0 %925
        %927 = vrot.lane.b32.xlu0 %v918, 124
        %v928 = vpop.permute.xlu0 %927
        %929 = vrot.lane.b32.xlu0 %v919, 124
        %v930 = vpop.permute.xlu0 %929
        %931 = vrot.lane.b32.xlu0 %v920, 124
        %v932 = vpop.permute.xlu0 %931
        %v933 = vsel %vm416, %v926, %v928
        %v934 = vsel %vm416, %v930, %v932
        %v939 = vadd.f32 %v905, %v933
        %v940 = vadd.f32 %v906, %v928
        %v941 = vadd.f32 %v907, %v934
        %v942 = vadd.f32 %v908, %v932
        %s943 = sadd.s32 %s240, 4
        %s944 = smul.u32 %s943, 2
        %s945 = scalar_lea.vmem %s227, %s944
        %v946 = vld [vmem:[%s945] sm:$0x3]
        %s947 = scalar_lea.vmem %s1, 64
        %v948 = vld [vmem:[%s947] sm:$0xff]
        %v949 = vld [vmem:[%s947 + $0x8] sm:$0xff]
        %951 = vset.pattern.permute.xlu0 0
        %952 = vperm.xlu0 %951, %v948
        %v953 = vpop.permute.xlu0 %952
        %956 = vset.pattern.permute.xlu0 0
        %957 = vperm.xlu0 %956, %v949
        %v958 = vpop.permute.xlu0 %957
        %v961 = vlaneseq
        %v962 = vshrl.u32 %v961, 7
        %v963 = vsub.s32 0, %v962
        %v964 = vrot.slane %v946, %v963
        %v965 = vlaneseq
        %v966 = vshrl.u32 %v965, 7
        %v967 = vsub.s32 1, %v966
        %v968 = vrot.slane %v946, %v967
        %v971 = vmul.f32 %v953, %v964
        %v972 = vmul.f32 %v953, %v968
        %v973 = vmul.f32 %v958, %v964
        %v974 = vmul.f32 %v958, %v968
        %v975 = vadd.f32 %v939, %v971
        %v976 = vadd.f32 %v940, %v972
        %v977 = vadd.f32 %v941, %v973
        %v978 = vadd.f32 %v942, %v974
        %979 = vset.pattern.permute.xlu0 1
        %980 = vperm.xlu0 %979, %v948
        %v981 = vpop.permute.xlu0 %980
        %983 = vset.pattern.permute.xlu0 1
        %984 = vperm.xlu0 %983, %v949
        %v985 = vpop.permute.xlu0 %984
        %v987 = vmul.f32 %v981, %v964
        %v988 = vmul.f32 %v981, %v968
        %v989 = vmul.f32 %v985, %v964
        %v990 = vmul.f32 %v985, %v968
        %995 = vrot.lane.b32.xlu0 %v987, 127
        %v996 = vpop.permute.xlu0 %995
        %997 = vrot.lane.b32.xlu0 %v988, 127
        %v998 = vpop.permute.xlu0 %997
        %999 = vrot.lane.b32.xlu0 %v989, 127
        %v1000 = vpop.permute.xlu0 %999
        %1001 = vrot.lane.b32.xlu0 %v990, 127
        %v1002 = vpop.permute.xlu0 %1001
        %v1003 = vsel %vm311, %v996, %v998
        %v1004 = vsel %vm311, %v1000, %v1002
        %v1009 = vadd.f32 %v975, %v1003
        %v1010 = vadd.f32 %v976, %v998
        %v1011 = vadd.f32 %v977, %v1004
        %v1012 = vadd.f32 %v978, %v1002
        %1013 = vset.pattern.permute.xlu0 2
        %1014 = vperm.xlu0 %1013, %v948
        %v1015 = vpop.permute.xlu0 %1014
        %1017 = vset.pattern.permute.xlu0 2
        %1018 = vperm.xlu0 %1017, %v949
        %v1019 = vpop.permute.xlu0 %1018
        %v1021 = vmul.f32 %v1015, %v964
        %v1022 = vmul.f32 %v1015, %v968
        %v1023 = vmul.f32 %v1019, %v964
        %v1024 = vmul.f32 %v1019, %v968
        %1029 = vrot.lane.b32.xlu0 %v1021, 126
        %v1030 = vpop.permute.xlu0 %1029
        %1031 = vrot.lane.b32.xlu0 %v1022, 126
        %v1032 = vpop.permute.xlu0 %1031
        %1033 = vrot.lane.b32.xlu0 %v1023, 126
        %v1034 = vpop.permute.xlu0 %1033
        %1035 = vrot.lane.b32.xlu0 %v1024, 126
        %v1036 = vpop.permute.xlu0 %1035
        %v1037 = vsel %vm346, %v1030, %v1032
        %v1038 = vsel %vm346, %v1034, %v1036
        %v1043 = vadd.f32 %v1009, %v1037
        %v1044 = vadd.f32 %v1010, %v1032
        %v1045 = vadd.f32 %v1011, %v1038
        %v1046 = vadd.f32 %v1012, %v1036
        %1047 = vset.pattern.permute.xlu0 3
        %1048 = vperm.xlu0 %1047, %v948
        %v1049 = vpop.permute.xlu0 %1048
        %1051 = vset.pattern.permute.xlu0 3
        %1052 = vperm.xlu0 %1051, %v949
        %v1053 = vpop.permute.xlu0 %1052
        %v1055 = vmul.f32 %v1049, %v964
        %v1056 = vmul.f32 %v1049, %v968
        %v1057 = vmul.f32 %v1053, %v964
        %v1058 = vmul.f32 %v1053, %v968
        %1063 = vrot.lane.b32.xlu0 %v1055, 125
        %v1064 = vpop.permute.xlu0 %1063
        %1065 = vrot.lane.b32.xlu0 %v1056, 125
        %v1066 = vpop.permute.xlu0 %1065
        %1067 = vrot.lane.b32.xlu0 %v1057, 125
        %v1068 = vpop.permute.xlu0 %1067
        %1069 = vrot.lane.b32.xlu0 %v1058, 125
        %v1070 = vpop.permute.xlu0 %1069
        %v1071 = vsel %vm381, %v1064, %v1066
        %v1072 = vsel %vm381, %v1068, %v1070
        %v1077 = vadd.f32 %v1043, %v1071
        %v1078 = vadd.f32 %v1044, %v1066
        %v1079 = vadd.f32 %v1045, %v1072
        %v1080 = vadd.f32 %v1046, %v1070
        %1081 = vset.pattern.permute.xlu0 4
        %1082 = vperm.xlu0 %1081, %v948
        %v1083 = vpop.permute.xlu0 %1082
        %1085 = vset.pattern.permute.xlu0 4
        %1086 = vperm.xlu0 %1085, %v949
        %v1087 = vpop.permute.xlu0 %1086
        %v1089 = vmul.f32 %v1083, %v964
        %v1090 = vmul.f32 %v1083, %v968
        %v1091 = vmul.f32 %v1087, %v964
        %v1092 = vmul.f32 %v1087, %v968
        %1097 = vrot.lane.b32.xlu0 %v1089, 124
        %v1098 = vpop.permute.xlu0 %1097
        %1099 = vrot.lane.b32.xlu0 %v1090, 124
        %v1100 = vpop.permute.xlu0 %1099
        %1101 = vrot.lane.b32.xlu0 %v1091, 124
        %v1102 = vpop.permute.xlu0 %1101
        %1103 = vrot.lane.b32.xlu0 %v1092, 124
        %v1104 = vpop.permute.xlu0 %1103
        %v1105 = vsel %vm416, %v1098, %v1100
        %v1106 = vsel %vm416, %v1102, %v1104
        %v1111 = vadd.f32 %v1077, %v1105
        %v1112 = vadd.f32 %v1078, %v1100
        %v1113 = vadd.f32 %v1079, %v1106
        %v1114 = vadd.f32 %v1080, %v1104
        %v1115 = vld [vmem:[%s2] sm:$0xff]
        %v1116 = vld [vmem:[%s2 + $0x8] sm:$0xff]
        %1118 = vset.pattern.permute.xlu0 0
        %1119 = vperm.xlu0 %1118, %v1115
        %v1120 = vpop.permute.xlu0 %1119
        %1123 = vset.pattern.permute.xlu0 0
        %1124 = vperm.xlu0 %1123, %v1116
        %v1125 = vpop.permute.xlu0 %1124
        %v1127 = vadd.f32 %v1111, %v1120
        %v1128 = vadd.f32 %v1112, %v1120
        %v1129 = vadd.f32 %v1113, %v1125
        %v1130 = vadd.f32 %v1114, %v1125
        %s1131 = smul.u32 %s240, 4
        %s1132 = smul.addr %s1131, 8
        %s1133 = scalar_lea.vmem %s232, %s1132
        %1134 = vst [vmem:[%s1133] sm:$0xff] %v1127
        %1135 = vst.msk [vmem:[%s1133 + $0x8] sm:$0xff] %vm416, %v1128
        %1136 = vst [vmem:[%s1133 + $0x10] sm:$0xff] %v1129
        %1137 = vst.msk [vmem:[%s1133 + $0x18] sm:$0xff] %vm416, %v1130
        %v1138 = vadd.f32 %v245, %v1127
        %v1139 = vadd.f32 %v246, %v1128
        %v1140 = vadd.f32 %v247, %v1129
        %v1141 = vadd.f32 %v248, %v1130
        %v1142 = vmul.f32 %v1127, %v1127
        %v1143 = vmul.f32 %v1128, %v1128
        %v1144 = vmul.f32 %v1129, %v1129
        %v1145 = vmul.f32 %v1130, %v1130
        %v1146 = vadd.f32 %v249, %v1142
        %v1147 = vadd.f32 %v250, %v1143
        %v1148 = vadd.f32 %v251, %v1144
        %v1149 = vadd.f32 %v252, %v1145
      $region37: #{gncnn_forward.11} parent=31 // loop_footer
        %s244 = sadd.s32 1, %s240
      $region38: #{gncnn_forward.11} parent=31 // loop_footer_branch
        %239 = sbr.rel target = $region34
      $region39: #{gncnn_forward.11} parent=31 // loop_exit
        _
      %vm1150 = vcmask 1014784
      %v1151 = vsel %vm1150, %v246, 0.0
      %v1152 = vadd.f32 %v245, %v1151
      %v1153 = vadd.f32 %v1152, %v247
      %v1154 = vsel %vm1150, %v248, 0.0
      %v1155 = vadd.f32 %v1153, %v1154
      %1156 = vadd.xlane.f32.xlu0 %v1155
      %v1157 = vpop.xlane.xlu0 %1156
      %v1158 = vrot.slane %v1157, 4
      %v1159 = vadd.f32 %v1157, %v1158
      %v1160 = vrot.slane %v1159, 2
      %v1161 = vadd.f32 %v1159, %v1160
      %v1162 = vrot.slane %v1161, 1
      %v1163 = vadd.f32 %v1161, %v1162
      %s1164 = vtos %v1163
      %v1165 = vstv %s1164
      %vm1166 = vcmask 0
      %1167 = vst.msk [vmem:[%s235] sm:$0x1] %vm1166, %v1165
      %v1168 = vsel %vm1150, %v250, 0.0
      %v1169 = vadd.f32 %v249, %v1168
      %v1170 = vadd.f32 %v1169, %v251
      %v1171 = vsel %vm1150, %v252, 0.0
      %v1172 = vadd.f32 %v1170, %v1171
      %1173 = vadd.xlane.f32.xlu0 %v1172
      %v1174 = vpop.xlane.xlu0 %1173
      %v1175 = vrot.slane %v1174, 4
      %v1176 = vadd.f32 %v1174, %v1175
      %v1177 = vrot.slane %v1176, 2
      %v1178 = vadd.f32 %v1176, %v1177
      %v1179 = vrot.slane %v1178, 1
      %v1180 = vadd.f32 %v1178, %v1179
      %s1181 = vtos %v1180
      %v1182 = vstv %s1181
      %1183 = vst.msk [vmem:[%s238] sm:$0x1] %vm1166, %v1182
      %p1184 = scmp.lt.s32.totalorder %s17, 1
      %s1185 = scalar_select %p1184, %s17, 1
      %s1186 = smul.addr %s1185, 1008
      %s1187 = smul.addr %s1186, 8
      %s1188 = scalar_lea.vmem %s3, %s1187
      %p1189 = scmp.lt.s32.totalorder %s17, 1
      %s1190 = scalar_select %p1189, %s17, 1
      %s1191 = scalar_lea.vmem %s4, %s1190
      %p1192 = scmp.lt.s32.totalorder %s17, 1
      %s1193 = scalar_select %p1192, %s17, 1
      %s1194 = scalar_lea.vmem %s5, %s1193
      // Predicated region
      $region40: #{gncnn_forward.11} parent=31 // pred_check
        %p1195 = pneg %p103
      $region41: #{gncnn_forward.11} parent=31 // pred_check_branch
        %1197 = sbr.rel (%p1195) target = $region43
      $region42: #{gncnn_forward.11} parent=31 // pred_region
        _
      $region43: #{gncnn_forward.11} parent=31 // pred_fallthru
        _
      // Predicated region
      $region44: #{gncnn_forward.11} parent=31 // pred_check
        %p1198 = pneg %p129
      $region45: #{gncnn_forward.11} parent=31 // pred_check_branch
        %1200 = sbr.rel (%p1198) target = $region47
      $region46: #{gncnn_forward.11} parent=31 // pred_region
        _
      $region47: #{gncnn_forward.11} parent=31 // pred_fallthru
        _
      // Predicated region
      $region48: #{gncnn_forward.11} parent=31 // pred_check
        %p1201 = pneg %p155
      $region49: #{gncnn_forward.11} parent=31 // pred_check_branch
        %1203 = sbr.rel (%p1201) target = $region51
      $region50: #{gncnn_forward.11} parent=31 // pred_region
        _
      $region51: #{gncnn_forward.11} parent=31 // pred_fallthru
        _
    $region32: #{gncnn_forward.11} parent=5 // pred_fallthru
      _
    %p1204 = scmp.le.s32.totalorder 2, %s12
    // Predicated region
    $region52: #{gncnn_forward.11} parent=5 // pred_check
      %p1205 = pneg %p1204
    $region53: #{gncnn_forward.11} parent=5 // pred_check_branch
      %1207 = sbr.rel (%p1205) target = $region55
    $region54: #{gncnn_forward.11} parent=5 // pred_region
      %s1208 = ssub.s32 %s12, 2
      // Predicated region
      $region56: #{gncnn_forward.11} parent=54 // pred_check
        %p1209 = pneg %p109
      $region57: #{gncnn_forward.11} parent=54 // pred_check_branch
        %1211 = sbr.rel (%p1209) target = $region59
      $region58: #{gncnn_forward.11} parent=54 // pred_region
        %p1212 = scmp.lt.s32.totalorder %s18, 1
        %s1213 = scalar_select %p1212, %s18, 1
        %s1214 = smul.addr %s1213, 1008
        %s1215 = smul.addr %s1214, 8
        %s1216 = scalar_lea.vmem %s3, %s1215
      $region59: #{gncnn_forward.11} parent=54 // pred_fallthru
        _
      // Predicated region
      $region60: #{gncnn_forward.11} parent=54 // pred_check
        %p1217 = pneg %p135
      $region61: #{gncnn_forward.11} parent=54 // pred_check_branch
        %1219 = sbr.rel (%p1217) target = $region63
      $region62: #{gncnn_forward.11} parent=54 // pred_region
        %p1220 = scmp.lt.s32.totalorder %s18, 1
        %s1221 = scalar_select %p1220, %s18, 1
        %s1222 = scalar_lea.vmem %s4, %s1221
      $region63: #{gncnn_forward.11} parent=54 // pred_fallthru
        _
      // Predicated region
      $region64: #{gncnn_forward.11} parent=54 // pred_check
        %p1223 = pneg %p161
      $region65: #{gncnn_forward.11} parent=54 // pred_check_branch
        %1225 = sbr.rel (%p1223) target = $region67
      $region66: #{gncnn_forward.11} parent=54 // pred_region
        %p1226 = scmp.lt.s32.totalorder %s18, 1
        %s1227 = scalar_select %p1226, %s18, 1
        %s1228 = scalar_lea.vmem %s5, %s1227
      $region67: #{gncnn_forward.11} parent=54 // pred_fallthru
        _
    $region55: #{gncnn_forward.11} parent=5 // pred_fallthru
      _
  $region6: #{gncnn_forward.11} parent=0 // loop_footer
    %s16 = sadd.s32 1, %s12
  $region7: #{gncnn_forward.11} parent=0 // loop_footer_branch
    %11 = sbr.rel target = $region3
  $region8: #{gncnn_forward.11} parent=0 // loop_exit
    _

// kernel: gncnn_forward.13
$region0: #{gncnn_forward.13}
  #allocation0 [shape = 'u32[]', space=smem, size = 0x4, offset = 0x4, fixed_abs, tag = 'smem constant byte address 0x4 - core index']
  #allocation1 [shape = 'u32[144,128]{1,0:T(1,128)}', space=vmem, size = 0x12000, scoped, tag = 'internal scratch']
  %s0 = inlined_call_operand.vmem [shape: f32[2,126,16,126], index: 0, kind: input, shape index: {}]
  %s1 = inlined_call_operand.vmem [shape: f32[3,16,48], index: 1, kind: input, shape index: {}]
  %s2 = inlined_call_operand.vmem [shape: f32[16,1], index: 2, kind: input, shape index: {}]
  %s3 = inlined_call_operand.vmem [shape: f32[2,124,16,124], index: 3, kind: output, shape index: {0}]
  %s4 = inlined_call_operand.vmem [shape: f32[2,1,1], index: 4, kind: output, shape index: {1}]
  %s5 = inlined_call_operand.vmem [shape: f32[2,1,1], index: 5, kind: output, shape index: {2}]
  %6 = xla_tuple %s3, %s4, %s5
  %s7 = sld [smem:[#allocation0]]
  $region68: #{gncnn_forward.13} parent=0
    _
  %s9 = ssub.s32 1, %s7
  %s10 = scalar_select 0, %s9, %s7
  loop: start=0, step=1, limit=4
  $region2: #{gncnn_forward.13} parent=0 // loop_pre_header
    _
  $region3: #{gncnn_forward.13} parent=0 // loop_header
    %s12 = sphi 0, %s16
    %p13 = scmp.ge.s32.totalorder %s12, 4
    %s22 = sphi 0, %s24
    %s25 = sphi 0, %s22
    %s26 = sphi 0, %s25
    %s42 = sphi 0, %s26
    %s46 = sphi 0, %s46
    %s48 = sphi 0, %s46
    %s49 = sphi 0, %s48
    %s63 = sphi 0, %s49
    %s67 = sphi 0, %s67
    %s69 = sphi 0, %s67
    %s70 = sphi 0, %s69
    %s84 = sphi 0, %s70
    %s90 = sphi 0, %s92
    %s93 = sphi 0, %s90
    %s94 = sphi 0, %s93
    %s110 = sphi 0, %s94
    %s116 = sphi 0, %s118
    %s119 = sphi 0, %s116
    %s120 = sphi 0, %s119
    %s136 = sphi 0, %s120
    %s142 = sphi 0, %s144
    %s145 = sphi 0, %s142
    %s146 = sphi 0, %s145
    %s162 = sphi 0, %s146
  $region4: #{gncnn_forward.13} parent=0 // loop_header_branch
    %15 = sbr.rel (%p13) target = $region8
  $region5: #{gncnn_forward.13} parent=0 // loop_body
    %s17 = ssub.s32 %s12, 1
    %s18 = ssub.s32 %s12, 2
    %s19 = sadd.s32 %s12, 1
    %s20 = ssub.s32 %s12, %s19
    %p21 = scmp.eq.s32.totalorder %s20, 0
    %s23 = sadd.s32 %s22, 1
    %s24 = scalar_select %p21, %s22, %s23
    %p27 = pneg %p21
    %p28 = scmp.eq.s32.totalorder %s12, 1
    %p29 = por %p27, %p28
    %p30 = scmp.ne.s32.totalorder %s22, %s25
    %p31 = scmp.eq.s32.totalorder %s12, 0
    %p32 = por %p30, %p31
    %p33 = scmp.ne.s32.totalorder %s22, %s25
    %p34 = scmp.eq.s32.totalorder %s17, 1
    %p35 = por %p33, %p34
    %p36 = scmp.ne.s32.totalorder %s25, %s26
    %p37 = scmp.eq.s32.totalorder %s17, 0
    %p38 = por %p36, %p37
    %p39 = scmp.ne.s32.totalorder %s25, %s26
    %p40 = scmp.eq.s32.totalorder %s18, 1
    %p41 = por %p39, %p40
    %p43 = scmp.ne.s32.totalorder %s26, %s42
    %p44 = scmp.eq.s32.totalorder %s18, 0
    %p45 = por %p43, %p44
    %s47 = sadd.s32 %s46, 1
    %p50 = scmp.eq.s32.totalorder %s12, 1
    %p51 = scmp.ne.s32.totalorder %s46, %s48
    %p52 = scmp.eq.s32.totalorder %s12, 0
    %p53 = por %p51, %p52
    %p54 = scmp.ne.s32.totalorder %s46, %s48
    %p55 = scmp.eq.s32.totalorder %s17, 1
    %p56 = por %p54, %p55
    %p57 = scmp.ne.s32.totalorder %s48, %s49
    %p58 = scmp.eq.s32.totalorder %s17, 0
    %p59 = por %p57, %p58
    %p60 = scmp.ne.s32.totalorder %s48, %s49
    %p61 = scmp.eq.s32.totalorder %s18, 1
    %p62 = por %p60, %p61
    %p64 = scmp.ne.s32.totalorder %s49, %s63
    %p65 = scmp.eq.s32.totalorder %s18, 0
    %p66 = por %p64, %p65
    %s68 = sadd.s32 %s67, 1
    %p71 = scmp.eq.s32.totalorder %s12, 1
    %p72 = scmp.ne.s32.totalorder %s67, %s69
    %p73 = scmp.eq.s32.totalorder %s12, 0
    %p74 = por %p72, %p73
    %p75 = scmp.ne.s32.totalorder %s67, %s69
    %p76 = scmp.eq.s32.totalorder %s17, 1
    %p77 = por %p75, %p76
    %p78 = scmp.ne.s32.totalorder %s69, %s70
    %p79 = scmp.eq.s32.totalorder %s17, 0
    %p80 = por %p78, %p79
    %p81 = scmp.ne.s32.totalorder %s69, %s70
    %p82 = scmp.eq.s32.totalorder %s18, 1
    %p83 = por %p81, %p82
    %p85 = scmp.ne.s32.totalorder %s70, %s84
    %p86 = scmp.eq.s32.totalorder %s18, 0
    %p87 = por %p85, %p86
    %s88 = ssub.s32 %s12, %s19
    %p89 = scmp.eq.s32.totalorder %s88, 0
    %s91 = sadd.s32 %s90, 1
    %s92 = scalar_select %p89, %s90, %s91
    %p95 = pneg %p89
    %p96 = scmp.eq.s32.totalorder %s12, 1
    %p97 = por %p95, %p96
    %p98 = scmp.ne.s32.totalorder %s90, %s93
    %p99 = scmp.eq.s32.totalorder %s12, 0
    %p100 = por %p98, %p99
    %p101 = scmp.ne.s32.totalorder %s90, %s93
    %p102 = scmp.eq.s32.totalorder %s17, 1
    %p103 = por %p101, %p102
    %p104 = scmp.ne.s32.totalorder %s93, %s94
    %p105 = scmp.eq.s32.totalorder %s17, 0
    %p106 = por %p104, %p105
    %p107 = scmp.ne.s32.totalorder %s93, %s94
    %p108 = scmp.eq.s32.totalorder %s18, 1
    %p109 = por %p107, %p108
    %p111 = scmp.ne.s32.totalorder %s94, %s110
    %p112 = scmp.eq.s32.totalorder %s18, 0
    %p113 = por %p111, %p112
    %s114 = ssub.s32 %s12, %s19
    %p115 = scmp.eq.s32.totalorder %s114, 0
    %s117 = sadd.s32 %s116, 1
    %s118 = scalar_select %p115, %s116, %s117
    %p121 = pneg %p115
    %p122 = scmp.eq.s32.totalorder %s12, 1
    %p123 = por %p121, %p122
    %p124 = scmp.ne.s32.totalorder %s116, %s119
    %p125 = scmp.eq.s32.totalorder %s12, 0
    %p126 = por %p124, %p125
    %p127 = scmp.ne.s32.totalorder %s116, %s119
    %p128 = scmp.eq.s32.totalorder %s17, 1
    %p129 = por %p127, %p128
    %p130 = scmp.ne.s32.totalorder %s119, %s120
    %p131 = scmp.eq.s32.totalorder %s17, 0
    %p132 = por %p130, %p131
    %p133 = scmp.ne.s32.totalorder %s119, %s120
    %p134 = scmp.eq.s32.totalorder %s18, 1
    %p135 = por %p133, %p134
    %p137 = scmp.ne.s32.totalorder %s120, %s136
    %p138 = scmp.eq.s32.totalorder %s18, 0
    %p139 = por %p137, %p138
    %s140 = ssub.s32 %s12, %s19
    %p141 = scmp.eq.s32.totalorder %s140, 0
    %s143 = sadd.s32 %s142, 1
    %s144 = scalar_select %p141, %s142, %s143
    %p147 = pneg %p141
    %p148 = scmp.eq.s32.totalorder %s12, 1
    %p149 = por %p147, %p148
    %p150 = scmp.ne.s32.totalorder %s142, %s145
    %p151 = scmp.eq.s32.totalorder %s12, 0
    %p152 = por %p150, %p151
    %p153 = scmp.ne.s32.totalorder %s142, %s145
    %p154 = scmp.eq.s32.totalorder %s17, 1
    %p155 = por %p153, %p154
    %p156 = scmp.ne.s32.totalorder %s145, %s146
    %p157 = scmp.eq.s32.totalorder %s17, 0
    %p158 = por %p156, %p157
    %p159 = scmp.ne.s32.totalorder %s145, %s146
    %p160 = scmp.eq.s32.totalorder %s18, 1
    %p161 = por %p159, %p160
    %p163 = scmp.ne.s32.totalorder %s146, %s162
    %p164 = scmp.eq.s32.totalorder %s18, 0
    %p165 = por %p163, %p164
    %p166 = scmp.le.s32.totalorder 1, %s12
    %p167 = scmp.lt.s32.totalorder %s12, 3
    %p168 = pnand %p166, %p167
    %p169 = pneg %p168
    // Predicated region
    $region9: #{gncnn_forward.13} parent=5 // pred_check
      _
    $region10: #{gncnn_forward.13} parent=5 // pred_check_branch
      %171 = sbr.rel (%p168) target = $region12
    $region11: #{gncnn_forward.13} parent=5 // pred_region
      %s172 = ssub.s32 %s12, 1
      // Predicated region
      $region13: #{gncnn_forward.13} parent=11 // pred_check
        %p173 = pneg %p59
      $region14: #{gncnn_forward.13} parent=11 // pred_check_branch
        %175 = sbr.rel (%p173) target = $region16
      $region15: #{gncnn_forward.13} parent=11 // pred_region
        _
      $region16: #{gncnn_forward.13} parent=11 // pred_fallthru
        _
      // Predicated region
      $region17: #{gncnn_forward.13} parent=11 // pred_check
        %p176 = pneg %p80
      $region18: #{gncnn_forward.13} parent=11 // pred_check_branch
        %178 = sbr.rel (%p176) target = $region20
      $region19: #{gncnn_forward.13} parent=11 // pred_region
        _
      $region20: #{gncnn_forward.13} parent=11 // pred_fallthru
        _
    $region12: #{gncnn_forward.13} parent=5 // pred_fallthru
      _
    %p179 = scmp.lt.s32.totalorder %s12, 2
    // Predicated region
    $region21: #{gncnn_forward.13} parent=5 // pred_check
      %p180 = pneg %p179
    $region22: #{gncnn_forward.13} parent=5 // pred_check_branch
      %182 = sbr.rel (%p180) target = $region24
    $region23: #{gncnn_forward.13} parent=5 // pred_region
      // Predicated region
      $region25: #{gncnn_forward.13} parent=23 // pred_check
        %p183 = pneg %p32
      $region26: #{gncnn_forward.13} parent=23 // pred_check_branch
        %185 = sbr.rel (%p183) target = $region28
      $region27: #{gncnn_forward.13} parent=23 // pred_region
        %p186 = scmp.lt.s32.totalorder %s12, 1
        %s187 = scalar_select %p186, %s12, 1
        %s188 = smul.addr %s187, 252
        %s189 = smul.addr %s188, 8
        %s190 = scalar_lea.vmem %s0, %s189
      $region28: #{gncnn_forward.13} parent=23 // pred_fallthru
        _
    $region24: #{gncnn_forward.13} parent=5 // pred_fallthru
      _
    %p191 = scmp.le.s32.totalorder 1, %s12
    %p192 = scmp.lt.s32.totalorder %s12, 3
    %p193 = pnand %p191, %p192
    %p194 = pneg %p193
    // Predicated region
    $region29: #{gncnn_forward.13} parent=5 // pred_check
      _
    $region30: #{gncnn_forward.13} parent=5 // pred_check_branch
      %196 = sbr.rel (%p193) target = $region32
    $region31: #{gncnn_forward.13} parent=5 // pred_region
      %s197 = ssub.s32 %s12, 1
      %p198 = scmp.lt.s32.totalorder %s17, 1
      %s199 = scalar_select %p198, %s17, 1
      %s200 = smul.addr %s199, 252
      %s201 = smul.addr %s200, 8
      %s202 = scalar_lea.vmem %s0, %s201
      %p203 = pneg %p38
      %p204 = pneg %p35
      %p205 = pneg %p59
      %p206 = pneg %p56
      %p207 = pneg %p80
      %p208 = pneg %p77
      %p209 = pneg %p106
      %p210 = pneg %p103
      %p211 = scmp.lt.s32.totalorder %s17, 1
      %s212 = scalar_select %p211, %s17, 1
      %s213 = smul.addr %s212, 248
      %s214 = smul.addr %s213, 8
      %s215 = scalar_lea.vmem %s3, %s214
      %p216 = pneg %p132
      %p217 = pneg %p129
      %p218 = scmp.lt.s32.totalorder %s17, 1
      %s219 = scalar_select %p218, %s17, 1
      %s220 = scalar_lea.vmem %s4, %s219
      %p221 = pneg %p158
      %p222 = pneg %p155
      %p223 = scmp.lt.s32.totalorder %s17, 1
      %s224 = scalar_select %p223, %s17, 1
      %s225 = scalar_lea.vmem %s5, %s224
      %p226 = scmp.lt.s32.totalorder %s17, 1
      %s227 = scalar_select %p226, %s17, 1
      %s228 = smul.addr %s227, 252
      %s229 = smul.addr %s228, 8
      %s230 = scalar_lea.vmem %s0, %s229
      %p231 = scmp.lt.s32.totalorder %s17, 1
      %s232 = scalar_select %p231, %s17, 1
      %s233 = smul.addr %s232, 248
      %s234 = smul.addr %s233, 8
      %s235 = scalar_lea.vmem %s3, %s234
      %p236 = scmp.lt.s32.totalorder %s17, 1
      %s237 = scalar_select %p236, %s17, 1
      %s238 = scalar_lea.vmem %s4, %s237
      %p239 = scmp.lt.s32.totalorder %s17, 1
      %s240 = scalar_select %p239, %s17, 1
      %s241 = scalar_lea.vmem %s5, %s240
      loop: start=0, step=1, limit=124
      $region33: #{gncnn_forward.13} parent=31 // loop_pre_header
        _
      $region34: #{gncnn_forward.13} parent=31 // loop_header
        %s243 = sphi 0, %s247
        %p244 = scmp.ge.s32.totalorder %s243, 124
        %v248 = vphi 0.0, %v580
        %v249 = vphi 0.0, %v581
        %v250 = vphi 0.0, %v584
        %v251 = vphi 0.0, %v585
      $region35: #{gncnn_forward.13} parent=31 // loop_header_branch
        %246 = sbr.rel (%p244) target = $region39
      $region36: #{gncnn_forward.13} parent=31 // loop_body
        %s252 = smul.u32 %s243, 16
        %s253 = scalar_lea.vmem %s230, %s252
        %v254 = vld [vmem:[%s253] sm:$0xff]
        %v255 = vld [vmem:[%s253 + $0x8] sm:$0xff]
        %258 = vrot.lane.b32.xlu0 %v254, 127
        %v259 = vpop.permute.xlu0 %258
        %260 = vrot.lane.b32.xlu0 %v255, 127
        %v261 = vpop.permute.xlu0 %260
        %264 = vrot.lane.b32.xlu0 %v254, 126
        %v265 = vpop.permute.xlu0 %264
        %266 = vrot.lane.b32.xlu0 %v255, 126
        %v267 = vpop.permute.xlu0 %266
        %v270 = vld [vmem:[%s1] sm:$0xff]
        %v271 = vld [vmem:[%s1 + $0x8] sm:$0xff]
        %s272 = sadd.s32 %s243, 1
        %s273 = smul.u32 %s272, 16
        %s274 = scalar_lea.vmem %s230, %s273
        %v275 = vld [vmem:[%s274] sm:$0xff]
        %v276 = vld [vmem:[%s274 + $0x8] sm:$0xff]
        %279 = vrot.lane.b32.xlu0 %v275, 127
        %v280 = vpop.permute.xlu0 %279
        %281 = vrot.lane.b32.xlu0 %v276, 127
        %v282 = vpop.permute.xlu0 %281
        %285 = vrot.lane.b32.xlu0 %v275, 126
        %v286 = vpop.permute.xlu0 %285
        %287 = vrot.lane.b32.xlu0 %v276, 126
        %v288 = vpop.permute.xlu0 %287
        %s291 = scalar_lea.vmem %s1, 16
        %v292 = vld [vmem:[%s291] sm:$0xff]
        %v293 = vld [vmem:[%s291 + $0x8] sm:$0xff]
        %vm294 = vcmask 392192
        %v296 = vsel %vm294, %v292, 0
        %v299 = vsel %vm294, %v293, 0
        %301 = vmatprep.subr.mxu0 0.0
        %302 = vmatpush1.msra.mxu0 %v275
        %303 = vmatprep.subr.mxu0 0.0
        %304 = vmatpush1.msra.mxu0 %v276
        %305 = vmatprep.subr.mxu0 0.0
        %306 = vmatpush1.msra.mxu0 %v280
        %307 = vmatprep.subr.mxu0 0.0
        %308 = vmatpush1.msra.mxu0 %v282
        %309 = vmatprep.subr.mxu0 0.0
        %310 = vmatpush1.msra.mxu0 %v286
        %311 = vmatprep.subr.mxu0 0.0
        %312 = vmatpush1.msra.mxu0 %v288
        %313 = vmatprep.subr.mxu0 0.0
        %314 = vmatpush1.msra.mxu0 0.0
        %315 = vmatprep.subr.mxu0 0.0
        %316 = vmatpush1.msra.mxu0 0.0
        %317 = vmatprep.subr.mxu0 0.0
        %318 = vmatpush1.msra.mxu0 0.0
        %319 = vmatprep.subr.mxu0 0.0
        %320 = vmatpush1.msra.mxu0 0.0
        %321 = vmatprep.subr.mxu0 0.0
        %322 = vmatpush1.msra.mxu0 0.0
        %323 = vmatprep.subr.mxu0 0.0
        %324 = vmatpush1.msra.mxu0 0.0
        %325 = vmatprep.subr.mxu0 0.0
        %326 = vmatpush1.msra.mxu0 0.0
        %327 = vmatprep.subr.mxu0 0.0
        %328 = vmatpush1.msra.mxu0 0.0
        %329 = vmatprep.subr.mxu0 0.0
        %330 = vmatpush1.msra.mxu0 0.0
        %331 = vmatprep.subr.mxu0 0.0
        %332 = vmatpush1.msra.mxu0 0.0
        %333 = vmatprep.subr.mxu0 0.0
        %334 = vmatpush1.msra.mxu0 0.0
        %335 = vmatprep.subr.mxu0 0.0
        %336 = vmatpush1.msra.mxu0 0.0
        %337 = vmatprep.subr.mxu0 0.0
        %338 = vmatpush1.msra.mxu0 0.0
        %339 = vmatprep.subr.mxu0 0.0
        %340 = vmatpush1.msra.mxu0 0.0
        %341 = vmatprep.subr.mxu0 0.0
        %342 = vmatpush1.msra.mxu0 0.0
        %343 = vmatprep.subr.mxu0 0.0
        %344 = vmatpush1.msra.mxu0 0.0
        %345 = vmatprep.subr.mxu0 0.0
        %346 = vmatpush1.msra.mxu0 0.0
        %347 = vmatprep.subr.mxu0 0.0
        %348 = vmatpush1.msra.mxu0 0.0
        %349 = vmatprep.subr.mxu0 0.0
        %350 = vmatpush1.msra.mxu0 0.0
        %351 = vmatprep.subr.mxu0 0.0
        %352 = vmatpush1.msra.mxu0 0.0
        %353 = vmatprep.subr.mxu0 0.0
        %354 = vmatpush1.msra.mxu0 0.0
        %355 = vmatprep.subr.mxu0 0.0
        %356 = vmatpush1.msra.mxu0 0.0
        %357 = vmatprep.subr.mxu0 0.0
        %358 = vmatpush1.msra.mxu0 0.0
        %359 = vmatprep.subr.mxu0 0.0
        %360 = vmatpush1.msra.mxu0 0.0
        %361 = vmatprep.subr.mxu0 0.0
        %362 = vmatpush1.msra.mxu0 0.0
        %363 = vmatprep.subr.mxu0 0.0
        %364 = vmatpush1.msra.mxu0 0.0
        %365 = vmatprep.mubr.f32.mxu0 0.0
        %366 = vmatmul.mubr.f32.gmra.mrb[0].mxu0 %v296
        %v367 = vpop.f32.mrb[0].mxu0
        %v368 = vadd.f32 0.0, %v367
        %v369 = vpop.f32.mrb[0].mxu0
        %370 = vmatprep.mubr.f32.mxu0 0.0
        %371 = vmatmul.mubr.f32.gmra.mrb[0].mxu0 %v299
        %v372 = vpop.f32.mrb[0].mxu0
        %v373 = vadd.f32 0.0, %v372
        %v374 = vpop.f32.mrb[0].mxu0
        %375 = vdwg.mxu0
        %v377 = vsel %vm294, %v270, 0
        %v380 = vsel %vm294, %v271, 0
        %382 = vmatprep.subr.mxu0 0.0
        %383 = vmatpush1.msra.mxu0 %v254
        %384 = vmatprep.subr.mxu0 0.0
        %385 = vmatpush1.msra.mxu0 %v255
        %386 = vmatprep.subr.mxu0 0.0
        %387 = vmatpush1.msra.mxu0 %v259
        %388 = vmatprep.subr.mxu0 0.0
        %389 = vmatpush1.msra.mxu0 %v261
        %390 = vmatprep.subr.mxu0 0.0
        %391 = vmatpush1.msra.mxu0 %v265
        %392 = vmatprep.subr.mxu0 0.0
        %393 = vmatpush1.msra.mxu0 %v267
        %394 = vmatprep.subr.mxu0 0.0
        %395 = vmatpush1.msra.mxu0 0.0
        %396 = vmatprep.subr.mxu0 0.0
        %397 = vmatpush1.msra.mxu0 0.0
        %398 = vmatprep.subr.mxu0 0.0
        %399 = vmatpush1.msra.mxu0 0.0
        %400 = vmatprep.subr.mxu0 0.0
        %401 = vmatpush1.msra.mxu0 0.0
        %402 = vmatprep.subr.mxu0 0.0
        %403 = vmatpush1.msra.mxu0 0.0
        %404 = vmatprep.subr.mxu0 0.0
        %405 = vmatpush1.msra.mxu0 0.0
        %406 = vmatprep.subr.mxu0 0.0
        %407 = vmatpush1.msra.mxu0 0.0
        %408 = vmatprep.subr.mxu0 0.0
        %409 = vmatpush1.msra.mxu0 0.0
        %410 = vmatprep.subr.mxu0 0.0
        %411 = vmatpush1.msra.mxu0 0.0
        %412 = vmatprep.subr.mxu0 0.0
        %413 = vmatpush1.msra.mxu0 0.0
        %414 = vmatprep.subr.mxu0 0.0
        %415 = vmatpush1.msra.mxu0 0.0
        %416 = vmatprep.subr.mxu0 0.0
        %417 = vmatpush1.msra.mxu0 0.0
        %418 = vmatprep.subr.mxu0 0.0
        %419 = vmatpush1.msra.mxu0 0.0
        %420 = vmatprep.subr.mxu0 0.0
        %421 = vmatpush1.msra.mxu0 0.0
        %422 = vmatprep.subr.mxu0 0.0
        %423 = vmatpush1.msra.mxu0 0.0
        %424 = vmatprep.subr.mxu0 0.0
        %425 = vmatpush1.msra.mxu0 0.0
        %426 = vmatprep.subr.mxu0 0.0
        %427 = vmatpush1.msra.mxu0 0.0
        %428 = vmatprep.subr.mxu0 0.0
        %429 = vmatpush1.msra.mxu0 0.0
        %430 = vmatprep.subr.mxu0 0.0
        %431 = vmatpush1.msra.mxu0 0.0
        %432 = vmatprep.subr.mxu0 0.0
        %433 = vmatpush1.msra.mxu0 0.0
        %434 = vmatprep.subr.mxu0 0.0
        %435 = vmatpush1.msra.mxu0 0.0
        %436 = vmatprep.subr.mxu0 0.0
        %437 = vmatpush1.msra.mxu0 0.0
        %438 = vmatprep.subr.mxu0 0.0
        %439 = vmatpush1.msra.mxu0 0.0
        %440 = vmatprep.subr.mxu0 0.0
        %441 = vmatpush1.msra.mxu0 0.0
        %442 = vmatprep.subr.mxu0 0.0
        %443 = vmatpush1.msra.mxu0 0.0
        %444 = vmatprep.subr.mxu0 0.0
        %445 = vmatpush1.msra.mxu0 0.0
        %446 = vmatprep.mubr.f32.mxu0 0.0
        %447 = vmatmul.mubr.f32.gmra.mrb[0].mxu0 %v377
        %v448 = vpop.f32.mrb[0].mxu0
        %v449 = vadd.f32 %v368, %v448
        %v450 = vpop.f32.mrb[0].mxu0
        %451 = vmatprep.mubr.f32.mxu0 0.0
        %452 = vmatmul.mubr.f32.gmra.mrb[0].mxu0 %v380
        %v453 = vpop.f32.mrb[0].mxu0
        %v454 = vadd.f32 %v373, %v453
        %v455 = vpop.f32.mrb[0].mxu0
        %456 = vdwg.mxu0
        %s457 = sadd.s32 %s243, 2
        %s458 = smul.u32 %s457, 16
        %s459 = scalar_lea.vmem %s230, %s458
        %v460 = vld [vmem:[%s459] sm:$0xff]
        %v461 = vld [vmem:[%s459 + $0x8] sm:$0xff]
        %464 = vrot.lane.b32.xlu0 %v460, 127
        %v465 = vpop.permute.xlu0 %464
        %466 = vrot.lane.b32.xlu0 %v461, 127
        %v467 = vpop.permute.xlu0 %466
        %470 = vrot.lane.b32.xlu0 %v460, 126
        %v471 = vpop.permute.xlu0 %470
        %472 = vrot.lane.b32.xlu0 %v461, 126
        %v473 = vpop.permute.xlu0 %472
        %s476 = scalar_lea.vmem %s1, 32
        %v477 = vld [vmem:[%s476] sm:$0xff]
        %v478 = vld [vmem:[%s476 + $0x8] sm:$0xff]
        %v480 = vsel %vm294, %v477, 0
        %v483 = vsel %vm294, %v478, 0
        %485 = vmatprep.subr.mxu0 0.0
        %486 = vmatpush1.msra.mxu0 %v460
        %487 = vmatprep.subr.mxu0 0.0
        %488 = vmatpush1.msra.mxu0 %v461
        %489 = vmatprep.subr.mxu0 0.0
        %490 = vmatpush1.msra.mxu0 %v465
        %491 = vmatprep.subr.mxu0 0.0
        %492 = vmatpush1.msra.mxu0 %v467
        %493 = vmatprep.subr.mxu0 0.0
        %494 = vmatpush1.msra.mxu0 %v471
        %495 = vmatprep.subr.mxu0 0.0
        %496 = vmatpush1.msra.mxu0 %v473
        %497 = vmatprep.subr.mxu0 0.0
        %498 = vmatpush1.msra.mxu0 0.0
        %499 = vmatprep.subr.mxu0 0.0
        %500 = vmatpush1.msra.mxu0 0.0
        %501 = vmatprep.subr.mxu0 0.0
        %502 = vmatpush1.msra.mxu0 0.0
        %503 = vmatprep.subr.mxu0 0.0
        %504 = vmatpush1.msra.mxu0 0.0
        %505 = vmatprep.subr.mxu0 0.0
        %506 = vmatpush1.msra.mxu0 0.0
        %507 = vmatprep.subr.mxu0 0.0
        %508 = vmatpush1.msra.mxu0 0.0
        %509 = vmatprep.subr.mxu0 0.0
        %510 = vmatpush1.msra.mxu0 0.0
        %511 = vmatprep.subr.mxu0 0.0
        %512 = vmatpush1.msra.mxu0 0.0
        %513 = vmatprep.subr.mxu0 0.0
        %514 = vmatpush1.msra.mxu0 0.0
        %515 = vmatprep.subr.mxu0 0.0
        %516 = vmatpush1.msra.mxu0 0.0
        %517 = vmatprep.subr.mxu0 0.0
        %518 = vmatpush1.msra.mxu0 0.0
        %519 = vmatprep.subr.mxu0 0.0
        %520 = vmatpush1.msra.mxu0 0.0
        %521 = vmatprep.subr.mxu0 0.0
        %522 = vmatpush1.msra.mxu0 0.0
        %523 = vmatprep.subr.mxu0 0.0
        %524 = vmatpush1.msra.mxu0 0.0
        %525 = vmatprep.subr.mxu0 0.0
        %526 = vmatpush1.msra.mxu0 0.0
        %527 = vmatprep.subr.mxu0 0.0
        %528 = vmatpush1.msra.mxu0 0.0
        %529 = vmatprep.subr.mxu0 0.0
        %530 = vmatpush1.msra.mxu0 0.0
        %531 = vmatprep.subr.mxu0 0.0
        %532 = vmatpush1.msra.mxu0 0.0
        %533 = vmatprep.subr.mxu0 0.0
        %534 = vmatpush1.msra.mxu0 0.0
        %535 = vmatprep.subr.mxu0 0.0
        %536 = vmatpush1.msra.mxu0 0.0
        %537 = vmatprep.subr.mxu0 0.0
        %538 = vmatpush1.msra.mxu0 0.0
        %539 = vmatprep.subr.mxu0 0.0
        %540 = vmatpush1.msra.mxu0 0.0
        %541 = vmatprep.subr.mxu0 0.0
        %542 = vmatpush1.msra.mxu0 0.0
        %543 = vmatprep.subr.mxu0 0.0
        %544 = vmatpush1.msra.mxu0 0.0
        %545 = vmatprep.subr.mxu0 0.0
        %546 = vmatpush1.msra.mxu0 0.0
        %547 = vmatprep.subr.mxu0 0.0
        %548 = vmatpush1.msra.mxu0 0.0
        %549 = vmatprep.mubr.f32.mxu0 0.0
        %550 = vmatmul.mubr.f32.gmra.mrb[0].mxu0 %v480
        %v551 = vpop.f32.mrb[0].mxu0
        %v552 = vadd.f32 0.0, %v551
        %v553 = vpop.f32.mrb[0].mxu0
        %554 = vmatprep.mubr.f32.mxu0 0.0
        %555 = vmatmul.mubr.f32.gmra.mrb[0].mxu0 %v483
        %v556 = vpop.f32.mrb[0].mxu0
        %v557 = vadd.f32 0.0, %v556
        %v558 = vpop.f32.mrb[0].mxu0
        %559 = vdwg.mxu0
        %v560 = vadd.f32 %v449, %v552
        %v561 = vadd.f32 %v454, %v557
        %v562 = vld [vmem:[%s2] sm:$0xff]
        %v563 = vld [vmem:[%s2 + $0x8] sm:$0xff]
        %565 = vset.pattern.permute.xlu0 0
        %566 = vperm.xlu0 %565, %v562
        %v567 = vpop.permute.xlu0 %566
        %570 = vset.pattern.permute.xlu0 0
        %571 = vperm.xlu0 %570, %v563
        %v572 = vpop.permute.xlu0 %571
        %v574 = vadd.f32 %v560, %v567
        %v575 = vadd.f32 %v561, %v572
        %s576 = scalar_lea.vmem %s235, %s252
        %vm577 = vcmask 1014784
        %578 = vst.msk [vmem:[%s576] sm:$0xff] %vm577, %v574
        %579 = vst.msk [vmem:[%s576 + $0x8] sm:$0xff] %vm577, %v575
        %v580 = vadd.f32 %v248, %v574
        %v581 = vadd.f32 %v249, %v575
        %v582 = vmul.f32 %v574, %v574
        %v583 = vmul.f32 %v575, %v575
        %v584 = vadd.f32 %v250, %v582
        %v585 = vadd.f32 %v251, %v583
      $region37: #{gncnn_forward.13} parent=31 // loop_footer
        %s247 = sadd.s32 1, %s243
      $region38: #{gncnn_forward.13} parent=31 // loop_footer_branch
        %242 = sbr.rel target = $region34
      $region39: #{gncnn_forward.13} parent=31 // loop_exit
        _
      %vm586 = vcmask 1014784
      %v587 = vsel %vm586, %v248, 0.0
      %v588 = vsel %vm586, %v249, 0.0
      %v589 = vadd.f32 %v587, %v588
      %590 = vadd.xlane.f32.xlu0 %v589
      %v591 = vpop.xlane.xlu0 %590
      %v592 = vrot.slane %v591, 4
      %v593 = vadd.f32 %v591, %v592
      %v594 = vrot.slane %v593, 2
      %v595 = vadd.f32 %v593, %v594
      %v596 = vrot.slane %v595, 1
      %v597 = vadd.f32 %v595, %v596
      %s598 = vtos %v597
      %v599 = vstv %s598
      %vm600 = vcmask 0
      %601 = vst.msk [vmem:[%s238] sm:$0x1] %vm600, %v599
      %v602 = vsel %vm586, %v250, 0.0
      %v603 = vsel %vm586, %v251, 0.0
      %v604 = vadd.f32 %v602, %v603
      %605 = vadd.xlane.f32.xlu0 %v604
      %v606 = vpop.xlane.xlu0 %605
      %v607 = vrot.slane %v606, 4
      %v608 = vadd.f32 %v606, %v607
      %v609 = vrot.slane %v608, 2
      %v610 = vadd.f32 %v608, %v609
      %v611 = vrot.slane %v610, 1
      %v612 = vadd.f32 %v610, %v611
      %s613 = vtos %v612
      %v614 = vstv %s613
      %615 = vst.msk [vmem:[%s241] sm:$0x1] %vm600, %v614
      %p616 = scmp.lt.s32.totalorder %s17, 1
      %s617 = scalar_select %p616, %s17, 1
      %s618 = smul.addr %s617, 248
      %s619 = smul.addr %s618, 8
      %s620 = scalar_lea.vmem %s3, %s619
      %p621 = scmp.lt.s32.totalorder %s17, 1
      %s622 = scalar_select %p621, %s17, 1
      %s623 = scalar_lea.vmem %s4, %s622
      %p624 = scmp.lt.s32.totalorder %s17, 1
      %s625 = scalar_select %p624, %s17, 1
      %s626 = scalar_lea.vmem %s5, %s625
      // Predicated region
      $region40: #{gncnn_forward.13} parent=31 // pred_check
        %p627 = pneg %p103
      $region41: #{gncnn_forward.13} parent=31 // pred_check_branch
        %629 = sbr.rel (%p627) target = $region43
      $region42: #{gncnn_forward.13} parent=31 // pred_region
        _
      $region43: #{gncnn_forward.13} parent=31 // pred_fallthru
        _
      // Predicated region
      $region44: #{gncnn_forward.13} parent=31 // pred_check
        %p630 = pneg %p129
      $region45: #{gncnn_forward.13} parent=31 // pred_check_branch
        %632 = sbr.rel (%p630) target = $region47
      $region46: #{gncnn_forward.13} parent=31 // pred_region
        _
      $region47: #{gncnn_forward.13} parent=31 // pred_fallthru
        _
      // Predicated region
      $region48: #{gncnn_forward.13} parent=31 // pred_check
        %p633 = pneg %p155
      $region49: #{gncnn_forward.13} parent=31 // pred_check_branch
        %635 = sbr.rel (%p633) target = $region51
      $region50: #{gncnn_forward.13} parent=31 // pred_region
        _
      $region51: #{gncnn_forward.13} parent=31 // pred_fallthru
        _
    $region32: #{gncnn_forward.13} parent=5 // pred_fallthru
      _
    %p636 = scmp.le.s32.totalorder 2, %s12
    // Predicated region
    $region52: #{gncnn_forward.13} parent=5 // pred_check
      %p637 = pneg %p636
    $region53: #{gncnn_forward.13} parent=5 // pred_check_branch
      %639 = sbr.rel (%p637) target = $region55
    $region54: #{gncnn_forward.13} parent=5 // pred_region
      %s640 = ssub.s32 %s12, 2
      // Predicated region
      $region56: #{gncnn_forward.13} parent=54 // pred_check
        %p641 = pneg %p109
      $region57: #{gncnn_forward.13} parent=54 // pred_check_branch
        %643 = sbr.rel (%p641) target = $region59
      $region58: #{gncnn_forward.13} parent=54 // pred_region
        %p644 = scmp.lt.s32.totalorder %s18, 1
        %s645 = scalar_select %p644, %s18, 1
        %s646 = smul.addr %s645, 248
        %s647 = smul.addr %s646, 8
        %s648 = scalar_lea.vmem %s3, %s647
      $region59: #{gncnn_forward.13} parent=54 // pred_fallthru
        _
      // Predicated region
      $region60: #{gncnn_forward.13} parent=54 // pred_check
        %p649 = pneg %p135
      $region61: #{gncnn_forward.13} parent=54 // pred_check_branch
        %651 = sbr.rel (%p649) target = $region63
      $region62: #{gncnn_forward.13} parent=54 // pred_region
        %p652 = scmp.lt.s32.totalorder %s18, 1
        %s653 = scalar_select %p652, %s18, 1
        %s654 = scalar_lea.vmem %s4, %s653
      $region63: #{gncnn_forward.13} parent=54 // pred_fallthru
        _
      // Predicated region
      $region64: #{gncnn_forward.13} parent=54 // pred_check
        %p655 = pneg %p161
      $region65: #{gncnn_forward.13} parent=54 // pred_check_branch
        %657 = sbr.rel (%p655) target = $region67
      $region66: #{gncnn_forward.13} parent=54 // pred_region
        %p658 = scmp.lt.s32.totalorder %s18, 1
        %s659 = scalar_select %p658, %s18, 1
        %s660 = scalar_lea.vmem %s5, %s659
      $region67: #{gncnn_forward.13} parent=54 // pred_fallthru
        _
    $region55: #{gncnn_forward.13} parent=5 // pred_fallthru
      _
  $region6: #{gncnn_forward.13} parent=0 // loop_footer
    %s16 = sadd.s32 1, %s12
  $region7: #{gncnn_forward.13} parent=0 // loop_footer_branch
    %11 = sbr.rel target = $region3
  $region8: #{gncnn_forward.13} parent=0 // loop_exit
    _

// kernel: gncnn_forward.14
$region0: #{gncnn_forward.14}
  #allocation0 [shape = 'u32[]', space=smem, size = 0x4, offset = 0x4, fixed_abs, tag = 'smem constant byte address 0x4 - core index']
  #allocation1 [shape = 'u32[144,128]{1,0:T(1,128)}', space=vmem, size = 0x12000, scoped, tag = 'internal scratch']
  #allocation2 [shape = 'f32[124,16,62]{2,1,0:T(8,128)}', space=vmem, size = 0xf8000, scoped, tag = 'scratch operand']
  %s0 = inlined_call_operand.vmem [shape: f32[2], index: 0, kind: input, shape index: {}]
  %s1 = inlined_call_operand.vmem [shape: f32[2,124,16,124], index: 1, kind: input, shape index: {}]
  %s2 = inlined_call_operand.vmem [shape: f32[124,62], index: 2, kind: input, shape index: {}]
  %s3 = inlined_call_operand.vmem [shape: f32[2,62,16,62], index: 3, kind: output, shape index: {}]
  %s4 = sld [smem:[#allocation0]]
  $region63: #{gncnn_forward.14} parent=0
    _
  %s6 = ssub.s32 1, %s4
  %s7 = scalar_select 0, %s6, %s4
  $region1: #{gncnn_forward.14} parent=0
    #allocation3 [shape = 'u8[512]{0}', space=smem, size = 0x200, scoped, tag = 'input window, operand 0, single buffered']
    #allocation4 [shape = 's32[2]{0}', space=sflag, size = 0x8, scoped, tag = 'scoped memory for gncnn_forward.14']
    %8 = vsyncpa [#allocation4], 0
    loop: start=0, step=1, limit=4
    $region2: #{gncnn_forward.14} parent=1 // loop_pre_header
      _
    $region3: #{gncnn_forward.14} parent=1 // loop_header
      %s10 = sphi 0, %s14
      %p11 = scmp.ge.s32.totalorder %s10, 4
      %s18 = sphi 0, %s18
      %s20 = sphi 0, %s18
      %s21 = sphi 0, %s20
      %s35 = sphi 0, %s21
      %s41 = sphi 0, %s43
      %s44 = sphi 0, %s41
      %s45 = sphi 0, %s44
      %s61 = sphi 0, %s45
      %s65 = sphi 0, %s65
      %s67 = sphi 0, %s65
      %s68 = sphi 0, %s67
      %s82 = sphi 0, %s68
      %s88 = sphi 0, %s90
      %s91 = sphi 0, %s88
      %s92 = sphi 0, %s91
      %s108 = sphi 0, %s92
    $region4: #{gncnn_forward.14} parent=1 // loop_header_branch
      %13 = sbr.rel (%p11) target = $region8
    $region5: #{gncnn_forward.14} parent=1 // loop_body
      %s15 = ssub.s32 %s10, 1
      %s16 = ssub.s32 %s10, 2
      %s17 = sadd.s32 %s10, 1
      %s19 = sadd.s32 %s18, 1
      %p22 = scmp.eq.s32.totalorder %s10, 1
      %p23 = scmp.ne.s32.totalorder %s18, %s20
      %p24 = scmp.eq.s32.totalorder %s10, 0
      %p25 = por %p23, %p24
      %p26 = scmp.ne.s32.totalorder %s18, %s20
      %p27 = scmp.eq.s32.totalorder %s15, 1
      %p28 = por %p26, %p27
      %p29 = scmp.ne.s32.totalorder %s20, %s21
      %p30 = scmp.eq.s32.totalorder %s15, 0
      %p31 = por %p29, %p30
      %p32 = scmp.ne.s32.totalorder %s20, %s21
      %p33 = scmp.eq.s32.totalorder %s16, 1
      %p34 = por %p32, %p33
      %p36 = scmp.ne.s32.totalorder %s21, %s35
      %p37 = scmp.eq.s32.totalorder %s16, 0
      %p38 = por %p36, %p37
      %s39 = ssub.s32 %s10, %s17
      %p40 = scmp.eq.s32.totalorder %s39, 0
      %s42 = sadd.s32 %s41, 1
      %s43 = scalar_select %p40, %s41, %s42
      %p46 = pneg %p40
      %p47 = scmp.eq.s32.totalorder %s10, 1
      %p48 = por %p46, %p47
      %p49 = scmp.ne.s32.totalorder %s41, %s44
      %p50 = scmp.eq.s32.totalorder %s10, 0
      %p51 = por %p49, %p50
      %p52 = scmp.ne.s32.totalorder %s41, %s44
      %p53 = scmp.eq.s32.totalorder %s15, 1
      %p54 = por %p52, %p53
      %p55 = scmp.ne.s32.totalorder %s44, %s45
      %p56 = scmp.eq.s32.totalorder %s15, 0
      %p57 = por %p55, %p56
      %p58 = scmp.ne.s32.totalorder %s44, %s45
      %p59 = scmp.eq.s32.totalorder %s16, 1
      %p60 = por %p58, %p59
      %p62 = scmp.ne.s32.totalorder %s45, %s61
      %p63 = scmp.eq.s32.totalorder %s16, 0
      %p64 = por %p62, %p63
      %s66 = sadd.s32 %s65, 1
      %p69 = scmp.eq.s32.totalorder %s10, 1
      %p70 = scmp.ne.s32.totalorder %s65, %s67
      %p71 = scmp.eq.s32.totalorder %s10, 0
      %p72 = por %p70, %p71
      %p73 = scmp.ne.s32.totalorder %s65, %s67
      %p74 = scmp.eq.s32.totalorder %s15, 1
      %p75 = por %p73, %p74
      %p76 = scmp.ne.s32.totalorder %s67, %s68
      %p77 = scmp.eq.s32.totalorder %s15, 0
      %p78 = por %p76, %p77
      %p79 = scmp.ne.s32.totalorder %s67, %s68
      %p80 = scmp.eq.s32.totalorder %s16, 1
      %p81 = por %p79, %p80
      %p83 = scmp.ne.s32.totalorder %s68, %s82
      %p84 = scmp.eq.s32.totalorder %s16, 0
      %p85 = por %p83, %p84
      %s86 = ssub.s32 %s10, %s17
      %p87 = scmp.eq.s32.totalorder %s86, 0
      %s89 = sadd.s32 %s88, 1
      %s90 = scalar_select %p87, %s88, %s89
      %p93 = pneg %p87
      %p94 = scmp.eq.s32.totalorder %s10, 1
      %p95 = por %p93, %p94
      %p96 = scmp.ne.s32.totalorder %s88, %s91
      %p97 = scmp.eq.s32.totalorder %s10, 0
      %p98 = por %p96, %p97
      %p99 = scmp.ne.s32.totalorder %s88, %s91
      %p100 = scmp.eq.s32.totalorder %s15, 1
      %p101 = por %p99, %p100
      %p102 = scmp.ne.s32.totalorder %s91, %s92
      %p103 = scmp.eq.s32.totalorder %s15, 0
      %p104 = por %p102, %p103
      %p105 = scmp.ne.s32.totalorder %s91, %s92
      %p106 = scmp.eq.s32.totalorder %s16, 1
      %p107 = por %p105, %p106
      %p109 = scmp.ne.s32.totalorder %s92, %s108
      %p110 = scmp.eq.s32.totalorder %s16, 0
      %p111 = por %p109, %p110
      %p112 = scmp.le.s32.totalorder 1, %s10
      %p113 = scmp.lt.s32.totalorder %s10, 3
      %p114 = pnand %p112, %p113
      %p115 = pneg %p114
      // Predicated region
      $region9: #{gncnn_forward.14} parent=5 // pred_check
        _
      $region10: #{gncnn_forward.14} parent=5 // pred_check_branch
        %117 = sbr.rel (%p114) target = $region12
      $region11: #{gncnn_forward.14} parent=5 // pred_region
        %s118 = ssub.s32 %s10, 1
        // Predicated region
        $region13: #{gncnn_forward.14} parent=11 // pred_check
          %p119 = pneg %p31
        $region14: #{gncnn_forward.14} parent=11 // pred_check_branch
          %121 = sbr.rel (%p119) target = $region16
        $region15: #{gncnn_forward.14} parent=11 // pred_region
          %s123 = ssub.s32 16, 16
          %124 = vsyncadd [#allocation4], %s123
          %s126 = sshll.u32 %s0, 4
          %s127 = int_to_ptr.vmem [resolvable:$true] %s126
          %129 = dma.vmem_to_smem %s127, 16, [#allocation3], [#allocation4]
        $region16: #{gncnn_forward.14} parent=11 // pred_fallthru
          _
        // Predicated region
        $region17: #{gncnn_forward.14} parent=11 // pred_check
          %p130 = pneg %p78
        $region18: #{gncnn_forward.14} parent=11 // pred_check_branch
          %132 = sbr.rel (%p130) target = $region20
        $region19: #{gncnn_forward.14} parent=11 // pred_region
          _
        $region20: #{gncnn_forward.14} parent=11 // pred_fallthru
          _
      $region12: #{gncnn_forward.14} parent=5 // pred_fallthru
        _
      %p133 = scmp.lt.s32.totalorder %s10, 2
      // Predicated region
      $region21: #{gncnn_forward.14} parent=5 // pred_check
        %p134 = pneg %p133
      $region22: #{gncnn_forward.14} parent=5 // pred_check_branch
        %136 = sbr.rel (%p134) target = $region24
      $region23: #{gncnn_forward.14} parent=5 // pred_region
        // Predicated region
        $region25: #{gncnn_forward.14} parent=23 // pred_check
          %p137 = pneg %p51
        $region26: #{gncnn_forward.14} parent=23 // pred_check_branch
          %139 = sbr.rel (%p137) target = $region28
        $region27: #{gncnn_forward.14} parent=23 // pred_region
          %p140 = scmp.lt.s32.totalorder %s10, 1
          %s141 = scalar_select %p140, %s10, 1
          %s142 = smul.addr %s141, 248
          %s143 = smul.addr %s142, 8
          %s144 = scalar_lea.vmem %s1, %s143
        $region28: #{gncnn_forward.14} parent=23 // pred_fallthru
          _
      $region24: #{gncnn_forward.14} parent=5 // pred_fallthru
        _
      %p145 = scmp.le.s32.totalorder 1, %s10
      %p146 = scmp.lt.s32.totalorder %s10, 3
      %p147 = pnand %p145, %p146
      %p148 = pneg %p147
      // Predicated region
      $region29: #{gncnn_forward.14} parent=5 // pred_check
        _
      $region30: #{gncnn_forward.14} parent=5 // pred_check_branch
        %150 = sbr.rel (%p147) target = $region32
      $region31: #{gncnn_forward.14} parent=5 // pred_region
        %s151 = ssub.s32 %s10, 1
        // Predicated region
        $region33: #{gncnn_forward.14} parent=31 // pred_check
          %p152 = pneg %p31
        $region34: #{gncnn_forward.14} parent=31 // pred_check_branch
          %154 = sbr.rel (%p152) target = $region36
        $region35: #{gncnn_forward.14} parent=31 // pred_region
          %155 = dma.done [#allocation4], 16
        $region36: #{gncnn_forward.14} parent=31 // pred_fallthru
          _
        %156 = sfence
        %p157 = pneg %p31
        %p158 = pneg %p28
        %p159 = scmp.lt.s32.totalorder %s15, 1
        %s160 = scalar_select %p159, %s15, 1
        %s161 = smul.addr %s160, 248
        %s162 = smul.addr %s161, 8
        %s163 = scalar_lea.vmem %s1, %s162
        %p164 = pneg %p57
        %p165 = pneg %p54
        %p166 = pneg %p78
        %p167 = pneg %p75
        %p168 = pneg %p104
        %p169 = pneg %p101
        %p170 = scmp.lt.s32.totalorder %s15, 1
        %s171 = scalar_select %p170, %s15, 1
        %s172 = smul.addr %s171, 124
        %s173 = smul.addr %s172, 8
        %s174 = scalar_lea.vmem %s3, %s173
        %p175 = scmp.lt.s32.totalorder %s15, 1
        %s176 = scalar_select %p175, %s15, 1
        %s177 = smul.addr %s176, 248
        %s178 = smul.addr %s177, 8
        %s179 = scalar_lea.vmem %s1, %s178
        %p180 = scmp.lt.s32.totalorder %s15, 1
        %s181 = scalar_select %p180, %s15, 1
        %s182 = smul.addr %s181, 124
        %s183 = smul.addr %s182, 8
        %s184 = scalar_lea.vmem %s3, %s183
        %s185 = sld [smem:[#allocation3]]
        %s186 = sld [smem:[#allocation3 + $0x1]]
        loop: start=0, step=1, limit=124
        $region37: #{gncnn_forward.14} parent=31 // loop_pre_header
          _
        $region38: #{gncnn_forward.14} parent=31 // loop_header
          %s188 = sphi 0, %s192
          %p189 = scmp.ge.s32.totalorder %s188, 124
        $region39: #{gncnn_forward.14} parent=31 // loop_header_branch
          %191 = sbr.rel (%p189) target = $region43
        $region40: #{gncnn_forward.14} parent=31 // loop_body
          %s193 = smul.u32 %s188, 16
          %s194 = scalar_lea.vmem %s179, %s193
          %v195 = vld [vmem:[%s194] sm:$0xff]
          %v196 = vld [vmem:[%s194 + $0x8] sm:$0xff]
          %v197 = vstv %s185
          %v198 = vsub.f32 %v195, %v197
          %v199 = vsub.f32 %v196, %v197
          %v200 = vmul.f32 %v198, %v198
          %v201 = vmul.f32 %v199, %v199
          %v202 = vsub.f32 0.0, %v200
          %v203 = vsub.f32 0.0, %v201
          %v204 = vstv %s186
          %v205 = vmul.f32 %v202, %v204
          %v206 = vmul.f32 %v203, %v204
          %v207 = vmul.f32 %v205, 1.442695
          %v208 = vpow.pop %v207
          %v209 = vmul.f32 %v206, 1.442695
          %v210 = vpow.pop %v209
          %v211 = vld [vmem:[%s2] sm:$0xff]
          %v212 = vld [vmem:[%s2 + $0x8] sm:$0xff]
          %v213 = vld [vmem:[%s2 + $0x10] sm:$0xff]
          %v214 = vld [vmem:[%s2 + $0x18] sm:$0xff]
          %v215 = vld [vmem:[%s2 + $0x20] sm:$0xff]
          %v216 = vld [vmem:[%s2 + $0x28] sm:$0xff]
          %v217 = vld [vmem:[%s2 + $0x30] sm:$0xff]
          %v218 = vld [vmem:[%s2 + $0x38] sm:$0xff]
          %v219 = vld [vmem:[%s2 + $0x40] sm:$0xff]
          %v220 = vld [vmem:[%s2 + $0x48] sm:$0xff]
          %v221 = vld [vmem:[%s2 + $0x50] sm:$0xff]
          %v222 = vld [vmem:[%s2 + $0x58] sm:$0xff]
          %v223 = vld [vmem:[%s2 + $0x60] sm:$0xff]
          %v224 = vld [vmem:[%s2 + $0x68] sm:$0xff]
          %v225 = vld [vmem:[%s2 + $0x70] sm:$0xff]
          %v226 = vld [vmem:[%s2 + $0x78] sm:$0xf]
          %vm227 = vcmask 1014784
          %v229 = vsel %vm227, %v208, 0
          %v232 = vsel %vm227, %v210, 0
          %vm234 = vcmask 1043456
          %v236 = vsel %vm234, %v226, 0
          %238 = vmatprep.subr.mxu0 0.0
          %239 = vmatpush1.msra.mxu0 %v211
          %240 = vmatprep.subr.mxu0 0.0
          %241 = vmatpush1.msra.mxu0 %v212
          %242 = vmatprep.subr.mxu0 0.0
          %243 = vmatpush1.msra.mxu0 %v213
          %244 = vmatprep.subr.mxu0 0.0
          %245 = vmatpush1.msra.mxu0 %v214
          %246 = vmatprep.subr.mxu0 0.0
          %247 = vmatpush1.msra.mxu0 %v215
          %248 = vmatprep.subr.mxu0 0.0
          %249 = vmatpush1.msra.mxu0 %v216
          %250 = vmatprep.subr.mxu0 0.0
          %251 = vmatpush1.msra.mxu0 %v217
          %252 = vmatprep.subr.mxu0 0.0
          %253 = vmatpush1.msra.mxu0 %v218
          %254 = vmatprep.subr.mxu0 0.0
          %255 = vmatpush1.msra.mxu0 %v219
          %256 = vmatprep.subr.mxu0 0.0
          %257 = vmatpush1.msra.mxu0 %v220
          %258 = vmatprep.subr.mxu0 0.0
          %259 = vmatpush1.msra.mxu0 %v221
          %260 = vmatprep.subr.mxu0 0.0
          %261 = vmatpush1.msra.mxu0 %v222
          %262 = vmatprep.subr.mxu0 0.0
          %263 = vmatpush1.msra.mxu0 %v223
          %264 = vmatprep.subr.mxu0 0.0
          %265 = vmatpush1.msra.mxu0 %v224
          %266 = vmatprep.subr.mxu0 0.0
          %267 = vmatpush1.msra.mxu0 %v225
          %268 = vmatprep.subr.mxu0 0.0
          %269 = vmatpush1.msra.mxu0 %v236
          %270 = vmatprep.subr.mxu0 0.0
          %271 = vmatpush1.msra.mxu0 0.0
          %272 = vmatprep.subr.mxu0 0.0
          %273 = vmatpush1.msra.mxu0 0.0
          %274 = vmatprep.subr.mxu0 0.0
          %275 = vmatpush1.msra.mxu0 0.0
          %276 = vmatprep.subr.mxu0 0.0
          %277 = vmatpush1.msra.mxu0 0.0
          %278 = vmatprep.subr.mxu0 0.0
          %279 = vmatpush1.msra.mxu0 0.0
          %280 = vmatprep.subr.mxu0 0.0
          %281 = vmatpush1.msra.mxu0 0.0
          %282 = vmatprep.subr.mxu0 0.0
          %283 = vmatpush1.msra.mxu0 0.0
          %284 = vmatprep.subr.mxu0 0.0
          %285 = vmatpush1.msra.mxu0 0.0
          %286 = vmatprep.subr.mxu0 0.0
          %287 = vmatpush1.msra.mxu0 0.0
          %288 = vmatprep.subr.mxu0 0.0
          %289 = vmatpush1.msra.mxu0 0.0
          %290 = vmatprep.subr.mxu0 0.0
          %291 = vmatpush1.msra.mxu0 0.0
          %292 = vmatprep.subr.mxu0 0.0
          %293 = vmatpush1.msra.mxu0 0.0
          %294 = vmatprep.subr.mxu0 0.0
          %295 = vmatpush1.msra.mxu0 0.0
          %296 = vmatprep.subr.mxu0 0.0
          %297 = vmatpush1.msra.mxu0 0.0
          %298 = vmatprep.subr.mxu0 0.0
          %299 = vmatpush1.msra.mxu0 0.0
          %300 = vmatprep.subr.mxu0 0.0
          %301 = vmatpush1.msra.mxu0 0.0
          %302 = vmatprep.mubr.f32.mxu0 0.0
          %303 = vmatmul.mubr.f32.gmra.mrb[0].mxu0 %v229
          %v304 = vpop.f32.mrb[0].mxu0
          %v305 = vadd.f32 0.0, %v304
          %v306 = vpop.f32.mrb[0].mxu0
          %307 = vmatprep.mubr.f32.mxu0 0.0
          %308 = vmatmul.mubr.f32.gmra.mrb[0].mxu0 %v232
          %v309 = vpop.f32.mrb[0].mxu0
          %v310 = vadd.f32 0.0, %v309
          %v311 = vpop.f32.mrb[0].mxu0
          %312 = vdwg.mxu0
          %s313 = scalar_lea.vmem [#allocation2], %s193
          %vm314 = vcmask 506880
          %315 = vst.msk [vmem:[%s313] sm:$0xff] %vm314, %v305
          %316 = vst.msk [vmem:[%s313 + $0x8] sm:$0xff] %vm314, %v310
        $region41: #{gncnn_forward.14} parent=31 // loop_footer
          %s192 = sadd.s32 1, %s188
        $region42: #{gncnn_forward.14} parent=31 // loop_footer_branch
          %187 = sbr.rel target = $region38
        $region43: #{gncnn_forward.14} parent=31 // loop_exit
          _
        loop: start=0, step=1, limit=62
        $region44: #{gncnn_forward.14} parent=31 // loop_pre_header
          _
        $region45: #{gncnn_forward.14} parent=31 // loop_header
          %s318 = sphi 0, %s322
          %p319 = scmp.ge.s32.totalorder %s318, 62
        $region46: #{gncnn_forward.14} parent=31 // loop_header_branch
          %321 = sbr.rel (%p319) target = $region50
        $region47: #{gncnn_forward.14} parent=31 // loop_body
          %s323 = smul.u32 %s318, 2
          %s324 = ssub.s32 %s323, 1
          %p325 = scmp.gt.s32.totalorder %s324, 0
          %s326 = scalar_select %p325, %s324, 0
          %p327 = scmp.lt.s32.totalorder %s326, 123
          %s328 = scalar_select %p327, %s326, 123
          %p329 = scmp.ge.s32.totalorder %s324, 0
          %p330 = scmp.lt.s32.totalorder %s324, 124
          %p331 = pnand %p329, %p330
          %p332 = pneg %p331
          %s333 = scalar_select %p332, 1, 0
          %s334 = scvt.s32.f32 %s333
          %s335 = smul.u32 %s328, 16
          %s336 = scalar_lea.vmem [#allocation2], %s335
          %v337 = vld [vmem:[%s336] sm:$0xff]
          %v338 = vld [vmem:[%s336 + $0x8] sm:$0xff]
          %v339 = vstv %s334
          %v340 = vmul.f32 %v337, %v339
          %v341 = vmul.f32 %v338, %v339
          %v342 = vadd.f32 %v340, 0.0
          %v343 = vadd.f32 %v341, 0.0
          %p344 = scmp.gt.s32.totalorder %s323, 0
          %s345 = scalar_select %p344, %s323, 0
          %p346 = scmp.lt.s32.totalorder %s345, 123
          %s347 = scalar_select %p346, %s345, 123
          %p348 = scmp.ge.s32.totalorder %s323, 0
          %p349 = scmp.lt.s32.totalorder %s323, 124
          %p350 = pnand %p348, %p349
          %p351 = pneg %p350
          %s352 = scalar_select %p351, 1, 0
          %s353 = scvt.s32.f32 %s352
          %s354 = smul.u32 %s347, 16
          %s355 = scalar_lea.vmem [#allocation2], %s354
          %v356 = vld [vmem:[%s355] sm:$0xff]
          %v357 = vld [vmem:[%s355 + $0x8] sm:$0xff]
          %v358 = vstv %s353
          %v359 = vmul.f32 %v356, %v358
          %v360 = vmul.f32 %v357, %v358
          %v361 = vadd.f32 %v342, %v359
          %v362 = vadd.f32 %v343, %v360
          %s363 = sadd.s32 %s323, 1
          %p364 = scmp.gt.s32.totalorder %s363, 0
          %s365 = scalar_select %p364, %s363, 0
          %p366 = scmp.lt.s32.totalorder %s365, 123
          %s367 = scalar_select %p366, %s365, 123
          %p368 = scmp.ge.s32.totalorder %s363, 0
          %p369 = scmp.lt.s32.totalorder %s363, 124
          %p370 = pnand %p368, %p369
          %p371 = pneg %p370
          %s372 = scalar_select %p371, 1, 0
          %s373 = scvt.s32.f32 %s372
          %s374 = smul.u32 %s367, 16
          %s375 = scalar_lea.vmem [#allocation2], %s374
          %v376 = vld [vmem:[%s375] sm:$0xff]
          %v377 = vld [vmem:[%s375 + $0x8] sm:$0xff]
          %v378 = vstv %s373
          %v379 = vmul.f32 %v376, %v378
          %v380 = vmul.f32 %v377, %v378
          %v381 = vadd.f32 %v361, %v379
          %v382 = vadd.f32 %v362, %v380
          %v383 = vmul.f32 %v381, 0.11111111
          %v384 = vmul.f32 %v382, 0.11111111
          %s385 = smul.u32 %s318, 16
          %s386 = scalar_lea.vmem %s184, %s385
          %vm387 = vcmask 506880
          %388 = vst.msk [vmem:[%s386] sm:$0xff] %vm387, %v383
          %389 = vst.msk [vmem:[%s386 + $0x8] sm:$0xff] %vm387, %v384
        $region48: #{gncnn_forward.14} parent=31 // loop_footer
          %s322 = sadd.s32 1, %s318
        $region49: #{gncnn_forward.14} parent=31 // loop_footer_branch
          %317 = sbr.rel target = $region45
        $region50: #{gncnn_forward.14} parent=31 // loop_exit
          _
        %p390 = scmp.lt.s32.totalorder %s15, 1
        %s391 = scalar_select %p390, %s15, 1
        %s392 = smul.addr %s391, 124
        %s393 = smul.addr %s392, 8
        %s394 = scalar_lea.vmem %s3, %s393
        // Predicated region
        $region51: #{gncnn_forward.14} parent=31 // pred_check
          %p395 = pneg %p101
        $region52: #{gncnn_forward.14} parent=31 // pred_check_branch
          %397 = sbr.rel (%p395) target = $region54
        $region53: #{gncnn_forward.14} parent=31 // pred_region
          _
        $region54: #{gncnn_forward.14} parent=31 // pred_fallthru
          _
      $region32: #{gncnn_forward.14} parent=5 // pred_fallthru
        _
      %p398 = scmp.le.s32.totalorder 2, %s10
      // Predicated region
      $region55: #{gncnn_forward.14} parent=5 // pred_check
        %p399 = pneg %p398
      $region56: #{gncnn_forward.14} parent=5 // pred_check_branch
        %401 = sbr.rel (%p399) target = $region58
      $region57: #{gncnn_forward.14} parent=5 // pred_region
        %s402 = ssub.s32 %s10, 2
        // Predicated region
        $region59: #{gncnn_forward.14} parent=57 // pred_check
          %p403 = pneg %p107
        $region60: #{gncnn_forward.14} parent=57 // pred_check_branch
          %405 = sbr.rel (%p403) target = $region62
        $region61: #{gncnn_forward.14} parent=57 // pred_region
          %p406 = scmp.lt.s32.totalorder %s16, 1
          %s407 = scalar_select %p406, %s16, 1
          %s408 = smul.addr %s407, 124
          %s409 = smul.addr %s408, 8
          %s410 = scalar_lea.vmem %s3, %s409
        $region62: #{gncnn_forward.14} parent=57 // pred_fallthru
          _
      $region58: #{gncnn_forward.14} parent=5 // pred_fallthru
        _
    $region6: #{gncnn_forward.14} parent=1 // loop_footer
      %s14 = sadd.s32 1, %s10
    $region7: #{gncnn_forward.14} parent=1 // loop_footer_branch
      %9 = sbr.rel target = $region3
    $region8: #{gncnn_forward.14} parent=1 // loop_exit
      _
    %411 = vsyncpa [#allocation4], 1
    %s412 = scalar_lea.sflag [#allocation4], 1
    %413 = vsyncpa %s412, 1

// kernel: gncnn_forward.15
$region0: #{gncnn_forward.15}
  #allocation0 [shape = 'u32[]', space=smem, size = 0x4, offset = 0x4, fixed_abs, tag = 'smem constant byte address 0x4 - core index']
  #allocation1 [shape = 'u32[144,128]{1,0:T(1,128)}', space=vmem, size = 0x12000, scoped, tag = 'internal scratch']
  %s0 = inlined_call_operand.vmem [shape: f32[2,62,16,62], index: 0, kind: input, shape index: {}]
  %s1 = inlined_call_operand.vmem [shape: f32[3,16,48], index: 1, kind: input, shape index: {}]
  %s2 = inlined_call_operand.vmem [shape: f32[16,1], index: 2, kind: input, shape index: {}]
  %s3 = inlined_call_operand.vmem [shape: f32[2,60,16,60], index: 3, kind: output, shape index: {0}]
  %s4 = inlined_call_operand.vmem [shape: f32[2,1,1], index: 4, kind: output, shape index: {1}]
  %s5 = inlined_call_operand.vmem [shape: f32[2,1,1], index: 5, kind: output, shape index: {2}]
  %6 = xla_tuple %s3, %s4, %s5
  %s7 = sld [smem:[#allocation0]]
  $region68: #{gncnn_forward.15} parent=0
    _
  %s9 = ssub.s32 1, %s7
  %s10 = scalar_select 0, %s9, %s7
  loop: start=0, step=1, limit=4
  $region2: #{gncnn_forward.15} parent=0 // loop_pre_header
    _
  $region3: #{gncnn_forward.15} parent=0 // loop_header
    %s12 = sphi 0, %s16
    %p13 = scmp.ge.s32.totalorder %s12, 4
    %s22 = sphi 0, %s24
    %s25 = sphi 0, %s22
    %s26 = sphi 0, %s25
    %s42 = sphi 0, %s26
    %s46 = sphi 0, %s46
    %s48 = sphi 0, %s46
    %s49 = sphi 0, %s48
    %s63 = sphi 0, %s49
    %s67 = sphi 0, %s67
    %s69 = sphi 0, %s67
    %s70 = sphi 0, %s69
    %s84 = sphi 0, %s70
    %s90 = sphi 0, %s92
    %s93 = sphi 0, %s90
    %s94 = sphi 0, %s93
    %s110 = sphi 0, %s94
    %s116 = sphi 0, %s118
    %s119 = sphi 0, %s116
    %s120 = sphi 0, %s119
    %s136 = sphi 0, %s120
    %s142 = sphi 0, %s144
    %s145 = sphi 0, %s142
    %s146 = sphi 0, %s145
    %s162 = sphi 0, %s146
  $region4: #{gncnn_forward.15} parent=0 // loop_header_branch
    %15 = sbr.rel (%p13) target = $region8
  $region5: #{gncnn_forward.15} parent=0 // loop_body
    %s17 = ssub.s32 %s12, 1
    %s18 = ssub.s32 %s12, 2
    %s19 = sadd.s32 %s12, 1
    %s20 = ssub.s32 %s12, %s19
    %p21 = scmp.eq.s32.totalorder %s20, 0
    %s23 = sadd.s32 %s22, 1
    %s24 = scalar_select %p21, %s22, %s23
    %p27 = pneg %p21
    %p28 = scmp.eq.s32.totalorder %s12, 1
    %p29 = por %p27, %p28
    %p30 = scmp.ne.s32.totalorder %s22, %s25
    %p31 = scmp.eq.s32.totalorder %s12, 0
    %p32 = por %p30, %p31
    %p33 = scmp.ne.s32.totalorder %s22, %s25
    %p34 = scmp.eq.s32.totalorder %s17, 1
    %p35 = por %p33, %p34
    %p36 = scmp.ne.s32.totalorder %s25, %s26
    %p37 = scmp.eq.s32.totalorder %s17, 0
    %p38 = por %p36, %p37
    %p39 = scmp.ne.s32.totalorder %s25, %s26
    %p40 = scmp.eq.s32.totalorder %s18, 1
    %p41 = por %p39, %p40
    %p43 = scmp.ne.s32.totalorder %s26, %s42
    %p44 = scmp.eq.s32.totalorder %s18, 0
    %p45 = por %p43, %p44
    %s47 = sadd.s32 %s46, 1
    %p50 = scmp.eq.s32.totalorder %s12, 1
    %p51 = scmp.ne.s32.totalorder %s46, %s48
    %p52 = scmp.eq.s32.totalorder %s12, 0
    %p53 = por %p51, %p52
    %p54 = scmp.ne.s32.totalorder %s46, %s48
    %p55 = scmp.eq.s32.totalorder %s17, 1
    %p56 = por %p54, %p55
    %p57 = scmp.ne.s32.totalorder %s48, %s49
    %p58 = scmp.eq.s32.totalorder %s17, 0
    %p59 = por %p57, %p58
    %p60 = scmp.ne.s32.totalorder %s48, %s49
    %p61 = scmp.eq.s32.totalorder %s18, 1
    %p62 = por %p60, %p61
    %p64 = scmp.ne.s32.totalorder %s49, %s63
    %p65 = scmp.eq.s32.totalorder %s18, 0
    %p66 = por %p64, %p65
    %s68 = sadd.s32 %s67, 1
    %p71 = scmp.eq.s32.totalorder %s12, 1
    %p72 = scmp.ne.s32.totalorder %s67, %s69
    %p73 = scmp.eq.s32.totalorder %s12, 0
    %p74 = por %p72, %p73
    %p75 = scmp.ne.s32.totalorder %s67, %s69
    %p76 = scmp.eq.s32.totalorder %s17, 1
    %p77 = por %p75, %p76
    %p78 = scmp.ne.s32.totalorder %s69, %s70
    %p79 = scmp.eq.s32.totalorder %s17, 0
    %p80 = por %p78, %p79
    %p81 = scmp.ne.s32.totalorder %s69, %s70
    %p82 = scmp.eq.s32.totalorder %s18, 1
    %p83 = por %p81, %p82
    %p85 = scmp.ne.s32.totalorder %s70, %s84
    %p86 = scmp.eq.s32.totalorder %s18, 0
    %p87 = por %p85, %p86
    %s88 = ssub.s32 %s12, %s19
    %p89 = scmp.eq.s32.totalorder %s88, 0
    %s91 = sadd.s32 %s90, 1
    %s92 = scalar_select %p89, %s90, %s91
    %p95 = pneg %p89
    %p96 = scmp.eq.s32.totalorder %s12, 1
    %p97 = por %p95, %p96
    %p98 = scmp.ne.s32.totalorder %s90, %s93
    %p99 = scmp.eq.s32.totalorder %s12, 0
    %p100 = por %p98, %p99
    %p101 = scmp.ne.s32.totalorder %s90, %s93
    %p102 = scmp.eq.s32.totalorder %s17, 1
    %p103 = por %p101, %p102
    %p104 = scmp.ne.s32.totalorder %s93, %s94
    %p105 = scmp.eq.s32.totalorder %s17, 0
    %p106 = por %p104, %p105
    %p107 = scmp.ne.s32.totalorder %s93, %s94
    %p108 = scmp.eq.s32.totalorder %s18, 1
    %p109 = por %p107, %p108
    %p111 = scmp.ne.s32.totalorder %s94, %s110
    %p112 = scmp.eq.s32.totalorder %s18, 0
    %p113 = por %p111, %p112
    %s114 = ssub.s32 %s12, %s19
    %p115 = scmp.eq.s32.totalorder %s114, 0
    %s117 = sadd.s32 %s116, 1
    %s118 = scalar_select %p115, %s116, %s117
    %p121 = pneg %p115
    %p122 = scmp.eq.s32.totalorder %s12, 1
    %p123 = por %p121, %p122
    %p124 = scmp.ne.s32.totalorder %s116, %s119
    %p125 = scmp.eq.s32.totalorder %s12, 0
    %p126 = por %p124, %p125
    %p127 = scmp.ne.s32.totalorder %s116, %s119
    %p128 = scmp.eq.s32.totalorder %s17, 1
    %p129 = por %p127, %p128
    %p130 = scmp.ne.s32.totalorder %s119, %s120
    %p131 = scmp.eq.s32.totalorder %s17, 0
    %p132 = por %p130, %p131
    %p133 = scmp.ne.s32.totalorder %s119, %s120
    %p134 = scmp.eq.s32.totalorder %s18, 1
    %p135 = por %p133, %p134
    %p137 = scmp.ne.s32.totalorder %s120, %s136
    %p138 = scmp.eq.s32.totalorder %s18, 0
    %p139 = por %p137, %p138
    %s140 = ssub.s32 %s12, %s19
    %p141 = scmp.eq.s32.totalorder %s140, 0
    %s143 = sadd.s32 %s142, 1
    %s144 = scalar_select %p141, %s142, %s143
    %p147 = pneg %p141
    %p148 = scmp.eq.s32.totalorder %s12, 1
    %p149 = por %p147, %p148
    %p150 = scmp.ne.s32.totalorder %s142, %s145
    %p151 = scmp.eq.s32.totalorder %s12, 0
    %p152 = por %p150, %p151
    %p153 = scmp.ne.s32.totalorder %s142, %s145
    %p154 = scmp.eq.s32.totalorder %s17, 1
    %p155 = por %p153, %p154
    %p156 = scmp.ne.s32.totalorder %s145, %s146
    %p157 = scmp.eq.s32.totalorder %s17, 0
    %p158 = por %p156, %p157
    %p159 = scmp.ne.s32.totalorder %s145, %s146
    %p160 = scmp.eq.s32.totalorder %s18, 1
    %p161 = por %p159, %p160
    %p163 = scmp.ne.s32.totalorder %s146, %s162
    %p164 = scmp.eq.s32.totalorder %s18, 0
    %p165 = por %p163, %p164
    %p166 = scmp.le.s32.totalorder 1, %s12
    %p167 = scmp.lt.s32.totalorder %s12, 3
    %p168 = pnand %p166, %p167
    %p169 = pneg %p168
    // Predicated region
    $region9: #{gncnn_forward.15} parent=5 // pred_check
      _
    $region10: #{gncnn_forward.15} parent=5 // pred_check_branch
      %171 = sbr.rel (%p168) target = $region12
    $region11: #{gncnn_forward.15} parent=5 // pred_region
      %s172 = ssub.s32 %s12, 1
      // Predicated region
      $region13: #{gncnn_forward.15} parent=11 // pred_check
        %p173 = pneg %p59
      $region14: #{gncnn_forward.15} parent=11 // pred_check_branch
        %175 = sbr.rel (%p173) target = $region16
      $region15: #{gncnn_forward.15} parent=11 // pred_region
        _
      $region16: #{gncnn_forward.15} parent=11 // pred_fallthru
        _
      // Predicated region
      $region17: #{gncnn_forward.15} parent=11 // pred_check
        %p176 = pneg %p80
      $region18: #{gncnn_forward.15} parent=11 // pred_check_branch
        %178 = sbr.rel (%p176) target = $region20
      $region19: #{gncnn_forward.15} parent=11 // pred_region
        _
      $region20: #{gncnn_forward.15} parent=11 // pred_fallthru
        _
    $region12: #{gncnn_forward.15} parent=5 // pred_fallthru
      _
    %p179 = scmp.lt.s32.totalorder %s12, 2
    // Predicated region
    $region21: #{gncnn_forward.15} parent=5 // pred_check
      %p180 = pneg %p179
    $region22: #{gncnn_forward.15} parent=5 // pred_check_branch
      %182 = sbr.rel (%p180) target = $region24
    $region23: #{gncnn_forward.15} parent=5 // pred_region
      // Predicated region
      $region25: #{gncnn_forward.15} parent=23 // pred_check
        %p183 = pneg %p32
      $region26: #{gncnn_forward.15} parent=23 // pred_check_branch
        %185 = sbr.rel (%p183) target = $region28
      $region27: #{gncnn_forward.15} parent=23 // pred_region
        %p186 = scmp.lt.s32.totalorder %s12, 1
        %s187 = scalar_select %p186, %s12, 1
        %s188 = smul.addr %s187, 124
        %s189 = smul.addr %s188, 8
        %s190 = scalar_lea.vmem %s0, %s189
      $region28: #{gncnn_forward.15} parent=23 // pred_fallthru
        _
    $region24: #{gncnn_forward.15} parent=5 // pred_fallthru
      _
    %p191 = scmp.le.s32.totalorder 1, %s12
    %p192 = scmp.lt.s32.totalorder %s12, 3
    %p193 = pnand %p191, %p192
    %p194 = pneg %p193
    // Predicated region
    $region29: #{gncnn_forward.15} parent=5 // pred_check
      _
    $region30: #{gncnn_forward.15} parent=5 // pred_check_branch
      %196 = sbr.rel (%p193) target = $region32
    $region31: #{gncnn_forward.15} parent=5 // pred_region
      %s197 = ssub.s32 %s12, 1
      %p198 = scmp.lt.s32.totalorder %s17, 1
      %s199 = scalar_select %p198, %s17, 1
      %s200 = smul.addr %s199, 124
      %s201 = smul.addr %s200, 8
      %s202 = scalar_lea.vmem %s0, %s201
      %p203 = pneg %p38
      %p204 = pneg %p35
      %p205 = pneg %p59
      %p206 = pneg %p56
      %p207 = pneg %p80
      %p208 = pneg %p77
      %p209 = pneg %p106
      %p210 = pneg %p103
      %p211 = scmp.lt.s32.totalorder %s17, 1
      %s212 = scalar_select %p211, %s17, 1
      %s213 = smul.addr %s212, 120
      %s214 = smul.addr %s213, 8
      %s215 = scalar_lea.vmem %s3, %s214
      %p216 = pneg %p132
      %p217 = pneg %p129
      %p218 = scmp.lt.s32.totalorder %s17, 1
      %s219 = scalar_select %p218, %s17, 1
      %s220 = scalar_lea.vmem %s4, %s219
      %p221 = pneg %p158
      %p222 = pneg %p155
      %p223 = scmp.lt.s32.totalorder %s17, 1
      %s224 = scalar_select %p223, %s17, 1
      %s225 = scalar_lea.vmem %s5, %s224
      %p226 = scmp.lt.s32.totalorder %s17, 1
      %s227 = scalar_select %p226, %s17, 1
      %s228 = smul.addr %s227, 124
      %s229 = smul.addr %s228, 8
      %s230 = scalar_lea.vmem %s0, %s229
      %p231 = scmp.lt.s32.totalorder %s17, 1
      %s232 = scalar_select %p231, %s17, 1
      %s233 = smul.addr %s232, 120
      %s234 = smul.addr %s233, 8
      %s235 = scalar_lea.vmem %s3, %s234
      %p236 = scmp.lt.s32.totalorder %s17, 1
      %s237 = scalar_select %p236, %s17, 1
      %s238 = scalar_lea.vmem %s4, %s237
      %p239 = scmp.lt.s32.totalorder %s17, 1
      %s240 = scalar_select %p239, %s17, 1
      %s241 = scalar_lea.vmem %s5, %s240
      loop: start=0, step=1, limit=60
      $region33: #{gncnn_forward.15} parent=31 // loop_pre_header
        _
      $region34: #{gncnn_forward.15} parent=31 // loop_header
        %s243 = sphi 0, %s247
        %p244 = scmp.ge.s32.totalorder %s243, 60
        %v248 = vphi 0.0, %v580
        %v249 = vphi 0.0, %v581
        %v250 = vphi 0.0, %v584
        %v251 = vphi 0.0, %v585
      $region35: #{gncnn_forward.15} parent=31 // loop_header_branch
        %246 = sbr.rel (%p244) target = $region39
      $region36: #{gncnn_forward.15} parent=31 // loop_body
        %s252 = smul.u32 %s243, 16
        %s253 = scalar_lea.vmem %s230, %s252
        %v254 = vld [vmem:[%s253] sm:$0xff]
        %v255 = vld [vmem:[%s253 + $0x8] sm:$0xff]
        %258 = vrot.lane.b32.xlu0 %v254, 127
        %v259 = vpop.permute.xlu0 %258
        %260 = vrot.lane.b32.xlu0 %v255, 127
        %v261 = vpop.permute.xlu0 %260
        %264 = vrot.lane.b32.xlu0 %v254, 126
        %v265 = vpop.permute.xlu0 %264
        %266 = vrot.lane.b32.xlu0 %v255, 126
        %v267 = vpop.permute.xlu0 %266
        %v270 = vld [vmem:[%s1] sm:$0xff]
        %v271 = vld [vmem:[%s1 + $0x8] sm:$0xff]
        %s272 = sadd.s32 %s243, 1
        %s273 = smul.u32 %s272, 16
        %s274 = scalar_lea.vmem %s230, %s273
        %v275 = vld [vmem:[%s274] sm:$0xff]
        %v276 = vld [vmem:[%s274 + $0x8] sm:$0xff]
        %279 = vrot.lane.b32.xlu0 %v275, 127
        %v280 = vpop.permute.xlu0 %279
        %281 = vrot.lane.b32.xlu0 %v276, 127
        %v282 = vpop.permute.xlu0 %281
        %285 = vrot.lane.b32.xlu0 %v275, 126
        %v286 = vpop.permute.xlu0 %285
        %287 = vrot.lane.b32.xlu0 %v276, 126
        %v288 = vpop.permute.xlu0 %287
        %s291 = scalar_lea.vmem %s1, 16
        %v292 = vld [vmem:[%s291] sm:$0xff]
        %v293 = vld [vmem:[%s291 + $0x8] sm:$0xff]
        %vm294 = vcmask 392192
        %v296 = vsel %vm294, %v292, 0
        %v299 = vsel %vm294, %v293, 0
        %301 = vmatprep.subr.mxu0 0.0
        %302 = vmatpush1.msra.mxu0 %v275
        %303 = vmatprep.subr.mxu0 0.0
        %304 = vmatpush1.msra.mxu0 %v276
        %305 = vmatprep.subr.mxu0 0.0
        %306 = vmatpush1.msra.mxu0 %v280
        %307 = vmatprep.subr.mxu0 0.0
        %308 = vmatpush1.msra.mxu0 %v282
        %309 = vmatprep.subr.mxu0 0.0
        %310 = vmatpush1.msra.mxu0 %v286
        %311 = vmatprep.subr.mxu0 0.0
        %312 = vmatpush1.msra.mxu0 %v288
        %313 = vmatprep.subr.mxu0 0.0
        %314 = vmatpush1.msra.mxu0 0.0
        %315 = vmatprep.subr.mxu0 0.0
        %316 = vmatpush1.msra.mxu0 0.0
        %317 = vmatprep.subr.mxu0 0.0
        %318 = vmatpush1.msra.mxu0 0.0
        %319 = vmatprep.subr.mxu0 0.0
        %320 = vmatpush1.msra.mxu0 0.0
        %321 = vmatprep.subr.mxu0 0.0
        %322 = vmatpush1.msra.mxu0 0.0
        %323 = vmatprep.subr.mxu0 0.0
        %324 = vmatpush1.msra.mxu0 0.0
        %325 = vmatprep.subr.mxu0 0.0
        %326 = vmatpush1.msra.mxu0 0.0
        %327 = vmatprep.subr.mxu0 0.0
        %328 = vmatpush1.msra.mxu0 0.0
        %329 = vmatprep.subr.mxu0 0.0
        %330 = vmatpush1.msra.mxu0 0.0
        %331 = vmatprep.subr.mxu0 0.0
        %332 = vmatpush1.msra.mxu0 0.0
        %333 = vmatprep.subr.mxu0 0.0
        %334 = vmatpush1.msra.mxu0 0.0
        %335 = vmatprep.subr.mxu0 0.0
        %336 = vmatpush1.msra.mxu0 0.0
        %337 = vmatprep.subr.mxu0 0.0
        %338 = vmatpush1.msra.mxu0 0.0
        %339 = vmatprep.subr.mxu0 0.0
        %340 = vmatpush1.msra.mxu0 0.0
        %341 = vmatprep.subr.mxu0 0.0
        %342 = vmatpush1.msra.mxu0 0.0
        %343 = vmatprep.subr.mxu0 0.0
        %344 = vmatpush1.msra.mxu0 0.0
        %345 = vmatprep.subr.mxu0 0.0
        %346 = vmatpush1.msra.mxu0 0.0
        %347 = vmatprep.subr.mxu0 0.0
        %348 = vmatpush1.msra.mxu0 0.0
        %349 = vmatprep.subr.mxu0 0.0
        %350 = vmatpush1.msra.mxu0 0.0
        %351 = vmatprep.subr.mxu0 0.0
        %352 = vmatpush1.msra.mxu0 0.0
        %353 = vmatprep.subr.mxu0 0.0
        %354 = vmatpush1.msra.mxu0 0.0
        %355 = vmatprep.subr.mxu0 0.0
        %356 = vmatpush1.msra.mxu0 0.0
        %357 = vmatprep.subr.mxu0 0.0
        %358 = vmatpush1.msra.mxu0 0.0
        %359 = vmatprep.subr.mxu0 0.0
        %360 = vmatpush1.msra.mxu0 0.0
        %361 = vmatprep.subr.mxu0 0.0
        %362 = vmatpush1.msra.mxu0 0.0
        %363 = vmatprep.subr.mxu0 0.0
        %364 = vmatpush1.msra.mxu0 0.0
        %365 = vmatprep.mubr.f32.mxu0 0.0
        %366 = vmatmul.mubr.f32.gmra.mrb[0].mxu0 %v296
        %v367 = vpop.f32.mrb[0].mxu0
        %v368 = vadd.f32 0.0, %v367
        %v369 = vpop.f32.mrb[0].mxu0
        %370 = vmatprep.mubr.f32.mxu0 0.0
        %371 = vmatmul.mubr.f32.gmra.mrb[0].mxu0 %v299
        %v372 = vpop.f32.mrb[0].mxu0
        %v373 = vadd.f32 0.0, %v372
        %v374 = vpop.f32.mrb[0].mxu0
        %375 = vdwg.mxu0
        %v377 = vsel %vm294, %v270, 0
        %v380 = vsel %vm294, %v271, 0
        %382 = vmatprep.subr.mxu0 0.0
        %383 = vmatpush1.msra.mxu0 %v254
        %384 = vmatprep.subr.mxu0 0.0
        %385 = vmatpush1.msra.mxu0 %v255
        %386 = vmatprep.subr.mxu0 0.0
        %387 = vmatpush1.msra.mxu0 %v259
        %388 = vmatprep.subr.mxu0 0.0
        %389 = vmatpush1.msra.mxu0 %v261
        %390 = vmatprep.subr.mxu0 0.0
        %391 = vmatpush1.msra.mxu0 %v265
        %392 = vmatprep.subr.mxu0 0.0
        %393 = vmatpush1.msra.mxu0 %v267
        %394 = vmatprep.subr.mxu0 0.0
        %395 = vmatpush1.msra.mxu0 0.0
        %396 = vmatprep.subr.mxu0 0.0
        %397 = vmatpush1.msra.mxu0 0.0
        %398 = vmatprep.subr.mxu0 0.0
        %399 = vmatpush1.msra.mxu0 0.0
        %400 = vmatprep.subr.mxu0 0.0
        %401 = vmatpush1.msra.mxu0 0.0
        %402 = vmatprep.subr.mxu0 0.0
        %403 = vmatpush1.msra.mxu0 0.0
        %404 = vmatprep.subr.mxu0 0.0
        %405 = vmatpush1.msra.mxu0 0.0
        %406 = vmatprep.subr.mxu0 0.0
        %407 = vmatpush1.msra.mxu0 0.0
        %408 = vmatprep.subr.mxu0 0.0
        %409 = vmatpush1.msra.mxu0 0.0
        %410 = vmatprep.subr.mxu0 0.0
        %411 = vmatpush1.msra.mxu0 0.0
        %412 = vmatprep.subr.mxu0 0.0
        %413 = vmatpush1.msra.mxu0 0.0
        %414 = vmatprep.subr.mxu0 0.0
        %415 = vmatpush1.msra.mxu0 0.0
        %416 = vmatprep.subr.mxu0 0.0
        %417 = vmatpush1.msra.mxu0 0.0
        %418 = vmatprep.subr.mxu0 0.0
        %419 = vmatpush1.msra.mxu0 0.0
        %420 = vmatprep.subr.mxu0 0.0
        %421 = vmatpush1.msra.mxu0 0.0
        %422 = vmatprep.subr.mxu0 0.0
        %423 = vmatpush1.msra.mxu0 0.0
        %424 = vmatprep.subr.mxu0 0.0
        %425 = vmatpush1.msra.mxu0 0.0
        %426 = vmatprep.subr.mxu0 0.0
        %427 = vmatpush1.msra.mxu0 0.0
        %428 = vmatprep.subr.mxu0 0.0
        %429 = vmatpush1.msra.mxu0 0.0
        %430 = vmatprep.subr.mxu0 0.0
        %431 = vmatpush1.msra.mxu0 0.0
        %432 = vmatprep.subr.mxu0 0.0
        %433 = vmatpush1.msra.mxu0 0.0
        %434 = vmatprep.subr.mxu0 0.0
        %435 = vmatpush1.msra.mxu0 0.0
        %436 = vmatprep.subr.mxu0 0.0
        %437 = vmatpush1.msra.mxu0 0.0
        %438 = vmatprep.subr.mxu0 0.0
        %439 = vmatpush1.msra.mxu0 0.0
        %440 = vmatprep.subr.mxu0 0.0
        %441 = vmatpush1.msra.mxu0 0.0
        %442 = vmatprep.subr.mxu0 0.0
        %443 = vmatpush1.msra.mxu0 0.0
        %444 = vmatprep.subr.mxu0 0.0
        %445 = vmatpush1.msra.mxu0 0.0
        %446 = vmatprep.mubr.f32.mxu0 0.0
        %447 = vmatmul.mubr.f32.gmra.mrb[0].mxu0 %v377
        %v448 = vpop.f32.mrb[0].mxu0
        %v449 = vadd.f32 %v368, %v448
        %v450 = vpop.f32.mrb[0].mxu0
        %451 = vmatprep.mubr.f32.mxu0 0.0
        %452 = vmatmul.mubr.f32.gmra.mrb[0].mxu0 %v380
        %v453 = vpop.f32.mrb[0].mxu0
        %v454 = vadd.f32 %v373, %v453
        %v455 = vpop.f32.mrb[0].mxu0
        %456 = vdwg.mxu0
        %s457 = sadd.s32 %s243, 2
        %s458 = smul.u32 %s457, 16
        %s459 = scalar_lea.vmem %s230, %s458
        %v460 = vld [vmem:[%s459] sm:$0xff]
        %v461 = vld [vmem:[%s459 + $0x8] sm:$0xff]
        %464 = vrot.lane.b32.xlu0 %v460, 127
        %v465 = vpop.permute.xlu0 %464
        %466 = vrot.lane.b32.xlu0 %v461, 127
        %v467 = vpop.permute.xlu0 %466
        %470 = vrot.lane.b32.xlu0 %v460, 126
        %v471 = vpop.permute.xlu0 %470
        %472 = vrot.lane.b32.xlu0 %v461, 126
        %v473 = vpop.permute.xlu0 %472
        %s476 = scalar_lea.vmem %s1, 32
        %v477 = vld [vmem:[%s476] sm:$0xff]
        %v478 = vld [vmem:[%s476 + $0x8] sm:$0xff]
        %v480 = vsel %vm294, %v477, 0
        %v483 = vsel %vm294, %v478, 0
        %485 = vmatprep.subr.mxu0 0.0
        %486 = vmatpush1.msra.mxu0 %v460
        %487 = vmatprep.subr.mxu0 0.0
        %488 = vmatpush1.msra.mxu0 %v461
        %489 = vmatprep.subr.mxu0 0.0
        %490 = vmatpush1.msra.mxu0 %v465
        %491 = vmatprep.subr.mxu0 0.0
        %492 = vmatpush1.msra.mxu0 %v467
        %493 = vmatprep.subr.mxu0 0.0
        %494 = vmatpush1.msra.mxu0 %v471
        %495 = vmatprep.subr.mxu0 0.0
        %496 = vmatpush1.msra.mxu0 %v473
        %497 = vmatprep.subr.mxu0 0.0
        %498 = vmatpush1.msra.mxu0 0.0
        %499 = vmatprep.subr.mxu0 0.0
        %500 = vmatpush1.msra.mxu0 0.0
        %501 = vmatprep.subr.mxu0 0.0
        %502 = vmatpush1.msra.mxu0 0.0
        %503 = vmatprep.subr.mxu0 0.0
        %504 = vmatpush1.msra.mxu0 0.0
        %505 = vmatprep.subr.mxu0 0.0
        %506 = vmatpush1.msra.mxu0 0.0
        %507 = vmatprep.subr.mxu0 0.0
        %508 = vmatpush1.msra.mxu0 0.0
        %509 = vmatprep.subr.mxu0 0.0
        %510 = vmatpush1.msra.mxu0 0.0
        %511 = vmatprep.subr.mxu0 0.0
        %512 = vmatpush1.msra.mxu0 0.0
        %513 = vmatprep.subr.mxu0 0.0
        %514 = vmatpush1.msra.mxu0 0.0
        %515 = vmatprep.subr.mxu0 0.0
        %516 = vmatpush1.msra.mxu0 0.0
        %517 = vmatprep.subr.mxu0 0.0
        %518 = vmatpush1.msra.mxu0 0.0
        %519 = vmatprep.subr.mxu0 0.0
        %520 = vmatpush1.msra.mxu0 0.0
        %521 = vmatprep.subr.mxu0 0.0
        %522 = vmatpush1.msra.mxu0 0.0
        %523 = vmatprep.subr.mxu0 0.0
        %524 = vmatpush1.msra.mxu0 0.0
        %525 = vmatprep.subr.mxu0 0.0
        %526 = vmatpush1.msra.mxu0 0.0
        %527 = vmatprep.subr.mxu0 0.0
        %528 = vmatpush1.msra.mxu0 0.0
        %529 = vmatprep.subr.mxu0 0.0
        %530 = vmatpush1.msra.mxu0 0.0
        %531 = vmatprep.subr.mxu0 0.0
        %532 = vmatpush1.msra.mxu0 0.0
        %533 = vmatprep.subr.mxu0 0.0
        %534 = vmatpush1.msra.mxu0 0.0
        %535 = vmatprep.subr.mxu0 0.0
        %536 = vmatpush1.msra.mxu0 0.0
        %537 = vmatprep.subr.mxu0 0.0
        %538 = vmatpush1.msra.mxu0 0.0
        %539 = vmatprep.subr.mxu0 0.0
        %540 = vmatpush1.msra.mxu0 0.0
        %541 = vmatprep.subr.mxu0 0.0
        %542 = vmatpush1.msra.mxu0 0.0
        %543 = vmatprep.subr.mxu0 0.0
        %544 = vmatpush1.msra.mxu0 0.0
        %545 = vmatprep.subr.mxu0 0.0
        %546 = vmatpush1.msra.mxu0 0.0
        %547 = vmatprep.subr.mxu0 0.0
        %548 = vmatpush1.msra.mxu0 0.0
        %549 = vmatprep.mubr.f32.mxu0 0.0
        %550 = vmatmul.mubr.f32.gmra.mrb[0].mxu0 %v480
        %v551 = vpop.f32.mrb[0].mxu0
        %v552 = vadd.f32 0.0, %v551
        %v553 = vpop.f32.mrb[0].mxu0
        %554 = vmatprep.mubr.f32.mxu0 0.0
        %555 = vmatmul.mubr.f32.gmra.mrb[0].mxu0 %v483
        %v556 = vpop.f32.mrb[0].mxu0
        %v557 = vadd.f32 0.0, %v556
        %v558 = vpop.f32.mrb[0].mxu0
        %559 = vdwg.mxu0
        %v560 = vadd.f32 %v449, %v552
        %v561 = vadd.f32 %v454, %v557
        %v562 = vld [vmem:[%s2] sm:$0xff]
        %v563 = vld [vmem:[%s2 + $0x8] sm:$0xff]
        %565 = vset.pattern.permute.xlu0 0
        %566 = vperm.xlu0 %565, %v562
        %v567 = vpop.permute.xlu0 %566
        %570 = vset.pattern.permute.xlu0 0
        %571 = vperm.xlu0 %570, %v563
        %v572 = vpop.permute.xlu0 %571
        %v574 = vadd.f32 %v560, %v567
        %v575 = vadd.f32 %v561, %v572
        %s576 = scalar_lea.vmem %s235, %s252
        %vm577 = vcmask 490496
        %578 = vst.msk [vmem:[%s576] sm:$0xff] %vm577, %v574
        %579 = vst.msk [vmem:[%s576 + $0x8] sm:$0xff] %vm577, %v575
        %v580 = vadd.f32 %v248, %v574
        %v581 = vadd.f32 %v249, %v575
        %v582 = vmul.f32 %v574, %v574
        %v583 = vmul.f32 %v575, %v575
        %v584 = vadd.f32 %v250, %v582
        %v585 = vadd.f32 %v251, %v583
      $region37: #{gncnn_forward.15} parent=31 // loop_footer
        %s247 = sadd.s32 1, %s243
      $region38: #{gncnn_forward.15} parent=31 // loop_footer_branch
        %242 = sbr.rel target = $region34
      $region39: #{gncnn_forward.15} parent=31 // loop_exit
        _
      %vm586 = vcmask 490496
      %v587 = vsel %vm586, %v248, 0.0
      %v588 = vsel %vm586, %v249, 0.0
      %v589 = vadd.f32 %v587, %v588
      %590 = vadd.xlane.f32.xlu0 %v589
      %v591 = vpop.xlane.xlu0 %590
      %v592 = vrot.slane %v591, 4
      %v593 = vadd.f32 %v591, %v592
      %v594 = vrot.slane %v593, 2
      %v595 = vadd.f32 %v593, %v594
      %v596 = vrot.slane %v595, 1
      %v597 = vadd.f32 %v595, %v596
      %s598 = vtos %v597
      %v599 = vstv %s598
      %vm600 = vcmask 0
      %601 = vst.msk [vmem:[%s238] sm:$0x1] %vm600, %v599
      %v602 = vsel %vm586, %v250, 0.0
      %v603 = vsel %vm586, %v251, 0.0
      %v604 = vadd.f32 %v602, %v603
      %605 = vadd.xlane.f32.xlu0 %v604
      %v606 = vpop.xlane.xlu0 %605
      %v607 = vrot.slane %v606, 4
      %v608 = vadd.f32 %v606, %v607
      %v609 = vrot.slane %v608, 2
      %v610 = vadd.f32 %v608, %v609
      %v611 = vrot.slane %v610, 1
      %v612 = vadd.f32 %v610, %v611
      %s613 = vtos %v612
      %v614 = vstv %s613
      %615 = vst.msk [vmem:[%s241] sm:$0x1] %vm600, %v614
      %p616 = scmp.lt.s32.totalorder %s17, 1
      %s617 = scalar_select %p616, %s17, 1
      %s618 = smul.addr %s617, 120
      %s619 = smul.addr %s618, 8
      %s620 = scalar_lea.vmem %s3, %s619
      %p621 = scmp.lt.s32.totalorder %s17, 1
      %s622 = scalar_select %p621, %s17, 1
      %s623 = scalar_lea.vmem %s4, %s622
      %p624 = scmp.lt.s32.totalorder %s17, 1
      %s625 = scalar_select %p624, %s17, 1
      %s626 = scalar_lea.vmem %s5, %s625
      // Predicated region
      $region40: #{gncnn_forward.15} parent=31 // pred_check
        %p627 = pneg %p103
      $region41: #{gncnn_forward.15} parent=31 // pred_check_branch
        %629 = sbr.rel (%p627) target = $region43
      $region42: #{gncnn_forward.15} parent=31 // pred_region
        _
      $region43: #{gncnn_forward.15} parent=31 // pred_fallthru
        _
      // Predicated region
      $region44: #{gncnn_forward.15} parent=31 // pred_check
        %p630 = pneg %p129
      $region45: #{gncnn_forward.15} parent=31 // pred_check_branch
        %632 = sbr.rel (%p630) target = $region47
      $region46: #{gncnn_forward.15} parent=31 // pred_region
        _
      $region47: #{gncnn_forward.15} parent=31 // pred_fallthru
        _
      // Predicated region
      $region48: #{gncnn_forward.15} parent=31 // pred_check
        %p633 = pneg %p155
      $region49: #{gncnn_forward.15} parent=31 // pred_check_branch
        %635 = sbr.rel (%p633) target = $region51
      $region50: #{gncnn_forward.15} parent=31 // pred_region
        _
      $region51: #{gncnn_forward.15} parent=31 // pred_fallthru
        _
    $region32: #{gncnn_forward.15} parent=5 // pred_fallthru
      _
    %p636 = scmp.le.s32.totalorder 2, %s12
    // Predicated region
    $region52: #{gncnn_forward.15} parent=5 // pred_check
      %p637 = pneg %p636
    $region53: #{gncnn_forward.15} parent=5 // pred_check_branch
      %639 = sbr.rel (%p637) target = $region55
    $region54: #{gncnn_forward.15} parent=5 // pred_region
      %s640 = ssub.s32 %s12, 2
      // Predicated region
      $region56: #{gncnn_forward.15} parent=54 // pred_check
        %p641 = pneg %p109
      $region57: #{gncnn_forward.15} parent=54 // pred_check_branch
        %643 = sbr.rel (%p641) target = $region59
      $region58: #{gncnn_forward.15} parent=54 // pred_region
        %p644 = scmp.lt.s32.totalorder %s18, 1
        %s645 = scalar_select %p644, %s18, 1
        %s646 = smul.addr %s645, 120
        %s647 = smul.addr %s646, 8
        %s648 = scalar_lea.vmem %s3, %s647
      $region59: #{gncnn_forward.15} parent=54 // pred_fallthru
        _
      // Predicated region
      $region60: #{gncnn_forward.15} parent=54 // pred_check
        %p649 = pneg %p135
      $region61: #{gncnn_forward.15} parent=54 // pred_check_branch
        %651 = sbr.rel (%p649) target = $region63
      $region62: #{gncnn_forward.15} parent=54 // pred_region
        %p652 = scmp.lt.s32.totalorder %s18, 1
        %s653 = scalar_select %p652, %s18, 1
        %s654 = scalar_lea.vmem %s4, %s653
      $region63: #{gncnn_forward.15} parent=54 // pred_fallthru
        _
      // Predicated region
      $region64: #{gncnn_forward.15} parent=54 // pred_check
        %p655 = pneg %p161
      $region65: #{gncnn_forward.15} parent=54 // pred_check_branch
        %657 = sbr.rel (%p655) target = $region67
      $region66: #{gncnn_forward.15} parent=54 // pred_region
        %p658 = scmp.lt.s32.totalorder %s18, 1
        %s659 = scalar_select %p658, %s18, 1
        %s660 = scalar_lea.vmem %s5, %s659
      $region67: #{gncnn_forward.15} parent=54 // pred_fallthru
        _
    $region55: #{gncnn_forward.15} parent=5 // pred_fallthru
      _
  $region6: #{gncnn_forward.15} parent=0 // loop_footer
    %s16 = sadd.s32 1, %s12
  $region7: #{gncnn_forward.15} parent=0 // loop_footer_branch
    %11 = sbr.rel target = $region3
  $region8: #{gncnn_forward.15} parent=0 // loop_exit
    _

// kernel: gncnn_forward.16
$region0: #{gncnn_forward.16}
  #allocation0 [shape = 'u32[]', space=smem, size = 0x4, offset = 0x4, fixed_abs, tag = 'smem constant byte address 0x4 - core index']
  #allocation1 [shape = 'u32[144,128]{1,0:T(1,128)}', space=vmem, size = 0x12000, scoped, tag = 'internal scratch']
  #allocation2 [shape = 'f32[60,16,29]{2,1,0:T(8,128)}', space=vmem, size = 0x78000, scoped, tag = 'scratch operand']
  %s0 = inlined_call_operand.vmem [shape: f32[2], index: 0, kind: input, shape index: {}]
  %s1 = inlined_call_operand.vmem [shape: f32[2,60,16,60], index: 1, kind: input, shape index: {}]
  %s2 = inlined_call_operand.vmem [shape: f32[60,29], index: 2, kind: input, shape index: {}]
  %s3 = inlined_call_operand.vmem [shape: f32[2,29,16,29], index: 3, kind: output, shape index: {}]
  %s4 = sld [smem:[#allocation0]]
  $region63: #{gncnn_forward.16} parent=0
    _
  %s6 = ssub.s32 1, %s4
  %s7 = scalar_select 0, %s6, %s4
  $region1: #{gncnn_forward.16} parent=0
    #allocation3 [shape = 'u8[512]{0}', space=smem, size = 0x200, scoped, tag = 'input window, operand 0, single buffered']
    #allocation4 [shape = 's32[2]{0}', space=sflag, size = 0x8, scoped, tag = 'scoped memory for gncnn_forward.16']
    %8 = vsyncpa [#allocation4], 0
    loop: start=0, step=1, limit=4
    $region2: #{gncnn_forward.16} parent=1 // loop_pre_header
      _
    $region3: #{gncnn_forward.16} parent=1 // loop_header
      %s10 = sphi 0, %s14
      %p11 = scmp.ge.s32.totalorder %s10, 4
      %s18 = sphi 0, %s18
      %s20 = sphi 0, %s18
      %s21 = sphi 0, %s20
      %s35 = sphi 0, %s21
      %s41 = sphi 0, %s43
      %s44 = sphi 0, %s41
      %s45 = sphi 0, %s44
      %s61 = sphi 0, %s45
      %s65 = sphi 0, %s65
      %s67 = sphi 0, %s65
      %s68 = sphi 0, %s67
      %s82 = sphi 0, %s68
      %s88 = sphi 0, %s90
      %s91 = sphi 0, %s88
      %s92 = sphi 0, %s91
      %s108 = sphi 0, %s92
    $region4: #{gncnn_forward.16} parent=1 // loop_header_branch
      %13 = sbr.rel (%p11) target = $region8
    $region5: #{gncnn_forward.16} parent=1 // loop_body
      %s15 = ssub.s32 %s10, 1
      %s16 = ssub.s32 %s10, 2
      %s17 = sadd.s32 %s10, 1
      %s19 = sadd.s32 %s18, 1
      %p22 = scmp.eq.s32.totalorder %s10, 1
      %p23 = scmp.ne.s32.totalorder %s18, %s20
      %p24 = scmp.eq.s32.totalorder %s10, 0
      %p25 = por %p23, %p24
      %p26 = scmp.ne.s32.totalorder %s18, %s20
      %p27 = scmp.eq.s32.totalorder %s15, 1
      %p28 = por %p26, %p27
      %p29 = scmp.ne.s32.totalorder %s20, %s21
      %p30 = scmp.eq.s32.totalorder %s15, 0
      %p31 = por %p29, %p30
      %p32 = scmp.ne.s32.totalorder %s20, %s21
      %p33 = scmp.eq.s32.totalorder %s16, 1
      %p34 = por %p32, %p33
      %p36 = scmp.ne.s32.totalorder %s21, %s35
      %p37 = scmp.eq.s32.totalorder %s16, 0
      %p38 = por %p36, %p37
      %s39 = ssub.s32 %s10, %s17
      %p40 = scmp.eq.s32.totalorder %s39, 0
      %s42 = sadd.s32 %s41, 1
      %s43 = scalar_select %p40, %s41, %s42
      %p46 = pneg %p40
      %p47 = scmp.eq.s32.totalorder %s10, 1
      %p48 = por %p46, %p47
      %p49 = scmp.ne.s32.totalorder %s41, %s44
      %p50 = scmp.eq.s32.totalorder %s10, 0
      %p51 = por %p49, %p50
      %p52 = scmp.ne.s32.totalorder %s41, %s44
      %p53 = scmp.eq.s32.totalorder %s15, 1
      %p54 = por %p52, %p53
      %p55 = scmp.ne.s32.totalorder %s44, %s45
      %p56 = scmp.eq.s32.totalorder %s15, 0
      %p57 = por %p55, %p56
      %p58 = scmp.ne.s32.totalorder %s44, %s45
      %p59 = scmp.eq.s32.totalorder %s16, 1
      %p60 = por %p58, %p59
      %p62 = scmp.ne.s32.totalorder %s45, %s61
      %p63 = scmp.eq.s32.totalorder %s16, 0
      %p64 = por %p62, %p63
      %s66 = sadd.s32 %s65, 1
      %p69 = scmp.eq.s32.totalorder %s10, 1
      %p70 = scmp.ne.s32.totalorder %s65, %s67
      %p71 = scmp.eq.s32.totalorder %s10, 0
      %p72 = por %p70, %p71
      %p73 = scmp.ne.s32.totalorder %s65, %s67
      %p74 = scmp.eq.s32.totalorder %s15, 1
      %p75 = por %p73, %p74
      %p76 = scmp.ne.s32.totalorder %s67, %s68
      %p77 = scmp.eq.s32.totalorder %s15, 0
      %p78 = por %p76, %p77
      %p79 = scmp.ne.s32.totalorder %s67, %s68
      %p80 = scmp.eq.s32.totalorder %s16, 1
      %p81 = por %p79, %p80
      %p83 = scmp.ne.s32.totalorder %s68, %s82
      %p84 = scmp.eq.s32.totalorder %s16, 0
      %p85 = por %p83, %p84
      %s86 = ssub.s32 %s10, %s17
      %p87 = scmp.eq.s32.totalorder %s86, 0
      %s89 = sadd.s32 %s88, 1
      %s90 = scalar_select %p87, %s88, %s89
      %p93 = pneg %p87
      %p94 = scmp.eq.s32.totalorder %s10, 1
      %p95 = por %p93, %p94
      %p96 = scmp.ne.s32.totalorder %s88, %s91
      %p97 = scmp.eq.s32.totalorder %s10, 0
      %p98 = por %p96, %p97
      %p99 = scmp.ne.s32.totalorder %s88, %s91
      %p100 = scmp.eq.s32.totalorder %s15, 1
      %p101 = por %p99, %p100
      %p102 = scmp.ne.s32.totalorder %s91, %s92
      %p103 = scmp.eq.s32.totalorder %s15, 0
      %p104 = por %p102, %p103
      %p105 = scmp.ne.s32.totalorder %s91, %s92
      %p106 = scmp.eq.s32.totalorder %s16, 1
      %p107 = por %p105, %p106
      %p109 = scmp.ne.s32.totalorder %s92, %s108
      %p110 = scmp.eq.s32.totalorder %s16, 0
      %p111 = por %p109, %p110
      %p112 = scmp.le.s32.totalorder 1, %s10
      %p113 = scmp.lt.s32.totalorder %s10, 3
      %p114 = pnand %p112, %p113
      %p115 = pneg %p114
      // Predicated region
      $region9: #{gncnn_forward.16} parent=5 // pred_check
        _
      $region10: #{gncnn_forward.16} parent=5 // pred_check_branch
        %117 = sbr.rel (%p114) target = $region12
      $region11: #{gncnn_forward.16} parent=5 // pred_region
        %s118 = ssub.s32 %s10, 1
        // Predicated region
        $region13: #{gncnn_forward.16} parent=11 // pred_check
          %p119 = pneg %p31
        $region14: #{gncnn_forward.16} parent=11 // pred_check_branch
          %121 = sbr.rel (%p119) target = $region16
        $region15: #{gncnn_forward.16} parent=11 // pred_region
          %s123 = ssub.s32 16, 16
          %124 = vsyncadd [#allocation4], %s123
          %s126 = sshll.u32 %s0, 4
          %s127 = int_to_ptr.vmem [resolvable:$true] %s126
          %129 = dma.vmem_to_smem %s127, 16, [#allocation3], [#allocation4]
        $region16: #{gncnn_forward.16} parent=11 // pred_fallthru
          _
        // Predicated region
        $region17: #{gncnn_forward.16} parent=11 // pred_check
          %p130 = pneg %p78
        $region18: #{gncnn_forward.16} parent=11 // pred_check_branch
          %132 = sbr.rel (%p130) target = $region20
        $region19: #{gncnn_forward.16} parent=11 // pred_region
          _
        $region20: #{gncnn_forward.16} parent=11 // pred_fallthru
          _
      $region12: #{gncnn_forward.16} parent=5 // pred_fallthru
        _
      %p133 = scmp.lt.s32.totalorder %s10, 2
      // Predicated region
      $region21: #{gncnn_forward.16} parent=5 // pred_check
        %p134 = pneg %p133
      $region22: #{gncnn_forward.16} parent=5 // pred_check_branch
        %136 = sbr.rel (%p134) target = $region24
      $region23: #{gncnn_forward.16} parent=5 // pred_region
        // Predicated region
        $region25: #{gncnn_forward.16} parent=23 // pred_check
          %p137 = pneg %p51
        $region26: #{gncnn_forward.16} parent=23 // pred_check_branch
          %139 = sbr.rel (%p137) target = $region28
        $region27: #{gncnn_forward.16} parent=23 // pred_region
          %p140 = scmp.lt.s32.totalorder %s10, 1
          %s141 = scalar_select %p140, %s10, 1
          %s142 = smul.addr %s141, 120
          %s143 = smul.addr %s142, 8
          %s144 = scalar_lea.vmem %s1, %s143
        $region28: #{gncnn_forward.16} parent=23 // pred_fallthru
          _
      $region24: #{gncnn_forward.16} parent=5 // pred_fallthru
        _
      %p145 = scmp.le.s32.totalorder 1, %s10
      %p146 = scmp.lt.s32.totalorder %s10, 3
      %p147 = pnand %p145, %p146
      %p148 = pneg %p147
      // Predicated region
      $region29: #{gncnn_forward.16} parent=5 // pred_check
        _
      $region30: #{gncnn_forward.16} parent=5 // pred_check_branch
        %150 = sbr.rel (%p147) target = $region32
      $region31: #{gncnn_forward.16} parent=5 // pred_region
        %s151 = ssub.s32 %s10, 1
        // Predicated region
        $region33: #{gncnn_forward.16} parent=31 // pred_check
          %p152 = pneg %p31
        $region34: #{gncnn_forward.16} parent=31 // pred_check_branch
          %154 = sbr.rel (%p152) target = $region36
        $region35: #{gncnn_forward.16} parent=31 // pred_region
          %155 = dma.done [#allocation4], 16
        $region36: #{gncnn_forward.16} parent=31 // pred_fallthru
          _
        %156 = sfence
        %p157 = pneg %p31
        %p158 = pneg %p28
        %p159 = scmp.lt.s32.totalorder %s15, 1
        %s160 = scalar_select %p159, %s15, 1
        %s161 = smul.addr %s160, 120
        %s162 = smul.addr %s161, 8
        %s163 = scalar_lea.vmem %s1, %s162
        %p164 = pneg %p57
        %p165 = pneg %p54
        %p166 = pneg %p78
        %p167 = pneg %p75
        %p168 = pneg %p104
        %p169 = pneg %p101
        %p170 = scmp.lt.s32.totalorder %s15, 1
        %s171 = scalar_select %p170, %s15, 1
        %s172 = smul.addr %s171, 58
        %s173 = smul.addr %s172, 8
        %s174 = scalar_lea.vmem %s3, %s173
        %p175 = scmp.lt.s32.totalorder %s15, 1
        %s176 = scalar_select %p175, %s15, 1
        %s177 = smul.addr %s176, 120
        %s178 = smul.addr %s177, 8
        %s179 = scalar_lea.vmem %s1, %s178
        %p180 = scmp.lt.s32.totalorder %s15, 1
        %s181 = scalar_select %p180, %s15, 1
        %s182 = smul.addr %s181, 58
        %s183 = smul.addr %s182, 8
        %s184 = scalar_lea.vmem %s3, %s183
        %s185 = sld [smem:[#allocation3]]
        %s186 = sld [smem:[#allocation3 + $0x1]]
        loop: start=0, step=1, limit=60
        $region37: #{gncnn_forward.16} parent=31 // loop_pre_header
          _
        $region38: #{gncnn_forward.16} parent=31 // loop_header
          %s188 = sphi 0, %s192
          %p189 = scmp.ge.s32.totalorder %s188, 60
        $region39: #{gncnn_forward.16} parent=31 // loop_header_branch
          %191 = sbr.rel (%p189) target = $region43
        $region40: #{gncnn_forward.16} parent=31 // loop_body
          %s193 = smul.u32 %s188, 16
          %s194 = scalar_lea.vmem %s179, %s193
          %v195 = vld [vmem:[%s194] sm:$0xff]
          %v196 = vld [vmem:[%s194 + $0x8] sm:$0xff]
          %v197 = vstv %s185
          %v198 = vsub.f32 %v195, %v197
          %v199 = vsub.f32 %v196, %v197
          %v200 = vmul.f32 %v198, %v198
          %v201 = vmul.f32 %v199, %v199
          %v202 = vsub.f32 0.0, %v200
          %v203 = vsub.f32 0.0, %v201
          %v204 = vstv %s186
          %v205 = vmul.f32 %v202, %v204
          %v206 = vmul.f32 %v203, %v204
          %v207 = vmul.f32 %v205, 1.442695
          %v208 = vpow.pop %v207
          %v209 = vmul.f32 %v206, 1.442695
          %v210 = vpow.pop %v209
          %v211 = vld [vmem:[%s2] sm:$0xff]
          %v212 = vld [vmem:[%s2 + $0x8] sm:$0xff]
          %v213 = vld [vmem:[%s2 + $0x10] sm:$0xff]
          %v214 = vld [vmem:[%s2 + $0x18] sm:$0xff]
          %v215 = vld [vmem:[%s2 + $0x20] sm:$0xff]
          %v216 = vld [vmem:[%s2 + $0x28] sm:$0xff]
          %v217 = vld [vmem:[%s2 + $0x30] sm:$0xff]
          %v218 = vld [vmem:[%s2 + $0x38] sm:$0xf]
          %vm219 = vcmask 490496
          %v221 = vsel %vm219, %v208, 0
          %v224 = vsel %vm219, %v210, 0
          %vm226 = vcmask 1043456
          %v228 = vsel %vm226, %v218, 0
          %230 = vmatprep.subr.mxu0 0.0
          %231 = vmatpush1.msra.mxu0 %v211
          %232 = vmatprep.subr.mxu0 0.0
          %233 = vmatpush1.msra.mxu0 %v212
          %234 = vmatprep.subr.mxu0 0.0
          %235 = vmatpush1.msra.mxu0 %v213
          %236 = vmatprep.subr.mxu0 0.0
          %237 = vmatpush1.msra.mxu0 %v214
          %238 = vmatprep.subr.mxu0 0.0
          %239 = vmatpush1.msra.mxu0 %v215
          %240 = vmatprep.subr.mxu0 0.0
          %241 = vmatpush1.msra.mxu0 %v216
          %242 = vmatprep.subr.mxu0 0.0
          %243 = vmatpush1.msra.mxu0 %v217
          %244 = vmatprep.subr.mxu0 0.0
          %245 = vmatpush1.msra.mxu0 %v228
          %246 = vmatprep.subr.mxu0 0.0
          %247 = vmatpush1.msra.mxu0 0.0
          %248 = vmatprep.subr.mxu0 0.0
          %249 = vmatpush1.msra.mxu0 0.0
          %250 = vmatprep.subr.mxu0 0.0
          %251 = vmatpush1.msra.mxu0 0.0
          %252 = vmatprep.subr.mxu0 0.0
          %253 = vmatpush1.msra.mxu0 0.0
          %254 = vmatprep.subr.mxu0 0.0
          %255 = vmatpush1.msra.mxu0 0.0
          %256 = vmatprep.subr.mxu0 0.0
          %257 = vmatpush1.msra.mxu0 0.0
          %258 = vmatprep.subr.mxu0 0.0
          %259 = vmatpush1.msra.mxu0 0.0
          %260 = vmatprep.subr.mxu0 0.0
          %261 = vmatpush1.msra.mxu0 0.0
          %262 = vmatprep.subr.mxu0 0.0
          %263 = vmatpush1.msra.mxu0 0.0
          %264 = vmatprep.subr.mxu0 0.0
          %265 = vmatpush1.msra.mxu0 0.0
          %266 = vmatprep.subr.mxu0 0.0
          %267 = vmatpush1.msra.mxu0 0.0
          %268 = vmatprep.subr.mxu0 0.0
          %269 = vmatpush1.msra.mxu0 0.0
          %270 = vmatprep.subr.mxu0 0.0
          %271 = vmatpush1.msra.mxu0 0.0
          %272 = vmatprep.subr.mxu0 0.0
          %273 = vmatpush1.msra.mxu0 0.0
          %274 = vmatprep.subr.mxu0 0.0
          %275 = vmatpush1.msra.mxu0 0.0
          %276 = vmatprep.subr.mxu0 0.0
          %277 = vmatpush1.msra.mxu0 0.0
          %278 = vmatprep.subr.mxu0 0.0
          %279 = vmatpush1.msra.mxu0 0.0
          %280 = vmatprep.subr.mxu0 0.0
          %281 = vmatpush1.msra.mxu0 0.0
          %282 = vmatprep.subr.mxu0 0.0
          %283 = vmatpush1.msra.mxu0 0.0
          %284 = vmatprep.subr.mxu0 0.0
          %285 = vmatpush1.msra.mxu0 0.0
          %286 = vmatprep.subr.mxu0 0.0
          %287 = vmatpush1.msra.mxu0 0.0
          %288 = vmatprep.subr.mxu0 0.0
          %289 = vmatpush1.msra.mxu0 0.0
          %290 = vmatprep.subr.mxu0 0.0
          %291 = vmatpush1.msra.mxu0 0.0
          %292 = vmatprep.subr.mxu0 0.0
          %293 = vmatpush1.msra.mxu0 0.0
          %294 = vmatprep.mubr.f32.mxu0 0.0
          %295 = vmatmul.mubr.f32.gmra.mrb[0].mxu0 %v221
          %v296 = vpop.f32.mrb[0].mxu0
          %v297 = vadd.f32 0.0, %v296
          %v298 = vpop.f32.mrb[0].mxu0
          %299 = vmatprep.mubr.f32.mxu0 0.0
          %300 = vmatmul.mubr.f32.gmra.mrb[0].mxu0 %v224
          %v301 = vpop.f32.mrb[0].mxu0
          %v302 = vadd.f32 0.0, %v301
          %v303 = vpop.f32.mrb[0].mxu0
          %304 = vdwg.mxu0
          %s305 = scalar_lea.vmem [#allocation2], %s193
          %vm306 = vcmask 236544
          %307 = vst.msk [vmem:[%s305] sm:$0xff] %vm306, %v297
          %308 = vst.msk [vmem:[%s305 + $0x8] sm:$0xff] %vm306, %v302
        $region41: #{gncnn_forward.16} parent=31 // loop_footer
          %s192 = sadd.s32 1, %s188
        $region42: #{gncnn_forward.16} parent=31 // loop_footer_branch
          %187 = sbr.rel target = $region38
        $region43: #{gncnn_forward.16} parent=31 // loop_exit
          _
        loop: start=0, step=1, limit=29
        $region44: #{gncnn_forward.16} parent=31 // loop_pre_header
          _
        $region45: #{gncnn_forward.16} parent=31 // loop_header
          %s310 = sphi 0, %s314
          %p311 = scmp.ge.s32.totalorder %s310, 29
        $region46: #{gncnn_forward.16} parent=31 // loop_header_branch
          %313 = sbr.rel (%p311) target = $region50
        $region47: #{gncnn_forward.16} parent=31 // loop_body
          %s315 = smul.u32 %s310, 2
          %p316 = scmp.gt.s32.totalorder %s315, 0
          %s317 = scalar_select %p316, %s315, 0
          %p318 = scmp.lt.s32.totalorder %s317, 59
          %s319 = scalar_select %p318, %s317, 59
          %p320 = scmp.ge.s32.totalorder %s315, 0
          %p321 = scmp.lt.s32.totalorder %s315, 60
          %p322 = pnand %p320, %p321
          %p323 = pneg %p322
          %s324 = scalar_select %p323, 1, 0
          %s325 = scvt.s32.f32 %s324
          %s326 = smul.u32 %s319, 16
          %s327 = scalar_lea.vmem [#allocation2], %s326
          %v328 = vld [vmem:[%s327] sm:$0xff]
          %v329 = vld [vmem:[%s327 + $0x8] sm:$0xff]
          %v330 = vstv %s325
          %v331 = vmul.f32 %v328, %v330
          %v332 = vmul.f32 %v329, %v330
          %v333 = vadd.f32 %v331, 0.0
          %v334 = vadd.f32 %v332, 0.0
          %s335 = sadd.s32 %s315, 1
          %p336 = scmp.gt.s32.totalorder %s335, 0
          %s337 = scalar_select %p336, %s335, 0
          %p338 = scmp.lt.s32.totalorder %s337, 59
          %s339 = scalar_select %p338, %s337, 59
          %p340 = scmp.ge.s32.totalorder %s335, 0
          %p341 = scmp.lt.s32.totalorder %s335, 60
          %p342 = pnand %p340, %p341
          %p343 = pneg %p342
          %s344 = scalar_select %p343, 1, 0
          %s345 = scvt.s32.f32 %s344
          %s346 = smul.u32 %s339, 16
          %s347 = scalar_lea.vmem [#allocation2], %s346
          %v348 = vld [vmem:[%s347] sm:$0xff]
          %v349 = vld [vmem:[%s347 + $0x8] sm:$0xff]
          %v350 = vstv %s345
          %v351 = vmul.f32 %v348, %v350
          %v352 = vmul.f32 %v349, %v350
          %v353 = vadd.f32 %v333, %v351
          %v354 = vadd.f32 %v334, %v352
          %s355 = sadd.s32 %s315, 2
          %p356 = scmp.gt.s32.totalorder %s355, 0
          %s357 = scalar_select %p356, %s355, 0
          %p358 = scmp.lt.s32.totalorder %s357, 59
          %s359 = scalar_select %p358, %s357, 59
          %p360 = scmp.ge.s32.totalorder %s355, 0
          %p361 = scmp.lt.s32.totalorder %s355, 60
          %p362 = pnand %p360, %p361
          %p363 = pneg %p362
          %s364 = scalar_select %p363, 1, 0
          %s365 = scvt.s32.f32 %s364
          %s366 = smul.u32 %s359, 16
          %s367 = scalar_lea.vmem [#allocation2], %s366
          %v368 = vld [vmem:[%s367] sm:$0xff]
          %v369 = vld [vmem:[%s367 + $0x8] sm:$0xff]
          %v370 = vstv %s365
          %v371 = vmul.f32 %v368, %v370
          %v372 = vmul.f32 %v369, %v370
          %v373 = vadd.f32 %v353, %v371
          %v374 = vadd.f32 %v354, %v372
          %v375 = vmul.f32 %v373, 0.11111111
          %v376 = vmul.f32 %v374, 0.11111111
          %s377 = smul.u32 %s310, 16
          %s378 = scalar_lea.vmem %s184, %s377
          %vm379 = vcmask 236544
          %380 = vst.msk [vmem:[%s378] sm:$0xff] %vm379, %v375
          %381 = vst.msk [vmem:[%s378 + $0x8] sm:$0xff] %vm379, %v376
        $region48: #{gncnn_forward.16} parent=31 // loop_footer
          %s314 = sadd.s32 1, %s310
        $region49: #{gncnn_forward.16} parent=31 // loop_footer_branch
          %309 = sbr.rel target = $region45
        $region50: #{gncnn_forward.16} parent=31 // loop_exit
          _
        %p382 = scmp.lt.s32.totalorder %s15, 1
        %s383 = scalar_select %p382, %s15, 1
        %s384 = smul.addr %s383, 58
        %s385 = smul.addr %s384, 8
        %s386 = scalar_lea.vmem %s3, %s385
        // Predicated region
        $region51: #{gncnn_forward.16} parent=31 // pred_check
          %p387 = pneg %p101
        $region52: #{gncnn_forward.16} parent=31 // pred_check_branch
          %389 = sbr.rel (%p387) target = $region54
        $region53: #{gncnn_forward.16} parent=31 // pred_region
          _
        $region54: #{gncnn_forward.16} parent=31 // pred_fallthru
          _
      $region32: #{gncnn_forward.16} parent=5 // pred_fallthru
        _
      %p390 = scmp.le.s32.totalorder 2, %s10
      // Predicated region
      $region55: #{gncnn_forward.16} parent=5 // pred_check
        %p391 = pneg %p390
      $region56: #{gncnn_forward.16} parent=5 // pred_check_branch
        %393 = sbr.rel (%p391) target = $region58
      $region57: #{gncnn_forward.16} parent=5 // pred_region
        %s394 = ssub.s32 %s10, 2
        // Predicated region
        $region59: #{gncnn_forward.16} parent=57 // pred_check
          %p395 = pneg %p107
        $region60: #{gncnn_forward.16} parent=57 // pred_check_branch
          %397 = sbr.rel (%p395) target = $region62
        $region61: #{gncnn_forward.16} parent=57 // pred_region
          %p398 = scmp.lt.s32.totalorder %s16, 1
          %s399 = scalar_select %p398, %s16, 1
          %s400 = smul.addr %s399, 58
          %s401 = smul.addr %s400, 8
          %s402 = scalar_lea.vmem %s3, %s401
        $region62: #{gncnn_forward.16} parent=57 // pred_fallthru
          _
      $region58: #{gncnn_forward.16} parent=5 // pred_fallthru
        _
    $region6: #{gncnn_forward.16} parent=1 // loop_footer
      %s14 = sadd.s32 1, %s10
    $region7: #{gncnn_forward.16} parent=1 // loop_footer_branch
      %9 = sbr.rel target = $region3
    $region8: #{gncnn_forward.16} parent=1 // loop_exit
      _
    %403 = vsyncpa [#allocation4], 1
    %s404 = scalar_lea.sflag [#allocation4], 1
    %405 = vsyncpa %s404, 1

// kernel: gncnn_forward.18
$region0: #{gncnn_forward.18}
  #allocation0 [shape = 'u32[]', space=smem, size = 0x4, offset = 0x4, fixed_abs, tag = 'smem constant byte address 0x4 - core index']
  #allocation1 [shape = 'u32[144,128]{1,0:T(1,128)}', space=vmem, size = 0x12000, scoped, tag = 'internal scratch']
  #allocation2 [shape = 'f32[27,16,13]{2,1,0:T(8,128)}', space=vmem, size = 0x36000, scoped, tag = 'scratch operand']
  %s0 = inlined_call_operand.vmem [shape: f32[2], index: 0, kind: input, shape index: {}]
  %s1 = inlined_call_operand.vmem [shape: f32[2,27,16,27], index: 1, kind: input, shape index: {}]
  %s2 = inlined_call_operand.vmem [shape: f32[27,13], index: 2, kind: input, shape index: {}]
  %s3 = inlined_call_operand.vmem [shape: f32[2,13,16,13], index: 3, kind: output, shape index: {}]
  %s4 = sld [smem:[#allocation0]]
  $region63: #{gncnn_forward.18} parent=0
    _
  %s6 = ssub.s32 1, %s4
  %s7 = scalar_select 0, %s6, %s4
  $region1: #{gncnn_forward.18} parent=0
    #allocation3 [shape = 'u8[512]{0}', space=smem, size = 0x200, scoped, tag = 'input window, operand 0, single buffered']
    #allocation4 [shape = 's32[2]{0}', space=sflag, size = 0x8, scoped, tag = 'scoped memory for gncnn_forward.18']
    %8 = vsyncpa [#allocation4], 0
    loop: start=0, step=1, limit=4
    $region2: #{gncnn_forward.18} parent=1 // loop_pre_header
      _
    $region3: #{gncnn_forward.18} parent=1 // loop_header
      %s10 = sphi 0, %s14
      %p11 = scmp.ge.s32.totalorder %s10, 4
      %s18 = sphi 0, %s18
      %s20 = sphi 0, %s18
      %s21 = sphi 0, %s20
      %s35 = sphi 0, %s21
      %s41 = sphi 0, %s43
      %s44 = sphi 0, %s41
      %s45 = sphi 0, %s44
      %s61 = sphi 0, %s45
      %s65 = sphi 0, %s65
      %s67 = sphi 0, %s65
      %s68 = sphi 0, %s67
      %s82 = sphi 0, %s68
      %s88 = sphi 0, %s90
      %s91 = sphi 0, %s88
      %s92 = sphi 0, %s91
      %s108 = sphi 0, %s92
    $region4: #{gncnn_forward.18} parent=1 // loop_header_branch
      %13 = sbr.rel (%p11) target = $region8
    $region5: #{gncnn_forward.18} parent=1 // loop_body
      %s15 = ssub.s32 %s10, 1
      %s16 = ssub.s32 %s10, 2
      %s17 = sadd.s32 %s10, 1
      %s19 = sadd.s32 %s18, 1
      %p22 = scmp.eq.s32.totalorder %s10, 1
      %p23 = scmp.ne.s32.totalorder %s18, %s20
      %p24 = scmp.eq.s32.totalorder %s10, 0
      %p25 = por %p23, %p24
      %p26 = scmp.ne.s32.totalorder %s18, %s20
      %p27 = scmp.eq.s32.totalorder %s15, 1
      %p28 = por %p26, %p27
      %p29 = scmp.ne.s32.totalorder %s20, %s21
      %p30 = scmp.eq.s32.totalorder %s15, 0
      %p31 = por %p29, %p30
      %p32 = scmp.ne.s32.totalorder %s20, %s21
      %p33 = scmp.eq.s32.totalorder %s16, 1
      %p34 = por %p32, %p33
      %p36 = scmp.ne.s32.totalorder %s21, %s35
      %p37 = scmp.eq.s32.totalorder %s16, 0
      %p38 = por %p36, %p37
      %s39 = ssub.s32 %s10, %s17
      %p40 = scmp.eq.s32.totalorder %s39, 0
      %s42 = sadd.s32 %s41, 1
      %s43 = scalar_select %p40, %s41, %s42
      %p46 = pneg %p40
      %p47 = scmp.eq.s32.totalorder %s10, 1
      %p48 = por %p46, %p47
      %p49 = scmp.ne.s32.totalorder %s41, %s44
      %p50 = scmp.eq.s32.totalorder %s10, 0
      %p51 = por %p49, %p50
      %p52 = scmp.ne.s32.totalorder %s41, %s44
      %p53 = scmp.eq.s32.totalorder %s15, 1
      %p54 = por %p52, %p53
      %p55 = scmp.ne.s32.totalorder %s44, %s45
      %p56 = scmp.eq.s32.totalorder %s15, 0
      %p57 = por %p55, %p56
      %p58 = scmp.ne.s32.totalorder %s44, %s45
      %p59 = scmp.eq.s32.totalorder %s16, 1
      %p60 = por %p58, %p59
      %p62 = scmp.ne.s32.totalorder %s45, %s61
      %p63 = scmp.eq.s32.totalorder %s16, 0
      %p64 = por %p62, %p63
      %s66 = sadd.s32 %s65, 1
      %p69 = scmp.eq.s32.totalorder %s10, 1
      %p70 = scmp.ne.s32.totalorder %s65, %s67
      %p71 = scmp.eq.s32.totalorder %s10, 0
      %p72 = por %p70, %p71
      %p73 = scmp.ne.s32.totalorder %s65, %s67
      %p74 = scmp.eq.s32.totalorder %s15, 1
      %p75 = por %p73, %p74
      %p76 = scmp.ne.s32.totalorder %s67, %s68
      %p77 = scmp.eq.s32.totalorder %s15, 0
      %p78 = por %p76, %p77
      %p79 = scmp.ne.s32.totalorder %s67, %s68
      %p80 = scmp.eq.s32.totalorder %s16, 1
      %p81 = por %p79, %p80
      %p83 = scmp.ne.s32.totalorder %s68, %s82
      %p84 = scmp.eq.s32.totalorder %s16, 0
      %p85 = por %p83, %p84
      %s86 = ssub.s32 %s10, %s17
      %p87 = scmp.eq.s32.totalorder %s86, 0
      %s89 = sadd.s32 %s88, 1
      %s90 = scalar_select %p87, %s88, %s89
      %p93 = pneg %p87
      %p94 = scmp.eq.s32.totalorder %s10, 1
      %p95 = por %p93, %p94
      %p96 = scmp.ne.s32.totalorder %s88, %s91
      %p97 = scmp.eq.s32.totalorder %s10, 0
      %p98 = por %p96, %p97
      %p99 = scmp.ne.s32.totalorder %s88, %s91
      %p100 = scmp.eq.s32.totalorder %s15, 1
      %p101 = por %p99, %p100
      %p102 = scmp.ne.s32.totalorder %s91, %s92
      %p103 = scmp.eq.s32.totalorder %s15, 0
      %p104 = por %p102, %p103
      %p105 = scmp.ne.s32.totalorder %s91, %s92
      %p106 = scmp.eq.s32.totalorder %s16, 1
      %p107 = por %p105, %p106
      %p109 = scmp.ne.s32.totalorder %s92, %s108
      %p110 = scmp.eq.s32.totalorder %s16, 0
      %p111 = por %p109, %p110
      %p112 = scmp.le.s32.totalorder 1, %s10
      %p113 = scmp.lt.s32.totalorder %s10, 3
      %p114 = pnand %p112, %p113
      %p115 = pneg %p114
      // Predicated region
      $region9: #{gncnn_forward.18} parent=5 // pred_check
        _
      $region10: #{gncnn_forward.18} parent=5 // pred_check_branch
        %117 = sbr.rel (%p114) target = $region12
      $region11: #{gncnn_forward.18} parent=5 // pred_region
        %s118 = ssub.s32 %s10, 1
        // Predicated region
        $region13: #{gncnn_forward.18} parent=11 // pred_check
          %p119 = pneg %p31
        $region14: #{gncnn_forward.18} parent=11 // pred_check_branch
          %121 = sbr.rel (%p119) target = $region16
        $region15: #{gncnn_forward.18} parent=11 // pred_region
          %s123 = ssub.s32 16, 16
          %124 = vsyncadd [#allocation4], %s123
          %s126 = sshll.u32 %s0, 4
          %s127 = int_to_ptr.vmem [resolvable:$true] %s126
          %129 = dma.vmem_to_smem %s127, 16, [#allocation3], [#allocation4]
        $region16: #{gncnn_forward.18} parent=11 // pred_fallthru
          _
        // Predicated region
        $region17: #{gncnn_forward.18} parent=11 // pred_check
          %p130 = pneg %p78
        $region18: #{gncnn_forward.18} parent=11 // pred_check_branch
          %132 = sbr.rel (%p130) target = $region20
        $region19: #{gncnn_forward.18} parent=11 // pred_region
          _
        $region20: #{gncnn_forward.18} parent=11 // pred_fallthru
          _
      $region12: #{gncnn_forward.18} parent=5 // pred_fallthru
        _
      %p133 = scmp.lt.s32.totalorder %s10, 2
      // Predicated region
      $region21: #{gncnn_forward.18} parent=5 // pred_check
        %p134 = pneg %p133
      $region22: #{gncnn_forward.18} parent=5 // pred_check_branch
        %136 = sbr.rel (%p134) target = $region24
      $region23: #{gncnn_forward.18} parent=5 // pred_region
        // Predicated region
        $region25: #{gncnn_forward.18} parent=23 // pred_check
          %p137 = pneg %p51
        $region26: #{gncnn_forward.18} parent=23 // pred_check_branch
          %139 = sbr.rel (%p137) target = $region28
        $region27: #{gncnn_forward.18} parent=23 // pred_region
          %p140 = scmp.lt.s32.totalorder %s10, 1
          %s141 = scalar_select %p140, %s10, 1
          %s142 = smul.addr %s141, 54
          %s143 = smul.addr %s142, 8
          %s144 = scalar_lea.vmem %s1, %s143
        $region28: #{gncnn_forward.18} parent=23 // pred_fallthru
          _
      $region24: #{gncnn_forward.18} parent=5 // pred_fallthru
        _
      %p145 = scmp.le.s32.totalorder 1, %s10
      %p146 = scmp.lt.s32.totalorder %s10, 3
      %p147 = pnand %p145, %p146
      %p148 = pneg %p147
      // Predicated region
      $region29: #{gncnn_forward.18} parent=5 // pred_check
        _
      $region30: #{gncnn_forward.18} parent=5 // pred_check_branch
        %150 = sbr.rel (%p147) target = $region32
      $region31: #{gncnn_forward.18} parent=5 // pred_region
        %s151 = ssub.s32 %s10, 1
        // Predicated region
        $region33: #{gncnn_forward.18} parent=31 // pred_check
          %p152 = pneg %p31
        $region34: #{gncnn_forward.18} parent=31 // pred_check_branch
          %154 = sbr.rel (%p152) target = $region36
        $region35: #{gncnn_forward.18} parent=31 // pred_region
          %155 = dma.done [#allocation4], 16
        $region36: #{gncnn_forward.18} parent=31 // pred_fallthru
          _
        %156 = sfence
        %p157 = pneg %p31
        %p158 = pneg %p28
        %p159 = scmp.lt.s32.totalorder %s15, 1
        %s160 = scalar_select %p159, %s15, 1
        %s161 = smul.addr %s160, 54
        %s162 = smul.addr %s161, 8
        %s163 = scalar_lea.vmem %s1, %s162
        %p164 = pneg %p57
        %p165 = pneg %p54
        %p166 = pneg %p78
        %p167 = pneg %p75
        %p168 = pneg %p104
        %p169 = pneg %p101
        %p170 = scmp.lt.s32.totalorder %s15, 1
        %s171 = scalar_select %p170, %s15, 1
        %s172 = smul.addr %s171, 26
        %s173 = smul.addr %s172, 8
        %s174 = scalar_lea.vmem %s3, %s173
        %p175 = scmp.lt.s32.totalorder %s15, 1
        %s176 = scalar_select %p175, %s15, 1
        %s177 = smul.addr %s176, 54
        %s178 = smul.addr %s177, 8
        %s179 = scalar_lea.vmem %s1, %s178
        %p180 = scmp.lt.s32.totalorder %s15, 1
        %s181 = scalar_select %p180, %s15, 1
        %s182 = smul.addr %s181, 26
        %s183 = smul.addr %s182, 8
        %s184 = scalar_lea.vmem %s3, %s183
        %s185 = sld [smem:[#allocation3]]
        %s186 = sld [smem:[#allocation3 + $0x1]]
        loop: start=0, step=1, limit=27
        $region37: #{gncnn_forward.18} parent=31 // loop_pre_header
          _
        $region38: #{gncnn_forward.18} parent=31 // loop_header
          %s188 = sphi 0, %s192
          %p189 = scmp.ge.s32.totalorder %s188, 27
        $region39: #{gncnn_forward.18} parent=31 // loop_header_branch
          %191 = sbr.rel (%p189) target = $region43
        $region40: #{gncnn_forward.18} parent=31 // loop_body
          %s193 = smul.u32 %s188, 16
          %s194 = scalar_lea.vmem %s179, %s193
          %v195 = vld [vmem:[%s194] sm:$0xff]
          %v196 = vld [vmem:[%s194 + $0x8] sm:$0xff]
          %v197 = vstv %s185
          %v198 = vsub.f32 %v195, %v197
          %v199 = vsub.f32 %v196, %v197
          %v200 = vmul.f32 %v198, %v198
          %v201 = vmul.f32 %v199, %v199
          %v202 = vsub.f32 0.0, %v200
          %v203 = vsub.f32 0.0, %v201
          %v204 = vstv %s186
          %v205 = vmul.f32 %v202, %v204
          %v206 = vmul.f32 %v203, %v204
          %v207 = vmul.f32 %v205, 1.442695
          %v208 = vpow.pop %v207
          %v209 = vmul.f32 %v206, 1.442695
          %v210 = vpow.pop %v209
          %v211 = vld [vmem:[%s2] sm:$0xff]
          %v212 = vld [vmem:[%s2 + $0x8] sm:$0xff]
          %v213 = vld [vmem:[%s2 + $0x10] sm:$0xff]
          %v214 = vld [vmem:[%s2 + $0x18] sm:$0x7]
          %vm215 = vcmask 220160
          %v217 = vsel %vm215, %v208, 0
          %v220 = vsel %vm215, %v210, 0
          %vm222 = vcmask 1042432
          %v224 = vsel %vm222, %v214, 0
          %226 = vmatprep.subr.mxu0 0.0
          %227 = vmatpush1.msra.mxu0 %v211
          %228 = vmatprep.subr.mxu0 0.0
          %229 = vmatpush1.msra.mxu0 %v212
          %230 = vmatprep.subr.mxu0 0.0
          %231 = vmatpush1.msra.mxu0 %v213
          %232 = vmatprep.subr.mxu0 0.0
          %233 = vmatpush1.msra.mxu0 %v224
          %234 = vmatprep.subr.mxu0 0.0
          %235 = vmatpush1.msra.mxu0 0.0
          %236 = vmatprep.subr.mxu0 0.0
          %237 = vmatpush1.msra.mxu0 0.0
          %238 = vmatprep.subr.mxu0 0.0
          %239 = vmatpush1.msra.mxu0 0.0
          %240 = vmatprep.subr.mxu0 0.0
          %241 = vmatpush1.msra.mxu0 0.0
          %242 = vmatprep.subr.mxu0 0.0
          %243 = vmatpush1.msra.mxu0 0.0
          %244 = vmatprep.subr.mxu0 0.0
          %245 = vmatpush1.msra.mxu0 0.0
          %246 = vmatprep.subr.mxu0 0.0
          %247 = vmatpush1.msra.mxu0 0.0
          %248 = vmatprep.subr.mxu0 0.0
          %249 = vmatpush1.msra.mxu0 0.0
          %250 = vmatprep.subr.mxu0 0.0
          %251 = vmatpush1.msra.mxu0 0.0
          %252 = vmatprep.subr.mxu0 0.0
          %253 = vmatpush1.msra.mxu0 0.0
          %254 = vmatprep.subr.mxu0 0.0
          %255 = vmatpush1.msra.mxu0 0.0
          %256 = vmatprep.subr.mxu0 0.0
          %257 = vmatpush1.msra.mxu0 0.0
          %258 = vmatprep.subr.mxu0 0.0
          %259 = vmatpush1.msra.mxu0 0.0
          %260 = vmatprep.subr.mxu0 0.0
          %261 = vmatpush1.msra.mxu0 0.0
          %262 = vmatprep.subr.mxu0 0.0
          %263 = vmatpush1.msra.mxu0 0.0
          %264 = vmatprep.subr.mxu0 0.0
          %265 = vmatpush1.msra.mxu0 0.0
          %266 = vmatprep.subr.mxu0 0.0
          %267 = vmatpush1.msra.mxu0 0.0
          %268 = vmatprep.subr.mxu0 0.0
          %269 = vmatpush1.msra.mxu0 0.0
          %270 = vmatprep.subr.mxu0 0.0
          %271 = vmatpush1.msra.mxu0 0.0
          %272 = vmatprep.subr.mxu0 0.0
          %273 = vmatpush1.msra.mxu0 0.0
          %274 = vmatprep.subr.mxu0 0.0
          %275 = vmatpush1.msra.mxu0 0.0
          %276 = vmatprep.subr.mxu0 0.0
          %277 = vmatpush1.msra.mxu0 0.0
          %278 = vmatprep.subr.mxu0 0.0
          %279 = vmatpush1.msra.mxu0 0.0
          %280 = vmatprep.subr.mxu0 0.0
          %281 = vmatpush1.msra.mxu0 0.0
          %282 = vmatprep.subr.mxu0 0.0
          %283 = vmatpush1.msra.mxu0 0.0
          %284 = vmatprep.subr.mxu0 0.0
          %285 = vmatpush1.msra.mxu0 0.0
          %286 = vmatprep.subr.mxu0 0.0
          %287 = vmatpush1.msra.mxu0 0.0
          %288 = vmatprep.subr.mxu0 0.0
          %289 = vmatpush1.msra.mxu0 0.0
          %290 = vmatprep.mubr.f32.mxu0 0.0
          %291 = vmatmul.mubr.f32.gmra.mrb[0].mxu0 %v217
          %v292 = vpop.f32.mrb[0].mxu0
          %v293 = vadd.f32 0.0, %v292
          %v294 = vpop.f32.mrb[0].mxu0
          %295 = vmatprep.mubr.f32.mxu0 0.0
          %296 = vmatmul.mubr.f32.gmra.mrb[0].mxu0 %v220
          %v297 = vpop.f32.mrb[0].mxu0
          %v298 = vadd.f32 0.0, %v297
          %v299 = vpop.f32.mrb[0].mxu0
          %300 = vdwg.mxu0
          %s301 = scalar_lea.vmem [#allocation2], %s193
          %vm302 = vcmask 105472
          %303 = vst.msk [vmem:[%s301] sm:$0xff] %vm302, %v293
          %304 = vst.msk [vmem:[%s301 + $0x8] sm:$0xff] %vm302, %v298
        $region41: #{gncnn_forward.18} parent=31 // loop_footer
          %s192 = sadd.s32 1, %s188
        $region42: #{gncnn_forward.18} parent=31 // loop_footer_branch
          %187 = sbr.rel target = $region38
        $region43: #{gncnn_forward.18} parent=31 // loop_exit
          _
        loop: start=0, step=1, limit=13
        $region44: #{gncnn_forward.18} parent=31 // loop_pre_header
          _
        $region45: #{gncnn_forward.18} parent=31 // loop_header
          %s306 = sphi 0, %s310
          %p307 = scmp.ge.s32.totalorder %s306, 13
        $region46: #{gncnn_forward.18} parent=31 // loop_header_branch
          %309 = sbr.rel (%p307) target = $region50
        $region47: #{gncnn_forward.18} parent=31 // loop_body
          %s311 = smul.u32 %s306, 2
          %p312 = scmp.gt.s32.totalorder %s311, 0
          %s313 = scalar_select %p312, %s311, 0
          %p314 = scmp.lt.s32.totalorder %s313, 26
          %s315 = scalar_select %p314, %s313, 26
          %p316 = scmp.ge.s32.totalorder %s311, 0
          %p317 = scmp.lt.s32.totalorder %s311, 27
          %p318 = pnand %p316, %p317
          %p319 = pneg %p318
          %s320 = scalar_select %p319, 1, 0
          %s321 = scvt.s32.f32 %s320
          %s322 = smul.u32 %s315, 16
          %s323 = scalar_lea.vmem [#allocation2], %s322
          %v324 = vld [vmem:[%s323] sm:$0xff]
          %v325 = vld [vmem:[%s323 + $0x8] sm:$0xff]
          %v326 = vstv %s321
          %v327 = vmul.f32 %v324, %v326
          %v328 = vmul.f32 %v325, %v326
          %v329 = vadd.f32 %v327, 0.0
          %v330 = vadd.f32 %v328, 0.0
          %s331 = sadd.s32 %s311, 1
          %p332 = scmp.gt.s32.totalorder %s331, 0
          %s333 = scalar_select %p332, %s331, 0
          %p334 = scmp.lt.s32.totalorder %s333, 26
          %s335 = scalar_select %p334, %s333, 26
          %p336 = scmp.ge.s32.totalorder %s331, 0
          %p337 = scmp.lt.s32.totalorder %s331, 27
          %p338 = pnand %p336, %p337
          %p339 = pneg %p338
          %s340 = scalar_select %p339, 1, 0
          %s341 = scvt.s32.f32 %s340
          %s342 = smul.u32 %s335, 16
          %s343 = scalar_lea.vmem [#allocation2], %s342
          %v344 = vld [vmem:[%s343] sm:$0xff]
          %v345 = vld [vmem:[%s343 + $0x8] sm:$0xff]
          %v346 = vstv %s341
          %v347 = vmul.f32 %v344, %v346
          %v348 = vmul.f32 %v345, %v346
          %v349 = vadd.f32 %v329, %v347
          %v350 = vadd.f32 %v330, %v348
          %s351 = sadd.s32 %s311, 2
          %p352 = scmp.gt.s32.totalorder %s351, 0
          %s353 = scalar_select %p352, %s351, 0
          %p354 = scmp.lt.s32.totalorder %s353, 26
          %s355 = scalar_select %p354, %s353, 26
          %p356 = scmp.ge.s32.totalorder %s351, 0
          %p357 = scmp.lt.s32.totalorder %s351, 27
          %p358 = pnand %p356, %p357
          %p359 = pneg %p358
          %s360 = scalar_select %p359, 1, 0
          %s361 = scvt.s32.f32 %s360
          %s362 = smul.u32 %s355, 16
          %s363 = scalar_lea.vmem [#allocation2], %s362
          %v364 = vld [vmem:[%s363] sm:$0xff]
          %v365 = vld [vmem:[%s363 + $0x8] sm:$0xff]
          %v366 = vstv %s361
          %v367 = vmul.f32 %v364, %v366
          %v368 = vmul.f32 %v365, %v366
          %v369 = vadd.f32 %v349, %v367
          %v370 = vadd.f32 %v350, %v368
          %v371 = vmul.f32 %v369, 0.11111111
          %v372 = vmul.f32 %v370, 0.11111111
          %s373 = smul.u32 %s306, 16
          %s374 = scalar_lea.vmem %s184, %s373
          %vm375 = vcmask 105472
          %376 = vst.msk [vmem:[%s374] sm:$0xff] %vm375, %v371
          %377 = vst.msk [vmem:[%s374 + $0x8] sm:$0xff] %vm375, %v372
        $region48: #{gncnn_forward.18} parent=31 // loop_footer
          %s310 = sadd.s32 1, %s306
        $region49: #{gncnn_forward.18} parent=31 // loop_footer_branch
          %305 = sbr.rel target = $region45
        $region50: #{gncnn_forward.18} parent=31 // loop_exit
          _
        %p378 = scmp.lt.s32.totalorder %s15, 1
        %s379 = scalar_select %p378, %s15, 1
        %s380 = smul.addr %s379, 26
        %s381 = smul.addr %s380, 8
        %s382 = scalar_lea.vmem %s3, %s381
        // Predicated region
        $region51: #{gncnn_forward.18} parent=31 // pred_check
          %p383 = pneg %p101
        $region52: #{gncnn_forward.18} parent=31 // pred_check_branch
          %385 = sbr.rel (%p383) target = $region54
        $region53: #{gncnn_forward.18} parent=31 // pred_region
          _
        $region54: #{gncnn_forward.18} parent=31 // pred_fallthru
          _
      $region32: #{gncnn_forward.18} parent=5 // pred_fallthru
        _
      %p386 = scmp.le.s32.totalorder 2, %s10
      // Predicated region
      $region55: #{gncnn_forward.18} parent=5 // pred_check
        %p387 = pneg %p386
      $region56: #{gncnn_forward.18} parent=5 // pred_check_branch
        %389 = sbr.rel (%p387) target = $region58
      $region57: #{gncnn_forward.18} parent=5 // pred_region
        %s390 = ssub.s32 %s10, 2
        // Predicated region
        $region59: #{gncnn_forward.18} parent=57 // pred_check
          %p391 = pneg %p107
        $region60: #{gncnn_forward.18} parent=57 // pred_check_branch
          %393 = sbr.rel (%p391) target = $region62
        $region61: #{gncnn_forward.18} parent=57 // pred_region
          %p394 = scmp.lt.s32.totalorder %s16, 1
          %s395 = scalar_select %p394, %s16, 1
          %s396 = smul.addr %s395, 26
          %s397 = smul.addr %s396, 8
          %s398 = scalar_lea.vmem %s3, %s397
        $region62: #{gncnn_forward.18} parent=57 // pred_fallthru
          _
      $region58: #{gncnn_forward.18} parent=5 // pred_fallthru
        _
    $region6: #{gncnn_forward.18} parent=1 // loop_footer
      %s14 = sadd.s32 1, %s10
    $region7: #{gncnn_forward.18} parent=1 // loop_footer_branch
      %9 = sbr.rel target = $region3
    $region8: #{gncnn_forward.18} parent=1 // loop_exit
      _
    %399 = vsyncpa [#allocation4], 1
    %s400 = scalar_lea.sflag [#allocation4], 1
    %401 = vsyncpa %s400, 1

// kernel: gncnn_forward.17
$region0: #{gncnn_forward.17}
  #allocation0 [shape = 'u32[]', space=smem, size = 0x4, offset = 0x4, fixed_abs, tag = 'smem constant byte address 0x4 - core index']
  #allocation1 [shape = 'u32[144,128]{1,0:T(1,128)}', space=vmem, size = 0x12000, scoped, tag = 'internal scratch']
  %s0 = inlined_call_operand.vmem [shape: f32[2,29,16,29], index: 0, kind: input, shape index: {}]
  %s1 = inlined_call_operand.vmem [shape: f32[3,16,48], index: 1, kind: input, shape index: {}]
  %s2 = inlined_call_operand.vmem [shape: f32[16,1], index: 2, kind: input, shape index: {}]
  %s3 = inlined_call_operand.vmem [shape: f32[2,27,16,27], index: 3, kind: output, shape index: {0}]
  %s4 = inlined_call_operand.vmem [shape: f32[2,1,1], index: 4, kind: output, shape index: {1}]
  %s5 = inlined_call_operand.vmem [shape: f32[2,1,1], index: 5, kind: output, shape index: {2}]
  %6 = xla_tuple %s3, %s4, %s5
  %s7 = sld [smem:[#allocation0]]
  $region68: #{gncnn_forward.17} parent=0
    _
  %s9 = ssub.s32 1, %s7
  %s10 = scalar_select 0, %s9, %s7
  loop: start=0, step=1, limit=4
  $region2: #{gncnn_forward.17} parent=0 // loop_pre_header
    _
  $region3: #{gncnn_forward.17} parent=0 // loop_header
    %s12 = sphi 0, %s16
    %p13 = scmp.ge.s32.totalorder %s12, 4
    %s22 = sphi 0, %s24
    %s25 = sphi 0, %s22
    %s26 = sphi 0, %s25
    %s42 = sphi 0, %s26
    %s46 = sphi 0, %s46
    %s48 = sphi 0, %s46
    %s49 = sphi 0, %s48
    %s63 = sphi 0, %s49
    %s67 = sphi 0, %s67
    %s69 = sphi 0, %s67
    %s70 = sphi 0, %s69
    %s84 = sphi 0, %s70
    %s90 = sphi 0, %s92
    %s93 = sphi 0, %s90
    %s94 = sphi 0, %s93
    %s110 = sphi 0, %s94
    %s116 = sphi 0, %s118
    %s119 = sphi 0, %s116
    %s120 = sphi 0, %s119
    %s136 = sphi 0, %s120
    %s142 = sphi 0, %s144
    %s145 = sphi 0, %s142
    %s146 = sphi 0, %s145
    %s162 = sphi 0, %s146
  $region4: #{gncnn_forward.17} parent=0 // loop_header_branch
    %15 = sbr.rel (%p13) target = $region8
  $region5: #{gncnn_forward.17} parent=0 // loop_body
    %s17 = ssub.s32 %s12, 1
    %s18 = ssub.s32 %s12, 2
    %s19 = sadd.s32 %s12, 1
    %s20 = ssub.s32 %s12, %s19
    %p21 = scmp.eq.s32.totalorder %s20, 0
    %s23 = sadd.s32 %s22, 1
    %s24 = scalar_select %p21, %s22, %s23
    %p27 = pneg %p21
    %p28 = scmp.eq.s32.totalorder %s12, 1
    %p29 = por %p27, %p28
    %p30 = scmp.ne.s32.totalorder %s22, %s25
    %p31 = scmp.eq.s32.totalorder %s12, 0
    %p32 = por %p30, %p31
    %p33 = scmp.ne.s32.totalorder %s22, %s25
    %p34 = scmp.eq.s32.totalorder %s17, 1
    %p35 = por %p33, %p34
    %p36 = scmp.ne.s32.totalorder %s25, %s26
    %p37 = scmp.eq.s32.totalorder %s17, 0
    %p38 = por %p36, %p37
    %p39 = scmp.ne.s32.totalorder %s25, %s26
    %p40 = scmp.eq.s32.totalorder %s18, 1
    %p41 = por %p39, %p40
    %p43 = scmp.ne.s32.totalorder %s26, %s42
    %p44 = scmp.eq.s32.totalorder %s18, 0
    %p45 = por %p43, %p44
    %s47 = sadd.s32 %s46, 1
    %p50 = scmp.eq.s32.totalorder %s12, 1
    %p51 = scmp.ne.s32.totalorder %s46, %s48
    %p52 = scmp.eq.s32.totalorder %s12, 0
    %p53 = por %p51, %p52
    %p54 = scmp.ne.s32.totalorder %s46, %s48
    %p55 = scmp.eq.s32.totalorder %s17, 1
    %p56 = por %p54, %p55
    %p57 = scmp.ne.s32.totalorder %s48, %s49
    %p58 = scmp.eq.s32.totalorder %s17, 0
    %p59 = por %p57, %p58
    %p60 = scmp.ne.s32.totalorder %s48, %s49
    %p61 = scmp.eq.s32.totalorder %s18, 1
    %p62 = por %p60, %p61
    %p64 = scmp.ne.s32.totalorder %s49, %s63
    %p65 = scmp.eq.s32.totalorder %s18, 0
    %p66 = por %p64, %p65
    %s68 = sadd.s32 %s67, 1
    %p71 = scmp.eq.s32.totalorder %s12, 1
    %p72 = scmp.ne.s32.totalorder %s67, %s69
    %p73 = scmp.eq.s32.totalorder %s12, 0
    %p74 = por %p72, %p73
    %p75 = scmp.ne.s32.totalorder %s67, %s69
    %p76 = scmp.eq.s32.totalorder %s17, 1
    %p77 = por %p75, %p76
    %p78 = scmp.ne.s32.totalorder %s69, %s70
    %p79 = scmp.eq.s32.totalorder %s17, 0
    %p80 = por %p78, %p79
    %p81 = scmp.ne.s32.totalorder %s69, %s70
    %p82 = scmp.eq.s32.totalorder %s18, 1
    %p83 = por %p81, %p82
    %p85 = scmp.ne.s32.totalorder %s70, %s84
    %p86 = scmp.eq.s32.totalorder %s18, 0
    %p87 = por %p85, %p86
    %s88 = ssub.s32 %s12, %s19
    %p89 = scmp.eq.s32.totalorder %s88, 0
    %s91 = sadd.s32 %s90, 1
    %s92 = scalar_select %p89, %s90, %s91
    %p95 = pneg %p89
    %p96 = scmp.eq.s32.totalorder %s12, 1
    %p97 = por %p95, %p96
    %p98 = scmp.ne.s32.totalorder %s90, %s93
    %p99 = scmp.eq.s32.totalorder %s12, 0
    %p100 = por %p98, %p99
    %p101 = scmp.ne.s32.totalorder %s90, %s93
    %p102 = scmp.eq.s32.totalorder %s17, 1
    %p103 = por %p101, %p102
    %p104 = scmp.ne.s32.totalorder %s93, %s94
    %p105 = scmp.eq.s32.totalorder %s17, 0
    %p106 = por %p104, %p105
    %p107 = scmp.ne.s32.totalorder %s93, %s94
    %p108 = scmp.eq.s32.totalorder %s18, 1
    %p109 = por %p107, %p108
    %p111 = scmp.ne.s32.totalorder %s94, %s110
    %p112 = scmp.eq.s32.totalorder %s18, 0
    %p113 = por %p111, %p112
    %s114 = ssub.s32 %s12, %s19
    %p115 = scmp.eq.s32.totalorder %s114, 0
    %s117 = sadd.s32 %s116, 1
    %s118 = scalar_select %p115, %s116, %s117
    %p121 = pneg %p115
    %p122 = scmp.eq.s32.totalorder %s12, 1
    %p123 = por %p121, %p122
    %p124 = scmp.ne.s32.totalorder %s116, %s119
    %p125 = scmp.eq.s32.totalorder %s12, 0
    %p126 = por %p124, %p125
    %p127 = scmp.ne.s32.totalorder %s116, %s119
    %p128 = scmp.eq.s32.totalorder %s17, 1
    %p129 = por %p127, %p128
    %p130 = scmp.ne.s32.totalorder %s119, %s120
    %p131 = scmp.eq.s32.totalorder %s17, 0
    %p132 = por %p130, %p131
    %p133 = scmp.ne.s32.totalorder %s119, %s120
    %p134 = scmp.eq.s32.totalorder %s18, 1
    %p135 = por %p133, %p134
    %p137 = scmp.ne.s32.totalorder %s120, %s136
    %p138 = scmp.eq.s32.totalorder %s18, 0
    %p139 = por %p137, %p138
    %s140 = ssub.s32 %s12, %s19
    %p141 = scmp.eq.s32.totalorder %s140, 0
    %s143 = sadd.s32 %s142, 1
    %s144 = scalar_select %p141, %s142, %s143
    %p147 = pneg %p141
    %p148 = scmp.eq.s32.totalorder %s12, 1
    %p149 = por %p147, %p148
    %p150 = scmp.ne.s32.totalorder %s142, %s145
    %p151 = scmp.eq.s32.totalorder %s12, 0
    %p152 = por %p150, %p151
    %p153 = scmp.ne.s32.totalorder %s142, %s145
    %p154 = scmp.eq.s32.totalorder %s17, 1
    %p155 = por %p153, %p154
    %p156 = scmp.ne.s32.totalorder %s145, %s146
    %p157 = scmp.eq.s32.totalorder %s17, 0
    %p158 = por %p156, %p157
    %p159 = scmp.ne.s32.totalorder %s145, %s146
    %p160 = scmp.eq.s32.totalorder %s18, 1
    %p161 = por %p159, %p160
    %p163 = scmp.ne.s32.totalorder %s146, %s162
    %p164 = scmp.eq.s32.totalorder %s18, 0
    %p165 = por %p163, %p164
    %p166 = scmp.le.s32.totalorder 1, %s12
    %p167 = scmp.lt.s32.totalorder %s12, 3
    %p168 = pnand %p166, %p167
    %p169 = pneg %p168
    // Predicated region
    $region9: #{gncnn_forward.17} parent=5 // pred_check
      _
    $region10: #{gncnn_forward.17} parent=5 // pred_check_branch
      %171 = sbr.rel (%p168) target = $region12
    $region11: #{gncnn_forward.17} parent=5 // pred_region
      %s172 = ssub.s32 %s12, 1
      // Predicated region
      $region13: #{gncnn_forward.17} parent=11 // pred_check
        %p173 = pneg %p59
      $region14: #{gncnn_forward.17} parent=11 // pred_check_branch
        %175 = sbr.rel (%p173) target = $region16
      $region15: #{gncnn_forward.17} parent=11 // pred_region
        _
      $region16: #{gncnn_forward.17} parent=11 // pred_fallthru
        _
      // Predicated region
      $region17: #{gncnn_forward.17} parent=11 // pred_check
        %p176 = pneg %p80
      $region18: #{gncnn_forward.17} parent=11 // pred_check_branch
        %178 = sbr.rel (%p176) target = $region20
      $region19: #{gncnn_forward.17} parent=11 // pred_region
        _
      $region20: #{gncnn_forward.17} parent=11 // pred_fallthru
        _
    $region12: #{gncnn_forward.17} parent=5 // pred_fallthru
      _
    %p179 = scmp.lt.s32.totalorder %s12, 2
    // Predicated region
    $region21: #{gncnn_forward.17} parent=5 // pred_check
      %p180 = pneg %p179
    $region22: #{gncnn_forward.17} parent=5 // pred_check_branch
      %182 = sbr.rel (%p180) target = $region24
    $region23: #{gncnn_forward.17} parent=5 // pred_region
      // Predicated region
      $region25: #{gncnn_forward.17} parent=23 // pred_check
        %p183 = pneg %p32
      $region26: #{gncnn_forward.17} parent=23 // pred_check_branch
        %185 = sbr.rel (%p183) target = $region28
      $region27: #{gncnn_forward.17} parent=23 // pred_region
        %p186 = scmp.lt.s32.totalorder %s12, 1
        %s187 = scalar_select %p186, %s12, 1
        %s188 = smul.addr %s187, 58
        %s189 = smul.addr %s188, 8
        %s190 = scalar_lea.vmem %s0, %s189
      $region28: #{gncnn_forward.17} parent=23 // pred_fallthru
        _
    $region24: #{gncnn_forward.17} parent=5 // pred_fallthru
      _
    %p191 = scmp.le.s32.totalorder 1, %s12
    %p192 = scmp.lt.s32.totalorder %s12, 3
    %p193 = pnand %p191, %p192
    %p194 = pneg %p193
    // Predicated region
    $region29: #{gncnn_forward.17} parent=5 // pred_check
      _
    $region30: #{gncnn_forward.17} parent=5 // pred_check_branch
      %196 = sbr.rel (%p193) target = $region32
    $region31: #{gncnn_forward.17} parent=5 // pred_region
      %s197 = ssub.s32 %s12, 1
      %p198 = scmp.lt.s32.totalorder %s17, 1
      %s199 = scalar_select %p198, %s17, 1
      %s200 = smul.addr %s199, 58
      %s201 = smul.addr %s200, 8
      %s202 = scalar_lea.vmem %s0, %s201
      %p203 = pneg %p38
      %p204 = pneg %p35
      %p205 = pneg %p59
      %p206 = pneg %p56
      %p207 = pneg %p80
      %p208 = pneg %p77
      %p209 = pneg %p106
      %p210 = pneg %p103
      %p211 = scmp.lt.s32.totalorder %s17, 1
      %s212 = scalar_select %p211, %s17, 1
      %s213 = smul.addr %s212, 54
      %s214 = smul.addr %s213, 8
      %s215 = scalar_lea.vmem %s3, %s214
      %p216 = pneg %p132
      %p217 = pneg %p129
      %p218 = scmp.lt.s32.totalorder %s17, 1
      %s219 = scalar_select %p218, %s17, 1
      %s220 = scalar_lea.vmem %s4, %s219
      %p221 = pneg %p158
      %p222 = pneg %p155
      %p223 = scmp.lt.s32.totalorder %s17, 1
      %s224 = scalar_select %p223, %s17, 1
      %s225 = scalar_lea.vmem %s5, %s224
      %p226 = scmp.lt.s32.totalorder %s17, 1
      %s227 = scalar_select %p226, %s17, 1
      %s228 = smul.addr %s227, 58
      %s229 = smul.addr %s228, 8
      %s230 = scalar_lea.vmem %s0, %s229
      %p231 = scmp.lt.s32.totalorder %s17, 1
      %s232 = scalar_select %p231, %s17, 1
      %s233 = smul.addr %s232, 54
      %s234 = smul.addr %s233, 8
      %s235 = scalar_lea.vmem %s3, %s234
      %p236 = scmp.lt.s32.totalorder %s17, 1
      %s237 = scalar_select %p236, %s17, 1
      %s238 = scalar_lea.vmem %s4, %s237
      %p239 = scmp.lt.s32.totalorder %s17, 1
      %s240 = scalar_select %p239, %s17, 1
      %s241 = scalar_lea.vmem %s5, %s240
      loop: start=0, step=1, limit=27
      $region33: #{gncnn_forward.17} parent=31 // loop_pre_header
        _
      $region34: #{gncnn_forward.17} parent=31 // loop_header
        %s243 = sphi 0, %s247
        %p244 = scmp.ge.s32.totalorder %s243, 27
        %v248 = vphi 0.0, %v580
        %v249 = vphi 0.0, %v581
        %v250 = vphi 0.0, %v584
        %v251 = vphi 0.0, %v585
      $region35: #{gncnn_forward.17} parent=31 // loop_header_branch
        %246 = sbr.rel (%p244) target = $region39
      $region36: #{gncnn_forward.17} parent=31 // loop_body
        %s252 = smul.u32 %s243, 16
        %s253 = scalar_lea.vmem %s230, %s252
        %v254 = vld [vmem:[%s253] sm:$0xff]
        %v255 = vld [vmem:[%s253 + $0x8] sm:$0xff]
        %258 = vrot.lane.b32.xlu0 %v254, 127
        %v259 = vpop.permute.xlu0 %258
        %260 = vrot.lane.b32.xlu0 %v255, 127
        %v261 = vpop.permute.xlu0 %260
        %264 = vrot.lane.b32.xlu0 %v254, 126
        %v265 = vpop.permute.xlu0 %264
        %266 = vrot.lane.b32.xlu0 %v255, 126
        %v267 = vpop.permute.xlu0 %266
        %v270 = vld [vmem:[%s1] sm:$0xff]
        %v271 = vld [vmem:[%s1 + $0x8] sm:$0xff]
        %s272 = sadd.s32 %s243, 1
        %s273 = smul.u32 %s272, 16
        %s274 = scalar_lea.vmem %s230, %s273
        %v275 = vld [vmem:[%s274] sm:$0xff]
        %v276 = vld [vmem:[%s274 + $0x8] sm:$0xff]
        %279 = vrot.lane.b32.xlu0 %v275, 127
        %v280 = vpop.permute.xlu0 %279
        %281 = vrot.lane.b32.xlu0 %v276, 127
        %v282 = vpop.permute.xlu0 %281
        %285 = vrot.lane.b32.xlu0 %v275, 126
        %v286 = vpop.permute.xlu0 %285
        %287 = vrot.lane.b32.xlu0 %v276, 126
        %v288 = vpop.permute.xlu0 %287
        %s291 = scalar_lea.vmem %s1, 16
        %v292 = vld [vmem:[%s291] sm:$0xff]
        %v293 = vld [vmem:[%s291 + $0x8] sm:$0xff]
        %vm294 = vcmask 392192
        %v296 = vsel %vm294, %v292, 0
        %v299 = vsel %vm294, %v293, 0
        %301 = vmatprep.subr.mxu0 0.0
        %302 = vmatpush1.msra.mxu0 %v275
        %303 = vmatprep.subr.mxu0 0.0
        %304 = vmatpush1.msra.mxu0 %v276
        %305 = vmatprep.subr.mxu0 0.0
        %306 = vmatpush1.msra.mxu0 %v280
        %307 = vmatprep.subr.mxu0 0.0
        %308 = vmatpush1.msra.mxu0 %v282
        %309 = vmatprep.subr.mxu0 0.0
        %310 = vmatpush1.msra.mxu0 %v286
        %311 = vmatprep.subr.mxu0 0.0
        %312 = vmatpush1.msra.mxu0 %v288
        %313 = vmatprep.subr.mxu0 0.0
        %314 = vmatpush1.msra.mxu0 0.0
        %315 = vmatprep.subr.mxu0 0.0
        %316 = vmatpush1.msra.mxu0 0.0
        %317 = vmatprep.subr.mxu0 0.0
        %318 = vmatpush1.msra.mxu0 0.0
        %319 = vmatprep.subr.mxu0 0.0
        %320 = vmatpush1.msra.mxu0 0.0
        %321 = vmatprep.subr.mxu0 0.0
        %322 = vmatpush1.msra.mxu0 0.0
        %323 = vmatprep.subr.mxu0 0.0
        %324 = vmatpush1.msra.mxu0 0.0
        %325 = vmatprep.subr.mxu0 0.0
        %326 = vmatpush1.msra.mxu0 0.0
        %327 = vmatprep.subr.mxu0 0.0
        %328 = vmatpush1.msra.mxu0 0.0
        %329 = vmatprep.subr.mxu0 0.0
        %330 = vmatpush1.msra.mxu0 0.0
        %331 = vmatprep.subr.mxu0 0.0
        %332 = vmatpush1.msra.mxu0 0.0
        %333 = vmatprep.subr.mxu0 0.0
        %334 = vmatpush1.msra.mxu0 0.0
        %335 = vmatprep.subr.mxu0 0.0
        %336 = vmatpush1.msra.mxu0 0.0
        %337 = vmatprep.subr.mxu0 0.0
        %338 = vmatpush1.msra.mxu0 0.0
        %339 = vmatprep.subr.mxu0 0.0
        %340 = vmatpush1.msra.mxu0 0.0
        %341 = vmatprep.subr.mxu0 0.0
        %342 = vmatpush1.msra.mxu0 0.0
        %343 = vmatprep.subr.mxu0 0.0
        %344 = vmatpush1.msra.mxu0 0.0
        %345 = vmatprep.subr.mxu0 0.0
        %346 = vmatpush1.msra.mxu0 0.0
        %347 = vmatprep.subr.mxu0 0.0
        %348 = vmatpush1.msra.mxu0 0.0
        %349 = vmatprep.subr.mxu0 0.0
        %350 = vmatpush1.msra.mxu0 0.0
        %351 = vmatprep.subr.mxu0 0.0
        %352 = vmatpush1.msra.mxu0 0.0
        %353 = vmatprep.subr.mxu0 0.0
        %354 = vmatpush1.msra.mxu0 0.0
        %355 = vmatprep.subr.mxu0 0.0
        %356 = vmatpush1.msra.mxu0 0.0
        %357 = vmatprep.subr.mxu0 0.0
        %358 = vmatpush1.msra.mxu0 0.0
        %359 = vmatprep.subr.mxu0 0.0
        %360 = vmatpush1.msra.mxu0 0.0
        %361 = vmatprep.subr.mxu0 0.0
        %362 = vmatpush1.msra.mxu0 0.0
        %363 = vmatprep.subr.mxu0 0.0
        %364 = vmatpush1.msra.mxu0 0.0
        %365 = vmatprep.mubr.f32.mxu0 0.0
        %366 = vmatmul.mubr.f32.gmra.mrb[0].mxu0 %v296
        %v367 = vpop.f32.mrb[0].mxu0
        %v368 = vadd.f32 0.0, %v367
        %v369 = vpop.f32.mrb[0].mxu0
        %370 = vmatprep.mubr.f32.mxu0 0.0
        %371 = vmatmul.mubr.f32.gmra.mrb[0].mxu0 %v299
        %v372 = vpop.f32.mrb[0].mxu0
        %v373 = vadd.f32 0.0, %v372
        %v374 = vpop.f32.mrb[0].mxu0
        %375 = vdwg.mxu0
        %v377 = vsel %vm294, %v270, 0
        %v380 = vsel %vm294, %v271, 0
        %382 = vmatprep.subr.mxu0 0.0
        %383 = vmatpush1.msra.mxu0 %v254
        %384 = vmatprep.subr.mxu0 0.0
        %385 = vmatpush1.msra.mxu0 %v255
        %386 = vmatprep.subr.mxu0 0.0
        %387 = vmatpush1.msra.mxu0 %v259
        %388 = vmatprep.subr.mxu0 0.0
        %389 = vmatpush1.msra.mxu0 %v261
        %390 = vmatprep.subr.mxu0 0.0
        %391 = vmatpush1.msra.mxu0 %v265
        %392 = vmatprep.subr.mxu0 0.0
        %393 = vmatpush1.msra.mxu0 %v267
        %394 = vmatprep.subr.mxu0 0.0
        %395 = vmatpush1.msra.mxu0 0.0
        %396 = vmatprep.subr.mxu0 0.0
        %397 = vmatpush1.msra.mxu0 0.0
        %398 = vmatprep.subr.mxu0 0.0
        %399 = vmatpush1.msra.mxu0 0.0
        %400 = vmatprep.subr.mxu0 0.0
        %401 = vmatpush1.msra.mxu0 0.0
        %402 = vmatprep.subr.mxu0 0.0
        %403 = vmatpush1.msra.mxu0 0.0
        %404 = vmatprep.subr.mxu0 0.0
        %405 = vmatpush1.msra.mxu0 0.0
        %406 = vmatprep.subr.mxu0 0.0
        %407 = vmatpush1.msra.mxu0 0.0
        %408 = vmatprep.subr.mxu0 0.0
        %409 = vmatpush1.msra.mxu0 0.0
        %410 = vmatprep.subr.mxu0 0.0
        %411 = vmatpush1.msra.mxu0 0.0
        %412 = vmatprep.subr.mxu0 0.0
        %413 = vmatpush1.msra.mxu0 0.0
        %414 = vmatprep.subr.mxu0 0.0
        %415 = vmatpush1.msra.mxu0 0.0
        %416 = vmatprep.subr.mxu0 0.0
        %417 = vmatpush1.msra.mxu0 0.0
        %418 = vmatprep.subr.mxu0 0.0
        %419 = vmatpush1.msra.mxu0 0.0
        %420 = vmatprep.subr.mxu0 0.0
        %421 = vmatpush1.msra.mxu0 0.0
        %422 = vmatprep.subr.mxu0 0.0
        %423 = vmatpush1.msra.mxu0 0.0
        %424 = vmatprep.subr.mxu0 0.0
        %425 = vmatpush1.msra.mxu0 0.0
        %426 = vmatprep.subr.mxu0 0.0
        %427 = vmatpush1.msra.mxu0 0.0
        %428 = vmatprep.subr.mxu0 0.0
        %429 = vmatpush1.msra.mxu0 0.0
        %430 = vmatprep.subr.mxu0 0.0
        %431 = vmatpush1.msra.mxu0 0.0
        %432 = vmatprep.subr.mxu0 0.0
        %433 = vmatpush1.msra.mxu0 0.0
        %434 = vmatprep.subr.mxu0 0.0
        %435 = vmatpush1.msra.mxu0 0.0
        %436 = vmatprep.subr.mxu0 0.0
        %437 = vmatpush1.msra.mxu0 0.0
        %438 = vmatprep.subr.mxu0 0.0
        %439 = vmatpush1.msra.mxu0 0.0
        %440 = vmatprep.subr.mxu0 0.0
        %441 = vmatpush1.msra.mxu0 0.0
        %442 = vmatprep.subr.mxu0 0.0
        %443 = vmatpush1.msra.mxu0 0.0
        %444 = vmatprep.subr.mxu0 0.0
        %445 = vmatpush1.msra.mxu0 0.0
        %446 = vmatprep.mubr.f32.mxu0 0.0
        %447 = vmatmul.mubr.f32.gmra.mrb[0].mxu0 %v377
        %v448 = vpop.f32.mrb[0].mxu0
        %v449 = vadd.f32 %v368, %v448
        %v450 = vpop.f32.mrb[0].mxu0
        %451 = vmatprep.mubr.f32.mxu0 0.0
        %452 = vmatmul.mubr.f32.gmra.mrb[0].mxu0 %v380
        %v453 = vpop.f32.mrb[0].mxu0
        %v454 = vadd.f32 %v373, %v453
        %v455 = vpop.f32.mrb[0].mxu0
        %456 = vdwg.mxu0
        %s457 = sadd.s32 %s243, 2
        %s458 = smul.u32 %s457, 16
        %s459 = scalar_lea.vmem %s230, %s458
        %v460 = vld [vmem:[%s459] sm:$0xff]
        %v461 = vld [vmem:[%s459 + $0x8] sm:$0xff]
        %464 = vrot.lane.b32.xlu0 %v460, 127
        %v465 = vpop.permute.xlu0 %464
        %466 = vrot.lane.b32.xlu0 %v461, 127
        %v467 = vpop.permute.xlu0 %466
        %470 = vrot.lane.b32.xlu0 %v460, 126
        %v471 = vpop.permute.xlu0 %470
        %472 = vrot.lane.b32.xlu0 %v461, 126
        %v473 = vpop.permute.xlu0 %472
        %s476 = scalar_lea.vmem %s1, 32
        %v477 = vld [vmem:[%s476] sm:$0xff]
        %v478 = vld [vmem:[%s476 + $0x8] sm:$0xff]
        %v480 = vsel %vm294, %v477, 0
        %v483 = vsel %vm294, %v478, 0
        %485 = vmatprep.subr.mxu0 0.0
        %486 = vmatpush1.msra.mxu0 %v460
        %487 = vmatprep.subr.mxu0 0.0
        %488 = vmatpush1.msra.mxu0 %v461
        %489 = vmatprep.subr.mxu0 0.0
        %490 = vmatpush1.msra.mxu0 %v465
        %491 = vmatprep.subr.mxu0 0.0
        %492 = vmatpush1.msra.mxu0 %v467
        %493 = vmatprep.subr.mxu0 0.0
        %494 = vmatpush1.msra.mxu0 %v471
        %495 = vmatprep.subr.mxu0 0.0
        %496 = vmatpush1.msra.mxu0 %v473
        %497 = vmatprep.subr.mxu0 0.0
        %498 = vmatpush1.msra.mxu0 0.0
        %499 = vmatprep.subr.mxu0 0.0
        %500 = vmatpush1.msra.mxu0 0.0
        %501 = vmatprep.subr.mxu0 0.0
        %502 = vmatpush1.msra.mxu0 0.0
        %503 = vmatprep.subr.mxu0 0.0
        %504 = vmatpush1.msra.mxu0 0.0
        %505 = vmatprep.subr.mxu0 0.0
        %506 = vmatpush1.msra.mxu0 0.0
        %507 = vmatprep.subr.mxu0 0.0
        %508 = vmatpush1.msra.mxu0 0.0
        %509 = vmatprep.subr.mxu0 0.0
        %510 = vmatpush1.msra.mxu0 0.0
        %511 = vmatprep.subr.mxu0 0.0
        %512 = vmatpush1.msra.mxu0 0.0
        %513 = vmatprep.subr.mxu0 0.0
        %514 = vmatpush1.msra.mxu0 0.0
        %515 = vmatprep.subr.mxu0 0.0
        %516 = vmatpush1.msra.mxu0 0.0
        %517 = vmatprep.subr.mxu0 0.0
        %518 = vmatpush1.msra.mxu0 0.0
        %519 = vmatprep.subr.mxu0 0.0
        %520 = vmatpush1.msra.mxu0 0.0
        %521 = vmatprep.subr.mxu0 0.0
        %522 = vmatpush1.msra.mxu0 0.0
        %523 = vmatprep.subr.mxu0 0.0
        %524 = vmatpush1.msra.mxu0 0.0
        %525 = vmatprep.subr.mxu0 0.0
        %526 = vmatpush1.msra.mxu0 0.0
        %527 = vmatprep.subr.mxu0 0.0
        %528 = vmatpush1.msra.mxu0 0.0
        %529 = vmatprep.subr.mxu0 0.0
        %530 = vmatpush1.msra.mxu0 0.0
        %531 = vmatprep.subr.mxu0 0.0
        %532 = vmatpush1.msra.mxu0 0.0
        %533 = vmatprep.subr.mxu0 0.0
        %534 = vmatpush1.msra.mxu0 0.0
        %535 = vmatprep.subr.mxu0 0.0
        %536 = vmatpush1.msra.mxu0 0.0
        %537 = vmatprep.subr.mxu0 0.0
        %538 = vmatpush1.msra.mxu0 0.0
        %539 = vmatprep.subr.mxu0 0.0
        %540 = vmatpush1.msra.mxu0 0.0
        %541 = vmatprep.subr.mxu0 0.0
        %542 = vmatpush1.msra.mxu0 0.0
        %543 = vmatprep.subr.mxu0 0.0
        %544 = vmatpush1.msra.mxu0 0.0
        %545 = vmatprep.subr.mxu0 0.0
        %546 = vmatpush1.msra.mxu0 0.0
        %547 = vmatprep.subr.mxu0 0.0
        %548 = vmatpush1.msra.mxu0 0.0
        %549 = vmatprep.mubr.f32.mxu0 0.0
        %550 = vmatmul.mubr.f32.gmra.mrb[0].mxu0 %v480
        %v551 = vpop.f32.mrb[0].mxu0
        %v552 = vadd.f32 0.0, %v551
        %v553 = vpop.f32.mrb[0].mxu0
        %554 = vmatprep.mubr.f32.mxu0 0.0
        %555 = vmatmul.mubr.f32.gmra.mrb[0].mxu0 %v483
        %v556 = vpop.f32.mrb[0].mxu0
        %v557 = vadd.f32 0.0, %v556
        %v558 = vpop.f32.mrb[0].mxu0
        %559 = vdwg.mxu0
        %v560 = vadd.f32 %v449, %v552
        %v561 = vadd.f32 %v454, %v557
        %v562 = vld [vmem:[%s2] sm:$0xff]
        %v563 = vld [vmem:[%s2 + $0x8] sm:$0xff]
        %565 = vset.pattern.permute.xlu0 0
        %566 = vperm.xlu0 %565, %v562
        %v567 = vpop.permute.xlu0 %566
        %570 = vset.pattern.permute.xlu0 0
        %571 = vperm.xlu0 %570, %v563
        %v572 = vpop.permute.xlu0 %571
        %v574 = vadd.f32 %v560, %v567
        %v575 = vadd.f32 %v561, %v572
        %s576 = scalar_lea.vmem %s235, %s252
        %vm577 = vcmask 220160
        %578 = vst.msk [vmem:[%s576] sm:$0xff] %vm577, %v574
        %579 = vst.msk [vmem:[%s576 + $0x8] sm:$0xff] %vm577, %v575
        %v580 = vadd.f32 %v248, %v574
        %v581 = vadd.f32 %v249, %v575
        %v582 = vmul.f32 %v574, %v574
        %v583 = vmul.f32 %v575, %v575
        %v584 = vadd.f32 %v250, %v582
        %v585 = vadd.f32 %v251, %v583
      $region37: #{gncnn_forward.17} parent=31 // loop_footer
        %s247 = sadd.s32 1, %s243
      $region38: #{gncnn_forward.17} parent=31 // loop_footer_branch
        %242 = sbr.rel target = $region34
      $region39: #{gncnn_forward.17} parent=31 // loop_exit
        _
      %vm586 = vcmask 220160
      %v587 = vsel %vm586, %v248, 0.0
      %v588 = vsel %vm586, %v249, 0.0
      %v589 = vadd.f32 %v587, %v588
      %590 = vadd.xlane.f32.xlu0 %v589
      %v591 = vpop.xlane.xlu0 %590
      %v592 = vrot.slane %v591, 4
      %v593 = vadd.f32 %v591, %v592
      %v594 = vrot.slane %v593, 2
      %v595 = vadd.f32 %v593, %v594
      %v596 = vrot.slane %v595, 1
      %v597 = vadd.f32 %v595, %v596
      %s598 = vtos %v597
      %v599 = vstv %s598
      %vm600 = vcmask 0
      %601 = vst.msk [vmem:[%s238] sm:$0x1] %vm600, %v599
      %v602 = vsel %vm586, %v250, 0.0
      %v603 = vsel %vm586, %v251, 0.0
      %v604 = vadd.f32 %v602, %v603
      %605 = vadd.xlane.f32.xlu0 %v604
      %v606 = vpop.xlane.xlu0 %605
      %v607 = vrot.slane %v606, 4
      %v608 = vadd.f32 %v606, %v607
      %v609 = vrot.slane %v608, 2
      %v610 = vadd.f32 %v608, %v609
      %v611 = vrot.slane %v610, 1
      %v612 = vadd.f32 %v610, %v611
      %s613 = vtos %v612
      %v614 = vstv %s613
      %615 = vst.msk [vmem:[%s241] sm:$0x1] %vm600, %v614
      %p616 = scmp.lt.s32.totalorder %s17, 1
      %s617 = scalar_select %p616, %s17, 1
      %s618 = smul.addr %s617, 54
      %s619 = smul.addr %s618, 8
      %s620 = scalar_lea.vmem %s3, %s619
      %p621 = scmp.lt.s32.totalorder %s17, 1
      %s622 = scalar_select %p621, %s17, 1
      %s623 = scalar_lea.vmem %s4, %s622
      %p624 = scmp.lt.s32.totalorder %s17, 1
      %s625 = scalar_select %p624, %s17, 1
      %s626 = scalar_lea.vmem %s5, %s625
      // Predicated region
      $region40: #{gncnn_forward.17} parent=31 // pred_check
        %p627 = pneg %p103
      $region41: #{gncnn_forward.17} parent=31 // pred_check_branch
        %629 = sbr.rel (%p627) target = $region43
      $region42: #{gncnn_forward.17} parent=31 // pred_region
        _
      $region43: #{gncnn_forward.17} parent=31 // pred_fallthru
        _
      // Predicated region
      $region44: #{gncnn_forward.17} parent=31 // pred_check
        %p630 = pneg %p129
      $region45: #{gncnn_forward.17} parent=31 // pred_check_branch
        %632 = sbr.rel (%p630) target = $region47
      $region46: #{gncnn_forward.17} parent=31 // pred_region
        _
      $region47: #{gncnn_forward.17} parent=31 // pred_fallthru
        _
      // Predicated region
      $region48: #{gncnn_forward.17} parent=31 // pred_check
        %p633 = pneg %p155
      $region49: #{gncnn_forward.17} parent=31 // pred_check_branch
        %635 = sbr.rel (%p633) target = $region51
      $region50: #{gncnn_forward.17} parent=31 // pred_region
        _
      $region51: #{gncnn_forward.17} parent=31 // pred_fallthru
        _
    $region32: #{gncnn_forward.17} parent=5 // pred_fallthru
      _
    %p636 = scmp.le.s32.totalorder 2, %s12
    // Predicated region
    $region52: #{gncnn_forward.17} parent=5 // pred_check
      %p637 = pneg %p636
    $region53: #{gncnn_forward.17} parent=5 // pred_check_branch
      %639 = sbr.rel (%p637) target = $region55
    $region54: #{gncnn_forward.17} parent=5 // pred_region
      %s640 = ssub.s32 %s12, 2
      // Predicated region
      $region56: #{gncnn_forward.17} parent=54 // pred_check
        %p641 = pneg %p109
      $region57: #{gncnn_forward.17} parent=54 // pred_check_branch
        %643 = sbr.rel (%p641) target = $region59
      $region58: #{gncnn_forward.17} parent=54 // pred_region
        %p644 = scmp.lt.s32.totalorder %s18, 1
        %s645 = scalar_select %p644, %s18, 1
        %s646 = smul.addr %s645, 54
        %s647 = smul.addr %s646, 8
        %s648 = scalar_lea.vmem %s3, %s647
      $region59: #{gncnn_forward.17} parent=54 // pred_fallthru
        _
      // Predicated region
      $region60: #{gncnn_forward.17} parent=54 // pred_check
        %p649 = pneg %p135
      $region61: #{gncnn_forward.17} parent=54 // pred_check_branch
        %651 = sbr.rel (%p649) target = $region63
      $region62: #{gncnn_forward.17} parent=54 // pred_region
        %p652 = scmp.lt.s32.totalorder %s18, 1
        %s653 = scalar_select %p652, %s18, 1
        %s654 = scalar_lea.vmem %s4, %s653
      $region63: #{gncnn_forward.17} parent=54 // pred_fallthru
        _
      // Predicated region
      $region64: #{gncnn_forward.17} parent=54 // pred_check
        %p655 = pneg %p161
      $region65: #{gncnn_forward.17} parent=54 // pred_check_branch
        %657 = sbr.rel (%p655) target = $region67
      $region66: #{gncnn_forward.17} parent=54 // pred_region
        %p658 = scmp.lt.s32.totalorder %s18, 1
        %s659 = scalar_select %p658, %s18, 1
        %s660 = scalar_lea.vmem %s5, %s659
      $region67: #{gncnn_forward.17} parent=54 // pred_fallthru
        _
    $region55: #{gncnn_forward.17} parent=5 // pred_fallthru
      _
  $region6: #{gncnn_forward.17} parent=0 // loop_footer
    %s16 = sadd.s32 1, %s12
  $region7: #{gncnn_forward.17} parent=0 // loop_footer_branch
    %11 = sbr.rel target = $region3
  $region8: #{gncnn_forward.17} parent=0 // loop_exit
    _

// kernel: gncnn_forward.19
$region0: #{gncnn_forward.19}
  #allocation0 [shape = 'u32[]', space=smem, size = 0x4, offset = 0x4, fixed_abs, tag = 'smem constant byte address 0x4 - core index']
  #allocation1 [shape = 'u32[144,128]{1,0:T(1,128)}', space=vmem, size = 0x12000, scoped, tag = 'internal scratch']
  %s0 = inlined_call_operand.vmem [shape: f32[2,13,16,13], index: 0, kind: input, shape index: {}]
  %s1 = inlined_call_operand.vmem [shape: f32[5,16,80], index: 1, kind: input, shape index: {}]
  %s2 = inlined_call_operand.vmem [shape: f32[16,1], index: 2, kind: input, shape index: {}]
  %s3 = inlined_call_operand.vmem [shape: f32[2,9,16,9], index: 3, kind: output, shape index: {0}]
  %s4 = inlined_call_operand.vmem [shape: f32[2,1,1], index: 4, kind: output, shape index: {1}]
  %s5 = inlined_call_operand.vmem [shape: f32[2,1,1], index: 5, kind: output, shape index: {2}]
  %6 = xla_tuple %s3, %s4, %s5
  %s7 = sld [smem:[#allocation0]]
  $region68: #{gncnn_forward.19} parent=0
    _
  %s9 = ssub.s32 1, %s7
  %s10 = scalar_select 0, %s9, %s7
  loop: start=0, step=1, limit=4
  $region2: #{gncnn_forward.19} parent=0 // loop_pre_header
    _
  $region3: #{gncnn_forward.19} parent=0 // loop_header
    %s12 = sphi 0, %s16
    %p13 = scmp.ge.s32.totalorder %s12, 4
    %s22 = sphi 0, %s24
    %s25 = sphi 0, %s22
    %s26 = sphi 0, %s25
    %s42 = sphi 0, %s26
    %s46 = sphi 0, %s46
    %s48 = sphi 0, %s46
    %s49 = sphi 0, %s48
    %s63 = sphi 0, %s49
    %s67 = sphi 0, %s67
    %s69 = sphi 0, %s67
    %s70 = sphi 0, %s69
    %s84 = sphi 0, %s70
    %s90 = sphi 0, %s92
    %s93 = sphi 0, %s90
    %s94 = sphi 0, %s93
    %s110 = sphi 0, %s94
    %s116 = sphi 0, %s118
    %s119 = sphi 0, %s116
    %s120 = sphi 0, %s119
    %s136 = sphi 0, %s120
    %s142 = sphi 0, %s144
    %s145 = sphi 0, %s142
    %s146 = sphi 0, %s145
    %s162 = sphi 0, %s146
  $region4: #{gncnn_forward.19} parent=0 // loop_header_branch
    %15 = sbr.rel (%p13) target = $region8
  $region5: #{gncnn_forward.19} parent=0 // loop_body
    %s17 = ssub.s32 %s12, 1
    %s18 = ssub.s32 %s12, 2
    %s19 = sadd.s32 %s12, 1
    %s20 = ssub.s32 %s12, %s19
    %p21 = scmp.eq.s32.totalorder %s20, 0
    %s23 = sadd.s32 %s22, 1
    %s24 = scalar_select %p21, %s22, %s23
    %p27 = pneg %p21
    %p28 = scmp.eq.s32.totalorder %s12, 1
    %p29 = por %p27, %p28
    %p30 = scmp.ne.s32.totalorder %s22, %s25
    %p31 = scmp.eq.s32.totalorder %s12, 0
    %p32 = por %p30, %p31
    %p33 = scmp.ne.s32.totalorder %s22, %s25
    %p34 = scmp.eq.s32.totalorder %s17, 1
    %p35 = por %p33, %p34
    %p36 = scmp.ne.s32.totalorder %s25, %s26
    %p37 = scmp.eq.s32.totalorder %s17, 0
    %p38 = por %p36, %p37
    %p39 = scmp.ne.s32.totalorder %s25, %s26
    %p40 = scmp.eq.s32.totalorder %s18, 1
    %p41 = por %p39, %p40
    %p43 = scmp.ne.s32.totalorder %s26, %s42
    %p44 = scmp.eq.s32.totalorder %s18, 0
    %p45 = por %p43, %p44
    %s47 = sadd.s32 %s46, 1
    %p50 = scmp.eq.s32.totalorder %s12, 1
    %p51 = scmp.ne.s32.totalorder %s46, %s48
    %p52 = scmp.eq.s32.totalorder %s12, 0
    %p53 = por %p51, %p52
    %p54 = scmp.ne.s32.totalorder %s46, %s48
    %p55 = scmp.eq.s32.totalorder %s17, 1
    %p56 = por %p54, %p55
    %p57 = scmp.ne.s32.totalorder %s48, %s49
    %p58 = scmp.eq.s32.totalorder %s17, 0
    %p59 = por %p57, %p58
    %p60 = scmp.ne.s32.totalorder %s48, %s49
    %p61 = scmp.eq.s32.totalorder %s18, 1
    %p62 = por %p60, %p61
    %p64 = scmp.ne.s32.totalorder %s49, %s63
    %p65 = scmp.eq.s32.totalorder %s18, 0
    %p66 = por %p64, %p65
    %s68 = sadd.s32 %s67, 1
    %p71 = scmp.eq.s32.totalorder %s12, 1
    %p72 = scmp.ne.s32.totalorder %s67, %s69
    %p73 = scmp.eq.s32.totalorder %s12, 0
    %p74 = por %p72, %p73
    %p75 = scmp.ne.s32.totalorder %s67, %s69
    %p76 = scmp.eq.s32.totalorder %s17, 1
    %p77 = por %p75, %p76
    %p78 = scmp.ne.s32.totalorder %s69, %s70
    %p79 = scmp.eq.s32.totalorder %s17, 0
    %p80 = por %p78, %p79
    %p81 = scmp.ne.s32.totalorder %s69, %s70
    %p82 = scmp.eq.s32.totalorder %s18, 1
    %p83 = por %p81, %p82
    %p85 = scmp.ne.s32.totalorder %s70, %s84
    %p86 = scmp.eq.s32.totalorder %s18, 0
    %p87 = por %p85, %p86
    %s88 = ssub.s32 %s12, %s19
    %p89 = scmp.eq.s32.totalorder %s88, 0
    %s91 = sadd.s32 %s90, 1
    %s92 = scalar_select %p89, %s90, %s91
    %p95 = pneg %p89
    %p96 = scmp.eq.s32.totalorder %s12, 1
    %p97 = por %p95, %p96
    %p98 = scmp.ne.s32.totalorder %s90, %s93
    %p99 = scmp.eq.s32.totalorder %s12, 0
    %p100 = por %p98, %p99
    %p101 = scmp.ne.s32.totalorder %s90, %s93
    %p102 = scmp.eq.s32.totalorder %s17, 1
    %p103 = por %p101, %p102
    %p104 = scmp.ne.s32.totalorder %s93, %s94
    %p105 = scmp.eq.s32.totalorder %s17, 0
    %p106 = por %p104, %p105
    %p107 = scmp.ne.s32.totalorder %s93, %s94
    %p108 = scmp.eq.s32.totalorder %s18, 1
    %p109 = por %p107, %p108
    %p111 = scmp.ne.s32.totalorder %s94, %s110
    %p112 = scmp.eq.s32.totalorder %s18, 0
    %p113 = por %p111, %p112
    %s114 = ssub.s32 %s12, %s19
    %p115 = scmp.eq.s32.totalorder %s114, 0
    %s117 = sadd.s32 %s116, 1
    %s118 = scalar_select %p115, %s116, %s117
    %p121 = pneg %p115
    %p122 = scmp.eq.s32.totalorder %s12, 1
    %p123 = por %p121, %p122
    %p124 = scmp.ne.s32.totalorder %s116, %s119
    %p125 = scmp.eq.s32.totalorder %s12, 0
    %p126 = por %p124, %p125
    %p127 = scmp.ne.s32.totalorder %s116, %s119
    %p128 = scmp.eq.s32.totalorder %s17, 1
    %p129 = por %p127, %p128
    %p130 = scmp.ne.s32.totalorder %s119, %s120
    %p131 = scmp.eq.s32.totalorder %s17, 0
    %p132 = por %p130, %p131
    %p133 = scmp.ne.s32.totalorder %s119, %s120
    %p134 = scmp.eq.s32.totalorder %s18, 1
    %p135 = por %p133, %p134
    %p137 = scmp.ne.s32.totalorder %s120, %s136
    %p138 = scmp.eq.s32.totalorder %s18, 0
    %p139 = por %p137, %p138
    %s140 = ssub.s32 %s12, %s19
    %p141 = scmp.eq.s32.totalorder %s140, 0
    %s143 = sadd.s32 %s142, 1
    %s144 = scalar_select %p141, %s142, %s143
    %p147 = pneg %p141
    %p148 = scmp.eq.s32.totalorder %s12, 1
    %p149 = por %p147, %p148
    %p150 = scmp.ne.s32.totalorder %s142, %s145
    %p151 = scmp.eq.s32.totalorder %s12, 0
    %p152 = por %p150, %p151
    %p153 = scmp.ne.s32.totalorder %s142, %s145
    %p154 = scmp.eq.s32.totalorder %s17, 1
    %p155 = por %p153, %p154
    %p156 = scmp.ne.s32.totalorder %s145, %s146
    %p157 = scmp.eq.s32.totalorder %s17, 0
    %p158 = por %p156, %p157
    %p159 = scmp.ne.s32.totalorder %s145, %s146
    %p160 = scmp.eq.s32.totalorder %s18, 1
    %p161 = por %p159, %p160
    %p163 = scmp.ne.s32.totalorder %s146, %s162
    %p164 = scmp.eq.s32.totalorder %s18, 0
    %p165 = por %p163, %p164
    %p166 = scmp.le.s32.totalorder 1, %s12
    %p167 = scmp.lt.s32.totalorder %s12, 3
    %p168 = pnand %p166, %p167
    %p169 = pneg %p168
    // Predicated region
    $region9: #{gncnn_forward.19} parent=5 // pred_check
      _
    $region10: #{gncnn_forward.19} parent=5 // pred_check_branch
      %171 = sbr.rel (%p168) target = $region12
    $region11: #{gncnn_forward.19} parent=5 // pred_region
      %s172 = ssub.s32 %s12, 1
      // Predicated region
      $region13: #{gncnn_forward.19} parent=11 // pred_check
        %p173 = pneg %p59
      $region14: #{gncnn_forward.19} parent=11 // pred_check_branch
        %175 = sbr.rel (%p173) target = $region16
      $region15: #{gncnn_forward.19} parent=11 // pred_region
        _
      $region16: #{gncnn_forward.19} parent=11 // pred_fallthru
        _
      // Predicated region
      $region17: #{gncnn_forward.19} parent=11 // pred_check
        %p176 = pneg %p80
      $region18: #{gncnn_forward.19} parent=11 // pred_check_branch
        %178 = sbr.rel (%p176) target = $region20
      $region19: #{gncnn_forward.19} parent=11 // pred_region
        _
      $region20: #{gncnn_forward.19} parent=11 // pred_fallthru
        _
    $region12: #{gncnn_forward.19} parent=5 // pred_fallthru
      _
    %p179 = scmp.lt.s32.totalorder %s12, 2
    // Predicated region
    $region21: #{gncnn_forward.19} parent=5 // pred_check
      %p180 = pneg %p179
    $region22: #{gncnn_forward.19} parent=5 // pred_check_branch
      %182 = sbr.rel (%p180) target = $region24
    $region23: #{gncnn_forward.19} parent=5 // pred_region
      // Predicated region
      $region25: #{gncnn_forward.19} parent=23 // pred_check
        %p183 = pneg %p32
      $region26: #{gncnn_forward.19} parent=23 // pred_check_branch
        %185 = sbr.rel (%p183) target = $region28
      $region27: #{gncnn_forward.19} parent=23 // pred_region
        %p186 = scmp.lt.s32.totalorder %s12, 1
        %s187 = scalar_select %p186, %s12, 1
        %s188 = smul.addr %s187, 26
        %s189 = smul.addr %s188, 8
        %s190 = scalar_lea.vmem %s0, %s189
      $region28: #{gncnn_forward.19} parent=23 // pred_fallthru
        _
    $region24: #{gncnn_forward.19} parent=5 // pred_fallthru
      _
    %p191 = scmp.le.s32.totalorder 1, %s12
    %p192 = scmp.lt.s32.totalorder %s12, 3
    %p193 = pnand %p191, %p192
    %p194 = pneg %p193
    // Predicated region
    $region29: #{gncnn_forward.19} parent=5 // pred_check
      _
    $region30: #{gncnn_forward.19} parent=5 // pred_check_branch
      %196 = sbr.rel (%p193) target = $region32
    $region31: #{gncnn_forward.19} parent=5 // pred_region
      %s197 = ssub.s32 %s12, 1
      %p198 = scmp.lt.s32.totalorder %s17, 1
      %s199 = scalar_select %p198, %s17, 1
      %s200 = smul.addr %s199, 26
      %s201 = smul.addr %s200, 8
      %s202 = scalar_lea.vmem %s0, %s201
      %p203 = pneg %p38
      %p204 = pneg %p35
      %p205 = pneg %p59
      %p206 = pneg %p56
      %p207 = pneg %p80
      %p208 = pneg %p77
      %p209 = pneg %p106
      %p210 = pneg %p103
      %p211 = scmp.lt.s32.totalorder %s17, 1
      %s212 = scalar_select %p211, %s17, 1
      %s213 = smul.addr %s212, 18
      %s214 = smul.addr %s213, 8
      %s215 = scalar_lea.vmem %s3, %s214
      %p216 = pneg %p132
      %p217 = pneg %p129
      %p218 = scmp.lt.s32.totalorder %s17, 1
      %s219 = scalar_select %p218, %s17, 1
      %s220 = scalar_lea.vmem %s4, %s219
      %p221 = pneg %p158
      %p222 = pneg %p155
      %p223 = scmp.lt.s32.totalorder %s17, 1
      %s224 = scalar_select %p223, %s17, 1
      %s225 = scalar_lea.vmem %s5, %s224
      %p226 = scmp.lt.s32.totalorder %s17, 1
      %s227 = scalar_select %p226, %s17, 1
      %s228 = smul.addr %s227, 26
      %s229 = smul.addr %s228, 8
      %s230 = scalar_lea.vmem %s0, %s229
      %p231 = scmp.lt.s32.totalorder %s17, 1
      %s232 = scalar_select %p231, %s17, 1
      %s233 = smul.addr %s232, 18
      %s234 = smul.addr %s233, 8
      %s235 = scalar_lea.vmem %s3, %s234
      %p236 = scmp.lt.s32.totalorder %s17, 1
      %s237 = scalar_select %p236, %s17, 1
      %s238 = scalar_lea.vmem %s4, %s237
      %p239 = scmp.lt.s32.totalorder %s17, 1
      %s240 = scalar_select %p239, %s17, 1
      %s241 = scalar_lea.vmem %s5, %s240
      loop: start=0, step=1, limit=9
      $region33: #{gncnn_forward.19} parent=31 // loop_pre_header
        _
      $region34: #{gncnn_forward.19} parent=31 // loop_header
        %s243 = sphi 0, %s247
        %p244 = scmp.ge.s32.totalorder %s243, 9
        %v248 = vphi 0.0, %v850
        %v249 = vphi 0.0, %v851
        %v250 = vphi 0.0, %v854
        %v251 = vphi 0.0, %v855
      $region35: #{gncnn_forward.19} parent=31 // loop_header_branch
        %246 = sbr.rel (%p244) target = $region39
      $region36: #{gncnn_forward.19} parent=31 // loop_body
        %s252 = smul.u32 %s243, 16
        %s253 = scalar_lea.vmem %s230, %s252
        %v254 = vld [vmem:[%s253] sm:$0xff]
        %v255 = vld [vmem:[%s253 + $0x8] sm:$0xff]
        %258 = vrot.lane.b32.xlu0 %v254, 127
        %v259 = vpop.permute.xlu0 %258
        %260 = vrot.lane.b32.xlu0 %v255, 127
        %v261 = vpop.permute.xlu0 %260
        %264 = vrot.lane.b32.xlu0 %v254, 126
        %v265 = vpop.permute.xlu0 %264
        %266 = vrot.lane.b32.xlu0 %v255, 126
        %v267 = vpop.permute.xlu0 %266
        %270 = vrot.lane.b32.xlu0 %v254, 125
        %v271 = vpop.permute.xlu0 %270
        %272 = vrot.lane.b32.xlu0 %v255, 125
        %v273 = vpop.permute.xlu0 %272
        %276 = vrot.lane.b32.xlu0 %v254, 124
        %v277 = vpop.permute.xlu0 %276
        %278 = vrot.lane.b32.xlu0 %v255, 124
        %v279 = vpop.permute.xlu0 %278
        %v282 = vld [vmem:[%s1] sm:$0xff]
        %v283 = vld [vmem:[%s1 + $0x8] sm:$0xff]
        %s284 = sadd.s32 %s243, 1
        %s285 = smul.u32 %s284, 16
        %s286 = scalar_lea.vmem %s230, %s285
        %v287 = vld [vmem:[%s286] sm:$0xff]
        %v288 = vld [vmem:[%s286 + $0x8] sm:$0xff]
        %291 = vrot.lane.b32.xlu0 %v287, 127
        %v292 = vpop.permute.xlu0 %291
        %293 = vrot.lane.b32.xlu0 %v288, 127
        %v294 = vpop.permute.xlu0 %293
        %297 = vrot.lane.b32.xlu0 %v287, 126
        %v298 = vpop.permute.xlu0 %297
        %299 = vrot.lane.b32.xlu0 %v288, 126
        %v300 = vpop.permute.xlu0 %299
        %303 = vrot.lane.b32.xlu0 %v287, 125
        %v304 = vpop.permute.xlu0 %303
        %305 = vrot.lane.b32.xlu0 %v288, 125
        %v306 = vpop.permute.xlu0 %305
        %309 = vrot.lane.b32.xlu0 %v287, 124
        %v310 = vpop.permute.xlu0 %309
        %311 = vrot.lane.b32.xlu0 %v288, 124
        %v312 = vpop.permute.xlu0 %311
        %s315 = scalar_lea.vmem %s1, 16
        %v316 = vld [vmem:[%s315] sm:$0xff]
        %v317 = vld [vmem:[%s315 + $0x8] sm:$0xff]
        %vm318 = vcmask 654336
        %v320 = vsel %vm318, %v316, 0
        %v323 = vsel %vm318, %v317, 0
        %325 = vmatprep.subr.mxu0 0.0
        %326 = vmatpush1.msra.mxu0 %v287
        %327 = vmatprep.subr.mxu0 0.0
        %328 = vmatpush1.msra.mxu0 %v288
        %329 = vmatprep.subr.mxu0 0.0
        %330 = vmatpush1.msra.mxu0 %v292
        %331 = vmatprep.subr.mxu0 0.0
        %332 = vmatpush1.msra.mxu0 %v294
        %333 = vmatprep.subr.mxu0 0.0
        %334 = vmatpush1.msra.mxu0 %v298
        %335 = vmatprep.subr.mxu0 0.0
        %336 = vmatpush1.msra.mxu0 %v300
        %337 = vmatprep.subr.mxu0 0.0
        %338 = vmatpush1.msra.mxu0 %v304
        %339 = vmatprep.subr.mxu0 0.0
        %340 = vmatpush1.msra.mxu0 %v306
        %341 = vmatprep.subr.mxu0 0.0
        %342 = vmatpush1.msra.mxu0 %v310
        %343 = vmatprep.subr.mxu0 0.0
        %344 = vmatpush1.msra.mxu0 %v312
        %345 = vmatprep.subr.mxu0 0.0
        %346 = vmatpush1.msra.mxu0 0.0
        %347 = vmatprep.subr.mxu0 0.0
        %348 = vmatpush1.msra.mxu0 0.0
        %349 = vmatprep.subr.mxu0 0.0
        %350 = vmatpush1.msra.mxu0 0.0
        %351 = vmatprep.subr.mxu0 0.0
        %352 = vmatpush1.msra.mxu0 0.0
        %353 = vmatprep.subr.mxu0 0.0
        %354 = vmatpush1.msra.mxu0 0.0
        %355 = vmatprep.subr.mxu0 0.0
        %356 = vmatpush1.msra.mxu0 0.0
        %357 = vmatprep.subr.mxu0 0.0
        %358 = vmatpush1.msra.mxu0 0.0
        %359 = vmatprep.subr.mxu0 0.0
        %360 = vmatpush1.msra.mxu0 0.0
        %361 = vmatprep.subr.mxu0 0.0
        %362 = vmatpush1.msra.mxu0 0.0
        %363 = vmatprep.subr.mxu0 0.0
        %364 = vmatpush1.msra.mxu0 0.0
        %365 = vmatprep.subr.mxu0 0.0
        %366 = vmatpush1.msra.mxu0 0.0
        %367 = vmatprep.subr.mxu0 0.0
        %368 = vmatpush1.msra.mxu0 0.0
        %369 = vmatprep.subr.mxu0 0.0
        %370 = vmatpush1.msra.mxu0 0.0
        %371 = vmatprep.subr.mxu0 0.0
        %372 = vmatpush1.msra.mxu0 0.0
        %373 = vmatprep.subr.mxu0 0.0
        %374 = vmatpush1.msra.mxu0 0.0
        %375 = vmatprep.subr.mxu0 0.0
        %376 = vmatpush1.msra.mxu0 0.0
        %377 = vmatprep.subr.mxu0 0.0
        %378 = vmatpush1.msra.mxu0 0.0
        %379 = vmatprep.subr.mxu0 0.0
        %380 = vmatpush1.msra.mxu0 0.0
        %381 = vmatprep.subr.mxu0 0.0
        %382 = vmatpush1.msra.mxu0 0.0
        %383 = vmatprep.subr.mxu0 0.0
        %384 = vmatpush1.msra.mxu0 0.0
        %385 = vmatprep.subr.mxu0 0.0
        %386 = vmatpush1.msra.mxu0 0.0
        %387 = vmatprep.subr.mxu0 0.0
        %388 = vmatpush1.msra.mxu0 0.0
        %389 = vmatprep.mubr.f32.mxu0 0.0
        %390 = vmatmul.mubr.f32.gmra.mrb[0].mxu0 %v320
        %v391 = vpop.f32.mrb[0].mxu0
        %v392 = vadd.f32 0.0, %v391
        %v393 = vpop.f32.mrb[0].mxu0
        %394 = vmatprep.mubr.f32.mxu0 0.0
        %395 = vmatmul.mubr.f32.gmra.mrb[0].mxu0 %v323
        %v396 = vpop.f32.mrb[0].mxu0
        %v397 = vadd.f32 0.0, %v396
        %v398 = vpop.f32.mrb[0].mxu0
        %399 = vdwg.mxu0
        %v401 = vsel %vm318, %v282, 0
        %v404 = vsel %vm318, %v283, 0
        %406 = vmatprep.subr.mxu0 0.0
        %407 = vmatpush1.msra.mxu0 %v254
        %408 = vmatprep.subr.mxu0 0.0
        %409 = vmatpush1.msra.mxu0 %v255
        %410 = vmatprep.subr.mxu0 0.0
        %411 = vmatpush1.msra.mxu0 %v259
        %412 = vmatprep.subr.mxu0 0.0
        %413 = vmatpush1.msra.mxu0 %v261
        %414 = vmatprep.subr.mxu0 0.0
        %415 = vmatpush1.msra.mxu0 %v265
        %416 = vmatprep.subr.mxu0 0.0
        %417 = vmatpush1.msra.mxu0 %v267
        %418 = vmatprep.subr.mxu0 0.0
        %419 = vmatpush1.msra.mxu0 %v271
        %420 = vmatprep.subr.mxu0 0.0
        %421 = vmatpush1.msra.mxu0 %v273
        %422 = vmatprep.subr.mxu0 0.0
        %423 = vmatpush1.msra.mxu0 %v277
        %424 = vmatprep.subr.mxu0 0.0
        %425 = vmatpush1.msra.mxu0 %v279
        %426 = vmatprep.subr.mxu0 0.0
        %427 = vmatpush1.msra.mxu0 0.0
        %428 = vmatprep.subr.mxu0 0.0
        %429 = vmatpush1.msra.mxu0 0.0
        %430 = vmatprep.subr.mxu0 0.0
        %431 = vmatpush1.msra.mxu0 0.0
        %432 = vmatprep.subr.mxu0 0.0
        %433 = vmatpush1.msra.mxu0 0.0
        %434 = vmatprep.subr.mxu0 0.0
        %435 = vmatpush1.msra.mxu0 0.0
        %436 = vmatprep.subr.mxu0 0.0
        %437 = vmatpush1.msra.mxu0 0.0
        %438 = vmatprep.subr.mxu0 0.0
        %439 = vmatpush1.msra.mxu0 0.0
        %440 = vmatprep.subr.mxu0 0.0
        %441 = vmatpush1.msra.mxu0 0.0
        %442 = vmatprep.subr.mxu0 0.0
        %443 = vmatpush1.msra.mxu0 0.0
        %444 = vmatprep.subr.mxu0 0.0
        %445 = vmatpush1.msra.mxu0 0.0
        %446 = vmatprep.subr.mxu0 0.0
        %447 = vmatpush1.msra.mxu0 0.0
        %448 = vmatprep.subr.mxu0 0.0
        %449 = vmatpush1.msra.mxu0 0.0
        %450 = vmatprep.subr.mxu0 0.0
        %451 = vmatpush1.msra.mxu0 0.0
        %452 = vmatprep.subr.mxu0 0.0
        %453 = vmatpush1.msra.mxu0 0.0
        %454 = vmatprep.subr.mxu0 0.0
        %455 = vmatpush1.msra.mxu0 0.0
        %456 = vmatprep.subr.mxu0 0.0
        %457 = vmatpush1.msra.mxu0 0.0
        %458 = vmatprep.subr.mxu0 0.0
        %459 = vmatpush1.msra.mxu0 0.0
        %460 = vmatprep.subr.mxu0 0.0
        %461 = vmatpush1.msra.mxu0 0.0
        %462 = vmatprep.subr.mxu0 0.0
        %463 = vmatpush1.msra.mxu0 0.0
        %464 = vmatprep.subr.mxu0 0.0
        %465 = vmatpush1.msra.mxu0 0.0
        %466 = vmatprep.subr.mxu0 0.0
        %467 = vmatpush1.msra.mxu0 0.0
        %468 = vmatprep.subr.mxu0 0.0
        %469 = vmatpush1.msra.mxu0 0.0
        %470 = vmatprep.mubr.f32.mxu0 0.0
        %471 = vmatmul.mubr.f32.gmra.mrb[0].mxu0 %v401
        %v472 = vpop.f32.mrb[0].mxu0
        %v473 = vadd.f32 %v392, %v472
        %v474 = vpop.f32.mrb[0].mxu0
        %475 = vmatprep.mubr.f32.mxu0 0.0
        %476 = vmatmul.mubr.f32.gmra.mrb[0].mxu0 %v404
        %v477 = vpop.f32.mrb[0].mxu0
        %v478 = vadd.f32 %v397, %v477
        %v479 = vpop.f32.mrb[0].mxu0
        %480 = vdwg.mxu0
        %s481 = sadd.s32 %s243, 2
        %s482 = smul.u32 %s481, 16
        %s483 = scalar_lea.vmem %s230, %s482
        %v484 = vld [vmem:[%s483] sm:$0xff]
        %v485 = vld [vmem:[%s483 + $0x8] sm:$0xff]
        %488 = vrot.lane.b32.xlu0 %v484, 127
        %v489 = vpop.permute.xlu0 %488
        %490 = vrot.lane.b32.xlu0 %v485, 127
        %v491 = vpop.permute.xlu0 %490
        %494 = vrot.lane.b32.xlu0 %v484, 126
        %v495 = vpop.permute.xlu0 %494
        %496 = vrot.lane.b32.xlu0 %v485, 126
        %v497 = vpop.permute.xlu0 %496
        %500 = vrot.lane.b32.xlu0 %v484, 125
        %v501 = vpop.permute.xlu0 %500
        %502 = vrot.lane.b32.xlu0 %v485, 125
        %v503 = vpop.permute.xlu0 %502
        %506 = vrot.lane.b32.xlu0 %v484, 124
        %v507 = vpop.permute.xlu0 %506
        %508 = vrot.lane.b32.xlu0 %v485, 124
        %v509 = vpop.permute.xlu0 %508
        %s512 = scalar_lea.vmem %s1, 32
        %v513 = vld [vmem:[%s512] sm:$0xff]
        %v514 = vld [vmem:[%s512 + $0x8] sm:$0xff]
        %v516 = vsel %vm318, %v513, 0
        %v519 = vsel %vm318, %v514, 0
        %521 = vmatprep.subr.mxu0 0.0
        %522 = vmatpush1.msra.mxu0 %v484
        %523 = vmatprep.subr.mxu0 0.0
        %524 = vmatpush1.msra.mxu0 %v485
        %525 = vmatprep.subr.mxu0 0.0
        %526 = vmatpush1.msra.mxu0 %v489
        %527 = vmatprep.subr.mxu0 0.0
        %528 = vmatpush1.msra.mxu0 %v491
        %529 = vmatprep.subr.mxu0 0.0
        %530 = vmatpush1.msra.mxu0 %v495
        %531 = vmatprep.subr.mxu0 0.0
        %532 = vmatpush1.msra.mxu0 %v497
        %533 = vmatprep.subr.mxu0 0.0
        %534 = vmatpush1.msra.mxu0 %v501
        %535 = vmatprep.subr.mxu0 0.0
        %536 = vmatpush1.msra.mxu0 %v503
        %537 = vmatprep.subr.mxu0 0.0
        %538 = vmatpush1.msra.mxu0 %v507
        %539 = vmatprep.subr.mxu0 0.0
        %540 = vmatpush1.msra.mxu0 %v509
        %541 = vmatprep.subr.mxu0 0.0
        %542 = vmatpush1.msra.mxu0 0.0
        %543 = vmatprep.subr.mxu0 0.0
        %544 = vmatpush1.msra.mxu0 0.0
        %545 = vmatprep.subr.mxu0 0.0
        %546 = vmatpush1.msra.mxu0 0.0
        %547 = vmatprep.subr.mxu0 0.0
        %548 = vmatpush1.msra.mxu0 0.0
        %549 = vmatprep.subr.mxu0 0.0
        %550 = vmatpush1.msra.mxu0 0.0
        %551 = vmatprep.subr.mxu0 0.0
        %552 = vmatpush1.msra.mxu0 0.0
        %553 = vmatprep.subr.mxu0 0.0
        %554 = vmatpush1.msra.mxu0 0.0
        %555 = vmatprep.subr.mxu0 0.0
        %556 = vmatpush1.msra.mxu0 0.0
        %557 = vmatprep.subr.mxu0 0.0
        %558 = vmatpush1.msra.mxu0 0.0
        %559 = vmatprep.subr.mxu0 0.0
        %560 = vmatpush1.msra.mxu0 0.0
        %561 = vmatprep.subr.mxu0 0.0
        %562 = vmatpush1.msra.mxu0 0.0
        %563 = vmatprep.subr.mxu0 0.0
        %564 = vmatpush1.msra.mxu0 0.0
        %565 = vmatprep.subr.mxu0 0.0
        %566 = vmatpush1.msra.mxu0 0.0
        %567 = vmatprep.subr.mxu0 0.0
        %568 = vmatpush1.msra.mxu0 0.0
        %569 = vmatprep.subr.mxu0 0.0
        %570 = vmatpush1.msra.mxu0 0.0
        %571 = vmatprep.subr.mxu0 0.0
        %572 = vmatpush1.msra.mxu0 0.0
        %573 = vmatprep.subr.mxu0 0.0
        %574 = vmatpush1.msra.mxu0 0.0
        %575 = vmatprep.subr.mxu0 0.0
        %576 = vmatpush1.msra.mxu0 0.0
        %577 = vmatprep.subr.mxu0 0.0
        %578 = vmatpush1.msra.mxu0 0.0
        %579 = vmatprep.subr.mxu0 0.0
        %580 = vmatpush1.msra.mxu0 0.0
        %581 = vmatprep.subr.mxu0 0.0
        %582 = vmatpush1.msra.mxu0 0.0
        %583 = vmatprep.subr.mxu0 0.0
        %584 = vmatpush1.msra.mxu0 0.0
        %585 = vmatprep.mubr.f32.mxu0 0.0
        %586 = vmatmul.mubr.f32.gmra.mrb[0].mxu0 %v516
        %v587 = vpop.f32.mrb[0].mxu0
        %v588 = vadd.f32 0.0, %v587
        %v589 = vpop.f32.mrb[0].mxu0
        %590 = vmatprep.mubr.f32.mxu0 0.0
        %591 = vmatmul.mubr.f32.gmra.mrb[0].mxu0 %v519
        %v592 = vpop.f32.mrb[0].mxu0
        %v593 = vadd.f32 0.0, %v592
        %v594 = vpop.f32.mrb[0].mxu0
        %595 = vdwg.mxu0
        %v596 = vadd.f32 %v473, %v588
        %v597 = vadd.f32 %v478, %v593
        %s598 = sadd.s32 %s243, 3
        %s599 = smul.u32 %s598, 16
        %s600 = scalar_lea.vmem %s230, %s599
        %v601 = vld [vmem:[%s600] sm:$0xff]
        %v602 = vld [vmem:[%s600 + $0x8] sm:$0xff]
        %605 = vrot.lane.b32.xlu0 %v601, 127
        %v606 = vpop.permute.xlu0 %605
        %607 = vrot.lane.b32.xlu0 %v602, 127
        %v608 = vpop.permute.xlu0 %607
        %611 = vrot.lane.b32.xlu0 %v601, 126
        %v612 = vpop.permute.xlu0 %611
        %613 = vrot.lane.b32.xlu0 %v602, 126
        %v614 = vpop.permute.xlu0 %613
        %617 = vrot.lane.b32.xlu0 %v601, 125
        %v618 = vpop.permute.xlu0 %617
        %619 = vrot.lane.b32.xlu0 %v602, 125
        %v620 = vpop.permute.xlu0 %619
        %623 = vrot.lane.b32.xlu0 %v601, 124
        %v624 = vpop.permute.xlu0 %623
        %625 = vrot.lane.b32.xlu0 %v602, 124
        %v626 = vpop.permute.xlu0 %625
        %s629 = scalar_lea.vmem %s1, 48
        %v630 = vld [vmem:[%s629] sm:$0xff]
        %v631 = vld [vmem:[%s629 + $0x8] sm:$0xff]
        %v633 = vsel %vm318, %v630, 0
        %v636 = vsel %vm318, %v631, 0
        %638 = vmatprep.subr.mxu0 0.0
        %639 = vmatpush1.msra.mxu0 %v601
        %640 = vmatprep.subr.mxu0 0.0
        %641 = vmatpush1.msra.mxu0 %v602
        %642 = vmatprep.subr.mxu0 0.0
        %643 = vmatpush1.msra.mxu0 %v606
        %644 = vmatprep.subr.mxu0 0.0
        %645 = vmatpush1.msra.mxu0 %v608
        %646 = vmatprep.subr.mxu0 0.0
        %647 = vmatpush1.msra.mxu0 %v612
        %648 = vmatprep.subr.mxu0 0.0
        %649 = vmatpush1.msra.mxu0 %v614
        %650 = vmatprep.subr.mxu0 0.0
        %651 = vmatpush1.msra.mxu0 %v618
        %652 = vmatprep.subr.mxu0 0.0
        %653 = vmatpush1.msra.mxu0 %v620
        %654 = vmatprep.subr.mxu0 0.0
        %655 = vmatpush1.msra.mxu0 %v624
        %656 = vmatprep.subr.mxu0 0.0
        %657 = vmatpush1.msra.mxu0 %v626
        %658 = vmatprep.subr.mxu0 0.0
        %659 = vmatpush1.msra.mxu0 0.0
        %660 = vmatprep.subr.mxu0 0.0
        %661 = vmatpush1.msra.mxu0 0.0
        %662 = vmatprep.subr.mxu0 0.0
        %663 = vmatpush1.msra.mxu0 0.0
        %664 = vmatprep.subr.mxu0 0.0
        %665 = vmatpush1.msra.mxu0 0.0
        %666 = vmatprep.subr.mxu0 0.0
        %667 = vmatpush1.msra.mxu0 0.0
        %668 = vmatprep.subr.mxu0 0.0
        %669 = vmatpush1.msra.mxu0 0.0
        %670 = vmatprep.subr.mxu0 0.0
        %671 = vmatpush1.msra.mxu0 0.0
        %672 = vmatprep.subr.mxu0 0.0
        %673 = vmatpush1.msra.mxu0 0.0
        %674 = vmatprep.subr.mxu0 0.0
        %675 = vmatpush1.msra.mxu0 0.0
        %676 = vmatprep.subr.mxu0 0.0
        %677 = vmatpush1.msra.mxu0 0.0
        %678 = vmatprep.subr.mxu0 0.0
        %679 = vmatpush1.msra.mxu0 0.0
        %680 = vmatprep.subr.mxu0 0.0
        %681 = vmatpush1.msra.mxu0 0.0
        %682 = vmatprep.subr.mxu0 0.0
        %683 = vmatpush1.msra.mxu0 0.0
        %684 = vmatprep.subr.mxu0 0.0
        %685 = vmatpush1.msra.mxu0 0.0
        %686 = vmatprep.subr.mxu0 0.0
        %687 = vmatpush1.msra.mxu0 0.0
        %688 = vmatprep.subr.mxu0 0.0
        %689 = vmatpush1.msra.mxu0 0.0
        %690 = vmatprep.subr.mxu0 0.0
        %691 = vmatpush1.msra.mxu0 0.0
        %692 = vmatprep.subr.mxu0 0.0
        %693 = vmatpush1.msra.mxu0 0.0
        %694 = vmatprep.subr.mxu0 0.0
        %695 = vmatpush1.msra.mxu0 0.0
        %696 = vmatprep.subr.mxu0 0.0
        %697 = vmatpush1.msra.mxu0 0.0
        %698 = vmatprep.subr.mxu0 0.0
        %699 = vmatpush1.msra.mxu0 0.0
        %700 = vmatprep.subr.mxu0 0.0
        %701 = vmatpush1.msra.mxu0 0.0
        %702 = vmatprep.mubr.f32.mxu0 0.0
        %703 = vmatmul.mubr.f32.gmra.mrb[0].mxu0 %v633
        %v704 = vpop.f32.mrb[0].mxu0
        %v705 = vadd.f32 0.0, %v704
        %v706 = vpop.f32.mrb[0].mxu0
        %707 = vmatprep.mubr.f32.mxu0 0.0
        %708 = vmatmul.mubr.f32.gmra.mrb[0].mxu0 %v636
        %v709 = vpop.f32.mrb[0].mxu0
        %v710 = vadd.f32 0.0, %v709
        %v711 = vpop.f32.mrb[0].mxu0
        %712 = vdwg.mxu0
        %v713 = vadd.f32 %v596, %v705
        %v714 = vadd.f32 %v597, %v710
        %s715 = sadd.s32 %s243, 4
        %s716 = smul.u32 %s715, 16
        %s717 = scalar_lea.vmem %s230, %s716
        %v718 = vld [vmem:[%s717] sm:$0xff]
        %v719 = vld [vmem:[%s717 + $0x8] sm:$0xff]
        %722 = vrot.lane.b32.xlu0 %v718, 127
        %v723 = vpop.permute.xlu0 %722
        %724 = vrot.lane.b32.xlu0 %v719, 127
        %v725 = vpop.permute.xlu0 %724
        %728 = vrot.lane.b32.xlu0 %v718, 126
        %v729 = vpop.permute.xlu0 %728
        %730 = vrot.lane.b32.xlu0 %v719, 126
        %v731 = vpop.permute.xlu0 %730
        %734 = vrot.lane.b32.xlu0 %v718, 125
        %v735 = vpop.permute.xlu0 %734
        %736 = vrot.lane.b32.xlu0 %v719, 125
        %v737 = vpop.permute.xlu0 %736
        %740 = vrot.lane.b32.xlu0 %v718, 124
        %v741 = vpop.permute.xlu0 %740
        %742 = vrot.lane.b32.xlu0 %v719, 124
        %v743 = vpop.permute.xlu0 %742
        %s746 = scalar_lea.vmem %s1, 64
        %v747 = vld [vmem:[%s746] sm:$0xff]
        %v748 = vld [vmem:[%s746 + $0x8] sm:$0xff]
        %v750 = vsel %vm318, %v747, 0
        %v753 = vsel %vm318, %v748, 0
        %755 = vmatprep.subr.mxu0 0.0
        %756 = vmatpush1.msra.mxu0 %v718
        %757 = vmatprep.subr.mxu0 0.0
        %758 = vmatpush1.msra.mxu0 %v719
        %759 = vmatprep.subr.mxu0 0.0
        %760 = vmatpush1.msra.mxu0 %v723
        %761 = vmatprep.subr.mxu0 0.0
        %762 = vmatpush1.msra.mxu0 %v725
        %763 = vmatprep.subr.mxu0 0.0
        %764 = vmatpush1.msra.mxu0 %v729
        %765 = vmatprep.subr.mxu0 0.0
        %766 = vmatpush1.msra.mxu0 %v731
        %767 = vmatprep.subr.mxu0 0.0
        %768 = vmatpush1.msra.mxu0 %v735
        %769 = vmatprep.subr.mxu0 0.0
        %770 = vmatpush1.msra.mxu0 %v737
        %771 = vmatprep.subr.mxu0 0.0
        %772 = vmatpush1.msra.mxu0 %v741
        %773 = vmatprep.subr.mxu0 0.0
        %774 = vmatpush1.msra.mxu0 %v743
        %775 = vmatprep.subr.mxu0 0.0
        %776 = vmatpush1.msra.mxu0 0.0
        %777 = vmatprep.subr.mxu0 0.0
        %778 = vmatpush1.msra.mxu0 0.0
        %779 = vmatprep.subr.mxu0 0.0
        %780 = vmatpush1.msra.mxu0 0.0
        %781 = vmatprep.subr.mxu0 0.0
        %782 = vmatpush1.msra.mxu0 0.0
        %783 = vmatprep.subr.mxu0 0.0
        %784 = vmatpush1.msra.mxu0 0.0
        %785 = vmatprep.subr.mxu0 0.0
        %786 = vmatpush1.msra.mxu0 0.0
        %787 = vmatprep.subr.mxu0 0.0
        %788 = vmatpush1.msra.mxu0 0.0
        %789 = vmatprep.subr.mxu0 0.0
        %790 = vmatpush1.msra.mxu0 0.0
        %791 = vmatprep.subr.mxu0 0.0
        %792 = vmatpush1.msra.mxu0 0.0
        %793 = vmatprep.subr.mxu0 0.0
        %794 = vmatpush1.msra.mxu0 0.0
        %795 = vmatprep.subr.mxu0 0.0
        %796 = vmatpush1.msra.mxu0 0.0
        %797 = vmatprep.subr.mxu0 0.0
        %798 = vmatpush1.msra.mxu0 0.0
        %799 = vmatprep.subr.mxu0 0.0
        %800 = vmatpush1.msra.mxu0 0.0
        %801 = vmatprep.subr.mxu0 0.0
        %802 = vmatpush1.msra.mxu0 0.0
        %803 = vmatprep.subr.mxu0 0.0
        %804 = vmatpush1.msra.mxu0 0.0
        %805 = vmatprep.subr.mxu0 0.0
        %806 = vmatpush1.msra.mxu0 0.0
        %807 = vmatprep.subr.mxu0 0.0
        %808 = vmatpush1.msra.mxu0 0.0
        %809 = vmatprep.subr.mxu0 0.0
        %810 = vmatpush1.msra.mxu0 0.0
        %811 = vmatprep.subr.mxu0 0.0
        %812 = vmatpush1.msra.mxu0 0.0
        %813 = vmatprep.subr.mxu0 0.0
        %814 = vmatpush1.msra.mxu0 0.0
        %815 = vmatprep.subr.mxu0 0.0
        %816 = vmatpush1.msra.mxu0 0.0
        %817 = vmatprep.subr.mxu0 0.0
        %818 = vmatpush1.msra.mxu0 0.0
        %819 = vmatprep.mubr.f32.mxu0 0.0
        %820 = vmatmul.mubr.f32.gmra.mrb[0].mxu0 %v750
        %v821 = vpop.f32.mrb[0].mxu0
        %v822 = vadd.f32 0.0, %v821
        %v823 = vpop.f32.mrb[0].mxu0
        %824 = vmatprep.mubr.f32.mxu0 0.0
        %825 = vmatmul.mubr.f32.gmra.mrb[0].mxu0 %v753
        %v826 = vpop.f32.mrb[0].mxu0
        %v827 = vadd.f32 0.0, %v826
        %v828 = vpop.f32.mrb[0].mxu0
        %829 = vdwg.mxu0
        %v830 = vadd.f32 %v713, %v822
        %v831 = vadd.f32 %v714, %v827
        %v832 = vld [vmem:[%s2] sm:$0xff]
        %v833 = vld [vmem:[%s2 + $0x8] sm:$0xff]
        %835 = vset.pattern.permute.xlu0 0
        %836 = vperm.xlu0 %835, %v832
        %v837 = vpop.permute.xlu0 %836
        %840 = vset.pattern.permute.xlu0 0
        %841 = vperm.xlu0 %840, %v833
        %v842 = vpop.permute.xlu0 %841
        %v844 = vadd.f32 %v830, %v837
        %v845 = vadd.f32 %v831, %v842
        %s846 = scalar_lea.vmem %s235, %s252
        %vm847 = vcmask 72704
        %848 = vst.msk [vmem:[%s846] sm:$0xff] %vm847, %v844
        %849 = vst.msk [vmem:[%s846 + $0x8] sm:$0xff] %vm847, %v845
        %v850 = vadd.f32 %v248, %v844
        %v851 = vadd.f32 %v249, %v845
        %v852 = vmul.f32 %v844, %v844
        %v853 = vmul.f32 %v845, %v845
        %v854 = vadd.f32 %v250, %v852
        %v855 = vadd.f32 %v251, %v853
      $region37: #{gncnn_forward.19} parent=31 // loop_footer
        %s247 = sadd.s32 1, %s243
      $region38: #{gncnn_forward.19} parent=31 // loop_footer_branch
        %242 = sbr.rel target = $region34
      $region39: #{gncnn_forward.19} parent=31 // loop_exit
        _
      %vm856 = vcmask 72704
      %v857 = vsel %vm856, %v248, 0.0
      %v858 = vsel %vm856, %v249, 0.0
      %v859 = vadd.f32 %v857, %v858
      %860 = vadd.xlane.f32.xlu0 %v859
      %v861 = vpop.xlane.xlu0 %860
      %v862 = vrot.slane %v861, 4
      %v863 = vadd.f32 %v861, %v862
      %v864 = vrot.slane %v863, 2
      %v865 = vadd.f32 %v863, %v864
      %v866 = vrot.slane %v865, 1
      %v867 = vadd.f32 %v865, %v866
      %s868 = vtos %v867
      %v869 = vstv %s868
      %vm870 = vcmask 0
      %871 = vst.msk [vmem:[%s238] sm:$0x1] %vm870, %v869
      %v872 = vsel %vm856, %v250, 0.0
      %v873 = vsel %vm856, %v251, 0.0
      %v874 = vadd.f32 %v872, %v873
      %875 = vadd.xlane.f32.xlu0 %v874
      %v876 = vpop.xlane.xlu0 %875
      %v877 = vrot.slane %v876, 4
      %v878 = vadd.f32 %v876, %v877
      %v879 = vrot.slane %v878, 2
      %v880 = vadd.f32 %v878, %v879
      %v881 = vrot.slane %v880, 1
      %v882 = vadd.f32 %v880, %v881
      %s883 = vtos %v882
      %v884 = vstv %s883
      %885 = vst.msk [vmem:[%s241] sm:$0x1] %vm870, %v884
      %p886 = scmp.lt.s32.totalorder %s17, 1
      %s887 = scalar_select %p886, %s17, 1
      %s888 = smul.addr %s887, 18
      %s889 = smul.addr %s888, 8
      %s890 = scalar_lea.vmem %s3, %s889
      %p891 = scmp.lt.s32.totalorder %s17, 1
      %s892 = scalar_select %p891, %s17, 1
      %s893 = scalar_lea.vmem %s4, %s892
      %p894 = scmp.lt.s32.totalorder %s17, 1
      %s895 = scalar_select %p894, %s17, 1
      %s896 = scalar_lea.vmem %s5, %s895
      // Predicated region
      $region40: #{gncnn_forward.19} parent=31 // pred_check
        %p897 = pneg %p103
      $region41: #{gncnn_forward.19} parent=31 // pred_check_branch
        %899 = sbr.rel (%p897) target = $region43
      $region42: #{gncnn_forward.19} parent=31 // pred_region
        _
      $region43: #{gncnn_forward.19} parent=31 // pred_fallthru
        _
      // Predicated region
      $region44: #{gncnn_forward.19} parent=31 // pred_check
        %p900 = pneg %p129
      $region45: #{gncnn_forward.19} parent=31 // pred_check_branch
        %902 = sbr.rel (%p900) target = $region47
      $region46: #{gncnn_forward.19} parent=31 // pred_region
        _
      $region47: #{gncnn_forward.19} parent=31 // pred_fallthru
        _
      // Predicated region
      $region48: #{gncnn_forward.19} parent=31 // pred_check
        %p903 = pneg %p155
      $region49: #{gncnn_forward.19} parent=31 // pred_check_branch
        %905 = sbr.rel (%p903) target = $region51
      $region50: #{gncnn_forward.19} parent=31 // pred_region
        _
      $region51: #{gncnn_forward.19} parent=31 // pred_fallthru
        _
    $region32: #{gncnn_forward.19} parent=5 // pred_fallthru
      _
    %p906 = scmp.le.s32.totalorder 2, %s12
    // Predicated region
    $region52: #{gncnn_forward.19} parent=5 // pred_check
      %p907 = pneg %p906
    $region53: #{gncnn_forward.19} parent=5 // pred_check_branch
      %909 = sbr.rel (%p907) target = $region55
    $region54: #{gncnn_forward.19} parent=5 // pred_region
      %s910 = ssub.s32 %s12, 2
      // Predicated region
      $region56: #{gncnn_forward.19} parent=54 // pred_check
        %p911 = pneg %p109
      $region57: #{gncnn_forward.19} parent=54 // pred_check_branch
        %913 = sbr.rel (%p911) target = $region59
      $region58: #{gncnn_forward.19} parent=54 // pred_region
        %p914 = scmp.lt.s32.totalorder %s18, 1
        %s915 = scalar_select %p914, %s18, 1
        %s916 = smul.addr %s915, 18
        %s917 = smul.addr %s916, 8
        %s918 = scalar_lea.vmem %s3, %s917
      $region59: #{gncnn_forward.19} parent=54 // pred_fallthru
        _
      // Predicated region
      $region60: #{gncnn_forward.19} parent=54 // pred_check
        %p919 = pneg %p135
      $region61: #{gncnn_forward.19} parent=54 // pred_check_branch
        %921 = sbr.rel (%p919) target = $region63
      $region62: #{gncnn_forward.19} parent=54 // pred_region
        %p922 = scmp.lt.s32.totalorder %s18, 1
        %s923 = scalar_select %p922, %s18, 1
        %s924 = scalar_lea.vmem %s4, %s923
      $region63: #{gncnn_forward.19} parent=54 // pred_fallthru
        _
      // Predicated region
      $region64: #{gncnn_forward.19} parent=54 // pred_check
        %p925 = pneg %p161
      $region65: #{gncnn_forward.19} parent=54 // pred_check_branch
        %927 = sbr.rel (%p925) target = $region67
      $region66: #{gncnn_forward.19} parent=54 // pred_region
        %p928 = scmp.lt.s32.totalorder %s18, 1
        %s929 = scalar_select %p928, %s18, 1
        %s930 = scalar_lea.vmem %s5, %s929
      $region67: #{gncnn_forward.19} parent=54 // pred_fallthru
        _
    $region55: #{gncnn_forward.19} parent=5 // pred_fallthru
      _
  $region6: #{gncnn_forward.19} parent=0 // loop_footer
    %s16 = sadd.s32 1, %s12
  $region7: #{gncnn_forward.19} parent=0 // loop_footer_branch
    %11 = sbr.rel target = $region3
  $region8: #{gncnn_forward.19} parent=0 // loop_exit
    _

// kernel: gncnn_forward.20
$region0: #{gncnn_forward.20}
  #allocation0 [shape = 'u32[]', space=smem, size = 0x4, offset = 0x4, fixed_abs, tag = 'smem constant byte address 0x4 - core index']
  #allocation1 [shape = 'u32[144,128]{1,0:T(1,128)}', space=vmem, size = 0x12000, scoped, tag = 'internal scratch']
  #allocation2 [shape = 'f32[9,16,4]{2,1,0:T(8,128)}', space=vmem, size = 0x12000, scoped, tag = 'scratch operand']
  %s0 = inlined_call_operand.vmem [shape: f32[2], index: 0, kind: input, shape index: {}]
  %s1 = inlined_call_operand.vmem [shape: f32[2,9,16,9], index: 1, kind: input, shape index: {}]
  %s2 = inlined_call_operand.vmem [shape: f32[9,4], index: 2, kind: input, shape index: {}]
  %s3 = inlined_call_operand.vmem [shape: f32[2,4,16,4], index: 3, kind: output, shape index: {}]
  %s4 = sld [smem:[#allocation0]]
  $region63: #{gncnn_forward.20} parent=0
    _
  %s6 = ssub.s32 1, %s4
  %s7 = scalar_select 0, %s6, %s4
  $region1: #{gncnn_forward.20} parent=0
    #allocation3 [shape = 'u8[512]{0}', space=smem, size = 0x200, scoped, tag = 'input window, operand 0, single buffered']
    #allocation4 [shape = 's32[2]{0}', space=sflag, size = 0x8, scoped, tag = 'scoped memory for gncnn_forward.20']
    %8 = vsyncpa [#allocation4], 0
    loop: start=0, step=1, limit=4
    $region2: #{gncnn_forward.20} parent=1 // loop_pre_header
      _
    $region3: #{gncnn_forward.20} parent=1 // loop_header
      %s10 = sphi 0, %s14
      %p11 = scmp.ge.s32.totalorder %s10, 4
      %s18 = sphi 0, %s18
      %s20 = sphi 0, %s18
      %s21 = sphi 0, %s20
      %s35 = sphi 0, %s21
      %s41 = sphi 0, %s43
      %s44 = sphi 0, %s41
      %s45 = sphi 0, %s44
      %s61 = sphi 0, %s45
      %s65 = sphi 0, %s65
      %s67 = sphi 0, %s65
      %s68 = sphi 0, %s67
      %s82 = sphi 0, %s68
      %s88 = sphi 0, %s90
      %s91 = sphi 0, %s88
      %s92 = sphi 0, %s91
      %s108 = sphi 0, %s92
    $region4: #{gncnn_forward.20} parent=1 // loop_header_branch
      %13 = sbr.rel (%p11) target = $region8
    $region5: #{gncnn_forward.20} parent=1 // loop_body
      %s15 = ssub.s32 %s10, 1
      %s16 = ssub.s32 %s10, 2
      %s17 = sadd.s32 %s10, 1
      %s19 = sadd.s32 %s18, 1
      %p22 = scmp.eq.s32.totalorder %s10, 1
      %p23 = scmp.ne.s32.totalorder %s18, %s20
      %p24 = scmp.eq.s32.totalorder %s10, 0
      %p25 = por %p23, %p24
      %p26 = scmp.ne.s32.totalorder %s18, %s20
      %p27 = scmp.eq.s32.totalorder %s15, 1
      %p28 = por %p26, %p27
      %p29 = scmp.ne.s32.totalorder %s20, %s21
      %p30 = scmp.eq.s32.totalorder %s15, 0
      %p31 = por %p29, %p30
      %p32 = scmp.ne.s32.totalorder %s20, %s21
      %p33 = scmp.eq.s32.totalorder %s16, 1
      %p34 = por %p32, %p33
      %p36 = scmp.ne.s32.totalorder %s21, %s35
      %p37 = scmp.eq.s32.totalorder %s16, 0
      %p38 = por %p36, %p37
      %s39 = ssub.s32 %s10, %s17
      %p40 = scmp.eq.s32.totalorder %s39, 0
      %s42 = sadd.s32 %s41, 1
      %s43 = scalar_select %p40, %s41, %s42
      %p46 = pneg %p40
      %p47 = scmp.eq.s32.totalorder %s10, 1
      %p48 = por %p46, %p47
      %p49 = scmp.ne.s32.totalorder %s41, %s44
      %p50 = scmp.eq.s32.totalorder %s10, 0
      %p51 = por %p49, %p50
      %p52 = scmp.ne.s32.totalorder %s41, %s44
      %p53 = scmp.eq.s32.totalorder %s15, 1
      %p54 = por %p52, %p53
      %p55 = scmp.ne.s32.totalorder %s44, %s45
      %p56 = scmp.eq.s32.totalorder %s15, 0
      %p57 = por %p55, %p56
      %p58 = scmp.ne.s32.totalorder %s44, %s45
      %p59 = scmp.eq.s32.totalorder %s16, 1
      %p60 = por %p58, %p59
      %p62 = scmp.ne.s32.totalorder %s45, %s61
      %p63 = scmp.eq.s32.totalorder %s16, 0
      %p64 = por %p62, %p63
      %s66 = sadd.s32 %s65, 1
      %p69 = scmp.eq.s32.totalorder %s10, 1
      %p70 = scmp.ne.s32.totalorder %s65, %s67
      %p71 = scmp.eq.s32.totalorder %s10, 0
      %p72 = por %p70, %p71
      %p73 = scmp.ne.s32.totalorder %s65, %s67
      %p74 = scmp.eq.s32.totalorder %s15, 1
      %p75 = por %p73, %p74
      %p76 = scmp.ne.s32.totalorder %s67, %s68
      %p77 = scmp.eq.s32.totalorder %s15, 0
      %p78 = por %p76, %p77
      %p79 = scmp.ne.s32.totalorder %s67, %s68
      %p80 = scmp.eq.s32.totalorder %s16, 1
      %p81 = por %p79, %p80
      %p83 = scmp.ne.s32.totalorder %s68, %s82
      %p84 = scmp.eq.s32.totalorder %s16, 0
      %p85 = por %p83, %p84
      %s86 = ssub.s32 %s10, %s17
      %p87 = scmp.eq.s32.totalorder %s86, 0
      %s89 = sadd.s32 %s88, 1
      %s90 = scalar_select %p87, %s88, %s89
      %p93 = pneg %p87
      %p94 = scmp.eq.s32.totalorder %s10, 1
      %p95 = por %p93, %p94
      %p96 = scmp.ne.s32.totalorder %s88, %s91
      %p97 = scmp.eq.s32.totalorder %s10, 0
      %p98 = por %p96, %p97
      %p99 = scmp.ne.s32.totalorder %s88, %s91
      %p100 = scmp.eq.s32.totalorder %s15, 1
      %p101 = por %p99, %p100
      %p102 = scmp.ne.s32.totalorder %s91, %s92
      %p103 = scmp.eq.s32.totalorder %s15, 0
      %p104 = por %p102, %p103
      %p105 = scmp.ne.s32.totalorder %s91, %s92
      %p106 = scmp.eq.s32.totalorder %s16, 1
      %p107 = por %p105, %p106
      %p109 = scmp.ne.s32.totalorder %s92, %s108
      %p110 = scmp.eq.s32.totalorder %s16, 0
      %p111 = por %p109, %p110
      %p112 = scmp.le.s32.totalorder 1, %s10
      %p113 = scmp.lt.s32.totalorder %s10, 3
      %p114 = pnand %p112, %p113
      %p115 = pneg %p114
      // Predicated region
      $region9: #{gncnn_forward.20} parent=5 // pred_check
        _
      $region10: #{gncnn_forward.20} parent=5 // pred_check_branch
        %117 = sbr.rel (%p114) target = $region12
      $region11: #{gncnn_forward.20} parent=5 // pred_region
        %s118 = ssub.s32 %s10, 1
        // Predicated region
        $region13: #{gncnn_forward.20} parent=11 // pred_check
          %p119 = pneg %p31
        $region14: #{gncnn_forward.20} parent=11 // pred_check_branch
          %121 = sbr.rel (%p119) target = $region16
        $region15: #{gncnn_forward.20} parent=11 // pred_region
          %s123 = ssub.s32 16, 16
          %124 = vsyncadd [#allocation4], %s123
          %s126 = sshll.u32 %s0, 4
          %s127 = int_to_ptr.vmem [resolvable:$true] %s126
          %129 = dma.vmem_to_smem %s127, 16, [#allocation3], [#allocation4]
        $region16: #{gncnn_forward.20} parent=11 // pred_fallthru
          _
        // Predicated region
        $region17: #{gncnn_forward.20} parent=11 // pred_check
          %p130 = pneg %p78
        $region18: #{gncnn_forward.20} parent=11 // pred_check_branch
          %132 = sbr.rel (%p130) target = $region20
        $region19: #{gncnn_forward.20} parent=11 // pred_region
          _
        $region20: #{gncnn_forward.20} parent=11 // pred_fallthru
          _
      $region12: #{gncnn_forward.20} parent=5 // pred_fallthru
        _
      %p133 = scmp.lt.s32.totalorder %s10, 2
      // Predicated region
      $region21: #{gncnn_forward.20} parent=5 // pred_check
        %p134 = pneg %p133
      $region22: #{gncnn_forward.20} parent=5 // pred_check_branch
        %136 = sbr.rel (%p134) target = $region24
      $region23: #{gncnn_forward.20} parent=5 // pred_region
        // Predicated region
        $region25: #{gncnn_forward.20} parent=23 // pred_check
          %p137 = pneg %p51
        $region26: #{gncnn_forward.20} parent=23 // pred_check_branch
          %139 = sbr.rel (%p137) target = $region28
        $region27: #{gncnn_forward.20} parent=23 // pred_region
          %p140 = scmp.lt.s32.totalorder %s10, 1
          %s141 = scalar_select %p140, %s10, 1
          %s142 = smul.addr %s141, 18
          %s143 = smul.addr %s142, 8
          %s144 = scalar_lea.vmem %s1, %s143
        $region28: #{gncnn_forward.20} parent=23 // pred_fallthru
          _
      $region24: #{gncnn_forward.20} parent=5 // pred_fallthru
        _
      %p145 = scmp.le.s32.totalorder 1, %s10
      %p146 = scmp.lt.s32.totalorder %s10, 3
      %p147 = pnand %p145, %p146
      %p148 = pneg %p147
      // Predicated region
      $region29: #{gncnn_forward.20} parent=5 // pred_check
        _
      $region30: #{gncnn_forward.20} parent=5 // pred_check_branch
        %150 = sbr.rel (%p147) target = $region32
      $region31: #{gncnn_forward.20} parent=5 // pred_region
        %s151 = ssub.s32 %s10, 1
        // Predicated region
        $region33: #{gncnn_forward.20} parent=31 // pred_check
          %p152 = pneg %p31
        $region34: #{gncnn_forward.20} parent=31 // pred_check_branch
          %154 = sbr.rel (%p152) target = $region36
        $region35: #{gncnn_forward.20} parent=31 // pred_region
          %155 = dma.done [#allocation4], 16
        $region36: #{gncnn_forward.20} parent=31 // pred_fallthru
          _
        %156 = sfence
        %p157 = pneg %p31
        %p158 = pneg %p28
        %p159 = scmp.lt.s32.totalorder %s15, 1
        %s160 = scalar_select %p159, %s15, 1
        %s161 = smul.addr %s160, 18
        %s162 = smul.addr %s161, 8
        %s163 = scalar_lea.vmem %s1, %s162
        %p164 = pneg %p57
        %p165 = pneg %p54
        %p166 = pneg %p78
        %p167 = pneg %p75
        %p168 = pneg %p104
        %p169 = pneg %p101
        %p170 = scmp.lt.s32.totalorder %s15, 1
        %s171 = scalar_select %p170, %s15, 1
        %s172 = smul.addr %s171, 8
        %s173 = smul.addr %s172, 8
        %s174 = scalar_lea.vmem %s3, %s173
        %p175 = scmp.lt.s32.totalorder %s15, 1
        %s176 = scalar_select %p175, %s15, 1
        %s177 = smul.addr %s176, 18
        %s178 = smul.addr %s177, 8
        %s179 = scalar_lea.vmem %s1, %s178
        %p180 = scmp.lt.s32.totalorder %s15, 1
        %s181 = scalar_select %p180, %s15, 1
        %s182 = smul.addr %s181, 8
        %s183 = smul.addr %s182, 8
        %s184 = scalar_lea.vmem %s3, %s183
        %s185 = sld [smem:[#allocation3]]
        %s186 = sld [smem:[#allocation3 + $0x1]]
        loop: start=0, step=1, limit=9
        $region37: #{gncnn_forward.20} parent=31 // loop_pre_header
          _
        $region38: #{gncnn_forward.20} parent=31 // loop_header
          %s188 = sphi 0, %s192
          %p189 = scmp.ge.s32.totalorder %s188, 9
        $region39: #{gncnn_forward.20} parent=31 // loop_header_branch
          %191 = sbr.rel (%p189) target = $region43
        $region40: #{gncnn_forward.20} parent=31 // loop_body
          %s193 = smul.u32 %s188, 16
          %s194 = scalar_lea.vmem %s179, %s193
          %v195 = vld [vmem:[%s194] sm:$0xff]
          %v196 = vld [vmem:[%s194 + $0x8] sm:$0xff]
          %v197 = vstv %s185
          %v198 = vsub.f32 %v195, %v197
          %v199 = vsub.f32 %v196, %v197
          %v200 = vmul.f32 %v198, %v198
          %v201 = vmul.f32 %v199, %v199
          %v202 = vsub.f32 0.0, %v200
          %v203 = vsub.f32 0.0, %v201
          %v204 = vstv %s186
          %v205 = vmul.f32 %v202, %v204
          %v206 = vmul.f32 %v203, %v204
          %v207 = vmul.f32 %v205, 1.442695
          %v208 = vpow.pop %v207
          %v209 = vmul.f32 %v206, 1.442695
          %v210 = vpow.pop %v209
          %v211 = vld [vmem:[%s2] sm:$0xff]
          %v212 = vld [vmem:[%s2 + $0x8] sm:$0x1]
          %vm213 = vcmask 72704
          %v215 = vsel %vm213, %v208, 0
          %v218 = vsel %vm213, %v210, 0
          %vm220 = vcmask 1040384
          %v222 = vsel %vm220, %v212, 0
          %224 = vmatprep.subr.mxu0 0.0
          %225 = vmatpush1.msra.mxu0 %v211
          %226 = vmatprep.subr.mxu0 0.0
          %227 = vmatpush1.msra.mxu0 %v222
          %228 = vmatprep.subr.mxu0 0.0
          %229 = vmatpush1.msra.mxu0 0.0
          %230 = vmatprep.subr.mxu0 0.0
          %231 = vmatpush1.msra.mxu0 0.0
          %232 = vmatprep.subr.mxu0 0.0
          %233 = vmatpush1.msra.mxu0 0.0
          %234 = vmatprep.subr.mxu0 0.0
          %235 = vmatpush1.msra.mxu0 0.0
          %236 = vmatprep.subr.mxu0 0.0
          %237 = vmatpush1.msra.mxu0 0.0
          %238 = vmatprep.subr.mxu0 0.0
          %239 = vmatpush1.msra.mxu0 0.0
          %240 = vmatprep.subr.mxu0 0.0
          %241 = vmatpush1.msra.mxu0 0.0
          %242 = vmatprep.subr.mxu0 0.0
          %243 = vmatpush1.msra.mxu0 0.0
          %244 = vmatprep.subr.mxu0 0.0
          %245 = vmatpush1.msra.mxu0 0.0
          %246 = vmatprep.subr.mxu0 0.0
          %247 = vmatpush1.msra.mxu0 0.0
          %248 = vmatprep.subr.mxu0 0.0
          %249 = vmatpush1.msra.mxu0 0.0
          %250 = vmatprep.subr.mxu0 0.0
          %251 = vmatpush1.msra.mxu0 0.0
          %252 = vmatprep.subr.mxu0 0.0
          %253 = vmatpush1.msra.mxu0 0.0
          %254 = vmatprep.subr.mxu0 0.0
          %255 = vmatpush1.msra.mxu0 0.0
          %256 = vmatprep.subr.mxu0 0.0
          %257 = vmatpush1.msra.mxu0 0.0
          %258 = vmatprep.subr.mxu0 0.0
          %259 = vmatpush1.msra.mxu0 0.0
          %260 = vmatprep.subr.mxu0 0.0
          %261 = vmatpush1.msra.mxu0 0.0
          %262 = vmatprep.subr.mxu0 0.0
          %263 = vmatpush1.msra.mxu0 0.0
          %264 = vmatprep.subr.mxu0 0.0
          %265 = vmatpush1.msra.mxu0 0.0
          %266 = vmatprep.subr.mxu0 0.0
          %267 = vmatpush1.msra.mxu0 0.0
          %268 = vmatprep.subr.mxu0 0.0
          %269 = vmatpush1.msra.mxu0 0.0
          %270 = vmatprep.subr.mxu0 0.0
          %271 = vmatpush1.msra.mxu0 0.0
          %272 = vmatprep.subr.mxu0 0.0
          %273 = vmatpush1.msra.mxu0 0.0
          %274 = vmatprep.subr.mxu0 0.0
          %275 = vmatpush1.msra.mxu0 0.0
          %276 = vmatprep.subr.mxu0 0.0
          %277 = vmatpush1.msra.mxu0 0.0
          %278 = vmatprep.subr.mxu0 0.0
          %279 = vmatpush1.msra.mxu0 0.0
          %280 = vmatprep.subr.mxu0 0.0
          %281 = vmatpush1.msra.mxu0 0.0
          %282 = vmatprep.subr.mxu0 0.0
          %283 = vmatpush1.msra.mxu0 0.0
          %284 = vmatprep.subr.mxu0 0.0
          %285 = vmatpush1.msra.mxu0 0.0
          %286 = vmatprep.subr.mxu0 0.0
          %287 = vmatpush1.msra.mxu0 0.0
          %288 = vmatprep.mubr.f32.mxu0 0.0
          %289 = vmatmul.mubr.f32.gmra.mrb[0].mxu0 %v215
          %v290 = vpop.f32.mrb[0].mxu0
          %v291 = vadd.f32 0.0, %v290
          %v292 = vpop.f32.mrb[0].mxu0
          %293 = vmatprep.mubr.f32.mxu0 0.0
          %294 = vmatmul.mubr.f32.gmra.mrb[0].mxu0 %v218
          %v295 = vpop.f32.mrb[0].mxu0
          %v296 = vadd.f32 0.0, %v295
          %v297 = vpop.f32.mrb[0].mxu0
          %298 = vdwg.mxu0
          %s299 = scalar_lea.vmem [#allocation2], %s193
          %vm300 = vcmask 31744
          %301 = vst.msk [vmem:[%s299] sm:$0xff] %vm300, %v291
          %302 = vst.msk [vmem:[%s299 + $0x8] sm:$0xff] %vm300, %v296
        $region41: #{gncnn_forward.20} parent=31 // loop_footer
          %s192 = sadd.s32 1, %s188
        $region42: #{gncnn_forward.20} parent=31 // loop_footer_branch
          %187 = sbr.rel target = $region38
        $region43: #{gncnn_forward.20} parent=31 // loop_exit
          _
        loop: start=0, step=1, limit=4
        $region44: #{gncnn_forward.20} parent=31 // loop_pre_header
          _
        $region45: #{gncnn_forward.20} parent=31 // loop_header
          %s304 = sphi 0, %s308
          %p305 = scmp.ge.s32.totalorder %s304, 4
        $region46: #{gncnn_forward.20} parent=31 // loop_header_branch
          %307 = sbr.rel (%p305) target = $region50
        $region47: #{gncnn_forward.20} parent=31 // loop_body
          %s309 = smul.u32 %s304, 2
          %p310 = scmp.gt.s32.totalorder %s309, 0
          %s311 = scalar_select %p310, %s309, 0
          %p312 = scmp.lt.s32.totalorder %s311, 8
          %s313 = scalar_select %p312, %s311, 8
          %p314 = scmp.ge.s32.totalorder %s309, 0
          %p315 = scmp.lt.s32.totalorder %s309, 9
          %p316 = pnand %p314, %p315
          %p317 = pneg %p316
          %s318 = scalar_select %p317, 1, 0
          %s319 = scvt.s32.f32 %s318
          %s320 = smul.u32 %s313, 16
          %s321 = scalar_lea.vmem [#allocation2], %s320
          %v322 = vld [vmem:[%s321] sm:$0xff]
          %v323 = vld [vmem:[%s321 + $0x8] sm:$0xff]
          %v324 = vstv %s319
          %v325 = vmul.f32 %v322, %v324
          %v326 = vmul.f32 %v323, %v324
          %v327 = vadd.f32 %v325, 0.0
          %v328 = vadd.f32 %v326, 0.0
          %s329 = sadd.s32 %s309, 1
          %p330 = scmp.gt.s32.totalorder %s329, 0
          %s331 = scalar_select %p330, %s329, 0
          %p332 = scmp.lt.s32.totalorder %s331, 8
          %s333 = scalar_select %p332, %s331, 8
          %p334 = scmp.ge.s32.totalorder %s329, 0
          %p335 = scmp.lt.s32.totalorder %s329, 9
          %p336 = pnand %p334, %p335
          %p337 = pneg %p336
          %s338 = scalar_select %p337, 1, 0
          %s339 = scvt.s32.f32 %s338
          %s340 = smul.u32 %s333, 16
          %s341 = scalar_lea.vmem [#allocation2], %s340
          %v342 = vld [vmem:[%s341] sm:$0xff]
          %v343 = vld [vmem:[%s341 + $0x8] sm:$0xff]
          %v344 = vstv %s339
          %v345 = vmul.f32 %v342, %v344
          %v346 = vmul.f32 %v343, %v344
          %v347 = vadd.f32 %v327, %v345
          %v348 = vadd.f32 %v328, %v346
          %s349 = sadd.s32 %s309, 2
          %p350 = scmp.gt.s32.totalorder %s349, 0
          %s351 = scalar_select %p350, %s349, 0
          %p352 = scmp.lt.s32.totalorder %s351, 8
          %s353 = scalar_select %p352, %s351, 8
          %p354 = scmp.ge.s32.totalorder %s349, 0
          %p355 = scmp.lt.s32.totalorder %s349, 9
          %p356 = pnand %p354, %p355
          %p357 = pneg %p356
          %s358 = scalar_select %p357, 1, 0
          %s359 = scvt.s32.f32 %s358
          %s360 = smul.u32 %s353, 16
          %s361 = scalar_lea.vmem [#allocation2], %s360
          %v362 = vld [vmem:[%s361] sm:$0xff]
          %v363 = vld [vmem:[%s361 + $0x8] sm:$0xff]
          %v364 = vstv %s359
          %v365 = vmul.f32 %v362, %v364
          %v366 = vmul.f32 %v363, %v364
          %v367 = vadd.f32 %v347, %v365
          %v368 = vadd.f32 %v348, %v366
          %v369 = vmul.f32 %v367, 0.11111111
          %v370 = vmul.f32 %v368, 0.11111111
          %s371 = smul.u32 %s304, 16
          %s372 = scalar_lea.vmem %s184, %s371
          %vm373 = vcmask 31744
          %374 = vst.msk [vmem:[%s372] sm:$0xff] %vm373, %v369
          %375 = vst.msk [vmem:[%s372 + $0x8] sm:$0xff] %vm373, %v370
        $region48: #{gncnn_forward.20} parent=31 // loop_footer
          %s308 = sadd.s32 1, %s304
        $region49: #{gncnn_forward.20} parent=31 // loop_footer_branch
          %303 = sbr.rel target = $region45
        $region50: #{gncnn_forward.20} parent=31 // loop_exit
          _
        %p376 = scmp.lt.s32.totalorder %s15, 1
        %s377 = scalar_select %p376, %s15, 1
        %s378 = smul.addr %s377, 8
        %s379 = smul.addr %s378, 8
        %s380 = scalar_lea.vmem %s3, %s379
        // Predicated region
        $region51: #{gncnn_forward.20} parent=31 // pred_check
          %p381 = pneg %p101
        $region52: #{gncnn_forward.20} parent=31 // pred_check_branch
          %383 = sbr.rel (%p381) target = $region54
        $region53: #{gncnn_forward.20} parent=31 // pred_region
          _
        $region54: #{gncnn_forward.20} parent=31 // pred_fallthru
          _
      $region32: #{gncnn_forward.20} parent=5 // pred_fallthru
        _
      %p384 = scmp.le.s32.totalorder 2, %s10
      // Predicated region
      $region55: #{gncnn_forward.20} parent=5 // pred_check
        %p385 = pneg %p384
      $region56: #{gncnn_forward.20} parent=5 // pred_check_branch
        %387 = sbr.rel (%p385) target = $region58
      $region57: #{gncnn_forward.20} parent=5 // pred_region
        %s388 = ssub.s32 %s10, 2
        // Predicated region
        $region59: #{gncnn_forward.20} parent=57 // pred_check
          %p389 = pneg %p107
        $region60: #{gncnn_forward.20} parent=57 // pred_check_branch
          %391 = sbr.rel (%p389) target = $region62
        $region61: #{gncnn_forward.20} parent=57 // pred_region
          %p392 = scmp.lt.s32.totalorder %s16, 1
          %s393 = scalar_select %p392, %s16, 1
          %s394 = smul.addr %s393, 8
          %s395 = smul.addr %s394, 8
          %s396 = scalar_lea.vmem %s3, %s395
        $region62: #{gncnn_forward.20} parent=57 // pred_fallthru
          _
      $region58: #{gncnn_forward.20} parent=5 // pred_fallthru
        _
    $region6: #{gncnn_forward.20} parent=1 // loop_footer
      %s14 = sadd.s32 1, %s10
    $region7: #{gncnn_forward.20} parent=1 // loop_footer_branch
      %9 = sbr.rel target = $region3
    $region8: #{gncnn_forward.20} parent=1 // loop_exit
      _
    %397 = vsyncpa [#allocation4], 1
    %s398 = scalar_lea.sflag [#allocation4], 1
    %399 = vsyncpa %s398, 1

// kernel: gncnn_forward.21
$region0: #{gncnn_forward.21}
  #allocation0 [shape = 'u32[]', space=smem, size = 0x4, offset = 0x4, fixed_abs, tag = 'smem constant byte address 0x4 - core index']
  #allocation1 [shape = 'u32[144,128]{1,0:T(1,128)}', space=vmem, size = 0x12000, scoped, tag = 'internal scratch']
  %s0 = inlined_call_operand.vmem [shape: f32[2,256], index: 0, kind: input, shape index: {}]
  %s1 = inlined_call_operand.vmem [shape: f32[256,128], index: 1, kind: input, shape index: {}]
  %s2 = inlined_call_operand.vmem [shape: f32[1,128], index: 2, kind: input, shape index: {}]
  %s3 = inlined_call_operand.vmem [shape: f32[128,128], index: 3, kind: input, shape index: {}]
  %s4 = inlined_call_operand.vmem [shape: f32[1,128], index: 4, kind: input, shape index: {}]
  %s5 = inlined_call_operand.vmem [shape: f32[128,2], index: 5, kind: input, shape index: {}]
  %s6 = inlined_call_operand.vmem [shape: f32[1,2], index: 6, kind: input, shape index: {}]
  %s7 = inlined_call_operand.hbm [shape: f32[2,2], index: 7, kind: output, shape index: {}]
  %s8 = sld [smem:[#allocation0]]
  $region38: #{gncnn_forward.21} parent=0
    _
  %s10 = ssub.s32 1, %s8
  %s11 = scalar_select 0, %s10, %s8
  $region1: #{gncnn_forward.21} parent=0
    #allocation2 [shape = 'u8[1024]{0}', space=vmem, size = 0x400, scoped, tag = 'output window, operand 0, single buffered']
    #allocation3 [shape = 's32[1]{0}', space=sflag, size = 0x4, scoped, tag = 'scoped memory for gncnn_forward.21']
    %12 = vsyncpa [#allocation3], 0
    // Predicated region
    $region2: #{gncnn_forward.21} parent=1 // pred_check
      _
    $region3: #{gncnn_forward.21} parent=1 // pred_check_branch
      %14 = sbr.rel (0) target = $region5
    $region4: #{gncnn_forward.21} parent=1 // pred_region
      _
    $region5: #{gncnn_forward.21} parent=1 // pred_fallthru
      _
    // Predicated region
    $region6: #{gncnn_forward.21} parent=1 // pred_check
      _
    $region7: #{gncnn_forward.21} parent=1 // pred_check_branch
      %16 = sbr.rel (0) target = $region9
    $region8: #{gncnn_forward.21} parent=1 // pred_region
      _
    $region9: #{gncnn_forward.21} parent=1 // pred_fallthru
      _
    // Predicated region
    $region10: #{gncnn_forward.21} parent=1 // pred_check
      _
    $region11: #{gncnn_forward.21} parent=1 // pred_check_branch
      %18 = sbr.rel (0) target = $region13
    $region12: #{gncnn_forward.21} parent=1 // pred_region
      _
    $region13: #{gncnn_forward.21} parent=1 // pred_fallthru
      _
    // Predicated region
    $region14: #{gncnn_forward.21} parent=1 // pred_check
      _
    $region15: #{gncnn_forward.21} parent=1 // pred_check_branch
      %20 = sbr.rel (0) target = $region17
    $region16: #{gncnn_forward.21} parent=1 // pred_region
      _
    $region17: #{gncnn_forward.21} parent=1 // pred_fallthru
      _
    // Predicated region
    $region18: #{gncnn_forward.21} parent=1 // pred_check
      _
    $region19: #{gncnn_forward.21} parent=1 // pred_check_branch
      %22 = sbr.rel (0) target = $region21
    $region20: #{gncnn_forward.21} parent=1 // pred_region
      _
    $region21: #{gncnn_forward.21} parent=1 // pred_fallthru
      _
    // Predicated region
    $region22: #{gncnn_forward.21} parent=1 // pred_check
      _
    $region23: #{gncnn_forward.21} parent=1 // pred_check_branch
      %24 = sbr.rel (0) target = $region25
    $region24: #{gncnn_forward.21} parent=1 // pred_region
      _
    $region25: #{gncnn_forward.21} parent=1 // pred_fallthru
      _
    // Predicated region
    $region26: #{gncnn_forward.21} parent=1 // pred_check
      _
    $region27: #{gncnn_forward.21} parent=1 // pred_check_branch
      %26 = sbr.rel (0) target = $region29
    $region28: #{gncnn_forward.21} parent=1 // pred_region
      _
    $region29: #{gncnn_forward.21} parent=1 // pred_fallthru
      _
    %v27 = vld [vmem:[%s0] sm:$0xf]
    %v28 = vld [vmem:[%s1] sm:$0xff]
    %v29 = vld [vmem:[%s1 + $0x8] sm:$0xff]
    %v30 = vld [vmem:[%s1 + $0x10] sm:$0xff]
    %v31 = vld [vmem:[%s1 + $0x18] sm:$0xff]
    %v32 = vld [vmem:[%s1 + $0x20] sm:$0xff]
    %v33 = vld [vmem:[%s1 + $0x28] sm:$0xff]
    %v34 = vld [vmem:[%s1 + $0x30] sm:$0xff]
    %v35 = vld [vmem:[%s1 + $0x38] sm:$0xff]
    %v36 = vld [vmem:[%s1 + $0x40] sm:$0xff]
    %v37 = vld [vmem:[%s1 + $0x48] sm:$0xff]
    %v38 = vld [vmem:[%s1 + $0x50] sm:$0xff]
    %v39 = vld [vmem:[%s1 + $0x58] sm:$0xff]
    %v40 = vld [vmem:[%s1 + $0x60] sm:$0xff]
    %v41 = vld [vmem:[%s1 + $0x68] sm:$0xff]
    %v42 = vld [vmem:[%s1 + $0x70] sm:$0xff]
    %v43 = vld [vmem:[%s1 + $0x78] sm:$0xff]
    %v44 = vld [vmem:[%s1 + $0x80] sm:$0xff]
    %v45 = vld [vmem:[%s1 + $0x88] sm:$0xff]
    %v46 = vld [vmem:[%s1 + $0x90] sm:$0xff]
    %v47 = vld [vmem:[%s1 + $0x98] sm:$0xff]
    %v48 = vld [vmem:[%s1 + $0xa0] sm:$0xff]
    %v49 = vld [vmem:[%s1 + $0xa8] sm:$0xff]
    %v50 = vld [vmem:[%s1 + $0xb0] sm:$0xff]
    %v51 = vld [vmem:[%s1 + $0xb8] sm:$0xff]
    %v52 = vld [vmem:[%s1 + $0xc0] sm:$0xff]
    %v53 = vld [vmem:[%s1 + $0xc8] sm:$0xff]
    %v54 = vld [vmem:[%s1 + $0xd0] sm:$0xff]
    %v55 = vld [vmem:[%s1 + $0xd8] sm:$0xff]
    %v56 = vld [vmem:[%s1 + $0xe0] sm:$0xff]
    %v57 = vld [vmem:[%s1 + $0xe8] sm:$0xff]
    %v58 = vld [vmem:[%s1 + $0xf0] sm:$0xff]
    %v59 = vld [vmem:[%s1 + $0xf8] sm:$0xff]
    %v60 = vld [vmem:[%s2] sm:$0x1]
    %v62 = vlaneseq
    %v63 = vshrl.u32 %v62, 7
    %v64 = vsub.s32 0, %v63
    %v65 = vrot.slane %v60, %v64
    %v69 = vunpack.c.l.s4 1983009808
    %v70 = vunpack.c.0.s8 %v69
    %v71 = vlaneseq
    %v72 = vshrl.u32 %v71, 7
    %v73 = vsub.s32 %v70, %v72
    %v74 = vrot.slane %v27, %v73
    %v75 = vcombine.high %v74, %v74
    %78 = vmatprep.subr.mxu0 0.0
    %79 = vmatpush1.msra.mxu0 %v28
    %80 = vmatprep.subr.mxu0 0.0
    %81 = vmatpush1.msra.mxu0 %v29
    %82 = vmatprep.subr.mxu0 0.0
    %83 = vmatpush1.msra.mxu0 %v30
    %84 = vmatprep.subr.mxu0 0.0
    %85 = vmatpush1.msra.mxu0 %v31
    %86 = vmatprep.subr.mxu0 0.0
    %87 = vmatpush1.msra.mxu0 %v32
    %88 = vmatprep.subr.mxu0 0.0
    %89 = vmatpush1.msra.mxu0 %v33
    %90 = vmatprep.subr.mxu0 0.0
    %91 = vmatpush1.msra.mxu0 %v34
    %92 = vmatprep.subr.mxu0 0.0
    %93 = vmatpush1.msra.mxu0 %v35
    %94 = vmatprep.subr.mxu0 0.0
    %95 = vmatpush1.msra.mxu0 %v36
    %96 = vmatprep.subr.mxu0 0.0
    %97 = vmatpush1.msra.mxu0 %v37
    %98 = vmatprep.subr.mxu0 0.0
    %99 = vmatpush1.msra.mxu0 %v38
    %100 = vmatprep.subr.mxu0 0.0
    %101 = vmatpush1.msra.mxu0 %v39
    %102 = vmatprep.subr.mxu0 0.0
    %103 = vmatpush1.msra.mxu0 %v40
    %104 = vmatprep.subr.mxu0 0.0
    %105 = vmatpush1.msra.mxu0 %v41
    %106 = vmatprep.subr.mxu0 0.0
    %107 = vmatpush1.msra.mxu0 %v42
    %108 = vmatprep.subr.mxu0 0.0
    %109 = vmatpush1.msra.mxu0 %v43
    %110 = vmatprep.subr.mxu0 0.0
    %111 = vmatpush1.msra.mxu0 %v44
    %112 = vmatprep.subr.mxu0 0.0
    %113 = vmatpush1.msra.mxu0 %v45
    %114 = vmatprep.subr.mxu0 0.0
    %115 = vmatpush1.msra.mxu0 %v46
    %116 = vmatprep.subr.mxu0 0.0
    %117 = vmatpush1.msra.mxu0 %v47
    %118 = vmatprep.subr.mxu0 0.0
    %119 = vmatpush1.msra.mxu0 %v48
    %120 = vmatprep.subr.mxu0 0.0
    %121 = vmatpush1.msra.mxu0 %v49
    %122 = vmatprep.subr.mxu0 0.0
    %123 = vmatpush1.msra.mxu0 %v50
    %124 = vmatprep.subr.mxu0 0.0
    %125 = vmatpush1.msra.mxu0 %v51
    %126 = vmatprep.subr.mxu0 0.0
    %127 = vmatpush1.msra.mxu0 %v52
    %128 = vmatprep.subr.mxu0 0.0
    %129 = vmatpush1.msra.mxu0 %v53
    %130 = vmatprep.subr.mxu0 0.0
    %131 = vmatpush1.msra.mxu0 %v54
    %132 = vmatprep.subr.mxu0 0.0
    %133 = vmatpush1.msra.mxu0 %v55
    %134 = vmatprep.subr.mxu0 0.0
    %135 = vmatpush1.msra.mxu0 %v56
    %136 = vmatprep.subr.mxu0 0.0
    %137 = vmatpush1.msra.mxu0 %v57
    %138 = vmatprep.subr.mxu0 0.0
    %139 = vmatpush1.msra.mxu0 %v58
    %140 = vmatprep.subr.mxu0 0.0
    %141 = vmatpush1.msra.mxu0 %v59
    %142 = vmatprep.mubr.f32.mxu0 %v75
    %143 = vmatmul.mubr.f32.gmra.mrb[0].mxu0 %v74
    %v144 = vpop.f32.mrb[0].mxu0
    %v145 = vadd.f32 %v65, %v144
    %v146 = vpop.f32.mrb[0].mxu0
    %147 = vdwg.mxu0
    %v148 = vmax.f32 %v145, 0.0
    %v149 = vld [vmem:[%s3] sm:$0xff]
    %v150 = vld [vmem:[%s3 + $0x8] sm:$0xff]
    %v151 = vld [vmem:[%s3 + $0x10] sm:$0xff]
    %v152 = vld [vmem:[%s3 + $0x18] sm:$0xff]
    %v153 = vld [vmem:[%s3 + $0x20] sm:$0xff]
    %v154 = vld [vmem:[%s3 + $0x28] sm:$0xff]
    %v155 = vld [vmem:[%s3 + $0x30] sm:$0xff]
    %v156 = vld [vmem:[%s3 + $0x38] sm:$0xff]
    %v157 = vld [vmem:[%s3 + $0x40] sm:$0xff]
    %v158 = vld [vmem:[%s3 + $0x48] sm:$0xff]
    %v159 = vld [vmem:[%s3 + $0x50] sm:$0xff]
    %v160 = vld [vmem:[%s3 + $0x58] sm:$0xff]
    %v161 = vld [vmem:[%s3 + $0x60] sm:$0xff]
    %v162 = vld [vmem:[%s3 + $0x68] sm:$0xff]
    %v163 = vld [vmem:[%s3 + $0x70] sm:$0xff]
    %v164 = vld [vmem:[%s3 + $0x78] sm:$0xff]
    %v165 = vld [vmem:[%s4] sm:$0x1]
    %v167 = vlaneseq
    %v168 = vshrl.u32 %v167, 7
    %v169 = vsub.s32 0, %v168
    %v170 = vrot.slane %v165, %v169
    %172 = vmatprep.subr.mxu0 0.0
    %173 = vmatpush1.msra.mxu0 %v149
    %174 = vmatprep.subr.mxu0 0.0
    %175 = vmatpush1.msra.mxu0 %v150
    %176 = vmatprep.subr.mxu0 0.0
    %177 = vmatpush1.msra.mxu0 %v151
    %178 = vmatprep.subr.mxu0 0.0
    %179 = vmatpush1.msra.mxu0 %v152
    %180 = vmatprep.subr.mxu0 0.0
    %181 = vmatpush1.msra.mxu0 %v153
    %182 = vmatprep.subr.mxu0 0.0
    %183 = vmatpush1.msra.mxu0 %v154
    %184 = vmatprep.subr.mxu0 0.0
    %185 = vmatpush1.msra.mxu0 %v155
    %186 = vmatprep.subr.mxu0 0.0
    %187 = vmatpush1.msra.mxu0 %v156
    %188 = vmatprep.subr.mxu0 0.0
    %189 = vmatpush1.msra.mxu0 %v157
    %190 = vmatprep.subr.mxu0 0.0
    %191 = vmatpush1.msra.mxu0 %v158
    %192 = vmatprep.subr.mxu0 0.0
    %193 = vmatpush1.msra.mxu0 %v159
    %194 = vmatprep.subr.mxu0 0.0
    %195 = vmatpush1.msra.mxu0 %v160
    %196 = vmatprep.subr.mxu0 0.0
    %197 = vmatpush1.msra.mxu0 %v161
    %198 = vmatprep.subr.mxu0 0.0
    %199 = vmatpush1.msra.mxu0 %v162
    %200 = vmatprep.subr.mxu0 0.0
    %201 = vmatpush1.msra.mxu0 %v163
    %202 = vmatprep.subr.mxu0 0.0
    %203 = vmatpush1.msra.mxu0 %v164
    %204 = vmatprep.subr.mxu0 0.0
    %205 = vmatpush1.msra.mxu0 0.0
    %206 = vmatprep.subr.mxu0 0.0
    %207 = vmatpush1.msra.mxu0 0.0
    %208 = vmatprep.subr.mxu0 0.0
    %209 = vmatpush1.msra.mxu0 0.0
    %210 = vmatprep.subr.mxu0 0.0
    %211 = vmatpush1.msra.mxu0 0.0
    %212 = vmatprep.subr.mxu0 0.0
    %213 = vmatpush1.msra.mxu0 0.0
    %214 = vmatprep.subr.mxu0 0.0
    %215 = vmatpush1.msra.mxu0 0.0
    %216 = vmatprep.subr.mxu0 0.0
    %217 = vmatpush1.msra.mxu0 0.0
    %218 = vmatprep.subr.mxu0 0.0
    %219 = vmatpush1.msra.mxu0 0.0
    %220 = vmatprep.subr.mxu0 0.0
    %221 = vmatpush1.msra.mxu0 0.0
    %222 = vmatprep.subr.mxu0 0.0
    %223 = vmatpush1.msra.mxu0 0.0
    %224 = vmatprep.subr.mxu0 0.0
    %225 = vmatpush1.msra.mxu0 0.0
    %226 = vmatprep.subr.mxu0 0.0
    %227 = vmatpush1.msra.mxu0 0.0
    %228 = vmatprep.subr.mxu0 0.0
    %229 = vmatpush1.msra.mxu0 0.0
    %230 = vmatprep.subr.mxu0 0.0
    %231 = vmatpush1.msra.mxu0 0.0
    %232 = vmatprep.subr.mxu0 0.0
    %233 = vmatpush1.msra.mxu0 0.0
    %234 = vmatprep.subr.mxu0 0.0
    %235 = vmatpush1.msra.mxu0 0.0
    %236 = vmatprep.mubr.f32.mxu0 0.0
    %237 = vmatmul.mubr.f32.gmra.mrb[0].mxu0 %v148
    %v238 = vpop.f32.mrb[0].mxu0
    %v239 = vadd.f32 %v170, %v238
    %v240 = vpop.f32.mrb[0].mxu0
    %241 = vdwg.mxu0
    %v242 = vmax.f32 %v239, 0.0
    %v243 = vld [vmem:[%s5] sm:$0xff]
    %v244 = vld [vmem:[%s5 + $0x8] sm:$0xff]
    %v245 = vld [vmem:[%s5 + $0x10] sm:$0xff]
    %v246 = vld [vmem:[%s5 + $0x18] sm:$0xff]
    %v247 = vld [vmem:[%s5 + $0x20] sm:$0xff]
    %v248 = vld [vmem:[%s5 + $0x28] sm:$0xff]
    %v249 = vld [vmem:[%s5 + $0x30] sm:$0xff]
    %v250 = vld [vmem:[%s5 + $0x38] sm:$0xff]
    %v251 = vld [vmem:[%s5 + $0x40] sm:$0xff]
    %v252 = vld [vmem:[%s5 + $0x48] sm:$0xff]
    %v253 = vld [vmem:[%s5 + $0x50] sm:$0xff]
    %v254 = vld [vmem:[%s5 + $0x58] sm:$0xff]
    %v255 = vld [vmem:[%s5 + $0x60] sm:$0xff]
    %v256 = vld [vmem:[%s5 + $0x68] sm:$0xff]
    %v257 = vld [vmem:[%s5 + $0x70] sm:$0xff]
    %v258 = vld [vmem:[%s5 + $0x78] sm:$0xff]
    %v259 = vld [vmem:[%s6] sm:$0x1]
    %v261 = vlaneseq
    %v262 = vshrl.u32 %v261, 7
    %v263 = vsub.s32 0, %v262
    %v264 = vrot.slane %v259, %v263
    %266 = vmatprep.subr.mxu0 0.0
    %267 = vmatpush1.msra.mxu0 %v243
    %268 = vmatprep.subr.mxu0 0.0
    %269 = vmatpush1.msra.mxu0 %v244
    %270 = vmatprep.subr.mxu0 0.0
    %271 = vmatpush1.msra.mxu0 %v245
    %272 = vmatprep.subr.mxu0 0.0
    %273 = vmatpush1.msra.mxu0 %v246
    %274 = vmatprep.subr.mxu0 0.0
    %275 = vmatpush1.msra.mxu0 %v247
    %276 = vmatprep.subr.mxu0 0.0
    %277 = vmatpush1.msra.mxu0 %v248
    %278 = vmatprep.subr.mxu0 0.0
    %279 = vmatpush1.msra.mxu0 %v249
    %280 = vmatprep.subr.mxu0 0.0
    %281 = vmatpush1.msra.mxu0 %v250
    %282 = vmatprep.subr.mxu0 0.0
    %283 = vmatpush1.msra.mxu0 %v251
    %284 = vmatprep.subr.mxu0 0.0
    %285 = vmatpush1.msra.mxu0 %v252
    %286 = vmatprep.subr.mxu0 0.0
    %287 = vmatpush1.msra.mxu0 %v253
    %288 = vmatprep.subr.mxu0 0.0
    %289 = vmatpush1.msra.mxu0 %v254
    %290 = vmatprep.subr.mxu0 0.0
    %291 = vmatpush1.msra.mxu0 %v255
    %292 = vmatprep.subr.mxu0 0.0
    %293 = vmatpush1.msra.mxu0 %v256
    %294 = vmatprep.subr.mxu0 0.0
    %295 = vmatpush1.msra.mxu0 %v257
    %296 = vmatprep.subr.mxu0 0.0
    %297 = vmatpush1.msra.mxu0 %v258
    %298 = vmatprep.subr.mxu0 0.0
    %299 = vmatpush1.msra.mxu0 0.0
    %300 = vmatprep.subr.mxu0 0.0
    %301 = vmatpush1.msra.mxu0 0.0
    %302 = vmatprep.subr.mxu0 0.0
    %303 = vmatpush1.msra.mxu0 0.0
    %304 = vmatprep.subr.mxu0 0.0
    %305 = vmatpush1.msra.mxu0 0.0
    %306 = vmatprep.subr.mxu0 0.0
    %307 = vmatpush1.msra.mxu0 0.0
    %308 = vmatprep.subr.mxu0 0.0
    %309 = vmatpush1.msra.mxu0 0.0
    %310 = vmatprep.subr.mxu0 0.0
    %311 = vmatpush1.msra.mxu0 0.0
    %312 = vmatprep.subr.mxu0 0.0
    %313 = vmatpush1.msra.mxu0 0.0
    %314 = vmatprep.subr.mxu0 0.0
    %315 = vmatpush1.msra.mxu0 0.0
    %316 = vmatprep.subr.mxu0 0.0
    %317 = vmatpush1.msra.mxu0 0.0
    %318 = vmatprep.subr.mxu0 0.0
    %319 = vmatpush1.msra.mxu0 0.0
    %320 = vmatprep.subr.mxu0 0.0
    %321 = vmatpush1.msra.mxu0 0.0
    %322 = vmatprep.subr.mxu0 0.0
    %323 = vmatpush1.msra.mxu0 0.0
    %324 = vmatprep.subr.mxu0 0.0
    %325 = vmatpush1.msra.mxu0 0.0
    %326 = vmatprep.subr.mxu0 0.0
    %327 = vmatpush1.msra.mxu0 0.0
    %328 = vmatprep.subr.mxu0 0.0
    %329 = vmatpush1.msra.mxu0 0.0
    %330 = vmatprep.mubr.f32.mxu0 0.0
    %331 = vmatmul.mubr.f32.gmra.mrb[0].mxu0 %v242
    %v332 = vpop.f32.mrb[0].mxu0
    %v333 = vadd.f32 %v264, %v332
    %v334 = vpop.f32.mrb[0].mxu0
    %335 = vdwg.mxu0
    %vm336 = vcmask 9216
    %337 = vst.msk [vmem:[#allocation2] sm:$0x3] %vm336, %v333
    // Predicated region
    $region30: #{gncnn_forward.21} parent=1 // pred_check
      _
    $region31: #{gncnn_forward.21} parent=1 // pred_check_branch
      %339 = sbr.rel (0) target = $region33
    $region32: #{gncnn_forward.21} parent=1 // pred_region
      %s341 = ssub.s32 32, 32
      %342 = vsyncadd [#allocation3], %s341
      %s344 = sshll.u32 [#allocation2], 4
      %s345 = int_to_ptr.vmem [resolvable:$true] %s344
      %347 = dma.vmem_to_hbm [thread:$0]  %s345, 32, %s7, [#allocation3]
    $region33: #{gncnn_forward.21} parent=1 // pred_fallthru
      _
    // Predicated region
    $region34: #{gncnn_forward.21} parent=1 // pred_check
      _
    $region35: #{gncnn_forward.21} parent=1 // pred_check_branch
      %349 = sbr.rel (0) target = $region37
    $region36: #{gncnn_forward.21} parent=1 // pred_region
      %350 = dma.done [#allocation3], 32
    $region37: #{gncnn_forward.21} parent=1 // pred_fallthru
      _
    %351 = vsyncpa [#allocation3], 1

</llo_original>
